<compile_context>
chip_gen: v7x
topology: tpu7x:2x2x1
jax: 0.10.0
libtpu: 0.0.40
codegen_flags: <defaults>
</compile_context>

<pallas_src>
import math

import jax
import jax.numpy as jnp
from jax.experimental import pallas as pl
from jax.experimental.pallas import tpu as pltpu

# ---- model config (small, consistent with the module's forward) ----
WIN_SIZE = 8          # sequence length L
ENC_IN   = 4          # input channels
C_OUT    = 4          # projection output channels
D_MODEL  = 32
N_HEADS  = 4
HEAD_DIM = D_MODEL // N_HEADS
E_LAYERS = 2
D_FF     = 32
BATCH    = 2
N_BLOCKS = 3
N_TOK    = BATCH * WIN_SIZE

_LOG3 = math.log(3.0)
_INV_SQRT_2PI = 1.0 / math.sqrt(2.0 * math.pi)
_GELU_C = math.sqrt(2.0 / math.pi)

_CP = pltpu.CompilerParams(dimension_semantics=("arbitrary",))


def _fs(shape):
    """Full-array BlockSpec for a grid=(1,) call."""
    n = len(shape)
    return pl.BlockSpec(shape, lambda i, _n=n: (0,) * _n)


# ---------------------- in-kernel helpers (pure jnp) ----------------------

def _ln(x, g, b):
    mu = jnp.mean(x, axis=-1, keepdims=True)
    var = jnp.mean((x - mu) ** 2, axis=-1, keepdims=True)
    return (x - mu) * jax.lax.rsqrt(var + 1e-5) * g + b


def _gelu(x):
    # TODO(synk): tanh-approx GELU (erf lowering in Mosaic not guaranteed); ~1e-3 of torch F.gelu.
    return 0.5 * x * (1.0 + jnp.tanh(_GELU_C * (x + 0.044715 * x * x * x)))


# ============================ fused forward kernel ============================

def _fwd_kernel(xs_ref, xf_ref, shifts_ref, pe_ref, nhd2_ref,
                blk_w_ref, blk_b_ref, emb_ws_ref, emb_wf_ref,
                wq_ref, bq_ref, wk_ref, bk_ref, wv_ref, bv_ref,
                wsig_ref, bsig_ref, wo_ref, bo_ref, norms_ref,
                ffw1_ref, ffb1_ref, ffw2_ref, ffb2_ref,
                fing_ref, finb_ref, projw_ref, projb_ref,
                enc_ref, attn_ref, prior_ref, sigma_ref,
                ctx_scr):
    D, H, E, B, L = D_MODEL, N_HEADS, HEAD_DIM, BATCH, WIN_SIZE

    s_pz = shifts_ref[0]      # previous position, zero pad   (block-diag over batch)
    s_nz = shifts_ref[1]      # next position, zero pad
    s_pc = shifts_ref[2]      # previous, circular
    s_nc = shifts_ref[3]      # next, circular
    pe = pe_ref[...]          # (N, D)  positional embedding, tiled over batch
    nhd2 = nhd2_ref[...]      # (L, L)  = -0.5 * dist**2   (jit-time constant)

    # -------------------- embedding (both branches, all tokens at once) --------------------
    def embed(x, emb_w_ref):
        # TODO(synk): Block(enc_in) source unavailable; residual Conv1d(k=3,pad=1)+ReLU guess.
        for blk in range(N_BLOCKS):
            bb = blk_b_ref[blk]                                # (1, C)
            xp = jnp.dot(s_pz, x, preferred_element_type=jnp.float32)
            xn = jnp.dot(s_nz, x, preferred_element_type=jnp.float32)
            y = (jnp.dot(xp, blk_w_ref[blk, 0], preferred_element_type=jnp.float32)
                 + jnp.dot(x, blk_w_ref[blk, 1], preferred_element_type=jnp.float32)
                 + jnp.dot(xn, blk_w_ref[blk, 2], preferred_element_type=jnp.float32)) + bb
            x = x + jnp.maximum(y, 0.0)
        # TokenEmbedding: Conv1d(c_in, d_model, k=3, circular pad, bias=False) + PE
        xp = jnp.dot(s_pc, x, preferred_element_type=jnp.float32)
        xn = jnp.dot(s_nc, x, preferred_element_type=jnp.float32)
        tok = (jnp.dot(xp, emb_w_ref[0], preferred_element_type=jnp.float32)
               + jnp.dot(x, emb_w_ref[1], preferred_element_type=jnp.float32)
               + jnp.dot(xn, emb_w_ref[2], preferred_element_type=jnp.float32))
        return tok + pe

    s = embed(xs_ref[...], emb_ws_ref)                         # (N, D) series tokens
    f = embed(xf_ref[...], emb_wf_ref)                         # (N, D) freq tokens

    scale = 1.0 / math.sqrt(E)

    # -------------------- encoder layers (VMEM-resident carries) --------------------
    for li in range(E_LAYERS):
        norms = norms_ref[li]                                  # (8, D)

        # TODO(synk): CrossAttentionLayer / AnomalyAttention sources not provided;
        # reconstructed: Q from freq tokens, K/V/sigma from series tokens.
        q_all = jnp.dot(f, wq_ref[li], preferred_element_type=jnp.float32) + bq_ref[li]
        k_all = jnp.dot(s, wk_ref[li], preferred_element_type=jnp.float32) + bk_ref[li]
        v_all = jnp.dot(s, wv_ref[li], preferred_element_type=jnp.float32) + bv_ref[li]

        # sigma head (own small matmul -> no unaligned slices of a fused result)
        sig = jnp.dot(s, wsig_ref[li], preferred_element_type=jnp.float32) + bsig_ref[li]
        sig = 1.0 / (1.0 + jnp.exp(-5.0 * sig)) + 1e-5
        sig = jnp.exp(sig * _LOG3) - 1.0                       # 3**sigma - 1, (N, H)
        inv_sig = 1.0 / sig                                    # exact, on the narrow slab
        sigma_ref[li] = sig                                    # narrow output; broadcast in wrapper

        for h in range(H):                                     # static unrolled head loop
            qh = q_all[:, h * E:(h + 1) * E].reshape(B, L, E)
            kh = k_all[:, h * E:(h + 1) * E].reshape(B, L, E)
            vh = v_all[:, h * E:(h + 1) * E].reshape(B, L, E)

            sc = jnp.einsum("ble,bse->bls", qh, kh,
                            preferred_element_type=jnp.float32) * scale
            sc = sc - jnp.max(sc, axis=-1, keepdims=True)
            ex = jnp.exp(sc)
            attn = ex / jnp.sum(ex, axis=-1, keepdims=True)    # exact softmax

            isg = inv_sig[:, h:h + 1].reshape(B, L, 1)
            prior = (_INV_SQRT_2PI * isg) * jnp.exp(nhd2[None] * isg * isg)

            out_h = jnp.einsum("bls,bse->ble", attn, vh,
                               preferred_element_type=jnp.float32)
            ctx_scr[:, h * E:(h + 1) * E] = out_h.reshape(B * L, E)

            for b in range(B):                                 # layer-major outputs, no wrapper transpose
                attn_ref[(li * B + b) * H + h] = attn[b]
                prior_ref[(li * B + b) * H + h] = prior[b]

        # single output projection: (N, D) @ (D, 2D) -> [series | freq]
        both = jnp.dot(ctx_scr[...], wo_ref[li], preferred_element_type=jnp.float32) + bo_ref[li]
        new_s = both[:, :D]
        new_f = both[:, D:]

        # residual + norm1 (dropout -> identity in eval)
        s1 = _ln(s + new_s, norms[0:1], norms[1:2])
        f1 = _ln(f + new_f, norms[2:3], norms[3:4])

        # FFN (Conv1d k=1 == matmul) + activation + residual + norm2, both branches
        s_h = _gelu(jnp.dot(s1, ffw1_ref[li, 0], preferred_element_type=jnp.float32) + ffb1_ref[li, 0])
        s_ff = jnp.dot(s_h, ffw2_ref[li, 0], preferred_element_type=jnp.float32) + ffb2_ref[li, 0]
        s = _ln(s1 + s_ff, norms[4:5], norms[5:6])

        f_h = _gelu(jnp.dot(f1, ffw1_ref[li, 1], preferred_element_type=jnp.float32) + ffb1_ref[li, 1])
        f_ff = jnp.dot(f_h, ffw2_ref[li, 1], preferred_element_type=jnp.float32) + ffb2_ref[li, 1]
        f = _ln(f1 + f_ff, norms[6:7], norms[7:8])

    # -------------------- final LayerNorm + projection (series branch) --------------------
    xn = _ln(s, fing_ref[...], finb_ref[...])
    enc_ref[...] = jnp.dot(xn, projw_ref[...], preferred_element_type=jnp.float32) + projb_ref[...]


# ============================ wrapper ============================

def positional_embedding(L, D):
    pos = jnp.arange(L, dtype=jnp.float32)[:, None]
    i = jnp.arange(0, D, 2, dtype=jnp.float32)[None, :]
    div = jnp.exp(-math.log(10000.0) * i / D)
    pe = jnp.zeros((L, D), dtype=jnp.float32)
    pe = pe.at[:, 0::2].set(jnp.sin(pos * div))
    pe = pe.at[:, 1::2].set(jnp.cos(pos * div))
    return pe


@jax.jit
def anomaly_transformer_fwd(params, x_series, x_freq):
    L = WIN_SIZE
    f32 = jnp.float32

    # jit-time constants (const-folded)
    idx = jnp.arange(L, dtype=f32)
    dist = jnp.abs(idx[:, None] - idx[None, :])
    nhd2 = -0.5 * dist * dist
    pe = jnp.tile(positional_embedding(L, D_MODEL), (BATCH, 1))          # (N, D)

    # block-diagonal (N, N) shift matrices: both batches processed as one slab
    r = jnp.arange(N_TOK)
    same = (r[:, None] // L) == (r[None, :] // L)
    pi = r[:, None] % L
    pj = r[None, :] % L
    shifts = jnp.stack([
        (same & (pj == pi - 1)).astype(f32),        # previous position, zero pad
        (same & (pj == pi + 1)).astype(f32),        # next position, zero pad
        (same & (pj == (pi - 1) % L)).astype(f32),  # previous, circular
        (same & (pj == (pi + 1) % L)).astype(f32),  # next, circular
    ])

    xs = x_series.reshape(N_TOK, ENC_IN)
    xf = x_freq.reshape(N_TOK, ENC_IN)

    args = (xs, xf, shifts, pe, nhd2,
            params["blocks_w"], params["blocks_b"], params["emb_ws"], params["emb_wf"],
            params["wq"], params["bq"], params["wk"], params["bk"],
            params["wv"], params["bv"], params["wsig"], params["bsig"],
            params["wo"], params["bo"], params["norms"],
            params["ffw1"], params["ffb1"], params["ffw2"], params["ffb2"],
            params["final_g"], params["final_b"], params["proj_w"], params["proj_b"])

    out_shapes = (
        jax.ShapeDtypeStruct((N_TOK, C_OUT), f32),
        jax.ShapeDtypeStruct((E_LAYERS * BATCH * N_HEADS, L, L), f32),   # attn
        jax.ShapeDtypeStruct((E_LAYERS * BATCH * N_HEADS, L, L), f32),   # prior
        jax.ShapeDtypeStruct((E_LAYERS, N_TOK, N_HEADS), f32),           # sigma (narrow)
    )
    enc, attn, prior, sig = pl.pallas_call(
        _fwd_kernel,
        grid=(1,),
        in_specs=[_fs(a.shape) for a in args],
        out_specs=[_fs(o.shape) for o in out_shapes],
        out_shape=out_shapes,
        scratch_shapes=[pltpu.VMEM((N_TOK, D_MODEL), jnp.float32)],      # ctx (head concat)
        compiler_params=_CP,
    )(*args)

    enc_out = enc.reshape(BATCH, WIN_SIZE, C_OUT)
    attn = attn.reshape(E_LAYERS, BATCH, N_HEADS, L, L)                   # pure reshape, no transpose
    prior = prior.reshape(E_LAYERS, BATCH, N_HEADS, L, L)
    # sigma broadcast done in XLA (free replication), matching reference (B, H, L, L)
    sig = sig.reshape(E_LAYERS, BATCH, L, N_HEADS)
    sig = jnp.transpose(sig, (0, 1, 3, 2))[..., None]
    sig = jnp.broadcast_to(sig, (E_LAYERS, BATCH, N_HEADS, L, L))

    series_list = [attn[i] for i in range(E_LAYERS)]
    prior_list = [prior[i] for i in range(E_LAYERS)]
    sigma_list = [sig[i] for i in range(E_LAYERS)]
    return enc_out, series_list, prior_list, sigma_list


# ============================ params ============================

def init_params(key):
    keys = iter(jax.random.split(key, 64))

    def nrm(shape, scale=0.05):
        return scale * jax.random.normal(next(keys), shape, dtype=jnp.float32)

    ones_d = jnp.ones((D_MODEL,), jnp.float32)
    zeros_d = jnp.zeros((D_MODEL,), jnp.float32)
    # [s_n1_g, s_n1_b, f_n1_g, f_n1_b, s_n2_g, s_n2_b, f_n2_g, f_n2_b]
    norms_one = jnp.stack([ones_d, zeros_d, ones_d, zeros_d,
                           ones_d, zeros_d, ones_d, zeros_d])

    return dict(
        blocks_w=nrm((N_BLOCKS, 3, ENC_IN, ENC_IN)),            # (block, tap, cin, cout)
        blocks_b=jnp.zeros((N_BLOCKS, 1, ENC_IN), jnp.float32),
        emb_ws=nrm((3, ENC_IN, D_MODEL)),                       # (tap, cin, d_model)
        emb_wf=nrm((3, ENC_IN, D_MODEL)),
        wq=nrm((E_LAYERS, D_MODEL, D_MODEL)),
        bq=jnp.zeros((E_LAYERS, 1, D_MODEL), jnp.float32),
        wk=nrm((E_LAYERS, D_MODEL, D_MODEL)),
        bk=jnp.zeros((E_LAYERS, 1, D_MODEL), jnp.float32),
        wv=nrm((E_LAYERS, D_MODEL, D_MODEL)),
        bv=jnp.zeros((E_LAYERS, 1, D_MODEL), jnp.float32),
        wsig=nrm((E_LAYERS, D_MODEL, N_HEADS)),
        bsig=jnp.zeros((E_LAYERS, 1, N_HEADS), jnp.float32),
        wo=nrm((E_LAYERS, D_MODEL, 2 * D_MODEL)),               # [wo_series | wo_freq]
        bo=jnp.zeros((E_LAYERS, 1, 2 * D_MODEL), jnp.float32),
        norms=jnp.stack([norms_one] * E_LAYERS),                # (E_LAYERS, 8, D)
        ffw1=nrm((E_LAYERS, 2, D_MODEL, D_FF)),                 # [:, 0]=series, [:, 1]=freq
        ffb1=jnp.zeros((E_LAYERS, 2, 1, D_FF), jnp.float32),
        ffw2=nrm((E_LAYERS, 2, D_FF, D_MODEL)),
        ffb2=jnp.zeros((E_LAYERS, 2, 1, D_MODEL), jnp.float32),
        final_g=jnp.ones((1, D_MODEL), jnp.float32),
        final_b=jnp.zeros((1, D_MODEL), jnp.float32),
        proj_w=nrm((D_MODEL, C_OUT)),
        proj_b=jnp.zeros((1, C_OUT), jnp.float32),
    )


if __name__ == "__main__":
    key = jax.random.PRNGKey(0)
    kp, kx, kf = jax.random.split(key, 3)
    params = init_params(kp)

    x_series = jax.random.normal(kx, (BATCH, WIN_SIZE, ENC_IN), dtype=jnp.float32)
    x_freq = jax.random.normal(kf, (BATCH, WIN_SIZE, ENC_IN), dtype=jnp.float32)

    enc_out, series_list, prior_list, sigma_list = anomaly_transformer_fwd(
        params, x_series, x_freq)
    jax.block_until_ready(enc_out)
    for t in list(series_list) + list(prior_list) + list(sigma_list):
        jax.block_until_ready(t)

    assert enc_out.shape == (BATCH, WIN_SIZE, C_OUT)
    assert len(series_list) == E_LAYERS
    assert series_list[0].shape == (BATCH, N_HEADS, WIN_SIZE, WIN_SIZE)
    assert prior_list[0].shape == (BATCH, N_HEADS, WIN_SIZE, WIN_SIZE)
    assert sigma_list[0].shape == (BATCH, N_HEADS, WIN_SIZE, WIN_SIZE)
    assert bool(jnp.all(jnp.isfinite(enc_out)))
    assert bool(jnp.all(jnp.isfinite(series_list[0])))
    assert bool(jnp.all(jnp.isfinite(prior_list[0])))
    print("KERNEL_OK")
</pallas_src>

<mosaic_0001>
module attributes {stable_mosaic.version = 11 : i64} {
  func.func @_fwd_kernel(%arg0: i32, %arg1: memref<16x4xf32, #tpu.memory_space<vmem>>, %arg2: memref<16x4xf32, #tpu.memory_space<vmem>>, %arg3: memref<4x16x16xf32, #tpu.memory_space<vmem>>, %arg4: memref<16x32xf32, #tpu.memory_space<vmem>>, %arg5: memref<8x8xf32, #tpu.memory_space<vmem>>, %arg6: memref<3x3x4x4xf32, #tpu.memory_space<vmem>>, %arg7: memref<3x1x4xf32, #tpu.memory_space<vmem>>, %arg8: memref<3x4x32xf32, #tpu.memory_space<vmem>>, %arg9: memref<3x4x32xf32, #tpu.memory_space<vmem>>, %arg10: memref<2x32x32xf32, #tpu.memory_space<vmem>>, %arg11: memref<2x1x32xf32, #tpu.memory_space<vmem>>, %arg12: memref<2x32x32xf32, #tpu.memory_space<vmem>>, %arg13: memref<2x1x32xf32, #tpu.memory_space<vmem>>, %arg14: memref<2x32x32xf32, #tpu.memory_space<vmem>>, %arg15: memref<2x1x32xf32, #tpu.memory_space<vmem>>, %arg16: memref<2x32x4xf32, #tpu.memory_space<vmem>>, %arg17: memref<2x1x4xf32, #tpu.memory_space<vmem>>, %arg18: memref<2x32x64xf32, #tpu.memory_space<vmem>>, %arg19: memref<2x1x64xf32, #tpu.memory_space<vmem>>, %arg20: memref<2x8x32xf32, #tpu.memory_space<vmem>>, %arg21: memref<2x2x32x32xf32, #tpu.memory_space<vmem>>, %arg22: memref<2x2x1x32xf32, #tpu.memory_space<vmem>>, %arg23: memref<2x2x32x32xf32, #tpu.memory_space<vmem>>, %arg24: memref<2x2x1x32xf32, #tpu.memory_space<vmem>>, %arg25: memref<1x32xf32, #tpu.memory_space<vmem>>, %arg26: memref<1x32xf32, #tpu.memory_space<vmem>>, %arg27: memref<32x4xf32, #tpu.memory_space<vmem>>, %arg28: memref<1x4xf32, #tpu.memory_space<vmem>>, %arg29: memref<16x4xf32, #tpu.memory_space<vmem>>, %arg30: memref<16x8x8xf32, #tpu.memory_space<vmem>>, %arg31: memref<16x8x8xf32, #tpu.memory_space<vmem>>, %arg32: memref<2x16x4xf32, #tpu.memory_space<vmem>>, %arg33: memref<16x32xf32, #tpu.memory_space<vmem>>) attributes {dimension_semantics = [#tpu.dimension_semantics<arbitrary>], iteration_bounds = array<i64: 1>, scalar_prefetch = 0 : i64, scratch_operands = 1 : i64, tpu.core_type = #tpu.core_type<tc>, window_params = [{pipeline_mode = #tpu.pipeline_mode<synchronous>, transform_indices = @transform_0, window_bounds = array<i64: 16, 4>}, {pipeline_mode = #tpu.pipeline_mode<synchronous>, transform_indices = @transform_1, window_bounds = array<i64: 16, 4>}, {pipeline_mode = #tpu.pipeline_mode<synchronous>, transform_indices = @transform_2, window_bounds = array<i64: 4, 16, 16>}, {pipeline_mode = #tpu.pipeline_mode<synchronous>, transform_indices = @transform_3, window_bounds = array<i64: 16, 32>}, {pipeline_mode = #tpu.pipeline_mode<synchronous>, transform_indices = @transform_4, window_bounds = array<i64: 8, 8>}, {pipeline_mode = #tpu.pipeline_mode<synchronous>, transform_indices = @transform_5, window_bounds = array<i64: 3, 3, 4, 4>}, {pipeline_mode = #tpu.pipeline_mode<synchronous>, transform_indices = @transform_6, window_bounds = array<i64: 3, 1, 4>}, {pipeline_mode = #tpu.pipeline_mode<synchronous>, transform_indices = @transform_7, window_bounds = array<i64: 3, 4, 32>}, {pipeline_mode = #tpu.pipeline_mode<synchronous>, transform_indices = @transform_8, window_bounds = array<i64: 3, 4, 32>}, {pipeline_mode = #tpu.pipeline_mode<synchronous>, transform_indices = @transform_9, window_bounds = array<i64: 2, 32, 32>}, {pipeline_mode = #tpu.pipeline_mode<synchronous>, transform_indices = @transform_10, window_bounds = array<i64: 2, 1, 32>}, {pipeline_mode = #tpu.pipeline_mode<synchronous>, transform_indices = @transform_11, window_bounds = array<i64: 2, 32, 32>}, {pipeline_mode = #tpu.pipeline_mode<synchronous>, transform_indices = @transform_12, window_bounds = array<i64: 2, 1, 32>}, {pipeline_mode = #tpu.pipeline_mode<synchronous>, transform_indices = @transform_13, window_bounds = array<i64: 2, 32, 32>}, {pipeline_mode = #tpu.pipeline_mode<synchronous>, transform_indices = @transform_14, window_bounds = array<i64: 2, 1, 32>}, {pipeline_mode = #tpu.pipeline_mode<synchronous>, transform_indices = @transform_15, window_bounds = array<i64: 2, 32, 4>}, {pipeline_mode = #tpu.pipeline_mode<synchronous>, transform_indices = @transform_16, window_bounds = array<i64: 2, 1, 4>}, {pipeline_mode = #tpu.pipeline_mode<synchronous>, transform_indices = @transform_17, window_bounds = array<i64: 2, 32, 64>}, {pipeline_mode = #tpu.pipeline_mode<synchronous>, transform_indices = @transform_18, window_bounds = array<i64: 2, 1, 64>}, {pipeline_mode = #tpu.pipeline_mode<synchronous>, transform_indices = @transform_19, window_bounds = array<i64: 2, 8, 32>}, {pipeline_mode = #tpu.pipeline_mode<synchronous>, transform_indices = @transform_20, window_bounds = array<i64: 2, 2, 32, 32>}, {pipeline_mode = #tpu.pipeline_mode<synchronous>, transform_indices = @transform_21, window_bounds = array<i64: 2, 2, 1, 32>}, {pipeline_mode = #tpu.pipeline_mode<synchronous>, transform_indices = @transform_22, window_bounds = array<i64: 2, 2, 32, 32>}, {pipeline_mode = #tpu.pipeline_mode<synchronous>, transform_indices = @transform_23, window_bounds = array<i64: 2, 2, 1, 32>}, {pipeline_mode = #tpu.pipeline_mode<synchronous>, transform_indices = @transform_24, window_bounds = array<i64: 1, 32>}, {pipeline_mode = #tpu.pipeline_mode<synchronous>, transform_indices = @transform_25, window_bounds = array<i64: 1, 32>}, {pipeline_mode = #tpu.pipeline_mode<synchronous>, transform_indices = @transform_26, window_bounds = array<i64: 32, 4>}, {pipeline_mode = #tpu.pipeline_mode<synchronous>, transform_indices = @transform_27, window_bounds = array<i64: 1, 4>}, {pipeline_mode = #tpu.pipeline_mode<synchronous>, transform_indices = @transform_28, window_bounds = array<i64: 16, 4>}, {pipeline_mode = #tpu.pipeline_mode<synchronous>, transform_indices = @transform_29, window_bounds = array<i64: 16, 8, 8>}, {pipeline_mode = #tpu.pipeline_mode<synchronous>, transform_indices = @transform_30, window_bounds = array<i64: 16, 8, 8>}, {pipeline_mode = #tpu.pipeline_mode<synchronous>, transform_indices = @transform_31, window_bounds = array<i64: 2, 16, 4>}]} {
    %c0 = arith.constant 0 : index
    %c0_0 = arith.constant 0 : index
    %c0_1 = arith.constant 0 : index
    %0 = vector.load %arg3[%c0, %c0_0, %c0_1] : memref<4x16x16xf32, #tpu.memory_space<vmem>>, vector<1x16x16xf32>
    %1 = vector.shape_cast %0 : vector<1x16x16xf32> to vector<16x16xf32>
    %c1 = arith.constant 1 : index
    %c0_2 = arith.constant 0 : index
    %c0_3 = arith.constant 0 : index
    %2 = vector.load %arg3[%c1, %c0_2, %c0_3] : memref<4x16x16xf32, #tpu.memory_space<vmem>>, vector<1x16x16xf32>
    %3 = vector.shape_cast %2 : vector<1x16x16xf32> to vector<16x16xf32>
    %c2 = arith.constant 2 : index
    %c0_4 = arith.constant 0 : index
    %c0_5 = arith.constant 0 : index
    %4 = vector.load %arg3[%c2, %c0_4, %c0_5] : memref<4x16x16xf32, #tpu.memory_space<vmem>>, vector<1x16x16xf32>
    %5 = vector.shape_cast %4 : vector<1x16x16xf32> to vector<16x16xf32>
    %c3 = arith.constant 3 : index
    %c0_6 = arith.constant 0 : index
    %c0_7 = arith.constant 0 : index
    %6 = vector.load %arg3[%c3, %c0_6, %c0_7] : memref<4x16x16xf32, #tpu.memory_space<vmem>>, vector<1x16x16xf32>
    %7 = vector.shape_cast %6 : vector<1x16x16xf32> to vector<16x16xf32>
    %c0_8 = arith.constant 0 : index
    %c0_9 = arith.constant 0 : index
    %8 = vector.load %arg4[%c0_8, %c0_9] : memref<16x32xf32, #tpu.memory_space<vmem>>, vector<16x32xf32>
    %c0_10 = arith.constant 0 : index
    %c0_11 = arith.constant 0 : index
    %9 = vector.load %arg5[%c0_10, %c0_11] : memref<8x8xf32, #tpu.memory_space<vmem>>, vector<8x8xf32>
    %c0_12 = arith.constant 0 : index
    %c0_13 = arith.constant 0 : index
    %10 = vector.load %arg1[%c0_12, %c0_13] : memref<16x4xf32, #tpu.memory_space<vmem>>, vector<16x4xf32>
    %c0_14 = arith.constant 0 : index
    %c0_15 = arith.constant 0 : index
    %c0_16 = arith.constant 0 : index
    %11 = vector.load %arg7[%c0_14, %c0_15, %c0_16] : memref<3x1x4xf32, #tpu.memory_space<vmem>>, vector<1x1x4xf32>
    %12 = vector.shape_cast %11 : vector<1x1x4xf32> to vector<1x4xf32>
    %cst = arith.constant dense<0.000000e+00> : vector<16x4xf32>
    %13 = tpu.matmul %1, %10, %cst {dimension_numbers = #tpu.dot_dimension_numbers<[1], [0], [0], [1], [0, 0, 1, 1], [], []>} : vector<16x16xf32>, vector<16x4xf32>, vector<16x4xf32> -> vector<16x4xf32>
    %cst_17 = arith.constant dense<0.000000e+00> : vector<16x4xf32>
    %14 = tpu.matmul %3, %10, %cst_17 {dimension_numbers = #tpu.dot_dimension_numbers<[1], [0], [0], [1], [0, 0, 1, 1], [], []>} : vector<16x16xf32>, vector<16x4xf32>, vector<16x4xf32> -> vector<16x4xf32>
    %c0_18 = arith.constant 0 : index
    %c0_19 = arith.constant 0 : index
    %c0_20 = arith.constant 0 : index
    %c0_21 = arith.constant 0 : index
    %15 = vector.load %arg6[%c0_18, %c0_19, %c0_20, %c0_21] : memref<3x3x4x4xf32, #tpu.memory_space<vmem>>, vector<1x1x4x4xf32>
    %16 = vector.shape_cast %15 : vector<1x1x4x4xf32> to vector<4x4xf32>
    %cst_22 = arith.constant dense<0.000000e+00> : vector<16x4xf32>
    %17 = tpu.matmul %13, %16, %cst_22 {dimension_numbers = #tpu.dot_dimension_numbers<[1], [0], [0], [1], [0, 0, 1, 1], [], []>} : vector<16x4xf32>, vector<4x4xf32>, vector<16x4xf32> -> vector<16x4xf32>
    %c0_23 = arith.constant 0 : index
    %c1_24 = arith.constant 1 : index
    %c0_25 = arith.constant 0 : index
    %c0_26 = arith.constant 0 : index
    %18 = vector.load %arg6[%c0_23, %c1_24, %c0_25, %c0_26] : memref<3x3x4x4xf32, #tpu.memory_space<vmem>>, vector<1x1x4x4xf32>
    %19 = vector.shape_cast %18 : vector<1x1x4x4xf32> to vector<4x4xf32>
    %cst_27 = arith.constant dense<0.000000e+00> : vector<16x4xf32>
    %20 = tpu.matmul %10, %19, %cst_27 {dimension_numbers = #tpu.dot_dimension_numbers<[1], [0], [0], [1], [0, 0, 1, 1], [], []>} : vector<16x4xf32>, vector<4x4xf32>, vector<16x4xf32> -> vector<16x4xf32>
    %21 = arith.addf %17, %20 : vector<16x4xf32>
    %c0_28 = arith.constant 0 : index
    %c2_29 = arith.constant 2 : index
    %c0_30 = arith.constant 0 : index
    %c0_31 = arith.constant 0 : index
    %22 = vector.load %arg6[%c0_28, %c2_29, %c0_30, %c0_31] : memref<3x3x4x4xf32, #tpu.memory_space<vmem>>, vector<1x1x4x4xf32>
    %23 = vector.shape_cast %22 : vector<1x1x4x4xf32> to vector<4x4xf32>
    %cst_32 = arith.constant dense<0.000000e+00> : vector<16x4xf32>
    %24 = tpu.matmul %14, %23, %cst_32 {dimension_numbers = #tpu.dot_dimension_numbers<[1], [0], [0], [1], [0, 0, 1, 1], [], []>} : vector<16x4xf32>, vector<4x4xf32>, vector<16x4xf32> -> vector<16x4xf32>
    %25 = arith.addf %21, %24 : vector<16x4xf32>
    %26 = vector.broadcast %12 : vector<1x4xf32> to vector<16x4xf32>
    %27 = arith.addf %25, %26 : vector<16x4xf32>
    %cst_33 = arith.constant 0.000000e+00 : f32
    %28 = vector.broadcast %cst_33 : f32 to vector<16x4xf32>
    %29 = arith.maximumf %27, %28 : vector<16x4xf32>
    %30 = arith.addf %10, %29 : vector<16x4xf32>
    %c1_34 = arith.constant 1 : index
    %c0_35 = arith.constant 0 : index
    %c0_36 = arith.constant 0 : index
    %31 = vector.load %arg7[%c1_34, %c0_35, %c0_36] : memref<3x1x4xf32, #tpu.memory_space<vmem>>, vector<1x1x4xf32>
    %32 = vector.shape_cast %31 : vector<1x1x4xf32> to vector<1x4xf32>
    %cst_37 = arith.constant dense<0.000000e+00> : vector<16x4xf32>
    %33 = tpu.matmul %1, %30, %cst_37 {dimension_numbers = #tpu.dot_dimension_numbers<[1], [0], [0], [1], [0, 0, 1, 1], [], []>} : vector<16x16xf32>, vector<16x4xf32>, vector<16x4xf32> -> vector<16x4xf32>
    %cst_38 = arith.constant dense<0.000000e+00> : vector<16x4xf32>
    %34 = tpu.matmul %3, %30, %cst_38 {dimension_numbers = #tpu.dot_dimension_numbers<[1], [0], [0], [1], [0, 0, 1, 1], [], []>} : vector<16x16xf32>, vector<16x4xf32>, vector<16x4xf32> -> vector<16x4xf32>
    %c1_39 = arith.constant 1 : index
    %c0_40 = arith.constant 0 : index
    %c0_41 = arith.constant 0 : index
    %c0_42 = arith.constant 0 : index
    %35 = vector.load %arg6[%c1_39, %c0_40, %c0_41, %c0_42] : memref<3x3x4x4xf32, #tpu.memory_space<vmem>>, vector<1x1x4x4xf32>
    %36 = vector.shape_cast %35 : vector<1x1x4x4xf32> to vector<4x4xf32>
    %cst_43 = arith.constant dense<0.000000e+00> : vector<16x4xf32>
    %37 = tpu.matmul %33, %36, %cst_43 {dimension_numbers = #tpu.dot_dimension_numbers<[1], [0], [0], [1], [0, 0, 1, 1], [], []>} : vector<16x4xf32>, vector<4x4xf32>, vector<16x4xf32> -> vector<16x4xf32>
    %c1_44 = arith.constant 1 : index
    %c1_45 = arith.constant 1 : index
    %c0_46 = arith.constant 0 : index
    %c0_47 = arith.constant 0 : index
    %38 = vector.load %arg6[%c1_44, %c1_45, %c0_46, %c0_47] : memref<3x3x4x4xf32, #tpu.memory_space<vmem>>, vector<1x1x4x4xf32>
    %39 = vector.shape_cast %38 : vector<1x1x4x4xf32> to vector<4x4xf32>
    %cst_48 = arith.constant dense<0.000000e+00> : vector<16x4xf32>
    %40 = tpu.matmul %30, %39, %cst_48 {dimension_numbers = #tpu.dot_dimension_numbers<[1], [0], [0], [1], [0, 0, 1, 1], [], []>} : vector<16x4xf32>, vector<4x4xf32>, vector<16x4xf32> -> vector<16x4xf32>
    %41 = arith.addf %37, %40 : vector<16x4xf32>
    %c1_49 = arith.constant 1 : index
    %c2_50 = arith.constant 2 : index
    %c0_51 = arith.constant 0 : index
    %c0_52 = arith.constant 0 : index
    %42 = vector.load %arg6[%c1_49, %c2_50, %c0_51, %c0_52] : memref<3x3x4x4xf32, #tpu.memory_space<vmem>>, vector<1x1x4x4xf32>
    %43 = vector.shape_cast %42 : vector<1x1x4x4xf32> to vector<4x4xf32>
    %cst_53 = arith.constant dense<0.000000e+00> : vector<16x4xf32>
    %44 = tpu.matmul %34, %43, %cst_53 {dimension_numbers = #tpu.dot_dimension_numbers<[1], [0], [0], [1], [0, 0, 1, 1], [], []>} : vector<16x4xf32>, vector<4x4xf32>, vector<16x4xf32> -> vector<16x4xf32>
    %45 = arith.addf %41, %44 : vector<16x4xf32>
    %46 = vector.broadcast %32 : vector<1x4xf32> to vector<16x4xf32>
    %47 = arith.addf %45, %46 : vector<16x4xf32>
    %cst_54 = arith.constant 0.000000e+00 : f32
    %48 = vector.broadcast %cst_54 : f32 to vector<16x4xf32>
    %49 = arith.maximumf %47, %48 : vector<16x4xf32>
    %50 = arith.addf %30, %49 : vector<16x4xf32>
    %c2_55 = arith.constant 2 : index
    %c0_56 = arith.constant 0 : index
    %c0_57 = arith.constant 0 : index
    %51 = vector.load %arg7[%c2_55, %c0_56, %c0_57] : memref<3x1x4xf32, #tpu.memory_space<vmem>>, vector<1x1x4xf32>
    %52 = vector.shape_cast %51 : vector<1x1x4xf32> to vector<1x4xf32>
    %cst_58 = arith.constant dense<0.000000e+00> : vector<16x4xf32>
    %53 = tpu.matmul %1, %50, %cst_58 {dimension_numbers = #tpu.dot_dimension_numbers<[1], [0], [0], [1], [0, 0, 1, 1], [], []>} : vector<16x16xf32>, vector<16x4xf32>, vector<16x4xf32> -> vector<16x4xf32>
    %cst_59 = arith.constant dense<0.000000e+00> : vector<16x4xf32>
    %54 = tpu.matmul %3, %50, %cst_59 {dimension_numbers = #tpu.dot_dimension_numbers<[1], [0], [0], [1], [0, 0, 1, 1], [], []>} : vector<16x16xf32>, vector<16x4xf32>, vector<16x4xf32> -> vector<16x4xf32>
    %c2_60 = arith.constant 2 : index
    %c0_61 = arith.constant 0 : index
    %c0_62 = arith.constant 0 : index
    %c0_63 = arith.constant 0 : index
    %55 = vector.load %arg6[%c2_60, %c0_61, %c0_62, %c0_63] : memref<3x3x4x4xf32, #tpu.memory_space<vmem>>, vector<1x1x4x4xf32>
    %56 = vector.shape_cast %55 : vector<1x1x4x4xf32> to vector<4x4xf32>
    %cst_64 = arith.constant dense<0.000000e+00> : vector<16x4xf32>
    %57 = tpu.matmul %53, %56, %cst_64 {dimension_numbers = #tpu.dot_dimension_numbers<[1], [0], [0], [1], [0, 0, 1, 1], [], []>} : vector<16x4xf32>, vector<4x4xf32>, vector<16x4xf32> -> vector<16x4xf32>
    %c2_65 = arith.constant 2 : index
    %c1_66 = arith.constant 1 : index
    %c0_67 = arith.constant 0 : index
    %c0_68 = arith.constant 0 : index
    %58 = vector.load %arg6[%c2_65, %c1_66, %c0_67, %c0_68] : memref<3x3x4x4xf32, #tpu.memory_space<vmem>>, vector<1x1x4x4xf32>
    %59 = vector.shape_cast %58 : vector<1x1x4x4xf32> to vector<4x4xf32>
    %cst_69 = arith.constant dense<0.000000e+00> : vector<16x4xf32>
    %60 = tpu.matmul %50, %59, %cst_69 {dimension_numbers = #tpu.dot_dimension_numbers<[1], [0], [0], [1], [0, 0, 1, 1], [], []>} : vector<16x4xf32>, vector<4x4xf32>, vector<16x4xf32> -> vector<16x4xf32>
    %61 = arith.addf %57, %60 : vector<16x4xf32>
    %c2_70 = arith.constant 2 : index
    %c2_71 = arith.constant 2 : index
    %c0_72 = arith.constant 0 : index
    %c0_73 = arith.constant 0 : index
    %62 = vector.load %arg6[%c2_70, %c2_71, %c0_72, %c0_73] : memref<3x3x4x4xf32, #tpu.memory_space<vmem>>, vector<1x1x4x4xf32>
    %63 = vector.shape_cast %62 : vector<1x1x4x4xf32> to vector<4x4xf32>
    %cst_74 = arith.constant dense<0.000000e+00> : vector<16x4xf32>
    %64 = tpu.matmul %54, %63, %cst_74 {dimension_numbers = #tpu.dot_dimension_numbers<[1], [0], [0], [1], [0, 0, 1, 1], [], []>} : vector<16x4xf32>, vector<4x4xf32>, vector<16x4xf32> -> vector<16x4xf32>
    %65 = arith.addf %61, %64 : vector<16x4xf32>
    %66 = vector.broadcast %52 : vector<1x4xf32> to vector<16x4xf32>
    %67 = arith.addf %65, %66 : vector<16x4xf32>
    %cst_75 = arith.constant 0.000000e+00 : f32
    %68 = vector.broadcast %cst_75 : f32 to vector<16x4xf32>
    %69 = arith.maximumf %67, %68 : vector<16x4xf32>
    %70 = arith.addf %50, %69 : vector<16x4xf32>
    %cst_76 = arith.constant dense<0.000000e+00> : vector<16x4xf32>
    %71 = tpu.matmul %5, %70, %cst_76 {dimension_numbers = #tpu.dot_dimension_numbers<[1], [0], [0], [1], [0, 0, 1, 1], [], []>} : vector<16x16xf32>, vector<16x4xf32>, vector<16x4xf32> -> vector<16x4xf32>
    %cst_77 = arith.constant dense<0.000000e+00> : vector<16x4xf32>
    %72 = tpu.matmul %7, %70, %cst_77 {dimension_numbers = #tpu.dot_dimension_numbers<[1], [0], [0], [1], [0, 0, 1, 1], [], []>} : vector<16x16xf32>, vector<16x4xf32>, vector<16x4xf32> -> vector<16x4xf32>
    %c0_78 = arith.constant 0 : index
    %c0_79 = arith.constant 0 : index
    %c0_80 = arith.constant 0 : index
    %73 = vector.load %arg8[%c0_78, %c0_79, %c0_80] : memref<3x4x32xf32, #tpu.memory_space<vmem>>, vector<1x4x32xf32>
    %74 = vector.shape_cast %73 : vector<1x4x32xf32> to vector<4x32xf32>
    %cst_81 = arith.constant dense<0.000000e+00> : vector<16x32xf32>
    %75 = tpu.matmul %71, %74, %cst_81 {dimension_numbers = #tpu.dot_dimension_numbers<[1], [0], [0], [1], [0, 0, 1, 1], [], []>} : vector<16x4xf32>, vector<4x32xf32>, vector<16x32xf32> -> vector<16x32xf32>
    %c1_82 = arith.constant 1 : index
    %c0_83 = arith.constant 0 : index
    %c0_84 = arith.constant 0 : index
    %76 = vector.load %arg8[%c1_82, %c0_83, %c0_84] : memref<3x4x32xf32, #tpu.memory_space<vmem>>, vector<1x4x32xf32>
    %77 = vector.shape_cast %76 : vector<1x4x32xf32> to vector<4x32xf32>
    %cst_85 = arith.constant dense<0.000000e+00> : vector<16x32xf32>
    %78 = tpu.matmul %70, %77, %cst_85 {dimension_numbers = #tpu.dot_dimension_numbers<[1], [0], [0], [1], [0, 0, 1, 1], [], []>} : vector<16x4xf32>, vector<4x32xf32>, vector<16x32xf32> -> vector<16x32xf32>
    %79 = arith.addf %75, %78 : vector<16x32xf32>
    %c2_86 = arith.constant 2 : index
    %c0_87 = arith.constant 0 : index
    %c0_88 = arith.constant 0 : index
    %80 = vector.load %arg8[%c2_86, %c0_87, %c0_88] : memref<3x4x32xf32, #tpu.memory_space<vmem>>, vector<1x4x32xf32>
    %81 = vector.shape_cast %80 : vector<1x4x32xf32> to vector<4x32xf32>
    %cst_89 = arith.constant dense<0.000000e+00> : vector<16x32xf32>
    %82 = tpu.matmul %72, %81, %cst_89 {dimension_numbers = #tpu.dot_dimension_numbers<[1], [0], [0], [1], [0, 0, 1, 1], [], []>} : vector<16x4xf32>, vector<4x32xf32>, vector<16x32xf32> -> vector<16x32xf32>
    %83 = arith.addf %79, %82 : vector<16x32xf32>
    %84 = arith.addf %83, %8 : vector<16x32xf32>
    %c0_90 = arith.constant 0 : index
    %c0_91 = arith.constant 0 : index
    %85 = vector.load %arg2[%c0_90, %c0_91] : memref<16x4xf32, #tpu.memory_space<vmem>>, vector<16x4xf32>
    %c0_92 = arith.constant 0 : index
    %c0_93 = arith.constant 0 : index
    %c0_94 = arith.constant 0 : index
    %86 = vector.load %arg7[%c0_92, %c0_93, %c0_94] : memref<3x1x4xf32, #tpu.memory_space<vmem>>, vector<1x1x4xf32>
    %87 = vector.shape_cast %86 : vector<1x1x4xf32> to vector<1x4xf32>
    %cst_95 = arith.constant dense<0.000000e+00> : vector<16x4xf32>
    %88 = tpu.matmul %1, %85, %cst_95 {dimension_numbers = #tpu.dot_dimension_numbers<[1], [0], [0], [1], [0, 0, 1, 1], [], []>} : vector<16x16xf32>, vector<16x4xf32>, vector<16x4xf32> -> vector<16x4xf32>
    %cst_96 = arith.constant dense<0.000000e+00> : vector<16x4xf32>
    %89 = tpu.matmul %3, %85, %cst_96 {dimension_numbers = #tpu.dot_dimension_numbers<[1], [0], [0], [1], [0, 0, 1, 1], [], []>} : vector<16x16xf32>, vector<16x4xf32>, vector<16x4xf32> -> vector<16x4xf32>
    %c0_97 = arith.constant 0 : index
    %c0_98 = arith.constant 0 : index
    %c0_99 = arith.constant 0 : index
    %c0_100 = arith.constant 0 : index
    %90 = vector.load %arg6[%c0_97, %c0_98, %c0_99, %c0_100] : memref<3x3x4x4xf32, #tpu.memory_space<vmem>>, vector<1x1x4x4xf32>
    %91 = vector.shape_cast %90 : vector<1x1x4x4xf32> to vector<4x4xf32>
    %cst_101 = arith.constant dense<0.000000e+00> : vector<16x4xf32>
    %92 = tpu.matmul %88, %91, %cst_101 {dimension_numbers = #tpu.dot_dimension_numbers<[1], [0], [0], [1], [0, 0, 1, 1], [], []>} : vector<16x4xf32>, vector<4x4xf32>, vector<16x4xf32> -> vector<16x4xf32>
    %c0_102 = arith.constant 0 : index
    %c1_103 = arith.constant 1 : index
    %c0_104 = arith.constant 0 : index
    %c0_105 = arith.constant 0 : index
    %93 = vector.load %arg6[%c0_102, %c1_103, %c0_104, %c0_105] : memref<3x3x4x4xf32, #tpu.memory_space<vmem>>, vector<1x1x4x4xf32>
    %94 = vector.shape_cast %93 : vector<1x1x4x4xf32> to vector<4x4xf32>
    %cst_106 = arith.constant dense<0.000000e+00> : vector<16x4xf32>
    %95 = tpu.matmul %85, %94, %cst_106 {dimension_numbers = #tpu.dot_dimension_numbers<[1], [0], [0], [1], [0, 0, 1, 1], [], []>} : vector<16x4xf32>, vector<4x4xf32>, vector<16x4xf32> -> vector<16x4xf32>
    %96 = arith.addf %92, %95 : vector<16x4xf32>
    %c0_107 = arith.constant 0 : index
    %c2_108 = arith.constant 2 : index
    %c0_109 = arith.constant 0 : index
    %c0_110 = arith.constant 0 : index
    %97 = vector.load %arg6[%c0_107, %c2_108, %c0_109, %c0_110] : memref<3x3x4x4xf32, #tpu.memory_space<vmem>>, vector<1x1x4x4xf32>
    %98 = vector.shape_cast %97 : vector<1x1x4x4xf32> to vector<4x4xf32>
    %cst_111 = arith.constant dense<0.000000e+00> : vector<16x4xf32>
    %99 = tpu.matmul %89, %98, %cst_111 {dimension_numbers = #tpu.dot_dimension_numbers<[1], [0], [0], [1], [0, 0, 1, 1], [], []>} : vector<16x4xf32>, vector<4x4xf32>, vector<16x4xf32> -> vector<16x4xf32>
    %100 = arith.addf %96, %99 : vector<16x4xf32>
    %101 = vector.broadcast %87 : vector<1x4xf32> to vector<16x4xf32>
    %102 = arith.addf %100, %101 : vector<16x4xf32>
    %cst_112 = arith.constant 0.000000e+00 : f32
    %103 = vector.broadcast %cst_112 : f32 to vector<16x4xf32>
    %104 = arith.maximumf %102, %103 : vector<16x4xf32>
    %105 = arith.addf %85, %104 : vector<16x4xf32>
    %c1_113 = arith.constant 1 : index
    %c0_114 = arith.constant 0 : index
    %c0_115 = arith.constant 0 : index
    %106 = vector.load %arg7[%c1_113, %c0_114, %c0_115] : memref<3x1x4xf32, #tpu.memory_space<vmem>>, vector<1x1x4xf32>
    %107 = vector.shape_cast %106 : vector<1x1x4xf32> to vector<1x4xf32>
    %cst_116 = arith.constant dense<0.000000e+00> : vector<16x4xf32>
    %108 = tpu.matmul %1, %105, %cst_116 {dimension_numbers = #tpu.dot_dimension_numbers<[1], [0], [0], [1], [0, 0, 1, 1], [], []>} : vector<16x16xf32>, vector<16x4xf32>, vector<16x4xf32> -> vector<16x4xf32>
    %cst_117 = arith.constant dense<0.000000e+00> : vector<16x4xf32>
    %109 = tpu.matmul %3, %105, %cst_117 {dimension_numbers = #tpu.dot_dimension_numbers<[1], [0], [0], [1], [0, 0, 1, 1], [], []>} : vector<16x16xf32>, vector<16x4xf32>, vector<16x4xf32> -> vector<16x4xf32>
    %c1_118 = arith.constant 1 : index
    %c0_119 = arith.constant 0 : index
    %c0_120 = arith.constant 0 : index
    %c0_121 = arith.constant 0 : index
    %110 = vector.load %arg6[%c1_118, %c0_119, %c0_120, %c0_121] : memref<3x3x4x4xf32, #tpu.memory_space<vmem>>, vector<1x1x4x4xf32>
    %111 = vector.shape_cast %110 : vector<1x1x4x4xf32> to vector<4x4xf32>
    %cst_122 = arith.constant dense<0.000000e+00> : vector<16x4xf32>
    %112 = tpu.matmul %108, %111, %cst_122 {dimension_numbers = #tpu.dot_dimension_numbers<[1], [0], [0], [1], [0, 0, 1, 1], [], []>} : vector<16x4xf32>, vector<4x4xf32>, vector<16x4xf32> -> vector<16x4xf32>
    %c1_123 = arith.constant 1 : index
    %c1_124 = arith.constant 1 : index
    %c0_125 = arith.constant 0 : index
    %c0_126 = arith.constant 0 : index
    %113 = vector.load %arg6[%c1_123, %c1_124, %c0_125, %c0_126] : memref<3x3x4x4xf32, #tpu.memory_space<vmem>>, vector<1x1x4x4xf32>
    %114 = vector.shape_cast %113 : vector<1x1x4x4xf32> to vector<4x4xf32>
    %cst_127 = arith.constant dense<0.000000e+00> : vector<16x4xf32>
    %115 = tpu.matmul %105, %114, %cst_127 {dimension_numbers = #tpu.dot_dimension_numbers<[1], [0], [0], [1], [0, 0, 1, 1], [], []>} : vector<16x4xf32>, vector<4x4xf32>, vector<16x4xf32> -> vector<16x4xf32>
    %116 = arith.addf %112, %115 : vector<16x4xf32>
    %c1_128 = arith.constant 1 : index
    %c2_129 = arith.constant 2 : index
    %c0_130 = arith.constant 0 : index
    %c0_131 = arith.constant 0 : index
    %117 = vector.load %arg6[%c1_128, %c2_129, %c0_130, %c0_131] : memref<3x3x4x4xf32, #tpu.memory_space<vmem>>, vector<1x1x4x4xf32>
    %118 = vector.shape_cast %117 : vector<1x1x4x4xf32> to vector<4x4xf32>
    %cst_132 = arith.constant dense<0.000000e+00> : vector<16x4xf32>
    %119 = tpu.matmul %109, %118, %cst_132 {dimension_numbers = #tpu.dot_dimension_numbers<[1], [0], [0], [1], [0, 0, 1, 1], [], []>} : vector<16x4xf32>, vector<4x4xf32>, vector<16x4xf32> -> vector<16x4xf32>
    %120 = arith.addf %116, %119 : vector<16x4xf32>
    %121 = vector.broadcast %107 : vector<1x4xf32> to vector<16x4xf32>
    %122 = arith.addf %120, %121 : vector<16x4xf32>
    %cst_133 = arith.constant 0.000000e+00 : f32
    %123 = vector.broadcast %cst_133 : f32 to vector<16x4xf32>
    %124 = arith.maximumf %122, %123 : vector<16x4xf32>
    %125 = arith.addf %105, %124 : vector<16x4xf32>
    %c2_134 = arith.constant 2 : index
    %c0_135 = arith.constant 0 : index
    %c0_136 = arith.constant 0 : index
    %126 = vector.load %arg7[%c2_134, %c0_135, %c0_136] : memref<3x1x4xf32, #tpu.memory_space<vmem>>, vector<1x1x4xf32>
    %127 = vector.shape_cast %126 : vector<1x1x4xf32> to vector<1x4xf32>
    %cst_137 = arith.constant dense<0.000000e+00> : vector<16x4xf32>
    %128 = tpu.matmul %1, %125, %cst_137 {dimension_numbers = #tpu.dot_dimension_numbers<[1], [0], [0], [1], [0, 0, 1, 1], [], []>} : vector<16x16xf32>, vector<16x4xf32>, vector<16x4xf32> -> vector<16x4xf32>
    %cst_138 = arith.constant dense<0.000000e+00> : vector<16x4xf32>
    %129 = tpu.matmul %3, %125, %cst_138 {dimension_numbers = #tpu.dot_dimension_numbers<[1], [0], [0], [1], [0, 0, 1, 1], [], []>} : vector<16x16xf32>, vector<16x4xf32>, vector<16x4xf32> -> vector<16x4xf32>
    %c2_139 = arith.constant 2 : index
    %c0_140 = arith.constant 0 : index
    %c0_141 = arith.constant 0 : index
    %c0_142 = arith.constant 0 : index
    %130 = vector.load %arg6[%c2_139, %c0_140, %c0_141, %c0_142] : memref<3x3x4x4xf32, #tpu.memory_space<vmem>>, vector<1x1x4x4xf32>
    %131 = vector.shape_cast %130 : vector<1x1x4x4xf32> to vector<4x4xf32>
    %cst_143 = arith.constant dense<0.000000e+00> : vector<16x4xf32>
    %132 = tpu.matmul %128, %131, %cst_143 {dimension_numbers = #tpu.dot_dimension_numbers<[1], [0], [0], [1], [0, 0, 1, 1], [], []>} : vector<16x4xf32>, vector<4x4xf32>, vector<16x4xf32> -> vector<16x4xf32>
    %c2_144 = arith.constant 2 : index
    %c1_145 = arith.constant 1 : index
    %c0_146 = arith.constant 0 : index
    %c0_147 = arith.constant 0 : index
    %133 = vector.load %arg6[%c2_144, %c1_145, %c0_146, %c0_147] : memref<3x3x4x4xf32, #tpu.memory_space<vmem>>, vector<1x1x4x4xf32>
    %134 = vector.shape_cast %133 : vector<1x1x4x4xf32> to vector<4x4xf32>
    %cst_148 = arith.constant dense<0.000000e+00> : vector<16x4xf32>
    %135 = tpu.matmul %125, %134, %cst_148 {dimension_numbers = #tpu.dot_dimension_numbers<[1], [0], [0], [1], [0, 0, 1, 1], [], []>} : vector<16x4xf32>, vector<4x4xf32>, vector<16x4xf32> -> vector<16x4xf32>
    %136 = arith.addf %132, %135 : vector<16x4xf32>
    %c2_149 = arith.constant 2 : index
    %c2_150 = arith.constant 2 : index
    %c0_151 = arith.constant 0 : index
    %c0_152 = arith.constant 0 : index
    %137 = vector.load %arg6[%c2_149, %c2_150, %c0_151, %c0_152] : memref<3x3x4x4xf32, #tpu.memory_space<vmem>>, vector<1x1x4x4xf32>
    %138 = vector.shape_cast %137 : vector<1x1x4x4xf32> to vector<4x4xf32>
    %cst_153 = arith.constant dense<0.000000e+00> : vector<16x4xf32>
    %139 = tpu.matmul %129, %138, %cst_153 {dimension_numbers = #tpu.dot_dimension_numbers<[1], [0], [0], [1], [0, 0, 1, 1], [], []>} : vector<16x4xf32>, vector<4x4xf32>, vector<16x4xf32> -> vector<16x4xf32>
    %140 = arith.addf %136, %139 : vector<16x4xf32>
    %141 = vector.broadcast %127 : vector<1x4xf32> to vector<16x4xf32>
    %142 = arith.addf %140, %141 : vector<16x4xf32>
    %cst_154 = arith.constant 0.000000e+00 : f32
    %143 = vector.broadcast %cst_154 : f32 to vector<16x4xf32>
    %144 = arith.maximumf %142, %143 : vector<16x4xf32>
    %145 = arith.addf %125, %144 : vector<16x4xf32>
    %cst_155 = arith.constant dense<0.000000e+00> : vector<16x4xf32>
    %146 = tpu.matmul %5, %145, %cst_155 {dimension_numbers = #tpu.dot_dimension_numbers<[1], [0], [0], [1], [0, 0, 1, 1], [], []>} : vector<16x16xf32>, vector<16x4xf32>, vector<16x4xf32> -> vector<16x4xf32>
    %cst_156 = arith.constant dense<0.000000e+00> : vector<16x4xf32>
    %147 = tpu.matmul %7, %145, %cst_156 {dimension_numbers = #tpu.dot_dimension_numbers<[1], [0], [0], [1], [0, 0, 1, 1], [], []>} : vector<16x16xf32>, vector<16x4xf32>, vector<16x4xf32> -> vector<16x4xf32>
    %c0_157 = arith.constant 0 : index
    %c0_158 = arith.constant 0 : index
    %c0_159 = arith.constant 0 : index
    %148 = vector.load %arg9[%c0_157, %c0_158, %c0_159] : memref<3x4x32xf32, #tpu.memory_space<vmem>>, vector<1x4x32xf32>
    %149 = vector.shape_cast %148 : vector<1x4x32xf32> to vector<4x32xf32>
    %cst_160 = arith.constant dense<0.000000e+00> : vector<16x32xf32>
    %150 = tpu.matmul %146, %149, %cst_160 {dimension_numbers = #tpu.dot_dimension_numbers<[1], [0], [0], [1], [0, 0, 1, 1], [], []>} : vector<16x4xf32>, vector<4x32xf32>, vector<16x32xf32> -> vector<16x32xf32>
    %c1_161 = arith.constant 1 : index
    %c0_162 = arith.constant 0 : index
    %c0_163 = arith.constant 0 : index
    %151 = vector.load %arg9[%c1_161, %c0_162, %c0_163] : memref<3x4x32xf32, #tpu.memory_space<vmem>>, vector<1x4x32xf32>
    %152 = vector.shape_cast %151 : vector<1x4x32xf32> to vector<4x32xf32>
    %cst_164 = arith.constant dense<0.000000e+00> : vector<16x32xf32>
    %153 = tpu.matmul %145, %152, %cst_164 {dimension_numbers = #tpu.dot_dimension_numbers<[1], [0], [0], [1], [0, 0, 1, 1], [], []>} : vector<16x4xf32>, vector<4x32xf32>, vector<16x32xf32> -> vector<16x32xf32>
    %154 = arith.addf %150, %153 : vector<16x32xf32>
    %c2_165 = arith.constant 2 : index
    %c0_166 = arith.constant 0 : index
    %c0_167 = arith.constant 0 : index
    %155 = vector.load %arg9[%c2_165, %c0_166, %c0_167] : memref<3x4x32xf32, #tpu.memory_space<vmem>>, vector<1x4x32xf32>
    %156 = vector.shape_cast %155 : vector<1x4x32xf32> to vector<4x32xf32>
    %cst_168 = arith.constant dense<0.000000e+00> : vector<16x32xf32>
    %157 = tpu.matmul %147, %156, %cst_168 {dimension_numbers = #tpu.dot_dimension_numbers<[1], [0], [0], [1], [0, 0, 1, 1], [], []>} : vector<16x4xf32>, vector<4x32xf32>, vector<16x32xf32> -> vector<16x32xf32>
    %158 = arith.addf %154, %157 : vector<16x32xf32>
    %159 = arith.addf %158, %8 : vector<16x32xf32>
    %c0_169 = arith.constant 0 : index
    %c0_170 = arith.constant 0 : index
    %c0_171 = arith.constant 0 : index
    %160 = vector.load %arg20[%c0_169, %c0_170, %c0_171] : memref<2x8x32xf32, #tpu.memory_space<vmem>>, vector<1x8x32xf32>
    %161 = vector.shape_cast %160 : vector<1x8x32xf32> to vector<8x32xf32>
    %c0_172 = arith.constant 0 : index
    %c0_173 = arith.constant 0 : index
    %c0_174 = arith.constant 0 : index
    %162 = vector.load %arg10[%c0_172, %c0_173, %c0_174] : memref<2x32x32xf32, #tpu.memory_space<vmem>>, vector<1x32x32xf32>
    %163 = vector.shape_cast %162 : vector<1x32x32xf32> to vector<32x32xf32>
    %cst_175 = arith.constant dense<0.000000e+00> : vector<16x32xf32>
    %164 = tpu.matmul %159, %163, %cst_175 {dimension_numbers = #tpu.dot_dimension_numbers<[1], [0], [0], [1], [0, 0, 1, 1], [], []>} : vector<16x32xf32>, vector<32x32xf32>, vector<16x32xf32> -> vector<16x32xf32>
    %c0_176 = arith.constant 0 : index
    %c0_177 = arith.constant 0 : index
    %c0_178 = arith.constant 0 : index
    %165 = vector.load %arg11[%c0_176, %c0_177, %c0_178] : memref<2x1x32xf32, #tpu.memory_space<vmem>>, vector<1x1x32xf32>
    %166 = vector.shape_cast %165 : vector<1x1x32xf32> to vector<1x32xf32>
    %167 = vector.broadcast %166 : vector<1x32xf32> to vector<16x32xf32>
    %168 = arith.addf %164, %167 : vector<16x32xf32>
    %c0_179 = arith.constant 0 : index
    %c0_180 = arith.constant 0 : index
    %c0_181 = arith.constant 0 : index
    %169 = vector.load %arg12[%c0_179, %c0_180, %c0_181] : memref<2x32x32xf32, #tpu.memory_space<vmem>>, vector<1x32x32xf32>
    %170 = vector.shape_cast %169 : vector<1x32x32xf32> to vector<32x32xf32>
    %cst_182 = arith.constant dense<0.000000e+00> : vector<16x32xf32>
    %171 = tpu.matmul %84, %170, %cst_182 {dimension_numbers = #tpu.dot_dimension_numbers<[1], [0], [0], [1], [0, 0, 1, 1], [], []>} : vector<16x32xf32>, vector<32x32xf32>, vector<16x32xf32> -> vector<16x32xf32>
    %c0_183 = arith.constant 0 : index
    %c0_184 = arith.constant 0 : index
    %c0_185 = arith.constant 0 : index
    %172 = vector.load %arg13[%c0_183, %c0_184, %c0_185] : memref<2x1x32xf32, #tpu.memory_space<vmem>>, vector<1x1x32xf32>
    %173 = vector.shape_cast %172 : vector<1x1x32xf32> to vector<1x32xf32>
    %174 = vector.broadcast %173 : vector<1x32xf32> to vector<16x32xf32>
    %175 = arith.addf %171, %174 : vector<16x32xf32>
    %c0_186 = arith.constant 0 : index
    %c0_187 = arith.constant 0 : index
    %c0_188 = arith.constant 0 : index
    %176 = vector.load %arg14[%c0_186, %c0_187, %c0_188] : memref<2x32x32xf32, #tpu.memory_space<vmem>>, vector<1x32x32xf32>
    %177 = vector.shape_cast %176 : vector<1x32x32xf32> to vector<32x32xf32>
    %cst_189 = arith.constant dense<0.000000e+00> : vector<16x32xf32>
    %178 = tpu.matmul %84, %177, %cst_189 {dimension_numbers = #tpu.dot_dimension_numbers<[1], [0], [0], [1], [0, 0, 1, 1], [], []>} : vector<16x32xf32>, vector<32x32xf32>, vector<16x32xf32> -> vector<16x32xf32>
    %c0_190 = arith.constant 0 : index
    %c0_191 = arith.constant 0 : index
    %c0_192 = arith.constant 0 : index
    %179 = vector.load %arg15[%c0_190, %c0_191, %c0_192] : memref<2x1x32xf32, #tpu.memory_space<vmem>>, vector<1x1x32xf32>
    %180 = vector.shape_cast %179 : vector<1x1x32xf32> to vector<1x32xf32>
    %181 = vector.broadcast %180 : vector<1x32xf32> to vector<16x32xf32>
    %182 = arith.addf %178, %181 : vector<16x32xf32>
    %c0_193 = arith.constant 0 : index
    %c0_194 = arith.constant 0 : index
    %c0_195 = arith.constant 0 : index
    %183 = vector.load %arg16[%c0_193, %c0_194, %c0_195] : memref<2x32x4xf32, #tpu.memory_space<vmem>>, vector<1x32x4xf32>
    %184 = vector.shape_cast %183 : vector<1x32x4xf32> to vector<32x4xf32>
    %cst_196 = arith.constant dense<0.000000e+00> : vector<16x4xf32>
    %185 = tpu.matmul %84, %184, %cst_196 {dimension_numbers = #tpu.dot_dimension_numbers<[1], [0], [0], [1], [0, 0, 1, 1], [], []>} : vector<16x32xf32>, vector<32x4xf32>, vector<16x4xf32> -> vector<16x4xf32>
    %c0_197 = arith.constant 0 : index
    %c0_198 = arith.constant 0 : index
    %c0_199 = arith.constant 0 : index
    %186 = vector.load %arg17[%c0_197, %c0_198, %c0_199] : memref<2x1x4xf32, #tpu.memory_space<vmem>>, vector<1x1x4xf32>
    %187 = vector.shape_cast %186 : vector<1x1x4xf32> to vector<1x4xf32>
    %188 = vector.broadcast %187 : vector<1x4xf32> to vector<16x4xf32>
    %189 = arith.addf %185, %188 : vector<16x4xf32>
    %cst_200 = arith.constant -5.000000e+00 : f32
    %190 = vector.broadcast %cst_200 : f32 to vector<16x4xf32>
    %191 = arith.mulf %190, %189 : vector<16x4xf32>
    %192 = math.exp %191 : vector<16x4xf32>
    %cst_201 = arith.constant 1.000000e+00 : f32
    %193 = vector.broadcast %cst_201 : f32 to vector<16x4xf32>
    %194 = arith.addf %193, %192 : vector<16x4xf32>
    %cst_202 = arith.constant 1.000000e+00 : f32
    %195 = vector.broadcast %cst_202 : f32 to vector<16x4xf32>
    %196 = arith.divf %195, %194 : vector<16x4xf32>
    %cst_203 = arith.constant 9.99999974E-6 : f32
    %197 = vector.broadcast %cst_203 : f32 to vector<16x4xf32>
    %198 = arith.addf %196, %197 : vector<16x4xf32>
    %cst_204 = arith.constant 1.09861231 : f32
    %199 = vector.broadcast %cst_204 : f32 to vector<16x4xf32>
    %200 = arith.mulf %198, %199 : vector<16x4xf32>
    %201 = math.exp %200 : vector<16x4xf32>
    %cst_205 = arith.constant 1.000000e+00 : f32
    %202 = vector.broadcast %cst_205 : f32 to vector<16x4xf32>
    %203 = arith.subf %201, %202 : vector<16x4xf32>
    %cst_206 = arith.constant 1.000000e+00 : f32
    %204 = vector.broadcast %cst_206 : f32 to vector<16x4xf32>
    %205 = arith.divf %204, %203 : vector<16x4xf32>
    %c0_207 = arith.constant 0 : index
    %c0_208 = arith.constant 0 : index
    %c0_209 = arith.constant 0 : index
    %206 = vector.load %arg32[%c0_207, %c0_208, %c0_209] : memref<2x16x4xf32, #tpu.memory_space<vmem>>, vector<1x16x4xf32>
    %207 = vector.shape_cast %206 : vector<1x16x4xf32> to vector<16x4xf32>
    %208 = vector.shape_cast %203 : vector<16x4xf32> to vector<1x16x4xf32>
    tpu.vector_store %arg32[%c0_207, %c0_208, %c0_209], %208 {strides = array<i32>} : memref<2x16x4xf32, #tpu.memory_space<vmem>>, vector<1x16x4xf32>,
    %209 = vector.extract_strided_slice %168 {offsets = [0, 0], sizes = [16, 8], strides = [1, 1]} : vector<16x32xf32> to vector<16x8xf32>
    %210 = vector.shape_cast %209 : vector<16x8xf32> to vector<2x8x8xf32>
    %211 = vector.extract_strided_slice %175 {offsets = [0, 0], sizes = [16, 8], strides = [1, 1]} : vector<16x32xf32> to vector<16x8xf32>
    %212 = vector.shape_cast %211 : vector<16x8xf32> to vector<2x8x8xf32>
    %213 = vector.extract_strided_slice %182 {offsets = [0, 0], sizes = [16, 8], strides = [1, 1]} : vector<16x32xf32> to vector<16x8xf32>
    %214 = vector.shape_cast %213 : vector<16x8xf32> to vector<2x8x8xf32>
    "tpu.trace_start"() <{level = 10 : i32, message = "ble,bse->bls"}> : () -> ()
    %cst_210 = arith.constant dense<0.000000e+00> : vector<2x8x8xf32>
    %215 = tpu.matmul %210, %212, %cst_210 {dimension_numbers = #tpu.dot_dimension_numbers<[2], [2], [1], [1], [0, 0, 0, 1, 1, 1], [0], [0]>} : vector<2x8x8xf32>, vector<2x8x8xf32>, vector<2x8x8xf32> -> vector<2x8x8xf32>
    "tpu.trace_stop"() : () -> ()
    %cst_211 = arith.constant 0.353553385 : f32
    %216 = vector.broadcast %cst_211 : f32 to vector<2x8x8xf32>
    %217 = arith.mulf %215, %216 : vector<2x8x8xf32>
    %cst_212 = arith.constant dense<0xFF800000> : vector<2x8xf32>
    %218 = vector.multi_reduction <maximumf>, %217, %cst_212 [2] : vector<2x8x8xf32> to vector<2x8xf32>
    %219 = vector.shape_cast %218 : vector<2x8xf32> to vector<2x8x1xf32>
    %220 = vector.broadcast %219 : vector<2x8x1xf32> to vector<2x8x8xf32>
    %221 = arith.subf %217, %220 : vector<2x8x8xf32>
    %222 = math.exp %221 : vector<2x8x8xf32>
    %cst_213 = arith.constant dense<0.000000e+00> : vector<2x8xf32>
    %223 = vector.multi_reduction <add>, %222, %cst_213 [2] : vector<2x8x8xf32> to vector<2x8xf32>
    %224 = vector.shape_cast %223 : vector<2x8xf32> to vector<2x8x1xf32>
    %225 = vector.broadcast %224 : vector<2x8x1xf32> to vector<2x8x8xf32>
    %226 = arith.divf %222, %225 : vector<2x8x8xf32>
    %227 = vector.extract_strided_slice %205 {offsets = [0, 0], sizes = [16, 1], strides = [1, 1]} : vector<16x4xf32> to vector<16x1xf32>
    %228 = vector.shape_cast %227 : vector<16x1xf32> to vector<2x8x1xf32>
    %cst_214 = arith.constant 0.398942292 : f32
    %229 = vector.broadcast %cst_214 : f32 to vector<2x8x1xf32>
    %230 = arith.mulf %229, %228 : vector<2x8x1xf32>
    %231 = vector.shape_cast %9 : vector<8x8xf32> to vector<1x8x8xf32>
    %232 = vector.broadcast %231 : vector<1x8x8xf32> to vector<2x8x8xf32>
    %233 = vector.broadcast %228 : vector<2x8x1xf32> to vector<2x8x8xf32>
    %234 = arith.mulf %232, %233 : vector<2x8x8xf32>
    %235 = vector.broadcast %228 : vector<2x8x1xf32> to vector<2x8x8xf32>
    %236 = arith.mulf %234, %235 : vector<2x8x8xf32>
    %237 = math.exp %236 : vector<2x8x8xf32>
    %238 = vector.broadcast %230 : vector<2x8x1xf32> to vector<2x8x8xf32>
    %239 = arith.mulf %238, %237 : vector<2x8x8xf32>
    "tpu.trace_start"() <{level = 10 : i32, message = "bls,bse->ble"}> : () -> ()
    %cst_215 = arith.constant dense<0.000000e+00> : vector<2x8x8xf32>
    %240 = tpu.matmul %226, %214, %cst_215 {dimension_numbers = #tpu.dot_dimension_numbers<[2], [1], [1], [2], [0, 0, 0, 1, 1, 2], [0], [0]>} : vector<2x8x8xf32>, vector<2x8x8xf32>, vector<2x8x8xf32> -> vector<2x8x8xf32>
    "tpu.trace_stop"() : () -> ()
    %241 = vector.shape_cast %240 : vector<2x8x8xf32> to vector<16x8xf32>
    %c0_216 = arith.constant 0 : index
    %c0_217 = arith.constant 0 : index
    %242 = vector.load %arg33[%c0_216, %c0_217] : memref<16x32xf32, #tpu.memory_space<vmem>>, vector<16x8xf32>
    tpu.vector_store %arg33[%c0_216, %c0_217], %241 {strides = array<i32>} : memref<16x32xf32, #tpu.memory_space<vmem>>, vector<16x8xf32>,
    %243 = vector.extract_strided_slice %226 {offsets = [0, 0, 0], sizes = [1, 8, 8], strides = [1, 1, 1]} : vector<2x8x8xf32> to vector<1x8x8xf32>
    %244 = vector.shape_cast %243 : vector<1x8x8xf32> to vector<8x8xf32>
    %c0_218 = arith.constant 0 : index
    %c0_219 = arith.constant 0 : index
    %c0_220 = arith.constant 0 : index
    %245 = vector.load %arg30[%c0_218, %c0_219, %c0_220] : memref<16x8x8xf32, #tpu.memory_space<vmem>>, vector<1x8x8xf32>
    %246 = vector.shape_cast %245 : vector<1x8x8xf32> to vector<8x8xf32>
    %247 = vector.shape_cast %244 : vector<8x8xf32> to vector<1x8x8xf32>
    tpu.vector_store %arg30[%c0_218, %c0_219, %c0_220], %247 {strides = array<i32>} : memref<16x8x8xf32, #tpu.memory_space<vmem>>, vector<1x8x8xf32>,
    %248 = vector.extract_strided_slice %239 {offsets = [0, 0, 0], sizes = [1, 8, 8], strides = [1, 1, 1]} : vector<2x8x8xf32> to vector<1x8x8xf32>
    %249 = vector.shape_cast %248 : vector<1x8x8xf32> to vector<8x8xf32>
    %c0_221 = arith.constant 0 : index
    %c0_222 = arith.constant 0 : index
    %c0_223 = arith.constant 0 : index
    %250 = vector.load %arg31[%c0_221, %c0_222, %c0_223] : memref<16x8x8xf32, #tpu.memory_space<vmem>>, vector<1x8x8xf32>
    %251 = vector.shape_cast %250 : vector<1x8x8xf32> to vector<8x8xf32>
    %252 = vector.shape_cast %249 : vector<8x8xf32> to vector<1x8x8xf32>
    tpu.vector_store %arg31[%c0_221, %c0_222, %c0_223], %252 {strides = array<i32>} : memref<16x8x8xf32, #tpu.memory_space<vmem>>, vector<1x8x8xf32>,
    %253 = vector.extract_strided_slice %226 {offsets = [1, 0, 0], sizes = [1, 8, 8], strides = [1, 1, 1]} : vector<2x8x8xf32> to vector<1x8x8xf32>
    %254 = vector.shape_cast %253 : vector<1x8x8xf32> to vector<8x8xf32>
    %c4 = arith.constant 4 : index
    %c0_224 = arith.constant 0 : index
    %c0_225 = arith.constant 0 : index
    %255 = vector.load %arg30[%c4, %c0_224, %c0_225] : memref<16x8x8xf32, #tpu.memory_space<vmem>>, vector<1x8x8xf32>
    %256 = vector.shape_cast %255 : vector<1x8x8xf32> to vector<8x8xf32>
    %257 = vector.shape_cast %254 : vector<8x8xf32> to vector<1x8x8xf32>
    tpu.vector_store %arg30[%c4, %c0_224, %c0_225], %257 {strides = array<i32>} : memref<16x8x8xf32, #tpu.memory_space<vmem>>, vector<1x8x8xf32>,
    %258 = vector.extract_strided_slice %239 {offsets = [1, 0, 0], sizes = [1, 8, 8], strides = [1, 1, 1]} : vector<2x8x8xf32> to vector<1x8x8xf32>
    %259 = vector.shape_cast %258 : vector<1x8x8xf32> to vector<8x8xf32>
    %c4_226 = arith.constant 4 : index
    %c0_227 = arith.constant 0 : index
    %c0_228 = arith.constant 0 : index
    %260 = vector.load %arg31[%c4_226, %c0_227, %c0_228] : memref<16x8x8xf32, #tpu.memory_space<vmem>>, vector<1x8x8xf32>
    %261 = vector.shape_cast %260 : vector<1x8x8xf32> to vector<8x8xf32>
    %262 = vector.shape_cast %259 : vector<8x8xf32> to vector<1x8x8xf32>
    tpu.vector_store %arg31[%c4_226, %c0_227, %c0_228], %262 {strides = array<i32>} : memref<16x8x8xf32, #tpu.memory_space<vmem>>, vector<1x8x8xf32>,
    %263 = vector.extract_strided_slice %168 {offsets = [0, 8], sizes = [16, 8], strides = [1, 1]} : vector<16x32xf32> to vector<16x8xf32>
    %264 = vector.shape_cast %263 : vector<16x8xf32> to vector<2x8x8xf32>
    %265 = vector.extract_strided_slice %175 {offsets = [0, 8], sizes = [16, 8], strides = [1, 1]} : vector<16x32xf32> to vector<16x8xf32>
    %266 = vector.shape_cast %265 : vector<16x8xf32> to vector<2x8x8xf32>
    %267 = vector.extract_strided_slice %182 {offsets = [0, 8], sizes = [16, 8], strides = [1, 1]} : vector<16x32xf32> to vector<16x8xf32>
    %268 = vector.shape_cast %267 : vector<16x8xf32> to vector<2x8x8xf32>
    "tpu.trace_start"() <{level = 10 : i32, message = "ble,bse->bls"}> : () -> ()
    %cst_229 = arith.constant dense<0.000000e+00> : vector<2x8x8xf32>
    %269 = tpu.matmul %264, %266, %cst_229 {dimension_numbers = #tpu.dot_dimension_numbers<[2], [2], [1], [1], [0, 0, 0, 1, 1, 1], [0], [0]>} : vector<2x8x8xf32>, vector<2x8x8xf32>, vector<2x8x8xf32> -> vector<2x8x8xf32>
    "tpu.trace_stop"() : () -> ()
    %cst_230 = arith.constant 0.353553385 : f32
    %270 = vector.broadcast %cst_230 : f32 to vector<2x8x8xf32>
    %271 = arith.mulf %269, %270 : vector<2x8x8xf32>
    %cst_231 = arith.constant dense<0xFF800000> : vector<2x8xf32>
    %272 = vector.multi_reduction <maximumf>, %271, %cst_231 [2] : vector<2x8x8xf32> to vector<2x8xf32>
    %273 = vector.shape_cast %272 : vector<2x8xf32> to vector<2x8x1xf32>
    %274 = vector.broadcast %273 : vector<2x8x1xf32> to vector<2x8x8xf32>
    %275 = arith.subf %271, %274 : vector<2x8x8xf32>
    %276 = math.exp %275 : vector<2x8x8xf32>
    %cst_232 = arith.constant dense<0.000000e+00> : vector<2x8xf32>
    %277 = vector.multi_reduction <add>, %276, %cst_232 [2] : vector<2x8x8xf32> to vector<2x8xf32>
    %278 = vector.shape_cast %277 : vector<2x8xf32> to vector<2x8x1xf32>
    %279 = vector.broadcast %278 : vector<2x8x1xf32> to vector<2x8x8xf32>
    %280 = arith.divf %276, %279 : vector<2x8x8xf32>
    %281 = vector.extract_strided_slice %205 {offsets = [0, 1], sizes = [16, 1], strides = [1, 1]} : vector<16x4xf32> to vector<16x1xf32>
    %282 = vector.shape_cast %281 : vector<16x1xf32> to vector<2x8x1xf32>
    %cst_233 = arith.constant 0.398942292 : f32
    %283 = vector.broadcast %cst_233 : f32 to vector<2x8x1xf32>
    %284 = arith.mulf %283, %282 : vector<2x8x1xf32>
    %285 = vector.shape_cast %9 : vector<8x8xf32> to vector<1x8x8xf32>
    %286 = vector.broadcast %285 : vector<1x8x8xf32> to vector<2x8x8xf32>
    %287 = vector.broadcast %282 : vector<2x8x1xf32> to vector<2x8x8xf32>
    %288 = arith.mulf %286, %287 : vector<2x8x8xf32>
    %289 = vector.broadcast %282 : vector<2x8x1xf32> to vector<2x8x8xf32>
    %290 = arith.mulf %288, %289 : vector<2x8x8xf32>
    %291 = math.exp %290 : vector<2x8x8xf32>
    %292 = vector.broadcast %284 : vector<2x8x1xf32> to vector<2x8x8xf32>
    %293 = arith.mulf %292, %291 : vector<2x8x8xf32>
    "tpu.trace_start"() <{level = 10 : i32, message = "bls,bse->ble"}> : () -> ()
    %cst_234 = arith.constant dense<0.000000e+00> : vector<2x8x8xf32>
    %294 = tpu.matmul %280, %268, %cst_234 {dimension_numbers = #tpu.dot_dimension_numbers<[2], [1], [1], [2], [0, 0, 0, 1, 1, 2], [0], [0]>} : vector<2x8x8xf32>, vector<2x8x8xf32>, vector<2x8x8xf32> -> vector<2x8x8xf32>
    "tpu.trace_stop"() : () -> ()
    %295 = vector.shape_cast %294 : vector<2x8x8xf32> to vector<16x8xf32>
    %c0_235 = arith.constant 0 : index
    %c8 = arith.constant 8 : index
    %296 = vector.load %arg33[%c0_235, %c8] : memref<16x32xf32, #tpu.memory_space<vmem>>, vector<16x8xf32>
    tpu.vector_store %arg33[%c0_235, %c8], %295 {strides = array<i32>} : memref<16x32xf32, #tpu.memory_space<vmem>>, vector<16x8xf32>,
    %297 = vector.extract_strided_slice %280 {offsets = [0, 0, 0], sizes = [1, 8, 8], strides = [1, 1, 1]} : vector<2x8x8xf32> to vector<1x8x8xf32>
    %298 = vector.shape_cast %297 : vector<1x8x8xf32> to vector<8x8xf32>
    %c1_236 = arith.constant 1 : index
    %c0_237 = arith.constant 0 : index
    %c0_238 = arith.constant 0 : index
    %299 = vector.load %arg30[%c1_236, %c0_237, %c0_238] : memref<16x8x8xf32, #tpu.memory_space<vmem>>, vector<1x8x8xf32>
    %300 = vector.shape_cast %299 : vector<1x8x8xf32> to vector<8x8xf32>
    %301 = vector.shape_cast %298 : vector<8x8xf32> to vector<1x8x8xf32>
    tpu.vector_store %arg30[%c1_236, %c0_237, %c0_238], %301 {strides = array<i32>} : memref<16x8x8xf32, #tpu.memory_space<vmem>>, vector<1x8x8xf32>,
    %302 = vector.extract_strided_slice %293 {offsets = [0, 0, 0], sizes = [1, 8, 8], strides = [1, 1, 1]} : vector<2x8x8xf32> to vector<1x8x8xf32>
    %303 = vector.shape_cast %302 : vector<1x8x8xf32> to vector<8x8xf32>
    %c1_239 = arith.constant 1 : index
    %c0_240 = arith.constant 0 : index
    %c0_241 = arith.constant 0 : index
    %304 = vector.load %arg31[%c1_239, %c0_240, %c0_241] : memref<16x8x8xf32, #tpu.memory_space<vmem>>, vector<1x8x8xf32>
    %305 = vector.shape_cast %304 : vector<1x8x8xf32> to vector<8x8xf32>
    %306 = vector.shape_cast %303 : vector<8x8xf32> to vector<1x8x8xf32>
    tpu.vector_store %arg31[%c1_239, %c0_240, %c0_241], %306 {strides = array<i32>} : memref<16x8x8xf32, #tpu.memory_space<vmem>>, vector<1x8x8xf32>,
    %307 = vector.extract_strided_slice %280 {offsets = [1, 0, 0], sizes = [1, 8, 8], strides = [1, 1, 1]} : vector<2x8x8xf32> to vector<1x8x8xf32>
    %308 = vector.shape_cast %307 : vector<1x8x8xf32> to vector<8x8xf32>
    %c5 = arith.constant 5 : index
    %c0_242 = arith.constant 0 : index
    %c0_243 = arith.constant 0 : index
    %309 = vector.load %arg30[%c5, %c0_242, %c0_243] : memref<16x8x8xf32, #tpu.memory_space<vmem>>, vector<1x8x8xf32>
    %310 = vector.shape_cast %309 : vector<1x8x8xf32> to vector<8x8xf32>
    %311 = vector.shape_cast %308 : vector<8x8xf32> to vector<1x8x8xf32>
    tpu.vector_store %arg30[%c5, %c0_242, %c0_243], %311 {strides = array<i32>} : memref<16x8x8xf32, #tpu.memory_space<vmem>>, vector<1x8x8xf32>,
    %312 = vector.extract_strided_slice %293 {offsets = [1, 0, 0], sizes = [1, 8, 8], strides = [1, 1, 1]} : vector<2x8x8xf32> to vector<1x8x8xf32>
    %313 = vector.shape_cast %312 : vector<1x8x8xf32> to vector<8x8xf32>
    %c5_244 = arith.constant 5 : index
    %c0_245 = arith.constant 0 : index
    %c0_246 = arith.constant 0 : index
    %314 = vector.load %arg31[%c5_244, %c0_245, %c0_246] : memref<16x8x8xf32, #tpu.memory_space<vmem>>, vector<1x8x8xf32>
    %315 = vector.shape_cast %314 : vector<1x8x8xf32> to vector<8x8xf32>
    %316 = vector.shape_cast %313 : vector<8x8xf32> to vector<1x8x8xf32>
    tpu.vector_store %arg31[%c5_244, %c0_245, %c0_246], %316 {strides = array<i32>} : memref<16x8x8xf32, #tpu.memory_space<vmem>>, vector<1x8x8xf32>,
    %317 = vector.extract_strided_slice %168 {offsets = [0, 16], sizes = [16, 8], strides = [1, 1]} : vector<16x32xf32> to vector<16x8xf32>
    %318 = vector.shape_cast %317 : vector<16x8xf32> to vector<2x8x8xf32>
    %319 = vector.extract_strided_slice %175 {offsets = [0, 16], sizes = [16, 8], strides = [1, 1]} : vector<16x32xf32> to vector<16x8xf32>
    %320 = vector.shape_cast %319 : vector<16x8xf32> to vector<2x8x8xf32>
    %321 = vector.extract_strided_slice %182 {offsets = [0, 16], sizes = [16, 8], strides = [1, 1]} : vector<16x32xf32> to vector<16x8xf32>
    %322 = vector.shape_cast %321 : vector<16x8xf32> to vector<2x8x8xf32>
    "tpu.trace_start"() <{level = 10 : i32, message = "ble,bse->bls"}> : () -> ()
    %cst_247 = arith.constant dense<0.000000e+00> : vector<2x8x8xf32>
    %323 = tpu.matmul %318, %320, %cst_247 {dimension_numbers = #tpu.dot_dimension_numbers<[2], [2], [1], [1], [0, 0, 0, 1, 1, 1], [0], [0]>} : vector<2x8x8xf32>, vector<2x8x8xf32>, vector<2x8x8xf32> -> vector<2x8x8xf32>
    "tpu.trace_stop"() : () -> ()
    %cst_248 = arith.constant 0.353553385 : f32
    %324 = vector.broadcast %cst_248 : f32 to vector<2x8x8xf32>
    %325 = arith.mulf %323, %324 : vector<2x8x8xf32>
    %cst_249 = arith.constant dense<0xFF800000> : vector<2x8xf32>
    %326 = vector.multi_reduction <maximumf>, %325, %cst_249 [2] : vector<2x8x8xf32> to vector<2x8xf32>
    %327 = vector.shape_cast %326 : vector<2x8xf32> to vector<2x8x1xf32>
    %328 = vector.broadcast %327 : vector<2x8x1xf32> to vector<2x8x8xf32>
    %329 = arith.subf %325, %328 : vector<2x8x8xf32>
    %330 = math.exp %329 : vector<2x8x8xf32>
    %cst_250 = arith.constant dense<0.000000e+00> : vector<2x8xf32>
    %331 = vector.multi_reduction <add>, %330, %cst_250 [2] : vector<2x8x8xf32> to vector<2x8xf32>
    %332 = vector.shape_cast %331 : vector<2x8xf32> to vector<2x8x1xf32>
    %333 = vector.broadcast %332 : vector<2x8x1xf32> to vector<2x8x8xf32>
    %334 = arith.divf %330, %333 : vector<2x8x8xf32>
    %335 = vector.extract_strided_slice %205 {offsets = [0, 2], sizes = [16, 1], strides = [1, 1]} : vector<16x4xf32> to vector<16x1xf32>
    %336 = vector.shape_cast %335 : vector<16x1xf32> to vector<2x8x1xf32>
    %cst_251 = arith.constant 0.398942292 : f32
    %337 = vector.broadcast %cst_251 : f32 to vector<2x8x1xf32>
    %338 = arith.mulf %337, %336 : vector<2x8x1xf32>
    %339 = vector.shape_cast %9 : vector<8x8xf32> to vector<1x8x8xf32>
    %340 = vector.broadcast %339 : vector<1x8x8xf32> to vector<2x8x8xf32>
    %341 = vector.broadcast %336 : vector<2x8x1xf32> to vector<2x8x8xf32>
    %342 = arith.mulf %340, %341 : vector<2x8x8xf32>
    %343 = vector.broadcast %336 : vector<2x8x1xf32> to vector<2x8x8xf32>
    %344 = arith.mulf %342, %343 : vector<2x8x8xf32>
    %345 = math.exp %344 : vector<2x8x8xf32>
    %346 = vector.broadcast %338 : vector<2x8x1xf32> to vector<2x8x8xf32>
    %347 = arith.mulf %346, %345 : vector<2x8x8xf32>
    "tpu.trace_start"() <{level = 10 : i32, message = "bls,bse->ble"}> : () -> ()
    %cst_252 = arith.constant dense<0.000000e+00> : vector<2x8x8xf32>
    %348 = tpu.matmul %334, %322, %cst_252 {dimension_numbers = #tpu.dot_dimension_numbers<[2], [1], [1], [2], [0, 0, 0, 1, 1, 2], [0], [0]>} : vector<2x8x8xf32>, vector<2x8x8xf32>, vector<2x8x8xf32> -> vector<2x8x8xf32>
    "tpu.trace_stop"() : () -> ()
    %349 = vector.shape_cast %348 : vector<2x8x8xf32> to vector<16x8xf32>
    %c0_253 = arith.constant 0 : index
    %c16 = arith.constant 16 : index
    %350 = vector.load %arg33[%c0_253, %c16] : memref<16x32xf32, #tpu.memory_space<vmem>>, vector<16x8xf32>
    tpu.vector_store %arg33[%c0_253, %c16], %349 {strides = array<i32>} : memref<16x32xf32, #tpu.memory_space<vmem>>, vector<16x8xf32>,
    %351 = vector.extract_strided_slice %334 {offsets = [0, 0, 0], sizes = [1, 8, 8], strides = [1, 1, 1]} : vector<2x8x8xf32> to vector<1x8x8xf32>
    %352 = vector.shape_cast %351 : vector<1x8x8xf32> to vector<8x8xf32>
    %c2_254 = arith.constant 2 : index
    %c0_255 = arith.constant 0 : index
    %c0_256 = arith.constant 0 : index
    %353 = vector.load %arg30[%c2_254, %c0_255, %c0_256] : memref<16x8x8xf32, #tpu.memory_space<vmem>>, vector<1x8x8xf32>
    %354 = vector.shape_cast %353 : vector<1x8x8xf32> to vector<8x8xf32>
    %355 = vector.shape_cast %352 : vector<8x8xf32> to vector<1x8x8xf32>
    tpu.vector_store %arg30[%c2_254, %c0_255, %c0_256], %355 {strides = array<i32>} : memref<16x8x8xf32, #tpu.memory_space<vmem>>, vector<1x8x8xf32>,
    %356 = vector.extract_strided_slice %347 {offsets = [0, 0, 0], sizes = [1, 8, 8], strides = [1, 1, 1]} : vector<2x8x8xf32> to vector<1x8x8xf32>
    %357 = vector.shape_cast %356 : vector<1x8x8xf32> to vector<8x8xf32>
    %c2_257 = arith.constant 2 : index
    %c0_258 = arith.constant 0 : index
    %c0_259 = arith.constant 0 : index
    %358 = vector.load %arg31[%c2_257, %c0_258, %c0_259] : memref<16x8x8xf32, #tpu.memory_space<vmem>>, vector<1x8x8xf32>
    %359 = vector.shape_cast %358 : vector<1x8x8xf32> to vector<8x8xf32>
    %360 = vector.shape_cast %357 : vector<8x8xf32> to vector<1x8x8xf32>
    tpu.vector_store %arg31[%c2_257, %c0_258, %c0_259], %360 {strides = array<i32>} : memref<16x8x8xf32, #tpu.memory_space<vmem>>, vector<1x8x8xf32>,
    %361 = vector.extract_strided_slice %334 {offsets = [1, 0, 0], sizes = [1, 8, 8], strides = [1, 1, 1]} : vector<2x8x8xf32> to vector<1x8x8xf32>
    %362 = vector.shape_cast %361 : vector<1x8x8xf32> to vector<8x8xf32>
    %c6 = arith.constant 6 : index
    %c0_260 = arith.constant 0 : index
    %c0_261 = arith.constant 0 : index
    %363 = vector.load %arg30[%c6, %c0_260, %c0_261] : memref<16x8x8xf32, #tpu.memory_space<vmem>>, vector<1x8x8xf32>
    %364 = vector.shape_cast %363 : vector<1x8x8xf32> to vector<8x8xf32>
    %365 = vector.shape_cast %362 : vector<8x8xf32> to vector<1x8x8xf32>
    tpu.vector_store %arg30[%c6, %c0_260, %c0_261], %365 {strides = array<i32>} : memref<16x8x8xf32, #tpu.memory_space<vmem>>, vector<1x8x8xf32>,
    %366 = vector.extract_strided_slice %347 {offsets = [1, 0, 0], sizes = [1, 8, 8], strides = [1, 1, 1]} : vector<2x8x8xf32> to vector<1x8x8xf32>
    %367 = vector.shape_cast %366 : vector<1x8x8xf32> to vector<8x8xf32>
    %c6_262 = arith.constant 6 : index
    %c0_263 = arith.constant 0 : index
    %c0_264 = arith.constant 0 : index
    %368 = vector.load %arg31[%c6_262, %c0_263, %c0_264] : memref<16x8x8xf32, #tpu.memory_space<vmem>>, vector<1x8x8xf32>
    %369 = vector.shape_cast %368 : vector<1x8x8xf32> to vector<8x8xf32>
    %370 = vector.shape_cast %367 : vector<8x8xf32> to vector<1x8x8xf32>
    tpu.vector_store %arg31[%c6_262, %c0_263, %c0_264], %370 {strides = array<i32>} : memref<16x8x8xf32, #tpu.memory_space<vmem>>, vector<1x8x8xf32>,
    %371 = vector.extract_strided_slice %168 {offsets = [0, 24], sizes = [16, 8], strides = [1, 1]} : vector<16x32xf32> to vector<16x8xf32>
    %372 = vector.shape_cast %371 : vector<16x8xf32> to vector<2x8x8xf32>
    %373 = vector.extract_strided_slice %175 {offsets = [0, 24], sizes = [16, 8], strides = [1, 1]} : vector<16x32xf32> to vector<16x8xf32>
    %374 = vector.shape_cast %373 : vector<16x8xf32> to vector<2x8x8xf32>
    %375 = vector.extract_strided_slice %182 {offsets = [0, 24], sizes = [16, 8], strides = [1, 1]} : vector<16x32xf32> to vector<16x8xf32>
    %376 = vector.shape_cast %375 : vector<16x8xf32> to vector<2x8x8xf32>
    "tpu.trace_start"() <{level = 10 : i32, message = "ble,bse->bls"}> : () -> ()
    %cst_265 = arith.constant dense<0.000000e+00> : vector<2x8x8xf32>
    %377 = tpu.matmul %372, %374, %cst_265 {dimension_numbers = #tpu.dot_dimension_numbers<[2], [2], [1], [1], [0, 0, 0, 1, 1, 1], [0], [0]>} : vector<2x8x8xf32>, vector<2x8x8xf32>, vector<2x8x8xf32> -> vector<2x8x8xf32>
    "tpu.trace_stop"() : () -> ()
    %cst_266 = arith.constant 0.353553385 : f32
    %378 = vector.broadcast %cst_266 : f32 to vector<2x8x8xf32>
    %379 = arith.mulf %377, %378 : vector<2x8x8xf32>
    %cst_267 = arith.constant dense<0xFF800000> : vector<2x8xf32>
    %380 = vector.multi_reduction <maximumf>, %379, %cst_267 [2] : vector<2x8x8xf32> to vector<2x8xf32>
    %381 = vector.shape_cast %380 : vector<2x8xf32> to vector<2x8x1xf32>
    %382 = vector.broadcast %381 : vector<2x8x1xf32> to vector<2x8x8xf32>
    %383 = arith.subf %379, %382 : vector<2x8x8xf32>
    %384 = math.exp %383 : vector<2x8x8xf32>
    %cst_268 = arith.constant dense<0.000000e+00> : vector<2x8xf32>
    %385 = vector.multi_reduction <add>, %384, %cst_268 [2] : vector<2x8x8xf32> to vector<2x8xf32>
    %386 = vector.shape_cast %385 : vector<2x8xf32> to vector<2x8x1xf32>
    %387 = vector.broadcast %386 : vector<2x8x1xf32> to vector<2x8x8xf32>
    %388 = arith.divf %384, %387 : vector<2x8x8xf32>
    %389 = vector.extract_strided_slice %205 {offsets = [0, 3], sizes = [16, 1], strides = [1, 1]} : vector<16x4xf32> to vector<16x1xf32>
    %390 = vector.shape_cast %389 : vector<16x1xf32> to vector<2x8x1xf32>
    %cst_269 = arith.constant 0.398942292 : f32
    %391 = vector.broadcast %cst_269 : f32 to vector<2x8x1xf32>
    %392 = arith.mulf %391, %390 : vector<2x8x1xf32>
    %393 = vector.shape_cast %9 : vector<8x8xf32> to vector<1x8x8xf32>
    %394 = vector.broadcast %393 : vector<1x8x8xf32> to vector<2x8x8xf32>
    %395 = vector.broadcast %390 : vector<2x8x1xf32> to vector<2x8x8xf32>
    %396 = arith.mulf %394, %395 : vector<2x8x8xf32>
    %397 = vector.broadcast %390 : vector<2x8x1xf32> to vector<2x8x8xf32>
    %398 = arith.mulf %396, %397 : vector<2x8x8xf32>
    %399 = math.exp %398 : vector<2x8x8xf32>
    %400 = vector.broadcast %392 : vector<2x8x1xf32> to vector<2x8x8xf32>
    %401 = arith.mulf %400, %399 : vector<2x8x8xf32>
    "tpu.trace_start"() <{level = 10 : i32, message = "bls,bse->ble"}> : () -> ()
    %cst_270 = arith.constant dense<0.000000e+00> : vector<2x8x8xf32>
    %402 = tpu.matmul %388, %376, %cst_270 {dimension_numbers = #tpu.dot_dimension_numbers<[2], [1], [1], [2], [0, 0, 0, 1, 1, 2], [0], [0]>} : vector<2x8x8xf32>, vector<2x8x8xf32>, vector<2x8x8xf32> -> vector<2x8x8xf32>
    "tpu.trace_stop"() : () -> ()
    %403 = vector.shape_cast %402 : vector<2x8x8xf32> to vector<16x8xf32>
    %c0_271 = arith.constant 0 : index
    %c24 = arith.constant 24 : index
    %404 = vector.load %arg33[%c0_271, %c24] : memref<16x32xf32, #tpu.memory_space<vmem>>, vector<16x8xf32>
    tpu.vector_store %arg33[%c0_271, %c24], %403 {strides = array<i32>} : memref<16x32xf32, #tpu.memory_space<vmem>>, vector<16x8xf32>,
    %405 = vector.extract_strided_slice %388 {offsets = [0, 0, 0], sizes = [1, 8, 8], strides = [1, 1, 1]} : vector<2x8x8xf32> to vector<1x8x8xf32>
    %406 = vector.shape_cast %405 : vector<1x8x8xf32> to vector<8x8xf32>
    %c3_272 = arith.constant 3 : index
    %c0_273 = arith.constant 0 : index
    %c0_274 = arith.constant 0 : index
    %407 = vector.load %arg30[%c3_272, %c0_273, %c0_274] : memref<16x8x8xf32, #tpu.memory_space<vmem>>, vector<1x8x8xf32>
    %408 = vector.shape_cast %407 : vector<1x8x8xf32> to vector<8x8xf32>
    %409 = vector.shape_cast %406 : vector<8x8xf32> to vector<1x8x8xf32>
    tpu.vector_store %arg30[%c3_272, %c0_273, %c0_274], %409 {strides = array<i32>} : memref<16x8x8xf32, #tpu.memory_space<vmem>>, vector<1x8x8xf32>,
    %410 = vector.extract_strided_slice %401 {offsets = [0, 0, 0], sizes = [1, 8, 8], strides = [1, 1, 1]} : vector<2x8x8xf32> to vector<1x8x8xf32>
    %411 = vector.shape_cast %410 : vector<1x8x8xf32> to vector<8x8xf32>
    %c3_275 = arith.constant 3 : index
    %c0_276 = arith.constant 0 : index
    %c0_277 = arith.constant 0 : index
    %412 = vector.load %arg31[%c3_275, %c0_276, %c0_277] : memref<16x8x8xf32, #tpu.memory_space<vmem>>, vector<1x8x8xf32>
    %413 = vector.shape_cast %412 : vector<1x8x8xf32> to vector<8x8xf32>
    %414 = vector.shape_cast %411 : vector<8x8xf32> to vector<1x8x8xf32>
    tpu.vector_store %arg31[%c3_275, %c0_276, %c0_277], %414 {strides = array<i32>} : memref<16x8x8xf32, #tpu.memory_space<vmem>>, vector<1x8x8xf32>,
    %415 = vector.extract_strided_slice %388 {offsets = [1, 0, 0], sizes = [1, 8, 8], strides = [1, 1, 1]} : vector<2x8x8xf32> to vector<1x8x8xf32>
    %416 = vector.shape_cast %415 : vector<1x8x8xf32> to vector<8x8xf32>
    %c7 = arith.constant 7 : index
    %c0_278 = arith.constant 0 : index
    %c0_279 = arith.constant 0 : index
    %417 = vector.load %arg30[%c7, %c0_278, %c0_279] : memref<16x8x8xf32, #tpu.memory_space<vmem>>, vector<1x8x8xf32>
    %418 = vector.shape_cast %417 : vector<1x8x8xf32> to vector<8x8xf32>
    %419 = vector.shape_cast %416 : vector<8x8xf32> to vector<1x8x8xf32>
    tpu.vector_store %arg30[%c7, %c0_278, %c0_279], %419 {strides = array<i32>} : memref<16x8x8xf32, #tpu.memory_space<vmem>>, vector<1x8x8xf32>,
    %420 = vector.extract_strided_slice %401 {offsets = [1, 0, 0], sizes = [1, 8, 8], strides = [1, 1, 1]} : vector<2x8x8xf32> to vector<1x8x8xf32>
    %421 = vector.shape_cast %420 : vector<1x8x8xf32> to vector<8x8xf32>
    %c7_280 = arith.constant 7 : index
    %c0_281 = arith.constant 0 : index
    %c0_282 = arith.constant 0 : index
    %422 = vector.load %arg31[%c7_280, %c0_281, %c0_282] : memref<16x8x8xf32, #tpu.memory_space<vmem>>, vector<1x8x8xf32>
    %423 = vector.shape_cast %422 : vector<1x8x8xf32> to vector<8x8xf32>
    %424 = vector.shape_cast %421 : vector<8x8xf32> to vector<1x8x8xf32>
    tpu.vector_store %arg31[%c7_280, %c0_281, %c0_282], %424 {strides = array<i32>} : memref<16x8x8xf32, #tpu.memory_space<vmem>>, vector<1x8x8xf32>,
    %c0_283 = arith.constant 0 : index
    %c0_284 = arith.constant 0 : index
    %425 = vector.load %arg33[%c0_283, %c0_284] : memref<16x32xf32, #tpu.memory_space<vmem>>, vector<16x32xf32>
    %c0_285 = arith.constant 0 : index
    %c0_286 = arith.constant 0 : index
    %c0_287 = arith.constant 0 : index
    %426 = vector.load %arg18[%c0_285, %c0_286, %c0_287] : memref<2x32x64xf32, #tpu.memory_space<vmem>>, vector<1x32x64xf32>
    %427 = vector.shape_cast %426 : vector<1x32x64xf32> to vector<32x64xf32>
    %cst_288 = arith.constant dense<0.000000e+00> : vector<16x64xf32>
    %428 = tpu.matmul %425, %427, %cst_288 {dimension_numbers = #tpu.dot_dimension_numbers<[1], [0], [0], [1], [0, 0, 1, 1], [], []>} : vector<16x32xf32>, vector<32x64xf32>, vector<16x64xf32> -> vector<16x64xf32>
    %c0_289 = arith.constant 0 : index
    %c0_290 = arith.constant 0 : index
    %c0_291 = arith.constant 0 : index
    %429 = vector.load %arg19[%c0_289, %c0_290, %c0_291] : memref<2x1x64xf32, #tpu.memory_space<vmem>>, vector<1x1x64xf32>
    %430 = vector.shape_cast %429 : vector<1x1x64xf32> to vector<1x64xf32>
    %431 = vector.broadcast %430 : vector<1x64xf32> to vector<16x64xf32>
    %432 = arith.addf %428, %431 : vector<16x64xf32>
    %433 = vector.extract_strided_slice %432 {offsets = [0, 0], sizes = [16, 32], strides = [1, 1]} : vector<16x64xf32> to vector<16x32xf32>
    %434 = vector.extract_strided_slice %432 {offsets = [0, 32], sizes = [16, 32], strides = [1, 1]} : vector<16x64xf32> to vector<16x32xf32>
    %435 = arith.addf %84, %433 : vector<16x32xf32>
    %436 = vector.extract_strided_slice %161 {offsets = [0, 0], sizes = [1, 32], strides = [1, 1]} : vector<8x32xf32> to vector<1x32xf32>
    %437 = vector.extract_strided_slice %161 {offsets = [1, 0], sizes = [1, 32], strides = [1, 1]} : vector<8x32xf32> to vector<1x32xf32>
    %cst_292 = arith.constant dense<0.000000e+00> : vector<16xf32>
    %438 = vector.multi_reduction <add>, %435, %cst_292 [1] : vector<16x32xf32> to vector<16xf32>
    %439 = vector.shape_cast %438 : vector<16xf32> to vector<16x1xf32>
    %cst_293 = arith.constant 3.200000e+01 : f32
    %440 = vector.broadcast %cst_293 : f32 to vector<16x1xf32>
    %441 = arith.divf %439, %440 : vector<16x1xf32>
    %442 = vector.broadcast %441 : vector<16x1xf32> to vector<16x32xf32>
    %443 = arith.subf %435, %442 : vector<16x32xf32>
    %444 = arith.mulf %443, %443 : vector<16x32xf32>
    %cst_294 = arith.constant dense<0.000000e+00> : vector<16xf32>
    %445 = vector.multi_reduction <add>, %444, %cst_294 [1] : vector<16x32xf32> to vector<16xf32>
    %446 = vector.shape_cast %445 : vector<16xf32> to vector<16x1xf32>
    %cst_295 = arith.constant 3.200000e+01 : f32
    %447 = vector.broadcast %cst_295 : f32 to vector<16x1xf32>
    %448 = arith.divf %446, %447 : vector<16x1xf32>
    %449 = vector.broadcast %441 : vector<16x1xf32> to vector<16x32xf32>
    %450 = arith.subf %435, %449 : vector<16x32xf32>
    %cst_296 = arith.constant 9.99999974E-6 : f32
    %451 = vector.broadcast %cst_296 : f32 to vector<16x1xf32>
    %452 = arith.addf %448, %451 : vector<16x1xf32>
    %453 = math.rsqrt %452 : vector<16x1xf32>
    %454 = vector.broadcast %453 : vector<16x1xf32> to vector<16x32xf32>
    %455 = arith.mulf %450, %454 : vector<16x32xf32>
    %456 = vector.broadcast %436 : vector<1x32xf32> to vector<16x32xf32>
    %457 = arith.mulf %455, %456 : vector<16x32xf32>
    %458 = vector.broadcast %437 : vector<1x32xf32> to vector<16x32xf32>
    %459 = arith.addf %457, %458 : vector<16x32xf32>
    %460 = arith.addf %159, %434 : vector<16x32xf32>
    %461 = vector.extract_strided_slice %161 {offsets = [2, 0], sizes = [1, 32], strides = [1, 1]} : vector<8x32xf32> to vector<1x32xf32>
    %462 = vector.extract_strided_slice %161 {offsets = [3, 0], sizes = [1, 32], strides = [1, 1]} : vector<8x32xf32> to vector<1x32xf32>
    %cst_297 = arith.constant dense<0.000000e+00> : vector<16xf32>
    %463 = vector.multi_reduction <add>, %460, %cst_297 [1] : vector<16x32xf32> to vector<16xf32>
    %464 = vector.shape_cast %463 : vector<16xf32> to vector<16x1xf32>
    %cst_298 = arith.constant 3.200000e+01 : f32
    %465 = vector.broadcast %cst_298 : f32 to vector<16x1xf32>
    %466 = arith.divf %464, %465 : vector<16x1xf32>
    %467 = vector.broadcast %466 : vector<16x1xf32> to vector<16x32xf32>
    %468 = arith.subf %460, %467 : vector<16x32xf32>
    %469 = arith.mulf %468, %468 : vector<16x32xf32>
    %cst_299 = arith.constant dense<0.000000e+00> : vector<16xf32>
    %470 = vector.multi_reduction <add>, %469, %cst_299 [1] : vector<16x32xf32> to vector<16xf32>
    %471 = vector.shape_cast %470 : vector<16xf32> to vector<16x1xf32>
    %cst_300 = arith.constant 3.200000e+01 : f32
    %472 = vector.broadcast %cst_300 : f32 to vector<16x1xf32>
    %473 = arith.divf %471, %472 : vector<16x1xf32>
    %474 = vector.broadcast %466 : vector<16x1xf32> to vector<16x32xf32>
    %475 = arith.subf %460, %474 : vector<16x32xf32>
    %cst_301 = arith.constant 9.99999974E-6 : f32
    %476 = vector.broadcast %cst_301 : f32 to vector<16x1xf32>
    %477 = arith.addf %473, %476 : vector<16x1xf32>
    %478 = math.rsqrt %477 : vector<16x1xf32>
    %479 = vector.broadcast %478 : vector<16x1xf32> to vector<16x32xf32>
    %480 = arith.mulf %475, %479 : vector<16x32xf32>
    %481 = vector.broadcast %461 : vector<1x32xf32> to vector<16x32xf32>
    %482 = arith.mulf %480, %481 : vector<16x32xf32>
    %483 = vector.broadcast %462 : vector<1x32xf32> to vector<16x32xf32>
    %484 = arith.addf %482, %483 : vector<16x32xf32>
    %c0_302 = arith.constant 0 : index
    %c0_303 = arith.constant 0 : index
    %c0_304 = arith.constant 0 : index
    %c0_305 = arith.constant 0 : index
    %485 = vector.load %arg21[%c0_302, %c0_303, %c0_304, %c0_305] : memref<2x2x32x32xf32, #tpu.memory_space<vmem>>, vector<1x1x32x32xf32>
    %486 = vector.shape_cast %485 : vector<1x1x32x32xf32> to vector<32x32xf32>
    %cst_306 = arith.constant dense<0.000000e+00> : vector<16x32xf32>
    %487 = tpu.matmul %459, %486, %cst_306 {dimension_numbers = #tpu.dot_dimension_numbers<[1], [0], [0], [1], [0, 0, 1, 1], [], []>} : vector<16x32xf32>, vector<32x32xf32>, vector<16x32xf32> -> vector<16x32xf32>
    %c0_307 = arith.constant 0 : index
    %c0_308 = arith.constant 0 : index
    %c0_309 = arith.constant 0 : index
    %c0_310 = arith.constant 0 : index
    %488 = vector.load %arg22[%c0_307, %c0_308, %c0_309, %c0_310] : memref<2x2x1x32xf32, #tpu.memory_space<vmem>>, vector<1x1x1x32xf32>
    %489 = vector.shape_cast %488 : vector<1x1x1x32xf32> to vector<1x32xf32>
    %490 = vector.broadcast %489 : vector<1x32xf32> to vector<16x32xf32>
    %491 = arith.addf %487, %490 : vector<16x32xf32>
    %cst_311 = arith.constant 5.000000e-01 : f32
    %492 = vector.broadcast %cst_311 : f32 to vector<16x32xf32>
    %493 = arith.mulf %492, %491 : vector<16x32xf32>
    %cst_312 = arith.constant 4.471500e-02 : f32
    %494 = vector.broadcast %cst_312 : f32 to vector<16x32xf32>
    %495 = arith.mulf %494, %491 : vector<16x32xf32>
    %496 = arith.mulf %495, %491 : vector<16x32xf32>
    %497 = arith.mulf %496, %491 : vector<16x32xf32>
    %498 = arith.addf %491, %497 : vector<16x32xf32>
    %cst_313 = arith.constant 0.797884583 : f32
    %499 = vector.broadcast %cst_313 : f32 to vector<16x32xf32>
    %500 = arith.mulf %499, %498 : vector<16x32xf32>
    %501 = math.tanh %500 : vector<16x32xf32>
    %cst_314 = arith.constant 1.000000e+00 : f32
    %502 = vector.broadcast %cst_314 : f32 to vector<16x32xf32>
    %503 = arith.addf %502, %501 : vector<16x32xf32>
    %504 = arith.mulf %493, %503 : vector<16x32xf32>
    %c0_315 = arith.constant 0 : index
    %c0_316 = arith.constant 0 : index
    %c0_317 = arith.constant 0 : index
    %c0_318 = arith.constant 0 : index
    %505 = vector.load %arg23[%c0_315, %c0_316, %c0_317, %c0_318] : memref<2x2x32x32xf32, #tpu.memory_space<vmem>>, vector<1x1x32x32xf32>
    %506 = vector.shape_cast %505 : vector<1x1x32x32xf32> to vector<32x32xf32>
    %cst_319 = arith.constant dense<0.000000e+00> : vector<16x32xf32>
    %507 = tpu.matmul %504, %506, %cst_319 {dimension_numbers = #tpu.dot_dimension_numbers<[1], [0], [0], [1], [0, 0, 1, 1], [], []>} : vector<16x32xf32>, vector<32x32xf32>, vector<16x32xf32> -> vector<16x32xf32>
    %c0_320 = arith.constant 0 : index
    %c0_321 = arith.constant 0 : index
    %c0_322 = arith.constant 0 : index
    %c0_323 = arith.constant 0 : index
    %508 = vector.load %arg24[%c0_320, %c0_321, %c0_322, %c0_323] : memref<2x2x1x32xf32, #tpu.memory_space<vmem>>, vector<1x1x1x32xf32>
    %509 = vector.shape_cast %508 : vector<1x1x1x32xf32> to vector<1x32xf32>
    %510 = vector.broadcast %509 : vector<1x32xf32> to vector<16x32xf32>
    %511 = arith.addf %507, %510 : vector<16x32xf32>
    %512 = arith.addf %459, %511 : vector<16x32xf32>
    %513 = vector.extract_strided_slice %161 {offsets = [4, 0], sizes = [1, 32], strides = [1, 1]} : vector<8x32xf32> to vector<1x32xf32>
    %514 = vector.extract_strided_slice %161 {offsets = [5, 0], sizes = [1, 32], strides = [1, 1]} : vector<8x32xf32> to vector<1x32xf32>
    %cst_324 = arith.constant dense<0.000000e+00> : vector<16xf32>
    %515 = vector.multi_reduction <add>, %512, %cst_324 [1] : vector<16x32xf32> to vector<16xf32>
    %516 = vector.shape_cast %515 : vector<16xf32> to vector<16x1xf32>
    %cst_325 = arith.constant 3.200000e+01 : f32
    %517 = vector.broadcast %cst_325 : f32 to vector<16x1xf32>
    %518 = arith.divf %516, %517 : vector<16x1xf32>
    %519 = vector.broadcast %518 : vector<16x1xf32> to vector<16x32xf32>
    %520 = arith.subf %512, %519 : vector<16x32xf32>
    %521 = arith.mulf %520, %520 : vector<16x32xf32>
    %cst_326 = arith.constant dense<0.000000e+00> : vector<16xf32>
    %522 = vector.multi_reduction <add>, %521, %cst_326 [1] : vector<16x32xf32> to vector<16xf32>
    %523 = vector.shape_cast %522 : vector<16xf32> to vector<16x1xf32>
    %cst_327 = arith.constant 3.200000e+01 : f32
    %524 = vector.broadcast %cst_327 : f32 to vector<16x1xf32>
    %525 = arith.divf %523, %524 : vector<16x1xf32>
    %526 = vector.broadcast %518 : vector<16x1xf32> to vector<16x32xf32>
    %527 = arith.subf %512, %526 : vector<16x32xf32>
    %cst_328 = arith.constant 9.99999974E-6 : f32
    %528 = vector.broadcast %cst_328 : f32 to vector<16x1xf32>
    %529 = arith.addf %525, %528 : vector<16x1xf32>
    %530 = math.rsqrt %529 : vector<16x1xf32>
    %531 = vector.broadcast %530 : vector<16x1xf32> to vector<16x32xf32>
    %532 = arith.mulf %527, %531 : vector<16x32xf32>
    %533 = vector.broadcast %513 : vector<1x32xf32> to vector<16x32xf32>
    %534 = arith.mulf %532, %533 : vector<16x32xf32>
    %535 = vector.broadcast %514 : vector<1x32xf32> to vector<16x32xf32>
    %536 = arith.addf %534, %535 : vector<16x32xf32>
    %c0_329 = arith.constant 0 : index
    %c1_330 = arith.constant 1 : index
    %c0_331 = arith.constant 0 : index
    %c0_332 = arith.constant 0 : index
    %537 = vector.load %arg21[%c0_329, %c1_330, %c0_331, %c0_332] : memref<2x2x32x32xf32, #tpu.memory_space<vmem>>, vector<1x1x32x32xf32>
    %538 = vector.shape_cast %537 : vector<1x1x32x32xf32> to vector<32x32xf32>
    %cst_333 = arith.constant dense<0.000000e+00> : vector<16x32xf32>
    %539 = tpu.matmul %484, %538, %cst_333 {dimension_numbers = #tpu.dot_dimension_numbers<[1], [0], [0], [1], [0, 0, 1, 1], [], []>} : vector<16x32xf32>, vector<32x32xf32>, vector<16x32xf32> -> vector<16x32xf32>
    %c0_334 = arith.constant 0 : index
    %c1_335 = arith.constant 1 : index
    %c0_336 = arith.constant 0 : index
    %c0_337 = arith.constant 0 : index
    %540 = vector.load %arg22[%c0_334, %c1_335, %c0_336, %c0_337] : memref<2x2x1x32xf32, #tpu.memory_space<vmem>>, vector<1x1x1x32xf32>
    %541 = vector.shape_cast %540 : vector<1x1x1x32xf32> to vector<1x32xf32>
    %542 = vector.broadcast %541 : vector<1x32xf32> to vector<16x32xf32>
    %543 = arith.addf %539, %542 : vector<16x32xf32>
    %cst_338 = arith.constant 5.000000e-01 : f32
    %544 = vector.broadcast %cst_338 : f32 to vector<16x32xf32>
    %545 = arith.mulf %544, %543 : vector<16x32xf32>
    %cst_339 = arith.constant 4.471500e-02 : f32
    %546 = vector.broadcast %cst_339 : f32 to vector<16x32xf32>
    %547 = arith.mulf %546, %543 : vector<16x32xf32>
    %548 = arith.mulf %547, %543 : vector<16x32xf32>
    %549 = arith.mulf %548, %543 : vector<16x32xf32>
    %550 = arith.addf %543, %549 : vector<16x32xf32>
    %cst_340 = arith.constant 0.797884583 : f32
    %551 = vector.broadcast %cst_340 : f32 to vector<16x32xf32>
    %552 = arith.mulf %551, %550 : vector<16x32xf32>
    %553 = math.tanh %552 : vector<16x32xf32>
    %cst_341 = arith.constant 1.000000e+00 : f32
    %554 = vector.broadcast %cst_341 : f32 to vector<16x32xf32>
    %555 = arith.addf %554, %553 : vector<16x32xf32>
    %556 = arith.mulf %545, %555 : vector<16x32xf32>
    %c0_342 = arith.constant 0 : index
    %c1_343 = arith.constant 1 : index
    %c0_344 = arith.constant 0 : index
    %c0_345 = arith.constant 0 : index
    %557 = vector.load %arg23[%c0_342, %c1_343, %c0_344, %c0_345] : memref<2x2x32x32xf32, #tpu.memory_space<vmem>>, vector<1x1x32x32xf32>
    %558 = vector.shape_cast %557 : vector<1x1x32x32xf32> to vector<32x32xf32>
    %cst_346 = arith.constant dense<0.000000e+00> : vector<16x32xf32>
    %559 = tpu.matmul %556, %558, %cst_346 {dimension_numbers = #tpu.dot_dimension_numbers<[1], [0], [0], [1], [0, 0, 1, 1], [], []>} : vector<16x32xf32>, vector<32x32xf32>, vector<16x32xf32> -> vector<16x32xf32>
    %c0_347 = arith.constant 0 : index
    %c1_348 = arith.constant 1 : index
    %c0_349 = arith.constant 0 : index
    %c0_350 = arith.constant 0 : index
    %560 = vector.load %arg24[%c0_347, %c1_348, %c0_349, %c0_350] : memref<2x2x1x32xf32, #tpu.memory_space<vmem>>, vector<1x1x1x32xf32>
    %561 = vector.shape_cast %560 : vector<1x1x1x32xf32> to vector<1x32xf32>
    %562 = vector.broadcast %561 : vector<1x32xf32> to vector<16x32xf32>
    %563 = arith.addf %559, %562 : vector<16x32xf32>
    %564 = arith.addf %484, %563 : vector<16x32xf32>
    %565 = vector.extract_strided_slice %161 {offsets = [6, 0], sizes = [1, 32], strides = [1, 1]} : vector<8x32xf32> to vector<1x32xf32>
    %566 = vector.extract_strided_slice %161 {offsets = [7, 0], sizes = [1, 32], strides = [1, 1]} : vector<8x32xf32> to vector<1x32xf32>
    %cst_351 = arith.constant dense<0.000000e+00> : vector<16xf32>
    %567 = vector.multi_reduction <add>, %564, %cst_351 [1] : vector<16x32xf32> to vector<16xf32>
    %568 = vector.shape_cast %567 : vector<16xf32> to vector<16x1xf32>
    %cst_352 = arith.constant 3.200000e+01 : f32
    %569 = vector.broadcast %cst_352 : f32 to vector<16x1xf32>
    %570 = arith.divf %568, %569 : vector<16x1xf32>
    %571 = vector.broadcast %570 : vector<16x1xf32> to vector<16x32xf32>
    %572 = arith.subf %564, %571 : vector<16x32xf32>
    %573 = arith.mulf %572, %572 : vector<16x32xf32>
    %cst_353 = arith.constant dense<0.000000e+00> : vector<16xf32>
    %574 = vector.multi_reduction <add>, %573, %cst_353 [1] : vector<16x32xf32> to vector<16xf32>
    %575 = vector.shape_cast %574 : vector<16xf32> to vector<16x1xf32>
    %cst_354 = arith.constant 3.200000e+01 : f32
    %576 = vector.broadcast %cst_354 : f32 to vector<16x1xf32>
    %577 = arith.divf %575, %576 : vector<16x1xf32>
    %578 = vector.broadcast %570 : vector<16x1xf32> to vector<16x32xf32>
    %579 = arith.subf %564, %578 : vector<16x32xf32>
    %cst_355 = arith.constant 9.99999974E-6 : f32
    %580 = vector.broadcast %cst_355 : f32 to vector<16x1xf32>
    %581 = arith.addf %577, %580 : vector<16x1xf32>
    %582 = math.rsqrt %581 : vector<16x1xf32>
    %583 = vector.broadcast %582 : vector<16x1xf32> to vector<16x32xf32>
    %584 = arith.mulf %579, %583 : vector<16x32xf32>
    %585 = vector.broadcast %565 : vector<1x32xf32> to vector<16x32xf32>
    %586 = arith.mulf %584, %585 : vector<16x32xf32>
    %587 = vector.broadcast %566 : vector<1x32xf32> to vector<16x32xf32>
    %588 = arith.addf %586, %587 : vector<16x32xf32>
    %c1_356 = arith.constant 1 : index
    %c0_357 = arith.constant 0 : index
    %c0_358 = arith.constant 0 : index
    %589 = vector.load %arg20[%c1_356, %c0_357, %c0_358] : memref<2x8x32xf32, #tpu.memory_space<vmem>>, vector<1x8x32xf32>
    %590 = vector.shape_cast %589 : vector<1x8x32xf32> to vector<8x32xf32>
    %c1_359 = arith.constant 1 : index
    %c0_360 = arith.constant 0 : index
    %c0_361 = arith.constant 0 : index
    %591 = vector.load %arg10[%c1_359, %c0_360, %c0_361] : memref<2x32x32xf32, #tpu.memory_space<vmem>>, vector<1x32x32xf32>
    %592 = vector.shape_cast %591 : vector<1x32x32xf32> to vector<32x32xf32>
    %cst_362 = arith.constant dense<0.000000e+00> : vector<16x32xf32>
    %593 = tpu.matmul %588, %592, %cst_362 {dimension_numbers = #tpu.dot_dimension_numbers<[1], [0], [0], [1], [0, 0, 1, 1], [], []>} : vector<16x32xf32>, vector<32x32xf32>, vector<16x32xf32> -> vector<16x32xf32>
    %c1_363 = arith.constant 1 : index
    %c0_364 = arith.constant 0 : index
    %c0_365 = arith.constant 0 : index
    %594 = vector.load %arg11[%c1_363, %c0_364, %c0_365] : memref<2x1x32xf32, #tpu.memory_space<vmem>>, vector<1x1x32xf32>
    %595 = vector.shape_cast %594 : vector<1x1x32xf32> to vector<1x32xf32>
    %596 = vector.broadcast %595 : vector<1x32xf32> to vector<16x32xf32>
    %597 = arith.addf %593, %596 : vector<16x32xf32>
    %c1_366 = arith.constant 1 : index
    %c0_367 = arith.constant 0 : index
    %c0_368 = arith.constant 0 : index
    %598 = vector.load %arg12[%c1_366, %c0_367, %c0_368] : memref<2x32x32xf32, #tpu.memory_space<vmem>>, vector<1x32x32xf32>
    %599 = vector.shape_cast %598 : vector<1x32x32xf32> to vector<32x32xf32>
    %cst_369 = arith.constant dense<0.000000e+00> : vector<16x32xf32>
    %600 = tpu.matmul %536, %599, %cst_369 {dimension_numbers = #tpu.dot_dimension_numbers<[1], [0], [0], [1], [0, 0, 1, 1], [], []>} : vector<16x32xf32>, vector<32x32xf32>, vector<16x32xf32> -> vector<16x32xf32>
    %c1_370 = arith.constant 1 : index
    %c0_371 = arith.constant 0 : index
    %c0_372 = arith.constant 0 : index
    %601 = vector.load %arg13[%c1_370, %c0_371, %c0_372] : memref<2x1x32xf32, #tpu.memory_space<vmem>>, vector<1x1x32xf32>
    %602 = vector.shape_cast %601 : vector<1x1x32xf32> to vector<1x32xf32>
    %603 = vector.broadcast %602 : vector<1x32xf32> to vector<16x32xf32>
    %604 = arith.addf %600, %603 : vector<16x32xf32>
    %c1_373 = arith.constant 1 : index
    %c0_374 = arith.constant 0 : index
    %c0_375 = arith.constant 0 : index
    %605 = vector.load %arg14[%c1_373, %c0_374, %c0_375] : memref<2x32x32xf32, #tpu.memory_space<vmem>>, vector<1x32x32xf32>
    %606 = vector.shape_cast %605 : vector<1x32x32xf32> to vector<32x32xf32>
    %cst_376 = arith.constant dense<0.000000e+00> : vector<16x32xf32>
    %607 = tpu.matmul %536, %606, %cst_376 {dimension_numbers = #tpu.dot_dimension_numbers<[1], [0], [0], [1], [0, 0, 1, 1], [], []>} : vector<16x32xf32>, vector<32x32xf32>, vector<16x32xf32> -> vector<16x32xf32>
    %c1_377 = arith.constant 1 : index
    %c0_378 = arith.constant 0 : index
    %c0_379 = arith.constant 0 : index
    %608 = vector.load %arg15[%c1_377, %c0_378, %c0_379] : memref<2x1x32xf32, #tpu.memory_space<vmem>>, vector<1x1x32xf32>
    %609 = vector.shape_cast %608 : vector<1x1x32xf32> to vector<1x32xf32>
    %610 = vector.broadcast %609 : vector<1x32xf32> to vector<16x32xf32>
    %611 = arith.addf %607, %610 : vector<16x32xf32>
    %c1_380 = arith.constant 1 : index
    %c0_381 = arith.constant 0 : index
    %c0_382 = arith.constant 0 : index
    %612 = vector.load %arg16[%c1_380, %c0_381, %c0_382] : memref<2x32x4xf32, #tpu.memory_space<vmem>>, vector<1x32x4xf32>
    %613 = vector.shape_cast %612 : vector<1x32x4xf32> to vector<32x4xf32>
    %cst_383 = arith.constant dense<0.000000e+00> : vector<16x4xf32>
    %614 = tpu.matmul %536, %613, %cst_383 {dimension_numbers = #tpu.dot_dimension_numbers<[1], [0], [0], [1], [0, 0, 1, 1], [], []>} : vector<16x32xf32>, vector<32x4xf32>, vector<16x4xf32> -> vector<16x4xf32>
    %c1_384 = arith.constant 1 : index
    %c0_385 = arith.constant 0 : index
    %c0_386 = arith.constant 0 : index
    %615 = vector.load %arg17[%c1_384, %c0_385, %c0_386] : memref<2x1x4xf32, #tpu.memory_space<vmem>>, vector<1x1x4xf32>
    %616 = vector.shape_cast %615 : vector<1x1x4xf32> to vector<1x4xf32>
    %617 = vector.broadcast %616 : vector<1x4xf32> to vector<16x4xf32>
    %618 = arith.addf %614, %617 : vector<16x4xf32>
    %cst_387 = arith.constant -5.000000e+00 : f32
    %619 = vector.broadcast %cst_387 : f32 to vector<16x4xf32>
    %620 = arith.mulf %619, %618 : vector<16x4xf32>
    %621 = math.exp %620 : vector<16x4xf32>
    %cst_388 = arith.constant 1.000000e+00 : f32
    %622 = vector.broadcast %cst_388 : f32 to vector<16x4xf32>
    %623 = arith.addf %622, %621 : vector<16x4xf32>
    %cst_389 = arith.constant 1.000000e+00 : f32
    %624 = vector.broadcast %cst_389 : f32 to vector<16x4xf32>
    %625 = arith.divf %624, %623 : vector<16x4xf32>
    %cst_390 = arith.constant 9.99999974E-6 : f32
    %626 = vector.broadcast %cst_390 : f32 to vector<16x4xf32>
    %627 = arith.addf %625, %626 : vector<16x4xf32>
    %cst_391 = arith.constant 1.09861231 : f32
    %628 = vector.broadcast %cst_391 : f32 to vector<16x4xf32>
    %629 = arith.mulf %627, %628 : vector<16x4xf32>
    %630 = math.exp %629 : vector<16x4xf32>
    %cst_392 = arith.constant 1.000000e+00 : f32
    %631 = vector.broadcast %cst_392 : f32 to vector<16x4xf32>
    %632 = arith.subf %630, %631 : vector<16x4xf32>
    %cst_393 = arith.constant 1.000000e+00 : f32
    %633 = vector.broadcast %cst_393 : f32 to vector<16x4xf32>
    %634 = arith.divf %633, %632 : vector<16x4xf32>
    %c1_394 = arith.constant 1 : index
    %c0_395 = arith.constant 0 : index
    %c0_396 = arith.constant 0 : index
    %635 = vector.load %arg32[%c1_394, %c0_395, %c0_396] : memref<2x16x4xf32, #tpu.memory_space<vmem>>, vector<1x16x4xf32>
    %636 = vector.shape_cast %635 : vector<1x16x4xf32> to vector<16x4xf32>
    %637 = vector.shape_cast %632 : vector<16x4xf32> to vector<1x16x4xf32>
    tpu.vector_store %arg32[%c1_394, %c0_395, %c0_396], %637 {strides = array<i32>} : memref<2x16x4xf32, #tpu.memory_space<vmem>>, vector<1x16x4xf32>,
    %638 = vector.extract_strided_slice %597 {offsets = [0, 0], sizes = [16, 8], strides = [1, 1]} : vector<16x32xf32> to vector<16x8xf32>
    %639 = vector.shape_cast %638 : vector<16x8xf32> to vector<2x8x8xf32>
    %640 = vector.extract_strided_slice %604 {offsets = [0, 0], sizes = [16, 8], strides = [1, 1]} : vector<16x32xf32> to vector<16x8xf32>
    %641 = vector.shape_cast %640 : vector<16x8xf32> to vector<2x8x8xf32>
    %642 = vector.extract_strided_slice %611 {offsets = [0, 0], sizes = [16, 8], strides = [1, 1]} : vector<16x32xf32> to vector<16x8xf32>
    %643 = vector.shape_cast %642 : vector<16x8xf32> to vector<2x8x8xf32>
    "tpu.trace_start"() <{level = 10 : i32, message = "ble,bse->bls"}> : () -> ()
    %cst_397 = arith.constant dense<0.000000e+00> : vector<2x8x8xf32>
    %644 = tpu.matmul %639, %641, %cst_397 {dimension_numbers = #tpu.dot_dimension_numbers<[2], [2], [1], [1], [0, 0, 0, 1, 1, 1], [0], [0]>} : vector<2x8x8xf32>, vector<2x8x8xf32>, vector<2x8x8xf32> -> vector<2x8x8xf32>
    "tpu.trace_stop"() : () -> ()
    %cst_398 = arith.constant 0.353553385 : f32
    %645 = vector.broadcast %cst_398 : f32 to vector<2x8x8xf32>
    %646 = arith.mulf %644, %645 : vector<2x8x8xf32>
    %cst_399 = arith.constant dense<0xFF800000> : vector<2x8xf32>
    %647 = vector.multi_reduction <maximumf>, %646, %cst_399 [2] : vector<2x8x8xf32> to vector<2x8xf32>
    %648 = vector.shape_cast %647 : vector<2x8xf32> to vector<2x8x1xf32>
    %649 = vector.broadcast %648 : vector<2x8x1xf32> to vector<2x8x8xf32>
    %650 = arith.subf %646, %649 : vector<2x8x8xf32>
    %651 = math.exp %650 : vector<2x8x8xf32>
    %cst_400 = arith.constant dense<0.000000e+00> : vector<2x8xf32>
    %652 = vector.multi_reduction <add>, %651, %cst_400 [2] : vector<2x8x8xf32> to vector<2x8xf32>
    %653 = vector.shape_cast %652 : vector<2x8xf32> to vector<2x8x1xf32>
    %654 = vector.broadcast %653 : vector<2x8x1xf32> to vector<2x8x8xf32>
    %655 = arith.divf %651, %654 : vector<2x8x8xf32>
    %656 = vector.extract_strided_slice %634 {offsets = [0, 0], sizes = [16, 1], strides = [1, 1]} : vector<16x4xf32> to vector<16x1xf32>
    %657 = vector.shape_cast %656 : vector<16x1xf32> to vector<2x8x1xf32>
    %cst_401 = arith.constant 0.398942292 : f32
    %658 = vector.broadcast %cst_401 : f32 to vector<2x8x1xf32>
    %659 = arith.mulf %658, %657 : vector<2x8x1xf32>
    %660 = vector.shape_cast %9 : vector<8x8xf32> to vector<1x8x8xf32>
    %661 = vector.broadcast %660 : vector<1x8x8xf32> to vector<2x8x8xf32>
    %662 = vector.broadcast %657 : vector<2x8x1xf32> to vector<2x8x8xf32>
    %663 = arith.mulf %661, %662 : vector<2x8x8xf32>
    %664 = vector.broadcast %657 : vector<2x8x1xf32> to vector<2x8x8xf32>
    %665 = arith.mulf %663, %664 : vector<2x8x8xf32>
    %666 = math.exp %665 : vector<2x8x8xf32>
    %667 = vector.broadcast %659 : vector<2x8x1xf32> to vector<2x8x8xf32>
    %668 = arith.mulf %667, %666 : vector<2x8x8xf32>
    "tpu.trace_start"() <{level = 10 : i32, message = "bls,bse->ble"}> : () -> ()
    %cst_402 = arith.constant dense<0.000000e+00> : vector<2x8x8xf32>
    %669 = tpu.matmul %655, %643, %cst_402 {dimension_numbers = #tpu.dot_dimension_numbers<[2], [1], [1], [2], [0, 0, 0, 1, 1, 2], [0], [0]>} : vector<2x8x8xf32>, vector<2x8x8xf32>, vector<2x8x8xf32> -> vector<2x8x8xf32>
    "tpu.trace_stop"() : () -> ()
    %670 = vector.shape_cast %669 : vector<2x8x8xf32> to vector<16x8xf32>
    %c0_403 = arith.constant 0 : index
    %c0_404 = arith.constant 0 : index
    %671 = vector.load %arg33[%c0_403, %c0_404] : memref<16x32xf32, #tpu.memory_space<vmem>>, vector<16x8xf32>
    tpu.vector_store %arg33[%c0_403, %c0_404], %670 {strides = array<i32>} : memref<16x32xf32, #tpu.memory_space<vmem>>, vector<16x8xf32>,
    %672 = vector.extract_strided_slice %655 {offsets = [0, 0, 0], sizes = [1, 8, 8], strides = [1, 1, 1]} : vector<2x8x8xf32> to vector<1x8x8xf32>
    %673 = vector.shape_cast %672 : vector<1x8x8xf32> to vector<8x8xf32>
    %c8_405 = arith.constant 8 : index
    %c0_406 = arith.constant 0 : index
    %c0_407 = arith.constant 0 : index
    %674 = vector.load %arg30[%c8_405, %c0_406, %c0_407] : memref<16x8x8xf32, #tpu.memory_space<vmem>>, vector<1x8x8xf32>
    %675 = vector.shape_cast %674 : vector<1x8x8xf32> to vector<8x8xf32>
    %676 = vector.shape_cast %673 : vector<8x8xf32> to vector<1x8x8xf32>
    tpu.vector_store %arg30[%c8_405, %c0_406, %c0_407], %676 {strides = array<i32>} : memref<16x8x8xf32, #tpu.memory_space<vmem>>, vector<1x8x8xf32>,
    %677 = vector.extract_strided_slice %668 {offsets = [0, 0, 0], sizes = [1, 8, 8], strides = [1, 1, 1]} : vector<2x8x8xf32> to vector<1x8x8xf32>
    %678 = vector.shape_cast %677 : vector<1x8x8xf32> to vector<8x8xf32>
    %c8_408 = arith.constant 8 : index
    %c0_409 = arith.constant 0 : index
    %c0_410 = arith.constant 0 : index
    %679 = vector.load %arg31[%c8_408, %c0_409, %c0_410] : memref<16x8x8xf32, #tpu.memory_space<vmem>>, vector<1x8x8xf32>
    %680 = vector.shape_cast %679 : vector<1x8x8xf32> to vector<8x8xf32>
    %681 = vector.shape_cast %678 : vector<8x8xf32> to vector<1x8x8xf32>
    tpu.vector_store %arg31[%c8_408, %c0_409, %c0_410], %681 {strides = array<i32>} : memref<16x8x8xf32, #tpu.memory_space<vmem>>, vector<1x8x8xf32>,
    %682 = vector.extract_strided_slice %655 {offsets = [1, 0, 0], sizes = [1, 8, 8], strides = [1, 1, 1]} : vector<2x8x8xf32> to vector<1x8x8xf32>
    %683 = vector.shape_cast %682 : vector<1x8x8xf32> to vector<8x8xf32>
    %c12 = arith.constant 12 : index
    %c0_411 = arith.constant 0 : index
    %c0_412 = arith.constant 0 : index
    %684 = vector.load %arg30[%c12, %c0_411, %c0_412] : memref<16x8x8xf32, #tpu.memory_space<vmem>>, vector<1x8x8xf32>
    %685 = vector.shape_cast %684 : vector<1x8x8xf32> to vector<8x8xf32>
    %686 = vector.shape_cast %683 : vector<8x8xf32> to vector<1x8x8xf32>
    tpu.vector_store %arg30[%c12, %c0_411, %c0_412], %686 {strides = array<i32>} : memref<16x8x8xf32, #tpu.memory_space<vmem>>, vector<1x8x8xf32>,
    %687 = vector.extract_strided_slice %668 {offsets = [1, 0, 0], sizes = [1, 8, 8], strides = [1, 1, 1]} : vector<2x8x8xf32> to vector<1x8x8xf32>
    %688 = vector.shape_cast %687 : vector<1x8x8xf32> to vector<8x8xf32>
    %c12_413 = arith.constant 12 : index
    %c0_414 = arith.constant 0 : index
    %c0_415 = arith.constant 0 : index
    %689 = vector.load %arg31[%c12_413, %c0_414, %c0_415] : memref<16x8x8xf32, #tpu.memory_space<vmem>>, vector<1x8x8xf32>
    %690 = vector.shape_cast %689 : vector<1x8x8xf32> to vector<8x8xf32>
    %691 = vector.shape_cast %688 : vector<8x8xf32> to vector<1x8x8xf32>
    tpu.vector_store %arg31[%c12_413, %c0_414, %c0_415], %691 {strides = array<i32>} : memref<16x8x8xf32, #tpu.memory_space<vmem>>, vector<1x8x8xf32>,
    %692 = vector.extract_strided_slice %597 {offsets = [0, 8], sizes = [16, 8], strides = [1, 1]} : vector<16x32xf32> to vector<16x8xf32>
    %693 = vector.shape_cast %692 : vector<16x8xf32> to vector<2x8x8xf32>
    %694 = vector.extract_strided_slice %604 {offsets = [0, 8], sizes = [16, 8], strides = [1, 1]} : vector<16x32xf32> to vector<16x8xf32>
    %695 = vector.shape_cast %694 : vector<16x8xf32> to vector<2x8x8xf32>
    %696 = vector.extract_strided_slice %611 {offsets = [0, 8], sizes = [16, 8], strides = [1, 1]} : vector<16x32xf32> to vector<16x8xf32>
    %697 = vector.shape_cast %696 : vector<16x8xf32> to vector<2x8x8xf32>
    "tpu.trace_start"() <{level = 10 : i32, message = "ble,bse->bls"}> : () -> ()
    %cst_416 = arith.constant dense<0.000000e+00> : vector<2x8x8xf32>
    %698 = tpu.matmul %693, %695, %cst_416 {dimension_numbers = #tpu.dot_dimension_numbers<[2], [2], [1], [1], [0, 0, 0, 1, 1, 1], [0], [0]>} : vector<2x8x8xf32>, vector<2x8x8xf32>, vector<2x8x8xf32> -> vector<2x8x8xf32>
    "tpu.trace_stop"() : () -> ()
    %cst_417 = arith.constant 0.353553385 : f32
    %699 = vector.broadcast %cst_417 : f32 to vector<2x8x8xf32>
    %700 = arith.mulf %698, %699 : vector<2x8x8xf32>
    %cst_418 = arith.constant dense<0xFF800000> : vector<2x8xf32>
    %701 = vector.multi_reduction <maximumf>, %700, %cst_418 [2] : vector<2x8x8xf32> to vector<2x8xf32>
    %702 = vector.shape_cast %701 : vector<2x8xf32> to vector<2x8x1xf32>
    %703 = vector.broadcast %702 : vector<2x8x1xf32> to vector<2x8x8xf32>
    %704 = arith.subf %700, %703 : vector<2x8x8xf32>
    %705 = math.exp %704 : vector<2x8x8xf32>
    %cst_419 = arith.constant dense<0.000000e+00> : vector<2x8xf32>
    %706 = vector.multi_reduction <add>, %705, %cst_419 [2] : vector<2x8x8xf32> to vector<2x8xf32>
    %707 = vector.shape_cast %706 : vector<2x8xf32> to vector<2x8x1xf32>
    %708 = vector.broadcast %707 : vector<2x8x1xf32> to vector<2x8x8xf32>
    %709 = arith.divf %705, %708 : vector<2x8x8xf32>
    %710 = vector.extract_strided_slice %634 {offsets = [0, 1], sizes = [16, 1], strides = [1, 1]} : vector<16x4xf32> to vector<16x1xf32>
    %711 = vector.shape_cast %710 : vector<16x1xf32> to vector<2x8x1xf32>
    %cst_420 = arith.constant 0.398942292 : f32
    %712 = vector.broadcast %cst_420 : f32 to vector<2x8x1xf32>
    %713 = arith.mulf %712, %711 : vector<2x8x1xf32>
    %714 = vector.shape_cast %9 : vector<8x8xf32> to vector<1x8x8xf32>
    %715 = vector.broadcast %714 : vector<1x8x8xf32> to vector<2x8x8xf32>
    %716 = vector.broadcast %711 : vector<2x8x1xf32> to vector<2x8x8xf32>
    %717 = arith.mulf %715, %716 : vector<2x8x8xf32>
    %718 = vector.broadcast %711 : vector<2x8x1xf32> to vector<2x8x8xf32>
    %719 = arith.mulf %717, %718 : vector<2x8x8xf32>
    %720 = math.exp %719 : vector<2x8x8xf32>
    %721 = vector.broadcast %713 : vector<2x8x1xf32> to vector<2x8x8xf32>
    %722 = arith.mulf %721, %720 : vector<2x8x8xf32>
    "tpu.trace_start"() <{level = 10 : i32, message = "bls,bse->ble"}> : () -> ()
    %cst_421 = arith.constant dense<0.000000e+00> : vector<2x8x8xf32>
    %723 = tpu.matmul %709, %697, %cst_421 {dimension_numbers = #tpu.dot_dimension_numbers<[2], [1], [1], [2], [0, 0, 0, 1, 1, 2], [0], [0]>} : vector<2x8x8xf32>, vector<2x8x8xf32>, vector<2x8x8xf32> -> vector<2x8x8xf32>
    "tpu.trace_stop"() : () -> ()
    %724 = vector.shape_cast %723 : vector<2x8x8xf32> to vector<16x8xf32>
    %c0_422 = arith.constant 0 : index
    %c8_423 = arith.constant 8 : index
    %725 = vector.load %arg33[%c0_422, %c8_423] : memref<16x32xf32, #tpu.memory_space<vmem>>, vector<16x8xf32>
    tpu.vector_store %arg33[%c0_422, %c8_423], %724 {strides = array<i32>} : memref<16x32xf32, #tpu.memory_space<vmem>>, vector<16x8xf32>,
    %726 = vector.extract_strided_slice %709 {offsets = [0, 0, 0], sizes = [1, 8, 8], strides = [1, 1, 1]} : vector<2x8x8xf32> to vector<1x8x8xf32>
    %727 = vector.shape_cast %726 : vector<1x8x8xf32> to vector<8x8xf32>
    %c9 = arith.constant 9 : index
    %c0_424 = arith.constant 0 : index
    %c0_425 = arith.constant 0 : index
    %728 = vector.load %arg30[%c9, %c0_424, %c0_425] : memref<16x8x8xf32, #tpu.memory_space<vmem>>, vector<1x8x8xf32>
    %729 = vector.shape_cast %728 : vector<1x8x8xf32> to vector<8x8xf32>
    %730 = vector.shape_cast %727 : vector<8x8xf32> to vector<1x8x8xf32>
    tpu.vector_store %arg30[%c9, %c0_424, %c0_425], %730 {strides = array<i32>} : memref<16x8x8xf32, #tpu.memory_space<vmem>>, vector<1x8x8xf32>,
    %731 = vector.extract_strided_slice %722 {offsets = [0, 0, 0], sizes = [1, 8, 8], strides = [1, 1, 1]} : vector<2x8x8xf32> to vector<1x8x8xf32>
    %732 = vector.shape_cast %731 : vector<1x8x8xf32> to vector<8x8xf32>
    %c9_426 = arith.constant 9 : index
    %c0_427 = arith.constant 0 : index
    %c0_428 = arith.constant 0 : index
    %733 = vector.load %arg31[%c9_426, %c0_427, %c0_428] : memref<16x8x8xf32, #tpu.memory_space<vmem>>, vector<1x8x8xf32>
    %734 = vector.shape_cast %733 : vector<1x8x8xf32> to vector<8x8xf32>
    %735 = vector.shape_cast %732 : vector<8x8xf32> to vector<1x8x8xf32>
    tpu.vector_store %arg31[%c9_426, %c0_427, %c0_428], %735 {strides = array<i32>} : memref<16x8x8xf32, #tpu.memory_space<vmem>>, vector<1x8x8xf32>,
    %736 = vector.extract_strided_slice %709 {offsets = [1, 0, 0], sizes = [1, 8, 8], strides = [1, 1, 1]} : vector<2x8x8xf32> to vector<1x8x8xf32>
    %737 = vector.shape_cast %736 : vector<1x8x8xf32> to vector<8x8xf32>
    %c13 = arith.constant 13 : index
    %c0_429 = arith.constant 0 : index
    %c0_430 = arith.constant 0 : index
    %738 = vector.load %arg30[%c13, %c0_429, %c0_430] : memref<16x8x8xf32, #tpu.memory_space<vmem>>, vector<1x8x8xf32>
    %739 = vector.shape_cast %738 : vector<1x8x8xf32> to vector<8x8xf32>
    %740 = vector.shape_cast %737 : vector<8x8xf32> to vector<1x8x8xf32>
    tpu.vector_store %arg30[%c13, %c0_429, %c0_430], %740 {strides = array<i32>} : memref<16x8x8xf32, #tpu.memory_space<vmem>>, vector<1x8x8xf32>,
    %741 = vector.extract_strided_slice %722 {offsets = [1, 0, 0], sizes = [1, 8, 8], strides = [1, 1, 1]} : vector<2x8x8xf32> to vector<1x8x8xf32>
    %742 = vector.shape_cast %741 : vector<1x8x8xf32> to vector<8x8xf32>
    %c13_431 = arith.constant 13 : index
    %c0_432 = arith.constant 0 : index
    %c0_433 = arith.constant 0 : index
    %743 = vector.load %arg31[%c13_431, %c0_432, %c0_433] : memref<16x8x8xf32, #tpu.memory_space<vmem>>, vector<1x8x8xf32>
    %744 = vector.shape_cast %743 : vector<1x8x8xf32> to vector<8x8xf32>
    %745 = vector.shape_cast %742 : vector<8x8xf32> to vector<1x8x8xf32>
    tpu.vector_store %arg31[%c13_431, %c0_432, %c0_433], %745 {strides = array<i32>} : memref<16x8x8xf32, #tpu.memory_space<vmem>>, vector<1x8x8xf32>,
    %746 = vector.extract_strided_slice %597 {offsets = [0, 16], sizes = [16, 8], strides = [1, 1]} : vector<16x32xf32> to vector<16x8xf32>
    %747 = vector.shape_cast %746 : vector<16x8xf32> to vector<2x8x8xf32>
    %748 = vector.extract_strided_slice %604 {offsets = [0, 16], sizes = [16, 8], strides = [1, 1]} : vector<16x32xf32> to vector<16x8xf32>
    %749 = vector.shape_cast %748 : vector<16x8xf32> to vector<2x8x8xf32>
    %750 = vector.extract_strided_slice %611 {offsets = [0, 16], sizes = [16, 8], strides = [1, 1]} : vector<16x32xf32> to vector<16x8xf32>
    %751 = vector.shape_cast %750 : vector<16x8xf32> to vector<2x8x8xf32>
    "tpu.trace_start"() <{level = 10 : i32, message = "ble,bse->bls"}> : () -> ()
    %cst_434 = arith.constant dense<0.000000e+00> : vector<2x8x8xf32>
    %752 = tpu.matmul %747, %749, %cst_434 {dimension_numbers = #tpu.dot_dimension_numbers<[2], [2], [1], [1], [0, 0, 0, 1, 1, 1], [0], [0]>} : vector<2x8x8xf32>, vector<2x8x8xf32>, vector<2x8x8xf32> -> vector<2x8x8xf32>
    "tpu.trace_stop"() : () -> ()
    %cst_435 = arith.constant 0.353553385 : f32
    %753 = vector.broadcast %cst_435 : f32 to vector<2x8x8xf32>
    %754 = arith.mulf %752, %753 : vector<2x8x8xf32>
    %cst_436 = arith.constant dense<0xFF800000> : vector<2x8xf32>
    %755 = vector.multi_reduction <maximumf>, %754, %cst_436 [2] : vector<2x8x8xf32> to vector<2x8xf32>
    %756 = vector.shape_cast %755 : vector<2x8xf32> to vector<2x8x1xf32>
    %757 = vector.broadcast %756 : vector<2x8x1xf32> to vector<2x8x8xf32>
    %758 = arith.subf %754, %757 : vector<2x8x8xf32>
    %759 = math.exp %758 : vector<2x8x8xf32>
    %cst_437 = arith.constant dense<0.000000e+00> : vector<2x8xf32>
    %760 = vector.multi_reduction <add>, %759, %cst_437 [2] : vector<2x8x8xf32> to vector<2x8xf32>
    %761 = vector.shape_cast %760 : vector<2x8xf32> to vector<2x8x1xf32>
    %762 = vector.broadcast %761 : vector<2x8x1xf32> to vector<2x8x8xf32>
    %763 = arith.divf %759, %762 : vector<2x8x8xf32>
    %764 = vector.extract_strided_slice %634 {offsets = [0, 2], sizes = [16, 1], strides = [1, 1]} : vector<16x4xf32> to vector<16x1xf32>
    %765 = vector.shape_cast %764 : vector<16x1xf32> to vector<2x8x1xf32>
    %cst_438 = arith.constant 0.398942292 : f32
    %766 = vector.broadcast %cst_438 : f32 to vector<2x8x1xf32>
    %767 = arith.mulf %766, %765 : vector<2x8x1xf32>
    %768 = vector.shape_cast %9 : vector<8x8xf32> to vector<1x8x8xf32>
    %769 = vector.broadcast %768 : vector<1x8x8xf32> to vector<2x8x8xf32>
    %770 = vector.broadcast %765 : vector<2x8x1xf32> to vector<2x8x8xf32>
    %771 = arith.mulf %769, %770 : vector<2x8x8xf32>
    %772 = vector.broadcast %765 : vector<2x8x1xf32> to vector<2x8x8xf32>
    %773 = arith.mulf %771, %772 : vector<2x8x8xf32>
    %774 = math.exp %773 : vector<2x8x8xf32>
    %775 = vector.broadcast %767 : vector<2x8x1xf32> to vector<2x8x8xf32>
    %776 = arith.mulf %775, %774 : vector<2x8x8xf32>
    "tpu.trace_start"() <{level = 10 : i32, message = "bls,bse->ble"}> : () -> ()
    %cst_439 = arith.constant dense<0.000000e+00> : vector<2x8x8xf32>
    %777 = tpu.matmul %763, %751, %cst_439 {dimension_numbers = #tpu.dot_dimension_numbers<[2], [1], [1], [2], [0, 0, 0, 1, 1, 2], [0], [0]>} : vector<2x8x8xf32>, vector<2x8x8xf32>, vector<2x8x8xf32> -> vector<2x8x8xf32>
    "tpu.trace_stop"() : () -> ()
    %778 = vector.shape_cast %777 : vector<2x8x8xf32> to vector<16x8xf32>
    %c0_440 = arith.constant 0 : index
    %c16_441 = arith.constant 16 : index
    %779 = vector.load %arg33[%c0_440, %c16_441] : memref<16x32xf32, #tpu.memory_space<vmem>>, vector<16x8xf32>
    tpu.vector_store %arg33[%c0_440, %c16_441], %778 {strides = array<i32>} : memref<16x32xf32, #tpu.memory_space<vmem>>, vector<16x8xf32>,
    %780 = vector.extract_strided_slice %763 {offsets = [0, 0, 0], sizes = [1, 8, 8], strides = [1, 1, 1]} : vector<2x8x8xf32> to vector<1x8x8xf32>
    %781 = vector.shape_cast %780 : vector<1x8x8xf32> to vector<8x8xf32>
    %c10 = arith.constant 10 : index
    %c0_442 = arith.constant 0 : index
    %c0_443 = arith.constant 0 : index
    %782 = vector.load %arg30[%c10, %c0_442, %c0_443] : memref<16x8x8xf32, #tpu.memory_space<vmem>>, vector<1x8x8xf32>
    %783 = vector.shape_cast %782 : vector<1x8x8xf32> to vector<8x8xf32>
    %784 = vector.shape_cast %781 : vector<8x8xf32> to vector<1x8x8xf32>
    tpu.vector_store %arg30[%c10, %c0_442, %c0_443], %784 {strides = array<i32>} : memref<16x8x8xf32, #tpu.memory_space<vmem>>, vector<1x8x8xf32>,
    %785 = vector.extract_strided_slice %776 {offsets = [0, 0, 0], sizes = [1, 8, 8], strides = [1, 1, 1]} : vector<2x8x8xf32> to vector<1x8x8xf32>
    %786 = vector.shape_cast %785 : vector<1x8x8xf32> to vector<8x8xf32>
    %c10_444 = arith.constant 10 : index
    %c0_445 = arith.constant 0 : index
    %c0_446 = arith.constant 0 : index
    %787 = vector.load %arg31[%c10_444, %c0_445, %c0_446] : memref<16x8x8xf32, #tpu.memory_space<vmem>>, vector<1x8x8xf32>
    %788 = vector.shape_cast %787 : vector<1x8x8xf32> to vector<8x8xf32>
    %789 = vector.shape_cast %786 : vector<8x8xf32> to vector<1x8x8xf32>
    tpu.vector_store %arg31[%c10_444, %c0_445, %c0_446], %789 {strides = array<i32>} : memref<16x8x8xf32, #tpu.memory_space<vmem>>, vector<1x8x8xf32>,
    %790 = vector.extract_strided_slice %763 {offsets = [1, 0, 0], sizes = [1, 8, 8], strides = [1, 1, 1]} : vector<2x8x8xf32> to vector<1x8x8xf32>
    %791 = vector.shape_cast %790 : vector<1x8x8xf32> to vector<8x8xf32>
    %c14 = arith.constant 14 : index
    %c0_447 = arith.constant 0 : index
    %c0_448 = arith.constant 0 : index
    %792 = vector.load %arg30[%c14, %c0_447, %c0_448] : memref<16x8x8xf32, #tpu.memory_space<vmem>>, vector<1x8x8xf32>
    %793 = vector.shape_cast %792 : vector<1x8x8xf32> to vector<8x8xf32>
    %794 = vector.shape_cast %791 : vector<8x8xf32> to vector<1x8x8xf32>
    tpu.vector_store %arg30[%c14, %c0_447, %c0_448], %794 {strides = array<i32>} : memref<16x8x8xf32, #tpu.memory_space<vmem>>, vector<1x8x8xf32>,
    %795 = vector.extract_strided_slice %776 {offsets = [1, 0, 0], sizes = [1, 8, 8], strides = [1, 1, 1]} : vector<2x8x8xf32> to vector<1x8x8xf32>
    %796 = vector.shape_cast %795 : vector<1x8x8xf32> to vector<8x8xf32>
    %c14_449 = arith.constant 14 : index
    %c0_450 = arith.constant 0 : index
    %c0_451 = arith.constant 0 : index
    %797 = vector.load %arg31[%c14_449, %c0_450, %c0_451] : memref<16x8x8xf32, #tpu.memory_space<vmem>>, vector<1x8x8xf32>
    %798 = vector.shape_cast %797 : vector<1x8x8xf32> to vector<8x8xf32>
    %799 = vector.shape_cast %796 : vector<8x8xf32> to vector<1x8x8xf32>
    tpu.vector_store %arg31[%c14_449, %c0_450, %c0_451], %799 {strides = array<i32>} : memref<16x8x8xf32, #tpu.memory_space<vmem>>, vector<1x8x8xf32>,
    %800 = vector.extract_strided_slice %597 {offsets = [0, 24], sizes = [16, 8], strides = [1, 1]} : vector<16x32xf32> to vector<16x8xf32>
    %801 = vector.shape_cast %800 : vector<16x8xf32> to vector<2x8x8xf32>
    %802 = vector.extract_strided_slice %604 {offsets = [0, 24], sizes = [16, 8], strides = [1, 1]} : vector<16x32xf32> to vector<16x8xf32>
    %803 = vector.shape_cast %802 : vector<16x8xf32> to vector<2x8x8xf32>
    %804 = vector.extract_strided_slice %611 {offsets = [0, 24], sizes = [16, 8], strides = [1, 1]} : vector<16x32xf32> to vector<16x8xf32>
    %805 = vector.shape_cast %804 : vector<16x8xf32> to vector<2x8x8xf32>
    "tpu.trace_start"() <{level = 10 : i32, message = "ble,bse->bls"}> : () -> ()
    %cst_452 = arith.constant dense<0.000000e+00> : vector<2x8x8xf32>
    %806 = tpu.matmul %801, %803, %cst_452 {dimension_numbers = #tpu.dot_dimension_numbers<[2], [2], [1], [1], [0, 0, 0, 1, 1, 1], [0], [0]>} : vector<2x8x8xf32>, vector<2x8x8xf32>, vector<2x8x8xf32> -> vector<2x8x8xf32>
    "tpu.trace_stop"() : () -> ()
    %cst_453 = arith.constant 0.353553385 : f32
    %807 = vector.broadcast %cst_453 : f32 to vector<2x8x8xf32>
    %808 = arith.mulf %806, %807 : vector<2x8x8xf32>
    %cst_454 = arith.constant dense<0xFF800000> : vector<2x8xf32>
    %809 = vector.multi_reduction <maximumf>, %808, %cst_454 [2] : vector<2x8x8xf32> to vector<2x8xf32>
    %810 = vector.shape_cast %809 : vector<2x8xf32> to vector<2x8x1xf32>
    %811 = vector.broadcast %810 : vector<2x8x1xf32> to vector<2x8x8xf32>
    %812 = arith.subf %808, %811 : vector<2x8x8xf32>
    %813 = math.exp %812 : vector<2x8x8xf32>
    %cst_455 = arith.constant dense<0.000000e+00> : vector<2x8xf32>
    %814 = vector.multi_reduction <add>, %813, %cst_455 [2] : vector<2x8x8xf32> to vector<2x8xf32>
    %815 = vector.shape_cast %814 : vector<2x8xf32> to vector<2x8x1xf32>
    %816 = vector.broadcast %815 : vector<2x8x1xf32> to vector<2x8x8xf32>
    %817 = arith.divf %813, %816 : vector<2x8x8xf32>
    %818 = vector.extract_strided_slice %634 {offsets = [0, 3], sizes = [16, 1], strides = [1, 1]} : vector<16x4xf32> to vector<16x1xf32>
    %819 = vector.shape_cast %818 : vector<16x1xf32> to vector<2x8x1xf32>
    %cst_456 = arith.constant 0.398942292 : f32
    %820 = vector.broadcast %cst_456 : f32 to vector<2x8x1xf32>
    %821 = arith.mulf %820, %819 : vector<2x8x1xf32>
    %822 = vector.shape_cast %9 : vector<8x8xf32> to vector<1x8x8xf32>
    %823 = vector.broadcast %822 : vector<1x8x8xf32> to vector<2x8x8xf32>
    %824 = vector.broadcast %819 : vector<2x8x1xf32> to vector<2x8x8xf32>
    %825 = arith.mulf %823, %824 : vector<2x8x8xf32>
    %826 = vector.broadcast %819 : vector<2x8x1xf32> to vector<2x8x8xf32>
    %827 = arith.mulf %825, %826 : vector<2x8x8xf32>
    %828 = math.exp %827 : vector<2x8x8xf32>
    %829 = vector.broadcast %821 : vector<2x8x1xf32> to vector<2x8x8xf32>
    %830 = arith.mulf %829, %828 : vector<2x8x8xf32>
    "tpu.trace_start"() <{level = 10 : i32, message = "bls,bse->ble"}> : () -> ()
    %cst_457 = arith.constant dense<0.000000e+00> : vector<2x8x8xf32>
    %831 = tpu.matmul %817, %805, %cst_457 {dimension_numbers = #tpu.dot_dimension_numbers<[2], [1], [1], [2], [0, 0, 0, 1, 1, 2], [0], [0]>} : vector<2x8x8xf32>, vector<2x8x8xf32>, vector<2x8x8xf32> -> vector<2x8x8xf32>
    "tpu.trace_stop"() : () -> ()
    %832 = vector.shape_cast %831 : vector<2x8x8xf32> to vector<16x8xf32>
    %c0_458 = arith.constant 0 : index
    %c24_459 = arith.constant 24 : index
    %833 = vector.load %arg33[%c0_458, %c24_459] : memref<16x32xf32, #tpu.memory_space<vmem>>, vector<16x8xf32>
    tpu.vector_store %arg33[%c0_458, %c24_459], %832 {strides = array<i32>} : memref<16x32xf32, #tpu.memory_space<vmem>>, vector<16x8xf32>,
    %834 = vector.extract_strided_slice %817 {offsets = [0, 0, 0], sizes = [1, 8, 8], strides = [1, 1, 1]} : vector<2x8x8xf32> to vector<1x8x8xf32>
    %835 = vector.shape_cast %834 : vector<1x8x8xf32> to vector<8x8xf32>
    %c11 = arith.constant 11 : index
    %c0_460 = arith.constant 0 : index
    %c0_461 = arith.constant 0 : index
    %836 = vector.load %arg30[%c11, %c0_460, %c0_461] : memref<16x8x8xf32, #tpu.memory_space<vmem>>, vector<1x8x8xf32>
    %837 = vector.shape_cast %836 : vector<1x8x8xf32> to vector<8x8xf32>
    %838 = vector.shape_cast %835 : vector<8x8xf32> to vector<1x8x8xf32>
    tpu.vector_store %arg30[%c11, %c0_460, %c0_461], %838 {strides = array<i32>} : memref<16x8x8xf32, #tpu.memory_space<vmem>>, vector<1x8x8xf32>,
    %839 = vector.extract_strided_slice %830 {offsets = [0, 0, 0], sizes = [1, 8, 8], strides = [1, 1, 1]} : vector<2x8x8xf32> to vector<1x8x8xf32>
    %840 = vector.shape_cast %839 : vector<1x8x8xf32> to vector<8x8xf32>
    %c11_462 = arith.constant 11 : index
    %c0_463 = arith.constant 0 : index
    %c0_464 = arith.constant 0 : index
    %841 = vector.load %arg31[%c11_462, %c0_463, %c0_464] : memref<16x8x8xf32, #tpu.memory_space<vmem>>, vector<1x8x8xf32>
    %842 = vector.shape_cast %841 : vector<1x8x8xf32> to vector<8x8xf32>
    %843 = vector.shape_cast %840 : vector<8x8xf32> to vector<1x8x8xf32>
    tpu.vector_store %arg31[%c11_462, %c0_463, %c0_464], %843 {strides = array<i32>} : memref<16x8x8xf32, #tpu.memory_space<vmem>>, vector<1x8x8xf32>,
    %844 = vector.extract_strided_slice %817 {offsets = [1, 0, 0], sizes = [1, 8, 8], strides = [1, 1, 1]} : vector<2x8x8xf32> to vector<1x8x8xf32>
    %845 = vector.shape_cast %844 : vector<1x8x8xf32> to vector<8x8xf32>
    %c15 = arith.constant 15 : index
    %c0_465 = arith.constant 0 : index
    %c0_466 = arith.constant 0 : index
    %846 = vector.load %arg30[%c15, %c0_465, %c0_466] : memref<16x8x8xf32, #tpu.memory_space<vmem>>, vector<1x8x8xf32>
    %847 = vector.shape_cast %846 : vector<1x8x8xf32> to vector<8x8xf32>
    %848 = vector.shape_cast %845 : vector<8x8xf32> to vector<1x8x8xf32>
    tpu.vector_store %arg30[%c15, %c0_465, %c0_466], %848 {strides = array<i32>} : memref<16x8x8xf32, #tpu.memory_space<vmem>>, vector<1x8x8xf32>,
    %849 = vector.extract_strided_slice %830 {offsets = [1, 0, 0], sizes = [1, 8, 8], strides = [1, 1, 1]} : vector<2x8x8xf32> to vector<1x8x8xf32>
    %850 = vector.shape_cast %849 : vector<1x8x8xf32> to vector<8x8xf32>
    %c15_467 = arith.constant 15 : index
    %c0_468 = arith.constant 0 : index
    %c0_469 = arith.constant 0 : index
    %851 = vector.load %arg31[%c15_467, %c0_468, %c0_469] : memref<16x8x8xf32, #tpu.memory_space<vmem>>, vector<1x8x8xf32>
    %852 = vector.shape_cast %851 : vector<1x8x8xf32> to vector<8x8xf32>
    %853 = vector.shape_cast %850 : vector<8x8xf32> to vector<1x8x8xf32>
    tpu.vector_store %arg31[%c15_467, %c0_468, %c0_469], %853 {strides = array<i32>} : memref<16x8x8xf32, #tpu.memory_space<vmem>>, vector<1x8x8xf32>,
    %c0_470 = arith.constant 0 : index
    %c0_471 = arith.constant 0 : index
    %854 = vector.load %arg33[%c0_470, %c0_471] : memref<16x32xf32, #tpu.memory_space<vmem>>, vector<16x32xf32>
    %c1_472 = arith.constant 1 : index
    %c0_473 = arith.constant 0 : index
    %c0_474 = arith.constant 0 : index
    %855 = vector.load %arg18[%c1_472, %c0_473, %c0_474] : memref<2x32x64xf32, #tpu.memory_space<vmem>>, vector<1x32x64xf32>
    %856 = vector.shape_cast %855 : vector<1x32x64xf32> to vector<32x64xf32>
    %cst_475 = arith.constant dense<0.000000e+00> : vector<16x64xf32>
    %857 = tpu.matmul %854, %856, %cst_475 {dimension_numbers = #tpu.dot_dimension_numbers<[1], [0], [0], [1], [0, 0, 1, 1], [], []>} : vector<16x32xf32>, vector<32x64xf32>, vector<16x64xf32> -> vector<16x64xf32>
    %c1_476 = arith.constant 1 : index
    %c0_477 = arith.constant 0 : index
    %c0_478 = arith.constant 0 : index
    %858 = vector.load %arg19[%c1_476, %c0_477, %c0_478] : memref<2x1x64xf32, #tpu.memory_space<vmem>>, vector<1x1x64xf32>
    %859 = vector.shape_cast %858 : vector<1x1x64xf32> to vector<1x64xf32>
    %860 = vector.broadcast %859 : vector<1x64xf32> to vector<16x64xf32>
    %861 = arith.addf %857, %860 : vector<16x64xf32>
    %862 = vector.extract_strided_slice %861 {offsets = [0, 0], sizes = [16, 32], strides = [1, 1]} : vector<16x64xf32> to vector<16x32xf32>
    %863 = arith.addf %536, %862 : vector<16x32xf32>
    %864 = vector.extract_strided_slice %590 {offsets = [0, 0], sizes = [1, 32], strides = [1, 1]} : vector<8x32xf32> to vector<1x32xf32>
    %865 = vector.extract_strided_slice %590 {offsets = [1, 0], sizes = [1, 32], strides = [1, 1]} : vector<8x32xf32> to vector<1x32xf32>
    %cst_479 = arith.constant dense<0.000000e+00> : vector<16xf32>
    %866 = vector.multi_reduction <add>, %863, %cst_479 [1] : vector<16x32xf32> to vector<16xf32>
    %867 = vector.shape_cast %866 : vector<16xf32> to vector<16x1xf32>
    %cst_480 = arith.constant 3.200000e+01 : f32
    %868 = vector.broadcast %cst_480 : f32 to vector<16x1xf32>
    %869 = arith.divf %867, %868 : vector<16x1xf32>
    %870 = vector.broadcast %869 : vector<16x1xf32> to vector<16x32xf32>
    %871 = arith.subf %863, %870 : vector<16x32xf32>
    %872 = arith.mulf %871, %871 : vector<16x32xf32>
    %cst_481 = arith.constant dense<0.000000e+00> : vector<16xf32>
    %873 = vector.multi_reduction <add>, %872, %cst_481 [1] : vector<16x32xf32> to vector<16xf32>
    %874 = vector.shape_cast %873 : vector<16xf32> to vector<16x1xf32>
    %cst_482 = arith.constant 3.200000e+01 : f32
    %875 = vector.broadcast %cst_482 : f32 to vector<16x1xf32>
    %876 = arith.divf %874, %875 : vector<16x1xf32>
    %877 = vector.broadcast %869 : vector<16x1xf32> to vector<16x32xf32>
    %878 = arith.subf %863, %877 : vector<16x32xf32>
    %cst_483 = arith.constant 9.99999974E-6 : f32
    %879 = vector.broadcast %cst_483 : f32 to vector<16x1xf32>
    %880 = arith.addf %876, %879 : vector<16x1xf32>
    %881 = math.rsqrt %880 : vector<16x1xf32>
    %882 = vector.broadcast %881 : vector<16x1xf32> to vector<16x32xf32>
    %883 = arith.mulf %878, %882 : vector<16x32xf32>
    %884 = vector.broadcast %864 : vector<1x32xf32> to vector<16x32xf32>
    %885 = arith.mulf %883, %884 : vector<16x32xf32>
    %886 = vector.broadcast %865 : vector<1x32xf32> to vector<16x32xf32>
    %887 = arith.addf %885, %886 : vector<16x32xf32>
    %c1_484 = arith.constant 1 : index
    %c0_485 = arith.constant 0 : index
    %c0_486 = arith.constant 0 : index
    %c0_487 = arith.constant 0 : index
    %888 = vector.load %arg21[%c1_484, %c0_485, %c0_486, %c0_487] : memref<2x2x32x32xf32, #tpu.memory_space<vmem>>, vector<1x1x32x32xf32>
    %889 = vector.shape_cast %888 : vector<1x1x32x32xf32> to vector<32x32xf32>
    %cst_488 = arith.constant dense<0.000000e+00> : vector<16x32xf32>
    %890 = tpu.matmul %887, %889, %cst_488 {dimension_numbers = #tpu.dot_dimension_numbers<[1], [0], [0], [1], [0, 0, 1, 1], [], []>} : vector<16x32xf32>, vector<32x32xf32>, vector<16x32xf32> -> vector<16x32xf32>
    %c1_489 = arith.constant 1 : index
    %c0_490 = arith.constant 0 : index
    %c0_491 = arith.constant 0 : index
    %c0_492 = arith.constant 0 : index
    %891 = vector.load %arg22[%c1_489, %c0_490, %c0_491, %c0_492] : memref<2x2x1x32xf32, #tpu.memory_space<vmem>>, vector<1x1x1x32xf32>
    %892 = vector.shape_cast %891 : vector<1x1x1x32xf32> to vector<1x32xf32>
    %893 = vector.broadcast %892 : vector<1x32xf32> to vector<16x32xf32>
    %894 = arith.addf %890, %893 : vector<16x32xf32>
    %cst_493 = arith.constant 5.000000e-01 : f32
    %895 = vector.broadcast %cst_493 : f32 to vector<16x32xf32>
    %896 = arith.mulf %895, %894 : vector<16x32xf32>
    %cst_494 = arith.constant 4.471500e-02 : f32
    %897 = vector.broadcast %cst_494 : f32 to vector<16x32xf32>
    %898 = arith.mulf %897, %894 : vector<16x32xf32>
    %899 = arith.mulf %898, %894 : vector<16x32xf32>
    %900 = arith.mulf %899, %894 : vector<16x32xf32>
    %901 = arith.addf %894, %900 : vector<16x32xf32>
    %cst_495 = arith.constant 0.797884583 : f32
    %902 = vector.broadcast %cst_495 : f32 to vector<16x32xf32>
    %903 = arith.mulf %902, %901 : vector<16x32xf32>
    %904 = math.tanh %903 : vector<16x32xf32>
    %cst_496 = arith.constant 1.000000e+00 : f32
    %905 = vector.broadcast %cst_496 : f32 to vector<16x32xf32>
    %906 = arith.addf %905, %904 : vector<16x32xf32>
    %907 = arith.mulf %896, %906 : vector<16x32xf32>
    %c1_497 = arith.constant 1 : index
    %c0_498 = arith.constant 0 : index
    %c0_499 = arith.constant 0 : index
    %c0_500 = arith.constant 0 : index
    %908 = vector.load %arg23[%c1_497, %c0_498, %c0_499, %c0_500] : memref<2x2x32x32xf32, #tpu.memory_space<vmem>>, vector<1x1x32x32xf32>
    %909 = vector.shape_cast %908 : vector<1x1x32x32xf32> to vector<32x32xf32>
    %cst_501 = arith.constant dense<0.000000e+00> : vector<16x32xf32>
    %910 = tpu.matmul %907, %909, %cst_501 {dimension_numbers = #tpu.dot_dimension_numbers<[1], [0], [0], [1], [0, 0, 1, 1], [], []>} : vector<16x32xf32>, vector<32x32xf32>, vector<16x32xf32> -> vector<16x32xf32>
    %c1_502 = arith.constant 1 : index
    %c0_503 = arith.constant 0 : index
    %c0_504 = arith.constant 0 : index
    %c0_505 = arith.constant 0 : index
    %911 = vector.load %arg24[%c1_502, %c0_503, %c0_504, %c0_505] : memref<2x2x1x32xf32, #tpu.memory_space<vmem>>, vector<1x1x1x32xf32>
    %912 = vector.shape_cast %911 : vector<1x1x1x32xf32> to vector<1x32xf32>
    %913 = vector.broadcast %912 : vector<1x32xf32> to vector<16x32xf32>
    %914 = arith.addf %910, %913 : vector<16x32xf32>
    %915 = arith.addf %887, %914 : vector<16x32xf32>
    %916 = vector.extract_strided_slice %590 {offsets = [4, 0], sizes = [1, 32], strides = [1, 1]} : vector<8x32xf32> to vector<1x32xf32>
    %917 = vector.extract_strided_slice %590 {offsets = [5, 0], sizes = [1, 32], strides = [1, 1]} : vector<8x32xf32> to vector<1x32xf32>
    %cst_506 = arith.constant dense<0.000000e+00> : vector<16xf32>
    %918 = vector.multi_reduction <add>, %915, %cst_506 [1] : vector<16x32xf32> to vector<16xf32>
    %919 = vector.shape_cast %918 : vector<16xf32> to vector<16x1xf32>
    %cst_507 = arith.constant 3.200000e+01 : f32
    %920 = vector.broadcast %cst_507 : f32 to vector<16x1xf32>
    %921 = arith.divf %919, %920 : vector<16x1xf32>
    %922 = vector.broadcast %921 : vector<16x1xf32> to vector<16x32xf32>
    %923 = arith.subf %915, %922 : vector<16x32xf32>
    %924 = arith.mulf %923, %923 : vector<16x32xf32>
    %cst_508 = arith.constant dense<0.000000e+00> : vector<16xf32>
    %925 = vector.multi_reduction <add>, %924, %cst_508 [1] : vector<16x32xf32> to vector<16xf32>
    %926 = vector.shape_cast %925 : vector<16xf32> to vector<16x1xf32>
    %cst_509 = arith.constant 3.200000e+01 : f32
    %927 = vector.broadcast %cst_509 : f32 to vector<16x1xf32>
    %928 = arith.divf %926, %927 : vector<16x1xf32>
    %929 = vector.broadcast %921 : vector<16x1xf32> to vector<16x32xf32>
    %930 = arith.subf %915, %929 : vector<16x32xf32>
    %cst_510 = arith.constant 9.99999974E-6 : f32
    %931 = vector.broadcast %cst_510 : f32 to vector<16x1xf32>
    %932 = arith.addf %928, %931 : vector<16x1xf32>
    %933 = math.rsqrt %932 : vector<16x1xf32>
    %934 = vector.broadcast %933 : vector<16x1xf32> to vector<16x32xf32>
    %935 = arith.mulf %930, %934 : vector<16x32xf32>
    %936 = vector.broadcast %916 : vector<1x32xf32> to vector<16x32xf32>
    %937 = arith.mulf %935, %936 : vector<16x32xf32>
    %938 = vector.broadcast %917 : vector<1x32xf32> to vector<16x32xf32>
    %939 = arith.addf %937, %938 : vector<16x32xf32>
    %c0_511 = arith.constant 0 : index
    %c0_512 = arith.constant 0 : index
    %940 = vector.load %arg25[%c0_511, %c0_512] : memref<1x32xf32, #tpu.memory_space<vmem>>, vector<1x32xf32>
    %c0_513 = arith.constant 0 : index
    %c0_514 = arith.constant 0 : index
    %941 = vector.load %arg26[%c0_513, %c0_514] : memref<1x32xf32, #tpu.memory_space<vmem>>, vector<1x32xf32>
    %cst_515 = arith.constant dense<0.000000e+00> : vector<16xf32>
    %942 = vector.multi_reduction <add>, %939, %cst_515 [1] : vector<16x32xf32> to vector<16xf32>
    %943 = vector.shape_cast %942 : vector<16xf32> to vector<16x1xf32>
    %cst_516 = arith.constant 3.200000e+01 : f32
    %944 = vector.broadcast %cst_516 : f32 to vector<16x1xf32>
    %945 = arith.divf %943, %944 : vector<16x1xf32>
    %946 = vector.broadcast %945 : vector<16x1xf32> to vector<16x32xf32>
    %947 = arith.subf %939, %946 : vector<16x32xf32>
    %948 = arith.mulf %947, %947 : vector<16x32xf32>
    %cst_517 = arith.constant dense<0.000000e+00> : vector<16xf32>
    %949 = vector.multi_reduction <add>, %948, %cst_517 [1] : vector<16x32xf32> to vector<16xf32>
    %950 = vector.shape_cast %949 : vector<16xf32> to vector<16x1xf32>
    %cst_518 = arith.constant 3.200000e+01 : f32
    %951 = vector.broadcast %cst_518 : f32 to vector<16x1xf32>
    %952 = arith.divf %950, %951 : vector<16x1xf32>
    %953 = vector.broadcast %945 : vector<16x1xf32> to vector<16x32xf32>
    %954 = arith.subf %939, %953 : vector<16x32xf32>
    %cst_519 = arith.constant 9.99999974E-6 : f32
    %955 = vector.broadcast %cst_519 : f32 to vector<16x1xf32>
    %956 = arith.addf %952, %955 : vector<16x1xf32>
    %957 = math.rsqrt %956 : vector<16x1xf32>
    %958 = vector.broadcast %957 : vector<16x1xf32> to vector<16x32xf32>
    %959 = arith.mulf %954, %958 : vector<16x32xf32>
    %960 = vector.broadcast %940 : vector<1x32xf32> to vector<16x32xf32>
    %961 = arith.mulf %959, %960 : vector<16x32xf32>
    %962 = vector.broadcast %941 : vector<1x32xf32> to vector<16x32xf32>
    %963 = arith.addf %961, %962 : vector<16x32xf32>
    %c0_520 = arith.constant 0 : index
    %c0_521 = arith.constant 0 : index
    %964 = vector.load %arg27[%c0_520, %c0_521] : memref<32x4xf32, #tpu.memory_space<vmem>>, vector<32x4xf32>
    %cst_522 = arith.constant dense<0.000000e+00> : vector<16x4xf32>
    %965 = tpu.matmul %963, %964, %cst_522 {dimension_numbers = #tpu.dot_dimension_numbers<[1], [0], [0], [1], [0, 0, 1, 1], [], []>} : vector<16x32xf32>, vector<32x4xf32>, vector<16x4xf32> -> vector<16x4xf32>
    %c0_523 = arith.constant 0 : index
    %c0_524 = arith.constant 0 : index
    %966 = vector.load %arg28[%c0_523, %c0_524] : memref<1x4xf32, #tpu.memory_space<vmem>>, vector<1x4xf32>
    %967 = vector.broadcast %966 : vector<1x4xf32> to vector<16x4xf32>
    %968 = arith.addf %965, %967 : vector<16x4xf32>
    %c0_525 = arith.constant 0 : index
    %c0_526 = arith.constant 0 : index
    %969 = vector.load %arg29[%c0_525, %c0_526] : memref<16x4xf32, #tpu.memory_space<vmem>>, vector<16x4xf32>
    tpu.vector_store %arg29[%c0_525, %c0_526], %968 {strides = array<i32>} : memref<16x4xf32, #tpu.memory_space<vmem>>, vector<16x4xf32>,
    return
  }
  func.func @transform_0(%arg0: i32) -> (i32, i32) {
    %c0_i32 = arith.constant 0 : i32
    %c0_i32_0 = arith.constant 0 : i32
    %c0_i32_1 = arith.constant 0 : i32
    return %c0_i32, %c0_i32_0 : i32, i32
  }
  func.func @transform_1(%arg0: i32) -> (i32, i32) {
    %c0_i32 = arith.constant 0 : i32
    %c0_i32_0 = arith.constant 0 : i32
    %c0_i32_1 = arith.constant 0 : i32
    return %c0_i32, %c0_i32_0 : i32, i32
  }
  func.func @transform_2(%arg0: i32) -> (i32, i32, i32) {
    %c0_i32 = arith.constant 0 : i32
    %c0_i32_0 = arith.constant 0 : i32
    %c0_i32_1 = arith.constant 0 : i32
    %c0_i32_2 = arith.constant 0 : i32
    return %c0_i32, %c0_i32_0, %c0_i32_1 : i32, i32, i32
  }
  func.func @transform_3(%arg0: i32) -> (i32, i32) {
    %c0_i32 = arith.constant 0 : i32
    %c0_i32_0 = arith.constant 0 : i32
    %c0_i32_1 = arith.constant 0 : i32
    return %c0_i32, %c0_i32_0 : i32, i32
  }
  func.func @transform_4(%arg0: i32) -> (i32, i32) {
    %c0_i32 = arith.constant 0 : i32
    %c0_i32_0 = arith.constant 0 : i32
    %c0_i32_1 = arith.constant 0 : i32
    return %c0_i32, %c0_i32_0 : i32, i32
  }
  func.func @transform_5(%arg0: i32) -> (i32, i32, i32, i32) {
    %c0_i32 = arith.constant 0 : i32
    %c0_i32_0 = arith.constant 0 : i32
    %c0_i32_1 = arith.constant 0 : i32
    %c0_i32_2 = arith.constant 0 : i32
    %c0_i32_3 = arith.constant 0 : i32
    return %c0_i32, %c0_i32_0, %c0_i32_1, %c0_i32_2 : i32, i32, i32, i32
  }
  func.func @transform_6(%arg0: i32) -> (i32, i32, i32) {
    %c0_i32 = arith.constant 0 : i32
    %c0_i32_0 = arith.constant 0 : i32
    %c0_i32_1 = arith.constant 0 : i32
    %c0_i32_2 = arith.constant 0 : i32
    return %c0_i32, %c0_i32_0, %c0_i32_1 : i32, i32, i32
  }
  func.func @transform_7(%arg0: i32) -> (i32, i32, i32) {
    %c0_i32 = arith.constant 0 : i32
    %c0_i32_0 = arith.constant 0 : i32
    %c0_i32_1 = arith.constant 0 : i32
    %c0_i32_2 = arith.constant 0 : i32
    return %c0_i32, %c0_i32_0, %c0_i32_1 : i32, i32, i32
  }
  func.func @transform_8(%arg0: i32) -> (i32, i32, i32) {
    %c0_i32 = arith.constant 0 : i32
    %c0_i32_0 = arith.constant 0 : i32
    %c0_i32_1 = arith.constant 0 : i32
    %c0_i32_2 = arith.constant 0 : i32
    return %c0_i32, %c0_i32_0, %c0_i32_1 : i32, i32, i32
  }
  func.func @transform_9(%arg0: i32) -> (i32, i32, i32) {
    %c0_i32 = arith.constant 0 : i32
    %c0_i32_0 = arith.constant 0 : i32
    %c0_i32_1 = arith.constant 0 : i32
    %c0_i32_2 = arith.constant 0 : i32
    return %c0_i32, %c0_i32_0, %c0_i32_1 : i32, i32, i32
  }
  func.func @transform_10(%arg0: i32) -> (i32, i32, i32) {
    %c0_i32 = arith.constant 0 : i32
    %c0_i32_0 = arith.constant 0 : i32
    %c0_i32_1 = arith.constant 0 : i32
    %c0_i32_2 = arith.constant 0 : i32
    return %c0_i32, %c0_i32_0, %c0_i32_1 : i32, i32, i32
  }
  func.func @transform_11(%arg0: i32) -> (i32, i32, i32) {
    %c0_i32 = arith.constant 0 : i32
    %c0_i32_0 = arith.constant 0 : i32
    %c0_i32_1 = arith.constant 0 : i32
    %c0_i32_2 = arith.constant 0 : i32
    return %c0_i32, %c0_i32_0, %c0_i32_1 : i32, i32, i32
  }
  func.func @transform_12(%arg0: i32) -> (i32, i32, i32) {
    %c0_i32 = arith.constant 0 : i32
    %c0_i32_0 = arith.constant 0 : i32
    %c0_i32_1 = arith.constant 0 : i32
    %c0_i32_2 = arith.constant 0 : i32
    return %c0_i32, %c0_i32_0, %c0_i32_1 : i32, i32, i32
  }
  func.func @transform_13(%arg0: i32) -> (i32, i32, i32) {
    %c0_i32 = arith.constant 0 : i32
    %c0_i32_0 = arith.constant 0 : i32
    %c0_i32_1 = arith.constant 0 : i32
    %c0_i32_2 = arith.constant 0 : i32
    return %c0_i32, %c0_i32_0, %c0_i32_1 : i32, i32, i32
  }
  func.func @transform_14(%arg0: i32) -> (i32, i32, i32) {
    %c0_i32 = arith.constant 0 : i32
    %c0_i32_0 = arith.constant 0 : i32
    %c0_i32_1 = arith.constant 0 : i32
    %c0_i32_2 = arith.constant 0 : i32
    return %c0_i32, %c0_i32_0, %c0_i32_1 : i32, i32, i32
  }
  func.func @transform_15(%arg0: i32) -> (i32, i32, i32) {
    %c0_i32 = arith.constant 0 : i32
    %c0_i32_0 = arith.constant 0 : i32
    %c0_i32_1 = arith.constant 0 : i32
    %c0_i32_2 = arith.constant 0 : i32
    return %c0_i32, %c0_i32_0, %c0_i32_1 : i32, i32, i32
  }
  func.func @transform_16(%arg0: i32) -> (i32, i32, i32) {
    %c0_i32 = arith.constant 0 : i32
    %c0_i32_0 = arith.constant 0 : i32
    %c0_i32_1 = arith.constant 0 : i32
    %c0_i32_2 = arith.constant 0 : i32
    return %c0_i32, %c0_i32_0, %c0_i32_1 : i32, i32, i32
  }
  func.func @transform_17(%arg0: i32) -> (i32, i32, i32) {
    %c0_i32 = arith.constant 0 : i32
    %c0_i32_0 = arith.constant 0 : i32
    %c0_i32_1 = arith.constant 0 : i32
    %c0_i32_2 = arith.constant 0 : i32
    return %c0_i32, %c0_i32_0, %c0_i32_1 : i32, i32, i32
  }
  func.func @transform_18(%arg0: i32) -> (i32, i32, i32) {
    %c0_i32 = arith.constant 0 : i32
    %c0_i32_0 = arith.constant 0 : i32
    %c0_i32_1 = arith.constant 0 : i32
    %c0_i32_2 = arith.constant 0 : i32
    return %c0_i32, %c0_i32_0, %c0_i32_1 : i32, i32, i32
  }
  func.func @transform_19(%arg0: i32) -> (i32, i32, i32) {
    %c0_i32 = arith.constant 0 : i32
    %c0_i32_0 = arith.constant 0 : i32
    %c0_i32_1 = arith.constant 0 : i32
    %c0_i32_2 = arith.constant 0 : i32
    return %c0_i32, %c0_i32_0, %c0_i32_1 : i32, i32, i32
  }
  func.func @transform_20(%arg0: i32) -> (i32, i32, i32, i32) {
    %c0_i32 = arith.constant 0 : i32
    %c0_i32_0 = arith.constant 0 : i32
    %c0_i32_1 = arith.constant 0 : i32
    %c0_i32_2 = arith.constant 0 : i32
    %c0_i32_3 = arith.constant 0 : i32
    return %c0_i32, %c0_i32_0, %c0_i32_1, %c0_i32_2 : i32, i32, i32, i32
  }
  func.func @transform_21(%arg0: i32) -> (i32, i32, i32, i32) {
    %c0_i32 = arith.constant 0 : i32
    %c0_i32_0 = arith.constant 0 : i32
    %c0_i32_1 = arith.constant 0 : i32
    %c0_i32_2 = arith.constant 0 : i32
    %c0_i32_3 = arith.constant 0 : i32
    return %c0_i32, %c0_i32_0, %c0_i32_1, %c0_i32_2 : i32, i32, i32, i32
  }
  func.func @transform_22(%arg0: i32) -> (i32, i32, i32, i32) {
    %c0_i32 = arith.constant 0 : i32
    %c0_i32_0 = arith.constant 0 : i32
    %c0_i32_1 = arith.constant 0 : i32
    %c0_i32_2 = arith.constant 0 : i32
    %c0_i32_3 = arith.constant 0 : i32
    return %c0_i32, %c0_i32_0, %c0_i32_1, %c0_i32_2 : i32, i32, i32, i32
  }
  func.func @transform_23(%arg0: i32) -> (i32, i32, i32, i32) {
    %c0_i32 = arith.constant 0 : i32
    %c0_i32_0 = arith.constant 0 : i32
    %c0_i32_1 = arith.constant 0 : i32
    %c0_i32_2 = arith.constant 0 : i32
    %c0_i32_3 = arith.constant 0 : i32
    return %c0_i32, %c0_i32_0, %c0_i32_1, %c0_i32_2 : i32, i32, i32, i32
  }
  func.func @transform_24(%arg0: i32) -> (i32, i32) {
    %c0_i32 = arith.constant 0 : i32
    %c0_i32_0 = arith.constant 0 : i32
    %c0_i32_1 = arith.constant 0 : i32
    return %c0_i32, %c0_i32_0 : i32, i32
  }
  func.func @transform_25(%arg0: i32) -> (i32, i32) {
    %c0_i32 = arith.constant 0 : i32
    %c0_i32_0 = arith.constant 0 : i32
    %c0_i32_1 = arith.constant 0 : i32
    return %c0_i32, %c0_i32_0 : i32, i32
  }
  func.func @transform_26(%arg0: i32) -> (i32, i32) {
    %c0_i32 = arith.constant 0 : i32
    %c0_i32_0 = arith.constant 0 : i32
    %c0_i32_1 = arith.constant 0 : i32
    return %c0_i32, %c0_i32_0 : i32, i32
  }
  func.func @transform_27(%arg0: i32) -> (i32, i32) {
    %c0_i32 = arith.constant 0 : i32
    %c0_i32_0 = arith.constant 0 : i32
    %c0_i32_1 = arith.constant 0 : i32
    return %c0_i32, %c0_i32_0 : i32, i32
  }
  func.func @transform_28(%arg0: i32) -> (i32, i32) {
    %c0_i32 = arith.constant 0 : i32
    %c0_i32_0 = arith.constant 0 : i32
    %c0_i32_1 = arith.constant 0 : i32
    return %c0_i32, %c0_i32_0 : i32, i32
  }
  func.func @transform_29(%arg0: i32) -> (i32, i32, i32) {
    %c0_i32 = arith.constant 0 : i32
    %c0_i32_0 = arith.constant 0 : i32
    %c0_i32_1 = arith.constant 0 : i32
    %c0_i32_2 = arith.constant 0 : i32
    return %c0_i32, %c0_i32_0, %c0_i32_1 : i32, i32, i32
  }
  func.func @transform_30(%arg0: i32) -> (i32, i32, i32) {
    %c0_i32 = arith.constant 0 : i32
    %c0_i32_0 = arith.constant 0 : i32
    %c0_i32_1 = arith.constant 0 : i32
    %c0_i32_2 = arith.constant 0 : i32
    return %c0_i32, %c0_i32_0, %c0_i32_1 : i32, i32, i32
  }
  func.func @transform_31(%arg0: i32) -> (i32, i32, i32) {
    %c0_i32 = arith.constant 0 : i32
    %c0_i32_0 = arith.constant 0 : i32
    %c0_i32_1 = arith.constant 0 : i32
    %c0_i32_2 = arith.constant 0 : i32
    return %c0_i32, %c0_i32_0, %c0_i32_1 : i32, i32, i32
  }
}

</mosaic_0001>

<llo_original>
// kernel: anomaly_transformer_fwd.1
$region0: #{anomaly_transformer_fwd.1}
  #allocation0 [shape = 'u32[]', space=smem, size = 0x4, offset = 0x4, fixed_abs, tag = 'smem constant byte address 0x4 - core index']
  #allocation1 [shape = 'u32[144,128]{1,0:T(1,128)}', space=vmem, size = 0x12000, scoped, tag = 'internal scratch']
  #allocation2 [shape = 'f32[16,32]{1,0:T(8,128)}', space=vmem, size = 0x2000, scoped, tag = 'scratch operand']
  %s0 = inlined_call_operand.smem [shape: u32[32], index: -1, kind: input, shape index: {}]
  %s1 = sld [smem:[%s0]]
  %s2 = scalar_lea.smem %s0, 1
  %s3 = sld [smem:[%s2]]
  %s4 = scalar_lea.smem %s0, 2
  %s5 = sld [smem:[%s4]]
  %s6 = scalar_lea.smem %s0, 3
  %s7 = sld [smem:[%s6]]
  %s8 = scalar_lea.smem %s0, 4
  %s9 = sld [smem:[%s8]]
  %s10 = scalar_lea.smem %s0, 5
  %s11 = sld [smem:[%s10]]
  %s12 = scalar_lea.smem %s0, 6
  %s13 = sld [smem:[%s12]]
  %s14 = scalar_lea.smem %s0, 7
  %s15 = sld [smem:[%s14]]
  %s16 = scalar_lea.smem %s0, 8
  %s17 = sld [smem:[%s16]]
  %s18 = scalar_lea.smem %s0, 9
  %s19 = sld [smem:[%s18]]
  %s20 = scalar_lea.smem %s0, 10
  %s21 = sld [smem:[%s20]]
  %s22 = scalar_lea.smem %s0, 11
  %s23 = sld [smem:[%s22]]
  %s24 = scalar_lea.smem %s0, 12
  %s25 = sld [smem:[%s24]]
  %s26 = scalar_lea.smem %s0, 13
  %s27 = sld [smem:[%s26]]
  %s28 = scalar_lea.smem %s0, 14
  %s29 = sld [smem:[%s28]]
  %s30 = scalar_lea.smem %s0, 15
  %s31 = sld [smem:[%s30]]
  %s32 = scalar_lea.smem %s0, 16
  %s33 = sld [smem:[%s32]]
  %s34 = scalar_lea.smem %s0, 17
  %s35 = sld [smem:[%s34]]
  %s36 = scalar_lea.smem %s0, 18
  %s37 = sld [smem:[%s36]]
  %s38 = scalar_lea.smem %s0, 19
  %s39 = sld [smem:[%s38]]
  %s40 = scalar_lea.smem %s0, 20
  %s41 = sld [smem:[%s40]]
  %s42 = scalar_lea.smem %s0, 21
  %s43 = sld [smem:[%s42]]
  %s44 = scalar_lea.smem %s0, 22
  %s45 = sld [smem:[%s44]]
  %s46 = scalar_lea.smem %s0, 23
  %s47 = sld [smem:[%s46]]
  %s48 = scalar_lea.smem %s0, 24
  %s49 = sld [smem:[%s48]]
  %s50 = scalar_lea.smem %s0, 25
  %s51 = sld [smem:[%s50]]
  %s52 = scalar_lea.smem %s0, 26
  %s53 = sld [smem:[%s52]]
  %s54 = scalar_lea.smem %s0, 27
  %s55 = sld [smem:[%s54]]
  %s56 = scalar_lea.smem %s0, 28
  %s57 = sld [smem:[%s56]]
  %s58 = scalar_lea.smem %s0, 29
  %s59 = sld [smem:[%s58]]
  %s60 = scalar_lea.smem %s0, 30
  %s61 = sld [smem:[%s60]]
  %s62 = scalar_lea.smem %s0, 31
  %s63 = sld [smem:[%s62]]
  %64 = xla_tuple %s57, %s59, %s61, %s63
  %s65 = sld [smem:[#allocation0]]
  $region190: #{anomaly_transformer_fwd.1} parent=0
    _
  %s67 = ssub.s32 1, %s65
  %s68 = scalar_select 0, %s67, %s65
  $region1: #{anomaly_transformer_fwd.1} parent=0
    #allocation3 [shape = 'u8[1024]{0}', space=vmem, size = 0x400, scoped, tag = 'input window, operand 12, single buffered']
    #allocation4 [shape = 's32[1]{0}', space=sflag, size = 0x4, scoped, tag = 'scoped memory for anomaly_transformer_fwd.1']
    #allocation5 [shape = 'u8[1024]{0}', space=vmem, size = 0x400, scoped, tag = 'input window, operand 14, single buffered']
    #allocation6 [shape = 's32[1]{0}', space=sflag, size = 0x4, scoped, tag = 'scoped memory for anomaly_transformer_fwd.1']
    #allocation7 [shape = 'u8[1024]{0}', space=vmem, size = 0x400, scoped, tag = 'input window, operand 16, single buffered']
    #allocation8 [shape = 'u8[32768]{0}', space=vmem, size = 0x8000, scoped, tag = 'input window, operand 17, single buffered']
    #allocation9 [shape = 's32[1]{0}', space=sflag, size = 0x4, scoped, tag = 'scoped memory for anomaly_transformer_fwd.1']
    #allocation10 [shape = 'u8[1024]{0}', space=vmem, size = 0x400, scoped, tag = 'input window, operand 18, single buffered']
    #allocation11 [shape = 'u8[8192]{0}', space=vmem, size = 0x2000, scoped, tag = 'input window, operand 19, single buffered']
    #allocation12 [shape = 's32[1]{0}', space=sflag, size = 0x4, scoped, tag = 'scoped memory for anomaly_transformer_fwd.1']
    #allocation13 [shape = 'u8[2048]{0}', space=vmem, size = 0x800, scoped, tag = 'input window, operand 21, single buffered']
    #allocation14 [shape = 'u8[2048]{0}', space=vmem, size = 0x800, scoped, tag = 'input window, operand 23, single buffered']
    #allocation15 [shape = 's32[1]{0}', space=sflag, size = 0x4, scoped, tag = 'scoped memory for anomaly_transformer_fwd.1']
    #allocation16 [shape = 'u8[512]{0}', space=vmem, size = 0x400, scoped, tag = 'input window, operand 24, single buffered']
    #allocation17 [shape = 'u8[512]{0}', space=vmem, size = 0x400, scoped, tag = 'input window, operand 25, single buffered']
    #allocation18 [shape = 's32[1]{0}', space=sflag, size = 0x4, scoped, tag = 'scoped memory for anomaly_transformer_fwd.1']
    #allocation19 [shape = 'u8[512]{0}', space=vmem, size = 0x400, scoped, tag = 'input window, operand 27, single buffered']
    %69 = vsyncpa [#allocation4], 0
    %70 = vsyncpa [#allocation6], 0
    %71 = vsyncpa [#allocation9], 0
    %72 = vsyncpa [#allocation12], 0
    %73 = vsyncpa [#allocation15], 0
    %74 = vsyncpa [#allocation18], 0
    // Predicated region
    $region2: #{anomaly_transformer_fwd.1} parent=1 // pred_check
      _
    $region3: #{anomaly_transformer_fwd.1} parent=1 // pred_check_branch
      %76 = sbr.rel (0) target = $region5
    $region4: #{anomaly_transformer_fwd.1} parent=1 // pred_region
      _
    $region5: #{anomaly_transformer_fwd.1} parent=1 // pred_fallthru
      _
    // Predicated region
    $region6: #{anomaly_transformer_fwd.1} parent=1 // pred_check
      _
    $region7: #{anomaly_transformer_fwd.1} parent=1 // pred_check_branch
      %78 = sbr.rel (0) target = $region9
    $region8: #{anomaly_transformer_fwd.1} parent=1 // pred_region
      _
    $region9: #{anomaly_transformer_fwd.1} parent=1 // pred_fallthru
      _
    // Predicated region
    $region10: #{anomaly_transformer_fwd.1} parent=1 // pred_check
      _
    $region11: #{anomaly_transformer_fwd.1} parent=1 // pred_check_branch
      %80 = sbr.rel (0) target = $region13
    $region12: #{anomaly_transformer_fwd.1} parent=1 // pred_region
      _
    $region13: #{anomaly_transformer_fwd.1} parent=1 // pred_fallthru
      _
    // Predicated region
    $region14: #{anomaly_transformer_fwd.1} parent=1 // pred_check
      _
    $region15: #{anomaly_transformer_fwd.1} parent=1 // pred_check_branch
      %82 = sbr.rel (0) target = $region17
    $region16: #{anomaly_transformer_fwd.1} parent=1 // pred_region
      _
    $region17: #{anomaly_transformer_fwd.1} parent=1 // pred_fallthru
      _
    // Predicated region
    $region18: #{anomaly_transformer_fwd.1} parent=1 // pred_check
      _
    $region19: #{anomaly_transformer_fwd.1} parent=1 // pred_check_branch
      %84 = sbr.rel (0) target = $region21
    $region20: #{anomaly_transformer_fwd.1} parent=1 // pred_region
      _
    $region21: #{anomaly_transformer_fwd.1} parent=1 // pred_fallthru
      _
    // Predicated region
    $region22: #{anomaly_transformer_fwd.1} parent=1 // pred_check
      _
    $region23: #{anomaly_transformer_fwd.1} parent=1 // pred_check_branch
      %86 = sbr.rel (0) target = $region25
    $region24: #{anomaly_transformer_fwd.1} parent=1 // pred_region
      _
    $region25: #{anomaly_transformer_fwd.1} parent=1 // pred_fallthru
      _
    // Predicated region
    $region26: #{anomaly_transformer_fwd.1} parent=1 // pred_check
      _
    $region27: #{anomaly_transformer_fwd.1} parent=1 // pred_check_branch
      %88 = sbr.rel (0) target = $region29
    $region28: #{anomaly_transformer_fwd.1} parent=1 // pred_region
      _
    $region29: #{anomaly_transformer_fwd.1} parent=1 // pred_fallthru
      _
    // Predicated region
    $region30: #{anomaly_transformer_fwd.1} parent=1 // pred_check
      _
    $region31: #{anomaly_transformer_fwd.1} parent=1 // pred_check_branch
      %90 = sbr.rel (0) target = $region33
    $region32: #{anomaly_transformer_fwd.1} parent=1 // pred_region
      _
    $region33: #{anomaly_transformer_fwd.1} parent=1 // pred_fallthru
      _
    // Predicated region
    $region34: #{anomaly_transformer_fwd.1} parent=1 // pred_check
      _
    $region35: #{anomaly_transformer_fwd.1} parent=1 // pred_check_branch
      %92 = sbr.rel (0) target = $region37
    $region36: #{anomaly_transformer_fwd.1} parent=1 // pred_region
      _
    $region37: #{anomaly_transformer_fwd.1} parent=1 // pred_fallthru
      _
    // Predicated region
    $region38: #{anomaly_transformer_fwd.1} parent=1 // pred_check
      _
    $region39: #{anomaly_transformer_fwd.1} parent=1 // pred_check_branch
      %94 = sbr.rel (0) target = $region41
    $region40: #{anomaly_transformer_fwd.1} parent=1 // pred_region
      _
    $region41: #{anomaly_transformer_fwd.1} parent=1 // pred_fallthru
      _
    // Predicated region
    $region42: #{anomaly_transformer_fwd.1} parent=1 // pred_check
      _
    $region43: #{anomaly_transformer_fwd.1} parent=1 // pred_check_branch
      %96 = sbr.rel (0) target = $region45
    $region44: #{anomaly_transformer_fwd.1} parent=1 // pred_region
      _
    $region45: #{anomaly_transformer_fwd.1} parent=1 // pred_fallthru
      _
    // Predicated region
    $region46: #{anomaly_transformer_fwd.1} parent=1 // pred_check
      _
    $region47: #{anomaly_transformer_fwd.1} parent=1 // pred_check_branch
      %98 = sbr.rel (0) target = $region49
    $region48: #{anomaly_transformer_fwd.1} parent=1 // pred_region
      _
    $region49: #{anomaly_transformer_fwd.1} parent=1 // pred_fallthru
      _
    // Predicated region
    $region50: #{anomaly_transformer_fwd.1} parent=1 // pred_check
      _
    $region51: #{anomaly_transformer_fwd.1} parent=1 // pred_check_branch
      %100 = sbr.rel (0) target = $region53
    $region52: #{anomaly_transformer_fwd.1} parent=1 // pred_region
      %s102 = ssub.s32 32, 32
      %103 = vsyncadd [#allocation4], %s102
      %s104 = sshll.u32 [#allocation3], 4
      %s105 = int_to_ptr.vmem [resolvable:$true] %s104
      %110 = dma.hbm_to_vmem [thread:$0]  %s25, 32, %s105, [#allocation4], 16, 16, 1
    $region53: #{anomaly_transformer_fwd.1} parent=1 // pred_fallthru
      _
    // Predicated region
    $region54: #{anomaly_transformer_fwd.1} parent=1 // pred_check
      _
    $region55: #{anomaly_transformer_fwd.1} parent=1 // pred_check_branch
      %112 = sbr.rel (0) target = $region57
    $region56: #{anomaly_transformer_fwd.1} parent=1 // pred_region
      _
    $region57: #{anomaly_transformer_fwd.1} parent=1 // pred_fallthru
      _
    // Predicated region
    $region58: #{anomaly_transformer_fwd.1} parent=1 // pred_check
      _
    $region59: #{anomaly_transformer_fwd.1} parent=1 // pred_check_branch
      %114 = sbr.rel (0) target = $region61
    $region60: #{anomaly_transformer_fwd.1} parent=1 // pred_region
      %s116 = ssub.s32 32, 32
      %117 = vsyncadd [#allocation6], %s116
      %s118 = sshll.u32 [#allocation5], 4
      %s119 = int_to_ptr.vmem [resolvable:$true] %s118
      %124 = dma.hbm_to_vmem [thread:$0]  %s29, 32, %s119, [#allocation6], 16, 16, 1
    $region61: #{anomaly_transformer_fwd.1} parent=1 // pred_fallthru
      _
    // Predicated region
    $region62: #{anomaly_transformer_fwd.1} parent=1 // pred_check
      _
    $region63: #{anomaly_transformer_fwd.1} parent=1 // pred_check_branch
      %126 = sbr.rel (0) target = $region65
    $region64: #{anomaly_transformer_fwd.1} parent=1 // pred_region
      _
    $region65: #{anomaly_transformer_fwd.1} parent=1 // pred_fallthru
      _
    // Predicated region
    $region66: #{anomaly_transformer_fwd.1} parent=1 // pred_check
      _
    $region67: #{anomaly_transformer_fwd.1} parent=1 // pred_check_branch
      %128 = sbr.rel (0) target = $region69
    $region68: #{anomaly_transformer_fwd.1} parent=1 // pred_region
      %s130 = ssub.s32 32, 32
      %131 = vsyncadd [#allocation6], %s130
      %s132 = sshll.u32 [#allocation7], 4
      %s133 = int_to_ptr.vmem [resolvable:$true] %s132
      %138 = dma.hbm_to_vmem [thread:$0]  %s33, 32, %s133, [#allocation6], 16, 16, 1
    $region69: #{anomaly_transformer_fwd.1} parent=1 // pred_fallthru
      _
    // Predicated region
    $region70: #{anomaly_transformer_fwd.1} parent=1 // pred_check
      _
    $region71: #{anomaly_transformer_fwd.1} parent=1 // pred_check_branch
      %140 = sbr.rel (0) target = $region73
    $region72: #{anomaly_transformer_fwd.1} parent=1 // pred_region
      %s142 = ssub.s32 1024, 1024
      %143 = vsyncadd [#allocation9], %s142
      %s144 = sshll.u32 [#allocation8], 4
      %s145 = int_to_ptr.vmem [resolvable:$true] %s144
      %150 = dma.hbm_to_vmem [thread:$0]  %s35, 1024, %s145, [#allocation9], 128, 128, 8
    $region73: #{anomaly_transformer_fwd.1} parent=1 // pred_fallthru
      _
    // Predicated region
    $region74: #{anomaly_transformer_fwd.1} parent=1 // pred_check
      _
    $region75: #{anomaly_transformer_fwd.1} parent=1 // pred_check_branch
      %152 = sbr.rel (0) target = $region77
    $region76: #{anomaly_transformer_fwd.1} parent=1 // pred_region
      %s154 = ssub.s32 32, 32
      %155 = vsyncadd [#allocation9], %s154
      %s156 = sshll.u32 [#allocation10], 4
      %s157 = int_to_ptr.vmem [resolvable:$true] %s156
      %162 = dma.hbm_to_vmem [thread:$0]  %s37, 32, %s157, [#allocation9], 16, 16, 1
    $region77: #{anomaly_transformer_fwd.1} parent=1 // pred_fallthru
      _
    // Predicated region
    $region78: #{anomaly_transformer_fwd.1} parent=1 // pred_check
      _
    $region79: #{anomaly_transformer_fwd.1} parent=1 // pred_check_branch
      %164 = sbr.rel (0) target = $region81
    $region80: #{anomaly_transformer_fwd.1} parent=1 // pred_region
      %s166 = ssub.s32 256, 256
      %167 = vsyncadd [#allocation12], %s166
      %s168 = sshll.u32 [#allocation11], 4
      %s169 = int_to_ptr.vmem [resolvable:$true] %s168
      %174 = dma.hbm_to_vmem [thread:$0]  %s39, 256, %s169, [#allocation12], 128, 128, 8
    $region81: #{anomaly_transformer_fwd.1} parent=1 // pred_fallthru
      _
    // Predicated region
    $region82: #{anomaly_transformer_fwd.1} parent=1 // pred_check
      _
    $region83: #{anomaly_transformer_fwd.1} parent=1 // pred_check_branch
      %176 = sbr.rel (0) target = $region85
    $region84: #{anomaly_transformer_fwd.1} parent=1 // pred_region
      _
    $region85: #{anomaly_transformer_fwd.1} parent=1 // pred_fallthru
      _
    // Predicated region
    $region86: #{anomaly_transformer_fwd.1} parent=1 // pred_check
      _
    $region87: #{anomaly_transformer_fwd.1} parent=1 // pred_check_branch
      %178 = sbr.rel (0) target = $region89
    $region88: #{anomaly_transformer_fwd.1} parent=1 // pred_region
      %s180 = ssub.s32 64, 64
      %181 = vsyncadd [#allocation12], %s180
      %s182 = sshll.u32 [#allocation13], 4
      %s183 = int_to_ptr.vmem [resolvable:$true] %s182
      %188 = dma.hbm_to_vmem [thread:$0]  %s43, 64, %s183, [#allocation12], 16, 16, 1
    $region89: #{anomaly_transformer_fwd.1} parent=1 // pred_fallthru
      _
    // Predicated region
    $region90: #{anomaly_transformer_fwd.1} parent=1 // pred_check
      _
    $region91: #{anomaly_transformer_fwd.1} parent=1 // pred_check_branch
      %190 = sbr.rel (0) target = $region93
    $region92: #{anomaly_transformer_fwd.1} parent=1 // pred_region
      _
    $region93: #{anomaly_transformer_fwd.1} parent=1 // pred_fallthru
      _
    // Predicated region
    $region94: #{anomaly_transformer_fwd.1} parent=1 // pred_check
      _
    $region95: #{anomaly_transformer_fwd.1} parent=1 // pred_check_branch
      %192 = sbr.rel (0) target = $region97
    $region96: #{anomaly_transformer_fwd.1} parent=1 // pred_region
      %s194 = ssub.s32 64, 64
      %195 = vsyncadd [#allocation15], %s194
      %s196 = sshll.u32 [#allocation14], 4
      %s197 = int_to_ptr.vmem [resolvable:$true] %s196
      %202 = dma.hbm_to_vmem [thread:$0]  %s47, 64, %s197, [#allocation15], 16, 16, 1
    $region97: #{anomaly_transformer_fwd.1} parent=1 // pred_fallthru
      _
    // Predicated region
    $region98: #{anomaly_transformer_fwd.1} parent=1 // pred_check
      _
    $region99: #{anomaly_transformer_fwd.1} parent=1 // pred_check_branch
      %204 = sbr.rel (0) target = $region101
    $region100: #{anomaly_transformer_fwd.1} parent=1 // pred_region
      %s206 = ssub.s32 16, 16
      %207 = vsyncadd [#allocation15], %s206
      %s209 = sshll.u32 [#allocation16], 4
      %s210 = int_to_ptr.vmem [resolvable:$true] %s209
      %212 = dma.hbm_to_vmem [thread:$0]  %s49, 16, %s210, [#allocation15]
    $region101: #{anomaly_transformer_fwd.1} parent=1 // pred_fallthru
      _
    // Predicated region
    $region102: #{anomaly_transformer_fwd.1} parent=1 // pred_check
      _
    $region103: #{anomaly_transformer_fwd.1} parent=1 // pred_check_branch
      %214 = sbr.rel (0) target = $region105
    $region104: #{anomaly_transformer_fwd.1} parent=1 // pred_region
      %s216 = ssub.s32 16, 16
      %217 = vsyncadd [#allocation18], %s216
      %s219 = sshll.u32 [#allocation17], 4
      %s220 = int_to_ptr.vmem [resolvable:$true] %s219
      %222 = dma.hbm_to_vmem [thread:$0]  %s51, 16, %s220, [#allocation18]
    $region105: #{anomaly_transformer_fwd.1} parent=1 // pred_fallthru
      _
    // Predicated region
    $region106: #{anomaly_transformer_fwd.1} parent=1 // pred_check
      _
    $region107: #{anomaly_transformer_fwd.1} parent=1 // pred_check_branch
      %224 = sbr.rel (0) target = $region109
    $region108: #{anomaly_transformer_fwd.1} parent=1 // pred_region
      _
    $region109: #{anomaly_transformer_fwd.1} parent=1 // pred_fallthru
      _
    // Predicated region
    $region110: #{anomaly_transformer_fwd.1} parent=1 // pred_check
      _
    $region111: #{anomaly_transformer_fwd.1} parent=1 // pred_check_branch
      %226 = sbr.rel (0) target = $region113
    $region112: #{anomaly_transformer_fwd.1} parent=1 // pred_region
      %s228 = ssub.s32 16, 16
      %229 = vsyncadd [#allocation18], %s228
      %s231 = sshll.u32 [#allocation19], 4
      %s232 = int_to_ptr.vmem [resolvable:$true] %s231
      %234 = dma.hbm_to_vmem [thread:$0]  %s55, 16, %s232, [#allocation18]
    $region113: #{anomaly_transformer_fwd.1} parent=1 // pred_fallthru
      _
    // Predicated region
    $region114: #{anomaly_transformer_fwd.1} parent=1 // pred_check
      _
    $region115: #{anomaly_transformer_fwd.1} parent=1 // pred_check_branch
      %236 = sbr.rel (0) target = $region117
    $region116: #{anomaly_transformer_fwd.1} parent=1 // pred_region
      %237 = dma.done [#allocation4], 32
    $region117: #{anomaly_transformer_fwd.1} parent=1 // pred_fallthru
      _
    // Predicated region
    $region118: #{anomaly_transformer_fwd.1} parent=1 // pred_check
      _
    $region119: #{anomaly_transformer_fwd.1} parent=1 // pred_check_branch
      %239 = sbr.rel (0) target = $region121
    $region120: #{anomaly_transformer_fwd.1} parent=1 // pred_region
      %240 = dma.done [#allocation6], 32
    $region121: #{anomaly_transformer_fwd.1} parent=1 // pred_fallthru
      _
    // Predicated region
    $region122: #{anomaly_transformer_fwd.1} parent=1 // pred_check
      _
    $region123: #{anomaly_transformer_fwd.1} parent=1 // pred_check_branch
      %242 = sbr.rel (0) target = $region125
    $region124: #{anomaly_transformer_fwd.1} parent=1 // pred_region
      %243 = dma.done [#allocation6], 32
    $region125: #{anomaly_transformer_fwd.1} parent=1 // pred_fallthru
      _
    // Predicated region
    $region126: #{anomaly_transformer_fwd.1} parent=1 // pred_check
      _
    $region127: #{anomaly_transformer_fwd.1} parent=1 // pred_check_branch
      %245 = sbr.rel (0) target = $region129
    $region128: #{anomaly_transformer_fwd.1} parent=1 // pred_region
      %246 = dma.done [#allocation9], 1024
    $region129: #{anomaly_transformer_fwd.1} parent=1 // pred_fallthru
      _
    // Predicated region
    $region130: #{anomaly_transformer_fwd.1} parent=1 // pred_check
      _
    $region131: #{anomaly_transformer_fwd.1} parent=1 // pred_check_branch
      %248 = sbr.rel (0) target = $region133
    $region132: #{anomaly_transformer_fwd.1} parent=1 // pred_region
      %249 = dma.done [#allocation9], 32
    $region133: #{anomaly_transformer_fwd.1} parent=1 // pred_fallthru
      _
    // Predicated region
    $region134: #{anomaly_transformer_fwd.1} parent=1 // pred_check
      _
    $region135: #{anomaly_transformer_fwd.1} parent=1 // pred_check_branch
      %251 = sbr.rel (0) target = $region137
    $region136: #{anomaly_transformer_fwd.1} parent=1 // pred_region
      %252 = dma.done [#allocation12], 256
    $region137: #{anomaly_transformer_fwd.1} parent=1 // pred_fallthru
      _
    // Predicated region
    $region138: #{anomaly_transformer_fwd.1} parent=1 // pred_check
      _
    $region139: #{anomaly_transformer_fwd.1} parent=1 // pred_check_branch
      %254 = sbr.rel (0) target = $region141
    $region140: #{anomaly_transformer_fwd.1} parent=1 // pred_region
      %255 = dma.done [#allocation12], 64
    $region141: #{anomaly_transformer_fwd.1} parent=1 // pred_fallthru
      _
    // Predicated region
    $region142: #{anomaly_transformer_fwd.1} parent=1 // pred_check
      _
    $region143: #{anomaly_transformer_fwd.1} parent=1 // pred_check_branch
      %257 = sbr.rel (0) target = $region145
    $region144: #{anomaly_transformer_fwd.1} parent=1 // pred_region
      %258 = dma.done [#allocation15], 64
    $region145: #{anomaly_transformer_fwd.1} parent=1 // pred_fallthru
      _
    // Predicated region
    $region146: #{anomaly_transformer_fwd.1} parent=1 // pred_check
      _
    $region147: #{anomaly_transformer_fwd.1} parent=1 // pred_check_branch
      %260 = sbr.rel (0) target = $region149
    $region148: #{anomaly_transformer_fwd.1} parent=1 // pred_region
      %261 = dma.done [#allocation15], 16
    $region149: #{anomaly_transformer_fwd.1} parent=1 // pred_fallthru
      _
    // Predicated region
    $region150: #{anomaly_transformer_fwd.1} parent=1 // pred_check
      _
    $region151: #{anomaly_transformer_fwd.1} parent=1 // pred_check_branch
      %263 = sbr.rel (0) target = $region153
    $region152: #{anomaly_transformer_fwd.1} parent=1 // pred_region
      %264 = dma.done [#allocation18], 16
    $region153: #{anomaly_transformer_fwd.1} parent=1 // pred_fallthru
      _
    // Predicated region
    $region154: #{anomaly_transformer_fwd.1} parent=1 // pred_check
      _
    $region155: #{anomaly_transformer_fwd.1} parent=1 // pred_check_branch
      %266 = sbr.rel (0) target = $region157
    $region156: #{anomaly_transformer_fwd.1} parent=1 // pred_region
      %267 = dma.done [#allocation18], 16
    $region157: #{anomaly_transformer_fwd.1} parent=1 // pred_fallthru
      _
    %v268 = vld [vmem:[%s5] sm:$0xff]
    %v269 = vld [vmem:[%s5 + $0x8] sm:$0xff]
    %s270 = scalar_lea.vmem %s5, 16
    %v271 = vld [vmem:[%s270] sm:$0xff]
    %v272 = vld [vmem:[%s270 + $0x8] sm:$0xff]
    %s273 = scalar_lea.vmem %s5, 32
    %v274 = vld [vmem:[%s273] sm:$0xff]
    %v275 = vld [vmem:[%s273 + $0x8] sm:$0xff]
    %s276 = scalar_lea.vmem %s5, 48
    %v277 = vld [vmem:[%s276] sm:$0xff]
    %v278 = vld [vmem:[%s276 + $0x8] sm:$0xff]
    %v279 = vld [vmem:[%s7] sm:$0xff]
    %v280 = vld [vmem:[%s7 + $0x8] sm:$0xff]
    %v281 = vld [vmem:[%s9] sm:$0xff]
    %v282 = vld [vmem:[%s1] sm:$0xff]
    %v283 = vld [vmem:[%s1 + $0x8] sm:$0xff]
    %v284 = vld [vmem:[%s13] sm:$0x1]
    %vm285 = vcmask 130048
    %v287 = vsel %vm285, %v268, 0
    %v290 = vsel %vm285, %v269, 0
    %292 = vmatprep.subr.mxu0 0.0
    %293 = vmatpush1.msra.mxu0 %v282
    %294 = vmatprep.subr.mxu0 0.0
    %295 = vmatpush1.msra.mxu0 %v283
    %296 = vmatprep.subr.mxu0 0.0
    %297 = vmatpush1.msra.mxu0 0.0
    %298 = vmatprep.subr.mxu0 0.0
    %299 = vmatpush1.msra.mxu0 0.0
    %300 = vmatprep.subr.mxu0 0.0
    %301 = vmatpush1.msra.mxu0 0.0
    %302 = vmatprep.subr.mxu0 0.0
    %303 = vmatpush1.msra.mxu0 0.0
    %304 = vmatprep.subr.mxu0 0.0
    %305 = vmatpush1.msra.mxu0 0.0
    %306 = vmatprep.subr.mxu0 0.0
    %307 = vmatpush1.msra.mxu0 0.0
    %308 = vmatprep.subr.mxu0 0.0
    %309 = vmatpush1.msra.mxu0 0.0
    %310 = vmatprep.subr.mxu0 0.0
    %311 = vmatpush1.msra.mxu0 0.0
    %312 = vmatprep.subr.mxu0 0.0
    %313 = vmatpush1.msra.mxu0 0.0
    %314 = vmatprep.subr.mxu0 0.0
    %315 = vmatpush1.msra.mxu0 0.0
    %316 = vmatprep.subr.mxu0 0.0
    %317 = vmatpush1.msra.mxu0 0.0
    %318 = vmatprep.subr.mxu0 0.0
    %319 = vmatpush1.msra.mxu0 0.0
    %320 = vmatprep.subr.mxu0 0.0
    %321 = vmatpush1.msra.mxu0 0.0
    %322 = vmatprep.subr.mxu0 0.0
    %323 = vmatpush1.msra.mxu0 0.0
    %324 = vmatprep.subr.mxu0 0.0
    %325 = vmatpush1.msra.mxu0 0.0
    %326 = vmatprep.subr.mxu0 0.0
    %327 = vmatpush1.msra.mxu0 0.0
    %328 = vmatprep.subr.mxu0 0.0
    %329 = vmatpush1.msra.mxu0 0.0
    %330 = vmatprep.subr.mxu0 0.0
    %331 = vmatpush1.msra.mxu0 0.0
    %332 = vmatprep.subr.mxu0 0.0
    %333 = vmatpush1.msra.mxu0 0.0
    %334 = vmatprep.subr.mxu0 0.0
    %335 = vmatpush1.msra.mxu0 0.0
    %336 = vmatprep.subr.mxu0 0.0
    %337 = vmatpush1.msra.mxu0 0.0
    %338 = vmatprep.subr.mxu0 0.0
    %339 = vmatpush1.msra.mxu0 0.0
    %340 = vmatprep.subr.mxu0 0.0
    %341 = vmatpush1.msra.mxu0 0.0
    %342 = vmatprep.subr.mxu0 0.0
    %343 = vmatpush1.msra.mxu0 0.0
    %344 = vmatprep.subr.mxu0 0.0
    %345 = vmatpush1.msra.mxu0 0.0
    %346 = vmatprep.subr.mxu0 0.0
    %347 = vmatpush1.msra.mxu0 0.0
    %348 = vmatprep.subr.mxu0 0.0
    %349 = vmatpush1.msra.mxu0 0.0
    %350 = vmatprep.subr.mxu0 0.0
    %351 = vmatpush1.msra.mxu0 0.0
    %352 = vmatprep.subr.mxu0 0.0
    %353 = vmatpush1.msra.mxu0 0.0
    %354 = vmatprep.subr.mxu0 0.0
    %355 = vmatpush1.msra.mxu0 0.0
    %356 = vmatprep.mubr.f32.mxu0 0.0
    %357 = vmatmul.mubr.f32.gmra.mrb[0].mxu0 %v287
    %v358 = vpop.f32.mrb[0].mxu0
    %v359 = vadd.f32 0.0, %v358
    %v360 = vpop.f32.mrb[0].mxu0
    %361 = vmatprep.mubr.f32.mxu0 0.0
    %362 = vmatmul.mubr.f32.gmra.mrb[0].mxu0 %v290
    %v363 = vpop.f32.mrb[0].mxu0
    %v364 = vadd.f32 0.0, %v363
    %v365 = vpop.f32.mrb[0].mxu0
    %366 = vdwg.mxu0
    %v368 = vsel %vm285, %v271, 0
    %v371 = vsel %vm285, %v272, 0
    %373 = vmatprep.subr.mxu0 0.0
    %374 = vmatpush1.msra.mxu0 %v282
    %375 = vmatprep.subr.mxu0 0.0
    %376 = vmatpush1.msra.mxu0 %v283
    %377 = vmatprep.subr.mxu0 0.0
    %378 = vmatpush1.msra.mxu0 0.0
    %379 = vmatprep.subr.mxu0 0.0
    %380 = vmatpush1.msra.mxu0 0.0
    %381 = vmatprep.subr.mxu0 0.0
    %382 = vmatpush1.msra.mxu0 0.0
    %383 = vmatprep.subr.mxu0 0.0
    %384 = vmatpush1.msra.mxu0 0.0
    %385 = vmatprep.subr.mxu0 0.0
    %386 = vmatpush1.msra.mxu0 0.0
    %387 = vmatprep.subr.mxu0 0.0
    %388 = vmatpush1.msra.mxu0 0.0
    %389 = vmatprep.subr.mxu0 0.0
    %390 = vmatpush1.msra.mxu0 0.0
    %391 = vmatprep.subr.mxu0 0.0
    %392 = vmatpush1.msra.mxu0 0.0
    %393 = vmatprep.subr.mxu0 0.0
    %394 = vmatpush1.msra.mxu0 0.0
    %395 = vmatprep.subr.mxu0 0.0
    %396 = vmatpush1.msra.mxu0 0.0
    %397 = vmatprep.subr.mxu0 0.0
    %398 = vmatpush1.msra.mxu0 0.0
    %399 = vmatprep.subr.mxu0 0.0
    %400 = vmatpush1.msra.mxu0 0.0
    %401 = vmatprep.subr.mxu0 0.0
    %402 = vmatpush1.msra.mxu0 0.0
    %403 = vmatprep.subr.mxu0 0.0
    %404 = vmatpush1.msra.mxu0 0.0
    %405 = vmatprep.subr.mxu0 0.0
    %406 = vmatpush1.msra.mxu0 0.0
    %407 = vmatprep.subr.mxu0 0.0
    %408 = vmatpush1.msra.mxu0 0.0
    %409 = vmatprep.subr.mxu0 0.0
    %410 = vmatpush1.msra.mxu0 0.0
    %411 = vmatprep.subr.mxu0 0.0
    %412 = vmatpush1.msra.mxu0 0.0
    %413 = vmatprep.subr.mxu0 0.0
    %414 = vmatpush1.msra.mxu0 0.0
    %415 = vmatprep.subr.mxu0 0.0
    %416 = vmatpush1.msra.mxu0 0.0
    %417 = vmatprep.subr.mxu0 0.0
    %418 = vmatpush1.msra.mxu0 0.0
    %419 = vmatprep.subr.mxu0 0.0
    %420 = vmatpush1.msra.mxu0 0.0
    %421 = vmatprep.subr.mxu0 0.0
    %422 = vmatpush1.msra.mxu0 0.0
    %423 = vmatprep.subr.mxu0 0.0
    %424 = vmatpush1.msra.mxu0 0.0
    %425 = vmatprep.subr.mxu0 0.0
    %426 = vmatpush1.msra.mxu0 0.0
    %427 = vmatprep.subr.mxu0 0.0
    %428 = vmatpush1.msra.mxu0 0.0
    %429 = vmatprep.subr.mxu0 0.0
    %430 = vmatpush1.msra.mxu0 0.0
    %431 = vmatprep.subr.mxu0 0.0
    %432 = vmatpush1.msra.mxu0 0.0
    %433 = vmatprep.subr.mxu0 0.0
    %434 = vmatpush1.msra.mxu0 0.0
    %435 = vmatprep.subr.mxu0 0.0
    %436 = vmatpush1.msra.mxu0 0.0
    %437 = vmatprep.mubr.f32.mxu0 0.0
    %438 = vmatmul.mubr.f32.gmra.mrb[0].mxu0 %v368
    %v439 = vpop.f32.mrb[0].mxu0
    %v440 = vadd.f32 0.0, %v439
    %v441 = vpop.f32.mrb[0].mxu0
    %442 = vmatprep.mubr.f32.mxu0 0.0
    %443 = vmatmul.mubr.f32.gmra.mrb[0].mxu0 %v371
    %v444 = vpop.f32.mrb[0].mxu0
    %v445 = vadd.f32 0.0, %v444
    %v446 = vpop.f32.mrb[0].mxu0
    %447 = vdwg.mxu0
    %v448 = vld [vmem:[%s11] sm:$0xf]
    %s449 = scalar_lea.vmem %s11, 4
    %v450 = vld [vmem:[%s449] sm:$0xf]
    %vm451 = vcmask 31744
    %v453 = vsel %vm451, %v282, 0
    %v456 = vsel %vm451, %v283, 0
    %vm458 = vcmask 1043456
    %v460 = vsel %vm458, %v450, 0
    %462 = vmatprep.subr.mxu0 0.0
    %463 = vmatpush1.msra.mxu0 %v460
    %464 = vmatprep.subr.mxu0 0.0
    %465 = vmatpush1.msra.mxu0 0.0
    %466 = vmatprep.subr.mxu0 0.0
    %467 = vmatpush1.msra.mxu0 0.0
    %468 = vmatprep.subr.mxu0 0.0
    %469 = vmatpush1.msra.mxu0 0.0
    %470 = vmatprep.subr.mxu0 0.0
    %471 = vmatpush1.msra.mxu0 0.0
    %472 = vmatprep.subr.mxu0 0.0
    %473 = vmatpush1.msra.mxu0 0.0
    %474 = vmatprep.subr.mxu0 0.0
    %475 = vmatpush1.msra.mxu0 0.0
    %476 = vmatprep.subr.mxu0 0.0
    %477 = vmatpush1.msra.mxu0 0.0
    %478 = vmatprep.subr.mxu0 0.0
    %479 = vmatpush1.msra.mxu0 0.0
    %480 = vmatprep.subr.mxu0 0.0
    %481 = vmatpush1.msra.mxu0 0.0
    %482 = vmatprep.subr.mxu0 0.0
    %483 = vmatpush1.msra.mxu0 0.0
    %484 = vmatprep.subr.mxu0 0.0
    %485 = vmatpush1.msra.mxu0 0.0
    %486 = vmatprep.subr.mxu0 0.0
    %487 = vmatpush1.msra.mxu0 0.0
    %488 = vmatprep.subr.mxu0 0.0
    %489 = vmatpush1.msra.mxu0 0.0
    %490 = vmatprep.subr.mxu0 0.0
    %491 = vmatpush1.msra.mxu0 0.0
    %492 = vmatprep.subr.mxu0 0.0
    %493 = vmatpush1.msra.mxu0 0.0
    %494 = vmatprep.subr.mxu0 0.0
    %495 = vmatpush1.msra.mxu0 0.0
    %496 = vmatprep.subr.mxu0 0.0
    %497 = vmatpush1.msra.mxu0 0.0
    %498 = vmatprep.subr.mxu0 0.0
    %499 = vmatpush1.msra.mxu0 0.0
    %500 = vmatprep.subr.mxu0 0.0
    %501 = vmatpush1.msra.mxu0 0.0
    %502 = vmatprep.subr.mxu0 0.0
    %503 = vmatpush1.msra.mxu0 0.0
    %504 = vmatprep.subr.mxu0 0.0
    %505 = vmatpush1.msra.mxu0 0.0
    %506 = vmatprep.subr.mxu0 0.0
    %507 = vmatpush1.msra.mxu0 0.0
    %508 = vmatprep.subr.mxu0 0.0
    %509 = vmatpush1.msra.mxu0 0.0
    %510 = vmatprep.subr.mxu0 0.0
    %511 = vmatpush1.msra.mxu0 0.0
    %512 = vmatprep.subr.mxu0 0.0
    %513 = vmatpush1.msra.mxu0 0.0
    %514 = vmatprep.subr.mxu0 0.0
    %515 = vmatpush1.msra.mxu0 0.0
    %516 = vmatprep.subr.mxu0 0.0
    %517 = vmatpush1.msra.mxu0 0.0
    %518 = vmatprep.subr.mxu0 0.0
    %519 = vmatpush1.msra.mxu0 0.0
    %520 = vmatprep.subr.mxu0 0.0
    %521 = vmatpush1.msra.mxu0 0.0
    %522 = vmatprep.subr.mxu0 0.0
    %523 = vmatpush1.msra.mxu0 0.0
    %524 = vmatprep.subr.mxu0 0.0
    %525 = vmatpush1.msra.mxu0 0.0
    %526 = vmatprep.mubr.f32.mxu0 0.0
    %527 = vmatmul.mubr.f32.gmra.mrb[0].mxu0 %v453
    %v528 = vpop.f32.mrb[0].mxu0
    %v529 = vadd.f32 0.0, %v528
    %v530 = vpop.f32.mrb[0].mxu0
    %531 = vmatprep.mubr.f32.mxu0 0.0
    %532 = vmatmul.mubr.f32.gmra.mrb[0].mxu0 %v456
    %v533 = vpop.f32.mrb[0].mxu0
    %v534 = vadd.f32 0.0, %v533
    %v535 = vpop.f32.mrb[0].mxu0
    %536 = vdwg.mxu0
    %v538 = vsel %vm451, %v359, 0
    %v541 = vsel %vm451, %v364, 0
    %v544 = vsel %vm458, %v448, 0
    %546 = vmatprep.subr.mxu0 0.0
    %547 = vmatpush1.msra.mxu0 %v544
    %548 = vmatprep.subr.mxu0 0.0
    %549 = vmatpush1.msra.mxu0 0.0
    %550 = vmatprep.subr.mxu0 0.0
    %551 = vmatpush1.msra.mxu0 0.0
    %552 = vmatprep.subr.mxu0 0.0
    %553 = vmatpush1.msra.mxu0 0.0
    %554 = vmatprep.subr.mxu0 0.0
    %555 = vmatpush1.msra.mxu0 0.0
    %556 = vmatprep.subr.mxu0 0.0
    %557 = vmatpush1.msra.mxu0 0.0
    %558 = vmatprep.subr.mxu0 0.0
    %559 = vmatpush1.msra.mxu0 0.0
    %560 = vmatprep.subr.mxu0 0.0
    %561 = vmatpush1.msra.mxu0 0.0
    %562 = vmatprep.subr.mxu0 0.0
    %563 = vmatpush1.msra.mxu0 0.0
    %564 = vmatprep.subr.mxu0 0.0
    %565 = vmatpush1.msra.mxu0 0.0
    %566 = vmatprep.subr.mxu0 0.0
    %567 = vmatpush1.msra.mxu0 0.0
    %568 = vmatprep.subr.mxu0 0.0
    %569 = vmatpush1.msra.mxu0 0.0
    %570 = vmatprep.subr.mxu0 0.0
    %571 = vmatpush1.msra.mxu0 0.0
    %572 = vmatprep.subr.mxu0 0.0
    %573 = vmatpush1.msra.mxu0 0.0
    %574 = vmatprep.subr.mxu0 0.0
    %575 = vmatpush1.msra.mxu0 0.0
    %576 = vmatprep.subr.mxu0 0.0
    %577 = vmatpush1.msra.mxu0 0.0
    %578 = vmatprep.subr.mxu0 0.0
    %579 = vmatpush1.msra.mxu0 0.0
    %580 = vmatprep.subr.mxu0 0.0
    %581 = vmatpush1.msra.mxu0 0.0
    %582 = vmatprep.subr.mxu0 0.0
    %583 = vmatpush1.msra.mxu0 0.0
    %584 = vmatprep.subr.mxu0 0.0
    %585 = vmatpush1.msra.mxu0 0.0
    %586 = vmatprep.subr.mxu0 0.0
    %587 = vmatpush1.msra.mxu0 0.0
    %588 = vmatprep.subr.mxu0 0.0
    %589 = vmatpush1.msra.mxu0 0.0
    %590 = vmatprep.subr.mxu0 0.0
    %591 = vmatpush1.msra.mxu0 0.0
    %592 = vmatprep.subr.mxu0 0.0
    %593 = vmatpush1.msra.mxu0 0.0
    %594 = vmatprep.subr.mxu0 0.0
    %595 = vmatpush1.msra.mxu0 0.0
    %596 = vmatprep.subr.mxu0 0.0
    %597 = vmatpush1.msra.mxu0 0.0
    %598 = vmatprep.subr.mxu0 0.0
    %599 = vmatpush1.msra.mxu0 0.0
    %600 = vmatprep.subr.mxu0 0.0
    %601 = vmatpush1.msra.mxu0 0.0
    %602 = vmatprep.subr.mxu0 0.0
    %603 = vmatpush1.msra.mxu0 0.0
    %604 = vmatprep.subr.mxu0 0.0
    %605 = vmatpush1.msra.mxu0 0.0
    %606 = vmatprep.subr.mxu0 0.0
    %607 = vmatpush1.msra.mxu0 0.0
    %608 = vmatprep.subr.mxu0 0.0
    %609 = vmatpush1.msra.mxu0 0.0
    %610 = vmatprep.mubr.f32.mxu0 0.0
    %611 = vmatmul.mubr.f32.gmra.mrb[0].mxu0 %v538
    %v612 = vpop.f32.mrb[0].mxu0
    %v613 = vadd.f32 %v529, %v612
    %v614 = vpop.f32.mrb[0].mxu0
    %615 = vmatprep.mubr.f32.mxu0 0.0
    %616 = vmatmul.mubr.f32.gmra.mrb[0].mxu0 %v541
    %v617 = vpop.f32.mrb[0].mxu0
    %v618 = vadd.f32 %v534, %v617
    %v619 = vpop.f32.mrb[0].mxu0
    %620 = vdwg.mxu0
    %s621 = scalar_lea.vmem %s11, 8
    %v622 = vld [vmem:[%s621] sm:$0xf]
    %v624 = vsel %vm451, %v440, 0
    %v627 = vsel %vm451, %v445, 0
    %v630 = vsel %vm458, %v622, 0
    %632 = vmatprep.subr.mxu0 0.0
    %633 = vmatpush1.msra.mxu0 %v630
    %634 = vmatprep.subr.mxu0 0.0
    %635 = vmatpush1.msra.mxu0 0.0
    %636 = vmatprep.subr.mxu0 0.0
    %637 = vmatpush1.msra.mxu0 0.0
    %638 = vmatprep.subr.mxu0 0.0
    %639 = vmatpush1.msra.mxu0 0.0
    %640 = vmatprep.subr.mxu0 0.0
    %641 = vmatpush1.msra.mxu0 0.0
    %642 = vmatprep.subr.mxu0 0.0
    %643 = vmatpush1.msra.mxu0 0.0
    %644 = vmatprep.subr.mxu0 0.0
    %645 = vmatpush1.msra.mxu0 0.0
    %646 = vmatprep.subr.mxu0 0.0
    %647 = vmatpush1.msra.mxu0 0.0
    %648 = vmatprep.subr.mxu0 0.0
    %649 = vmatpush1.msra.mxu0 0.0
    %650 = vmatprep.subr.mxu0 0.0
    %651 = vmatpush1.msra.mxu0 0.0
    %652 = vmatprep.subr.mxu0 0.0
    %653 = vmatpush1.msra.mxu0 0.0
    %654 = vmatprep.subr.mxu0 0.0
    %655 = vmatpush1.msra.mxu0 0.0
    %656 = vmatprep.subr.mxu0 0.0
    %657 = vmatpush1.msra.mxu0 0.0
    %658 = vmatprep.subr.mxu0 0.0
    %659 = vmatpush1.msra.mxu0 0.0
    %660 = vmatprep.subr.mxu0 0.0
    %661 = vmatpush1.msra.mxu0 0.0
    %662 = vmatprep.subr.mxu0 0.0
    %663 = vmatpush1.msra.mxu0 0.0
    %664 = vmatprep.subr.mxu0 0.0
    %665 = vmatpush1.msra.mxu0 0.0
    %666 = vmatprep.subr.mxu0 0.0
    %667 = vmatpush1.msra.mxu0 0.0
    %668 = vmatprep.subr.mxu0 0.0
    %669 = vmatpush1.msra.mxu0 0.0
    %670 = vmatprep.subr.mxu0 0.0
    %671 = vmatpush1.msra.mxu0 0.0
    %672 = vmatprep.subr.mxu0 0.0
    %673 = vmatpush1.msra.mxu0 0.0
    %674 = vmatprep.subr.mxu0 0.0
    %675 = vmatpush1.msra.mxu0 0.0
    %676 = vmatprep.subr.mxu0 0.0
    %677 = vmatpush1.msra.mxu0 0.0
    %678 = vmatprep.subr.mxu0 0.0
    %679 = vmatpush1.msra.mxu0 0.0
    %680 = vmatprep.subr.mxu0 0.0
    %681 = vmatpush1.msra.mxu0 0.0
    %682 = vmatprep.subr.mxu0 0.0
    %683 = vmatpush1.msra.mxu0 0.0
    %684 = vmatprep.subr.mxu0 0.0
    %685 = vmatpush1.msra.mxu0 0.0
    %686 = vmatprep.subr.mxu0 0.0
    %687 = vmatpush1.msra.mxu0 0.0
    %688 = vmatprep.subr.mxu0 0.0
    %689 = vmatpush1.msra.mxu0 0.0
    %690 = vmatprep.subr.mxu0 0.0
    %691 = vmatpush1.msra.mxu0 0.0
    %692 = vmatprep.subr.mxu0 0.0
    %693 = vmatpush1.msra.mxu0 0.0
    %694 = vmatprep.subr.mxu0 0.0
    %695 = vmatpush1.msra.mxu0 0.0
    %696 = vmatprep.mubr.f32.mxu0 0.0
    %697 = vmatmul.mubr.f32.gmra.mrb[0].mxu0 %v624
    %v698 = vpop.f32.mrb[0].mxu0
    %v699 = vadd.f32 0.0, %v698
    %v700 = vpop.f32.mrb[0].mxu0
    %701 = vmatprep.mubr.f32.mxu0 0.0
    %702 = vmatmul.mubr.f32.gmra.mrb[0].mxu0 %v627
    %v703 = vpop.f32.mrb[0].mxu0
    %v704 = vadd.f32 0.0, %v703
    %v705 = vpop.f32.mrb[0].mxu0
    %706 = vdwg.mxu0
    %v707 = vadd.f32 %v613, %v699
    %v708 = vadd.f32 %v618, %v704
    %v710 = vlaneseq
    %v711 = vshrl.u32 %v710, 7
    %v712 = vsub.s32 0, %v711
    %v713 = vrot.slane %v284, %v712
    %v715 = vadd.f32 %v707, %v713
    %v716 = vadd.f32 %v708, %v713
    %v717 = vmax.f32 %v715, 0.0
    %v718 = vmax.f32 %v716, 0.0
    %v719 = vadd.f32 %v282, %v717
    %v720 = vadd.f32 %v283, %v718
    %s721 = scalar_lea.vmem %s13, 1
    %v722 = vld [vmem:[%s721] sm:$0x1]
    %723 = vmatprep.subr.mxu0 0.0
    %724 = vmatpush1.msra.mxu0 %v719
    %725 = vmatprep.subr.mxu0 0.0
    %726 = vmatpush1.msra.mxu0 %v720
    %727 = vmatprep.subr.mxu0 0.0
    %728 = vmatpush1.msra.mxu0 0.0
    %729 = vmatprep.subr.mxu0 0.0
    %730 = vmatpush1.msra.mxu0 0.0
    %731 = vmatprep.subr.mxu0 0.0
    %732 = vmatpush1.msra.mxu0 0.0
    %733 = vmatprep.subr.mxu0 0.0
    %734 = vmatpush1.msra.mxu0 0.0
    %735 = vmatprep.subr.mxu0 0.0
    %736 = vmatpush1.msra.mxu0 0.0
    %737 = vmatprep.subr.mxu0 0.0
    %738 = vmatpush1.msra.mxu0 0.0
    %739 = vmatprep.subr.mxu0 0.0
    %740 = vmatpush1.msra.mxu0 0.0
    %741 = vmatprep.subr.mxu0 0.0
    %742 = vmatpush1.msra.mxu0 0.0
    %743 = vmatprep.subr.mxu0 0.0
    %744 = vmatpush1.msra.mxu0 0.0
    %745 = vmatprep.subr.mxu0 0.0
    %746 = vmatpush1.msra.mxu0 0.0
    %747 = vmatprep.subr.mxu0 0.0
    %748 = vmatpush1.msra.mxu0 0.0
    %749 = vmatprep.subr.mxu0 0.0
    %750 = vmatpush1.msra.mxu0 0.0
    %751 = vmatprep.subr.mxu0 0.0
    %752 = vmatpush1.msra.mxu0 0.0
    %753 = vmatprep.subr.mxu0 0.0
    %754 = vmatpush1.msra.mxu0 0.0
    %755 = vmatprep.subr.mxu0 0.0
    %756 = vmatpush1.msra.mxu0 0.0
    %757 = vmatprep.subr.mxu0 0.0
    %758 = vmatpush1.msra.mxu0 0.0
    %759 = vmatprep.subr.mxu0 0.0
    %760 = vmatpush1.msra.mxu0 0.0
    %761 = vmatprep.subr.mxu0 0.0
    %762 = vmatpush1.msra.mxu0 0.0
    %763 = vmatprep.subr.mxu0 0.0
    %764 = vmatpush1.msra.mxu0 0.0
    %765 = vmatprep.subr.mxu0 0.0
    %766 = vmatpush1.msra.mxu0 0.0
    %767 = vmatprep.subr.mxu0 0.0
    %768 = vmatpush1.msra.mxu0 0.0
    %769 = vmatprep.subr.mxu0 0.0
    %770 = vmatpush1.msra.mxu0 0.0
    %771 = vmatprep.subr.mxu0 0.0
    %772 = vmatpush1.msra.mxu0 0.0
    %773 = vmatprep.subr.mxu0 0.0
    %774 = vmatpush1.msra.mxu0 0.0
    %775 = vmatprep.subr.mxu0 0.0
    %776 = vmatpush1.msra.mxu0 0.0
    %777 = vmatprep.subr.mxu0 0.0
    %778 = vmatpush1.msra.mxu0 0.0
    %779 = vmatprep.subr.mxu0 0.0
    %780 = vmatpush1.msra.mxu0 0.0
    %781 = vmatprep.subr.mxu0 0.0
    %782 = vmatpush1.msra.mxu0 0.0
    %783 = vmatprep.subr.mxu0 0.0
    %784 = vmatpush1.msra.mxu0 0.0
    %785 = vmatprep.subr.mxu0 0.0
    %786 = vmatpush1.msra.mxu0 0.0
    %787 = vmatprep.mubr.f32.mxu0 0.0
    %788 = vmatmul.mubr.f32.gmra.mrb[0].mxu0 %v287
    %v789 = vpop.f32.mrb[0].mxu0
    %v790 = vadd.f32 0.0, %v789
    %v791 = vpop.f32.mrb[0].mxu0
    %792 = vmatprep.mubr.f32.mxu0 0.0
    %793 = vmatmul.mubr.f32.gmra.mrb[0].mxu0 %v290
    %v794 = vpop.f32.mrb[0].mxu0
    %v795 = vadd.f32 0.0, %v794
    %v796 = vpop.f32.mrb[0].mxu0
    %797 = vdwg.mxu0
    %798 = vmatprep.subr.mxu0 0.0
    %799 = vmatpush1.msra.mxu0 %v719
    %800 = vmatprep.subr.mxu0 0.0
    %801 = vmatpush1.msra.mxu0 %v720
    %802 = vmatprep.subr.mxu0 0.0
    %803 = vmatpush1.msra.mxu0 0.0
    %804 = vmatprep.subr.mxu0 0.0
    %805 = vmatpush1.msra.mxu0 0.0
    %806 = vmatprep.subr.mxu0 0.0
    %807 = vmatpush1.msra.mxu0 0.0
    %808 = vmatprep.subr.mxu0 0.0
    %809 = vmatpush1.msra.mxu0 0.0
    %810 = vmatprep.subr.mxu0 0.0
    %811 = vmatpush1.msra.mxu0 0.0
    %812 = vmatprep.subr.mxu0 0.0
    %813 = vmatpush1.msra.mxu0 0.0
    %814 = vmatprep.subr.mxu0 0.0
    %815 = vmatpush1.msra.mxu0 0.0
    %816 = vmatprep.subr.mxu0 0.0
    %817 = vmatpush1.msra.mxu0 0.0
    %818 = vmatprep.subr.mxu0 0.0
    %819 = vmatpush1.msra.mxu0 0.0
    %820 = vmatprep.subr.mxu0 0.0
    %821 = vmatpush1.msra.mxu0 0.0
    %822 = vmatprep.subr.mxu0 0.0
    %823 = vmatpush1.msra.mxu0 0.0
    %824 = vmatprep.subr.mxu0 0.0
    %825 = vmatpush1.msra.mxu0 0.0
    %826 = vmatprep.subr.mxu0 0.0
    %827 = vmatpush1.msra.mxu0 0.0
    %828 = vmatprep.subr.mxu0 0.0
    %829 = vmatpush1.msra.mxu0 0.0
    %830 = vmatprep.subr.mxu0 0.0
    %831 = vmatpush1.msra.mxu0 0.0
    %832 = vmatprep.subr.mxu0 0.0
    %833 = vmatpush1.msra.mxu0 0.0
    %834 = vmatprep.subr.mxu0 0.0
    %835 = vmatpush1.msra.mxu0 0.0
    %836 = vmatprep.subr.mxu0 0.0
    %837 = vmatpush1.msra.mxu0 0.0
    %838 = vmatprep.subr.mxu0 0.0
    %839 = vmatpush1.msra.mxu0 0.0
    %840 = vmatprep.subr.mxu0 0.0
    %841 = vmatpush1.msra.mxu0 0.0
    %842 = vmatprep.subr.mxu0 0.0
    %843 = vmatpush1.msra.mxu0 0.0
    %844 = vmatprep.subr.mxu0 0.0
    %845 = vmatpush1.msra.mxu0 0.0
    %846 = vmatprep.subr.mxu0 0.0
    %847 = vmatpush1.msra.mxu0 0.0
    %848 = vmatprep.subr.mxu0 0.0
    %849 = vmatpush1.msra.mxu0 0.0
    %850 = vmatprep.subr.mxu0 0.0
    %851 = vmatpush1.msra.mxu0 0.0
    %852 = vmatprep.subr.mxu0 0.0
    %853 = vmatpush1.msra.mxu0 0.0
    %854 = vmatprep.subr.mxu0 0.0
    %855 = vmatpush1.msra.mxu0 0.0
    %856 = vmatprep.subr.mxu0 0.0
    %857 = vmatpush1.msra.mxu0 0.0
    %858 = vmatprep.subr.mxu0 0.0
    %859 = vmatpush1.msra.mxu0 0.0
    %860 = vmatprep.subr.mxu0 0.0
    %861 = vmatpush1.msra.mxu0 0.0
    %862 = vmatprep.mubr.f32.mxu0 0.0
    %863 = vmatmul.mubr.f32.gmra.mrb[0].mxu0 %v368
    %v864 = vpop.f32.mrb[0].mxu0
    %v865 = vadd.f32 0.0, %v864
    %v866 = vpop.f32.mrb[0].mxu0
    %867 = vmatprep.mubr.f32.mxu0 0.0
    %868 = vmatmul.mubr.f32.gmra.mrb[0].mxu0 %v371
    %v869 = vpop.f32.mrb[0].mxu0
    %v870 = vadd.f32 0.0, %v869
    %v871 = vpop.f32.mrb[0].mxu0
    %872 = vdwg.mxu0
    %s873 = scalar_lea.vmem %s11, 12
    %v874 = vld [vmem:[%s873] sm:$0xf]
    %s875 = scalar_lea.vmem %s11, 16
    %v876 = vld [vmem:[%s875] sm:$0xf]
    %v878 = vsel %vm451, %v719, 0
    %v881 = vsel %vm451, %v720, 0
    %v884 = vsel %vm458, %v876, 0
    %886 = vmatprep.subr.mxu0 0.0
    %887 = vmatpush1.msra.mxu0 %v884
    %888 = vmatprep.subr.mxu0 0.0
    %889 = vmatpush1.msra.mxu0 0.0
    %890 = vmatprep.subr.mxu0 0.0
    %891 = vmatpush1.msra.mxu0 0.0
    %892 = vmatprep.subr.mxu0 0.0
    %893 = vmatpush1.msra.mxu0 0.0
    %894 = vmatprep.subr.mxu0 0.0
    %895 = vmatpush1.msra.mxu0 0.0
    %896 = vmatprep.subr.mxu0 0.0
    %897 = vmatpush1.msra.mxu0 0.0
    %898 = vmatprep.subr.mxu0 0.0
    %899 = vmatpush1.msra.mxu0 0.0
    %900 = vmatprep.subr.mxu0 0.0
    %901 = vmatpush1.msra.mxu0 0.0
    %902 = vmatprep.subr.mxu0 0.0
    %903 = vmatpush1.msra.mxu0 0.0
    %904 = vmatprep.subr.mxu0 0.0
    %905 = vmatpush1.msra.mxu0 0.0
    %906 = vmatprep.subr.mxu0 0.0
    %907 = vmatpush1.msra.mxu0 0.0
    %908 = vmatprep.subr.mxu0 0.0
    %909 = vmatpush1.msra.mxu0 0.0
    %910 = vmatprep.subr.mxu0 0.0
    %911 = vmatpush1.msra.mxu0 0.0
    %912 = vmatprep.subr.mxu0 0.0
    %913 = vmatpush1.msra.mxu0 0.0
    %914 = vmatprep.subr.mxu0 0.0
    %915 = vmatpush1.msra.mxu0 0.0
    %916 = vmatprep.subr.mxu0 0.0
    %917 = vmatpush1.msra.mxu0 0.0
    %918 = vmatprep.subr.mxu0 0.0
    %919 = vmatpush1.msra.mxu0 0.0
    %920 = vmatprep.subr.mxu0 0.0
    %921 = vmatpush1.msra.mxu0 0.0
    %922 = vmatprep.subr.mxu0 0.0
    %923 = vmatpush1.msra.mxu0 0.0
    %924 = vmatprep.subr.mxu0 0.0
    %925 = vmatpush1.msra.mxu0 0.0
    %926 = vmatprep.subr.mxu0 0.0
    %927 = vmatpush1.msra.mxu0 0.0
    %928 = vmatprep.subr.mxu0 0.0
    %929 = vmatpush1.msra.mxu0 0.0
    %930 = vmatprep.subr.mxu0 0.0
    %931 = vmatpush1.msra.mxu0 0.0
    %932 = vmatprep.subr.mxu0 0.0
    %933 = vmatpush1.msra.mxu0 0.0
    %934 = vmatprep.subr.mxu0 0.0
    %935 = vmatpush1.msra.mxu0 0.0
    %936 = vmatprep.subr.mxu0 0.0
    %937 = vmatpush1.msra.mxu0 0.0
    %938 = vmatprep.subr.mxu0 0.0
    %939 = vmatpush1.msra.mxu0 0.0
    %940 = vmatprep.subr.mxu0 0.0
    %941 = vmatpush1.msra.mxu0 0.0
    %942 = vmatprep.subr.mxu0 0.0
    %943 = vmatpush1.msra.mxu0 0.0
    %944 = vmatprep.subr.mxu0 0.0
    %945 = vmatpush1.msra.mxu0 0.0
    %946 = vmatprep.subr.mxu0 0.0
    %947 = vmatpush1.msra.mxu0 0.0
    %948 = vmatprep.subr.mxu0 0.0
    %949 = vmatpush1.msra.mxu0 0.0
    %950 = vmatprep.mubr.f32.mxu0 0.0
    %951 = vmatmul.mubr.f32.gmra.mrb[0].mxu0 %v878
    %v952 = vpop.f32.mrb[0].mxu0
    %v953 = vadd.f32 0.0, %v952
    %v954 = vpop.f32.mrb[0].mxu0
    %955 = vmatprep.mubr.f32.mxu0 0.0
    %956 = vmatmul.mubr.f32.gmra.mrb[0].mxu0 %v881
    %v957 = vpop.f32.mrb[0].mxu0
    %v958 = vadd.f32 0.0, %v957
    %v959 = vpop.f32.mrb[0].mxu0
    %960 = vdwg.mxu0
    %v962 = vsel %vm451, %v790, 0
    %v965 = vsel %vm451, %v795, 0
    %v968 = vsel %vm458, %v874, 0
    %970 = vmatprep.subr.mxu0 0.0
    %971 = vmatpush1.msra.mxu0 %v968
    %972 = vmatprep.subr.mxu0 0.0
    %973 = vmatpush1.msra.mxu0 0.0
    %974 = vmatprep.subr.mxu0 0.0
    %975 = vmatpush1.msra.mxu0 0.0
    %976 = vmatprep.subr.mxu0 0.0
    %977 = vmatpush1.msra.mxu0 0.0
    %978 = vmatprep.subr.mxu0 0.0
    %979 = vmatpush1.msra.mxu0 0.0
    %980 = vmatprep.subr.mxu0 0.0
    %981 = vmatpush1.msra.mxu0 0.0
    %982 = vmatprep.subr.mxu0 0.0
    %983 = vmatpush1.msra.mxu0 0.0
    %984 = vmatprep.subr.mxu0 0.0
    %985 = vmatpush1.msra.mxu0 0.0
    %986 = vmatprep.subr.mxu0 0.0
    %987 = vmatpush1.msra.mxu0 0.0
    %988 = vmatprep.subr.mxu0 0.0
    %989 = vmatpush1.msra.mxu0 0.0
    %990 = vmatprep.subr.mxu0 0.0
    %991 = vmatpush1.msra.mxu0 0.0
    %992 = vmatprep.subr.mxu0 0.0
    %993 = vmatpush1.msra.mxu0 0.0
    %994 = vmatprep.subr.mxu0 0.0
    %995 = vmatpush1.msra.mxu0 0.0
    %996 = vmatprep.subr.mxu0 0.0
    %997 = vmatpush1.msra.mxu0 0.0
    %998 = vmatprep.subr.mxu0 0.0
    %999 = vmatpush1.msra.mxu0 0.0
    %1000 = vmatprep.subr.mxu0 0.0
    %1001 = vmatpush1.msra.mxu0 0.0
    %1002 = vmatprep.subr.mxu0 0.0
    %1003 = vmatpush1.msra.mxu0 0.0
    %1004 = vmatprep.subr.mxu0 0.0
    %1005 = vmatpush1.msra.mxu0 0.0
    %1006 = vmatprep.subr.mxu0 0.0
    %1007 = vmatpush1.msra.mxu0 0.0
    %1008 = vmatprep.subr.mxu0 0.0
    %1009 = vmatpush1.msra.mxu0 0.0
    %1010 = vmatprep.subr.mxu0 0.0
    %1011 = vmatpush1.msra.mxu0 0.0
    %1012 = vmatprep.subr.mxu0 0.0
    %1013 = vmatpush1.msra.mxu0 0.0
    %1014 = vmatprep.subr.mxu0 0.0
    %1015 = vmatpush1.msra.mxu0 0.0
    %1016 = vmatprep.subr.mxu0 0.0
    %1017 = vmatpush1.msra.mxu0 0.0
    %1018 = vmatprep.subr.mxu0 0.0
    %1019 = vmatpush1.msra.mxu0 0.0
    %1020 = vmatprep.subr.mxu0 0.0
    %1021 = vmatpush1.msra.mxu0 0.0
    %1022 = vmatprep.subr.mxu0 0.0
    %1023 = vmatpush1.msra.mxu0 0.0
    %1024 = vmatprep.subr.mxu0 0.0
    %1025 = vmatpush1.msra.mxu0 0.0
    %1026 = vmatprep.subr.mxu0 0.0
    %1027 = vmatpush1.msra.mxu0 0.0
    %1028 = vmatprep.subr.mxu0 0.0
    %1029 = vmatpush1.msra.mxu0 0.0
    %1030 = vmatprep.subr.mxu0 0.0
    %1031 = vmatpush1.msra.mxu0 0.0
    %1032 = vmatprep.subr.mxu0 0.0
    %1033 = vmatpush1.msra.mxu0 0.0
    %1034 = vmatprep.mubr.f32.mxu0 0.0
    %1035 = vmatmul.mubr.f32.gmra.mrb[0].mxu0 %v962
    %v1036 = vpop.f32.mrb[0].mxu0
    %v1037 = vadd.f32 %v953, %v1036
    %v1038 = vpop.f32.mrb[0].mxu0
    %1039 = vmatprep.mubr.f32.mxu0 0.0
    %1040 = vmatmul.mubr.f32.gmra.mrb[0].mxu0 %v965
    %v1041 = vpop.f32.mrb[0].mxu0
    %v1042 = vadd.f32 %v958, %v1041
    %v1043 = vpop.f32.mrb[0].mxu0
    %1044 = vdwg.mxu0
    %s1045 = scalar_lea.vmem %s11, 20
    %v1046 = vld [vmem:[%s1045] sm:$0xf]
    %v1048 = vsel %vm451, %v865, 0
    %v1051 = vsel %vm451, %v870, 0
    %v1054 = vsel %vm458, %v1046, 0
    %1056 = vmatprep.subr.mxu0 0.0
    %1057 = vmatpush1.msra.mxu0 %v1054
    %1058 = vmatprep.subr.mxu0 0.0
    %1059 = vmatpush1.msra.mxu0 0.0
    %1060 = vmatprep.subr.mxu0 0.0
    %1061 = vmatpush1.msra.mxu0 0.0
    %1062 = vmatprep.subr.mxu0 0.0
    %1063 = vmatpush1.msra.mxu0 0.0
    %1064 = vmatprep.subr.mxu0 0.0
    %1065 = vmatpush1.msra.mxu0 0.0
    %1066 = vmatprep.subr.mxu0 0.0
    %1067 = vmatpush1.msra.mxu0 0.0
    %1068 = vmatprep.subr.mxu0 0.0
    %1069 = vmatpush1.msra.mxu0 0.0
    %1070 = vmatprep.subr.mxu0 0.0
    %1071 = vmatpush1.msra.mxu0 0.0
    %1072 = vmatprep.subr.mxu0 0.0
    %1073 = vmatpush1.msra.mxu0 0.0
    %1074 = vmatprep.subr.mxu0 0.0
    %1075 = vmatpush1.msra.mxu0 0.0
    %1076 = vmatprep.subr.mxu0 0.0
    %1077 = vmatpush1.msra.mxu0 0.0
    %1078 = vmatprep.subr.mxu0 0.0
    %1079 = vmatpush1.msra.mxu0 0.0
    %1080 = vmatprep.subr.mxu0 0.0
    %1081 = vmatpush1.msra.mxu0 0.0
    %1082 = vmatprep.subr.mxu0 0.0
    %1083 = vmatpush1.msra.mxu0 0.0
    %1084 = vmatprep.subr.mxu0 0.0
    %1085 = vmatpush1.msra.mxu0 0.0
    %1086 = vmatprep.subr.mxu0 0.0
    %1087 = vmatpush1.msra.mxu0 0.0
    %1088 = vmatprep.subr.mxu0 0.0
    %1089 = vmatpush1.msra.mxu0 0.0
    %1090 = vmatprep.subr.mxu0 0.0
    %1091 = vmatpush1.msra.mxu0 0.0
    %1092 = vmatprep.subr.mxu0 0.0
    %1093 = vmatpush1.msra.mxu0 0.0
    %1094 = vmatprep.subr.mxu0 0.0
    %1095 = vmatpush1.msra.mxu0 0.0
    %1096 = vmatprep.subr.mxu0 0.0
    %1097 = vmatpush1.msra.mxu0 0.0
    %1098 = vmatprep.subr.mxu0 0.0
    %1099 = vmatpush1.msra.mxu0 0.0
    %1100 = vmatprep.subr.mxu0 0.0
    %1101 = vmatpush1.msra.mxu0 0.0
    %1102 = vmatprep.subr.mxu0 0.0
    %1103 = vmatpush1.msra.mxu0 0.0
    %1104 = vmatprep.subr.mxu0 0.0
    %1105 = vmatpush1.msra.mxu0 0.0
    %1106 = vmatprep.subr.mxu0 0.0
    %1107 = vmatpush1.msra.mxu0 0.0
    %1108 = vmatprep.subr.mxu0 0.0
    %1109 = vmatpush1.msra.mxu0 0.0
    %1110 = vmatprep.subr.mxu0 0.0
    %1111 = vmatpush1.msra.mxu0 0.0
    %1112 = vmatprep.subr.mxu0 0.0
    %1113 = vmatpush1.msra.mxu0 0.0
    %1114 = vmatprep.subr.mxu0 0.0
    %1115 = vmatpush1.msra.mxu0 0.0
    %1116 = vmatprep.subr.mxu0 0.0
    %1117 = vmatpush1.msra.mxu0 0.0
    %1118 = vmatprep.subr.mxu0 0.0
    %1119 = vmatpush1.msra.mxu0 0.0
    %1120 = vmatprep.mubr.f32.mxu0 0.0
    %1121 = vmatmul.mubr.f32.gmra.mrb[0].mxu0 %v1048
    %v1122 = vpop.f32.mrb[0].mxu0
    %v1123 = vadd.f32 0.0, %v1122
    %v1124 = vpop.f32.mrb[0].mxu0
    %1125 = vmatprep.mubr.f32.mxu0 0.0
    %1126 = vmatmul.mubr.f32.gmra.mrb[0].mxu0 %v1051
    %v1127 = vpop.f32.mrb[0].mxu0
    %v1128 = vadd.f32 0.0, %v1127
    %v1129 = vpop.f32.mrb[0].mxu0
    %1130 = vdwg.mxu0
    %v1131 = vadd.f32 %v1037, %v1123
    %v1132 = vadd.f32 %v1042, %v1128
    %v1134 = vlaneseq
    %v1135 = vshrl.u32 %v1134, 7
    %v1136 = vsub.s32 0, %v1135
    %v1137 = vrot.slane %v722, %v1136
    %v1139 = vadd.f32 %v1131, %v1137
    %v1140 = vadd.f32 %v1132, %v1137
    %v1141 = vmax.f32 %v1139, 0.0
    %v1142 = vmax.f32 %v1140, 0.0
    %v1143 = vadd.f32 %v719, %v1141
    %v1144 = vadd.f32 %v720, %v1142
    %s1145 = scalar_lea.vmem %s13, 2
    %v1146 = vld [vmem:[%s1145] sm:$0x1]
    %1147 = vmatprep.subr.mxu0 0.0
    %1148 = vmatpush1.msra.mxu0 %v1143
    %1149 = vmatprep.subr.mxu0 0.0
    %1150 = vmatpush1.msra.mxu0 %v1144
    %1151 = vmatprep.subr.mxu0 0.0
    %1152 = vmatpush1.msra.mxu0 0.0
    %1153 = vmatprep.subr.mxu0 0.0
    %1154 = vmatpush1.msra.mxu0 0.0
    %1155 = vmatprep.subr.mxu0 0.0
    %1156 = vmatpush1.msra.mxu0 0.0
    %1157 = vmatprep.subr.mxu0 0.0
    %1158 = vmatpush1.msra.mxu0 0.0
    %1159 = vmatprep.subr.mxu0 0.0
    %1160 = vmatpush1.msra.mxu0 0.0
    %1161 = vmatprep.subr.mxu0 0.0
    %1162 = vmatpush1.msra.mxu0 0.0
    %1163 = vmatprep.subr.mxu0 0.0
    %1164 = vmatpush1.msra.mxu0 0.0
    %1165 = vmatprep.subr.mxu0 0.0
    %1166 = vmatpush1.msra.mxu0 0.0
    %1167 = vmatprep.subr.mxu0 0.0
    %1168 = vmatpush1.msra.mxu0 0.0
    %1169 = vmatprep.subr.mxu0 0.0
    %1170 = vmatpush1.msra.mxu0 0.0
    %1171 = vmatprep.subr.mxu0 0.0
    %1172 = vmatpush1.msra.mxu0 0.0
    %1173 = vmatprep.subr.mxu0 0.0
    %1174 = vmatpush1.msra.mxu0 0.0
    %1175 = vmatprep.subr.mxu0 0.0
    %1176 = vmatpush1.msra.mxu0 0.0
    %1177 = vmatprep.subr.mxu0 0.0
    %1178 = vmatpush1.msra.mxu0 0.0
    %1179 = vmatprep.subr.mxu0 0.0
    %1180 = vmatpush1.msra.mxu0 0.0
    %1181 = vmatprep.subr.mxu0 0.0
    %1182 = vmatpush1.msra.mxu0 0.0
    %1183 = vmatprep.subr.mxu0 0.0
    %1184 = vmatpush1.msra.mxu0 0.0
    %1185 = vmatprep.subr.mxu0 0.0
    %1186 = vmatpush1.msra.mxu0 0.0
    %1187 = vmatprep.subr.mxu0 0.0
    %1188 = vmatpush1.msra.mxu0 0.0
    %1189 = vmatprep.subr.mxu0 0.0
    %1190 = vmatpush1.msra.mxu0 0.0
    %1191 = vmatprep.subr.mxu0 0.0
    %1192 = vmatpush1.msra.mxu0 0.0
    %1193 = vmatprep.subr.mxu0 0.0
    %1194 = vmatpush1.msra.mxu0 0.0
    %1195 = vmatprep.subr.mxu0 0.0
    %1196 = vmatpush1.msra.mxu0 0.0
    %1197 = vmatprep.subr.mxu0 0.0
    %1198 = vmatpush1.msra.mxu0 0.0
    %1199 = vmatprep.subr.mxu0 0.0
    %1200 = vmatpush1.msra.mxu0 0.0
    %1201 = vmatprep.subr.mxu0 0.0
    %1202 = vmatpush1.msra.mxu0 0.0
    %1203 = vmatprep.subr.mxu0 0.0
    %1204 = vmatpush1.msra.mxu0 0.0
    %1205 = vmatprep.subr.mxu0 0.0
    %1206 = vmatpush1.msra.mxu0 0.0
    %1207 = vmatprep.subr.mxu0 0.0
    %1208 = vmatpush1.msra.mxu0 0.0
    %1209 = vmatprep.subr.mxu0 0.0
    %1210 = vmatpush1.msra.mxu0 0.0
    %1211 = vmatprep.mubr.f32.mxu0 0.0
    %1212 = vmatmul.mubr.f32.gmra.mrb[0].mxu0 %v287
    %v1213 = vpop.f32.mrb[0].mxu0
    %v1214 = vadd.f32 0.0, %v1213
    %v1215 = vpop.f32.mrb[0].mxu0
    %1216 = vmatprep.mubr.f32.mxu0 0.0
    %1217 = vmatmul.mubr.f32.gmra.mrb[0].mxu0 %v290
    %v1218 = vpop.f32.mrb[0].mxu0
    %v1219 = vadd.f32 0.0, %v1218
    %v1220 = vpop.f32.mrb[0].mxu0
    %1221 = vdwg.mxu0
    %1222 = vmatprep.subr.mxu0 0.0
    %1223 = vmatpush1.msra.mxu0 %v1143
    %1224 = vmatprep.subr.mxu0 0.0
    %1225 = vmatpush1.msra.mxu0 %v1144
    %1226 = vmatprep.subr.mxu0 0.0
    %1227 = vmatpush1.msra.mxu0 0.0
    %1228 = vmatprep.subr.mxu0 0.0
    %1229 = vmatpush1.msra.mxu0 0.0
    %1230 = vmatprep.subr.mxu0 0.0
    %1231 = vmatpush1.msra.mxu0 0.0
    %1232 = vmatprep.subr.mxu0 0.0
    %1233 = vmatpush1.msra.mxu0 0.0
    %1234 = vmatprep.subr.mxu0 0.0
    %1235 = vmatpush1.msra.mxu0 0.0
    %1236 = vmatprep.subr.mxu0 0.0
    %1237 = vmatpush1.msra.mxu0 0.0
    %1238 = vmatprep.subr.mxu0 0.0
    %1239 = vmatpush1.msra.mxu0 0.0
    %1240 = vmatprep.subr.mxu0 0.0
    %1241 = vmatpush1.msra.mxu0 0.0
    %1242 = vmatprep.subr.mxu0 0.0
    %1243 = vmatpush1.msra.mxu0 0.0
    %1244 = vmatprep.subr.mxu0 0.0
    %1245 = vmatpush1.msra.mxu0 0.0
    %1246 = vmatprep.subr.mxu0 0.0
    %1247 = vmatpush1.msra.mxu0 0.0
    %1248 = vmatprep.subr.mxu0 0.0
    %1249 = vmatpush1.msra.mxu0 0.0
    %1250 = vmatprep.subr.mxu0 0.0
    %1251 = vmatpush1.msra.mxu0 0.0
    %1252 = vmatprep.subr.mxu0 0.0
    %1253 = vmatpush1.msra.mxu0 0.0
    %1254 = vmatprep.subr.mxu0 0.0
    %1255 = vmatpush1.msra.mxu0 0.0
    %1256 = vmatprep.subr.mxu0 0.0
    %1257 = vmatpush1.msra.mxu0 0.0
    %1258 = vmatprep.subr.mxu0 0.0
    %1259 = vmatpush1.msra.mxu0 0.0
    %1260 = vmatprep.subr.mxu0 0.0
    %1261 = vmatpush1.msra.mxu0 0.0
    %1262 = vmatprep.subr.mxu0 0.0
    %1263 = vmatpush1.msra.mxu0 0.0
    %1264 = vmatprep.subr.mxu0 0.0
    %1265 = vmatpush1.msra.mxu0 0.0
    %1266 = vmatprep.subr.mxu0 0.0
    %1267 = vmatpush1.msra.mxu0 0.0
    %1268 = vmatprep.subr.mxu0 0.0
    %1269 = vmatpush1.msra.mxu0 0.0
    %1270 = vmatprep.subr.mxu0 0.0
    %1271 = vmatpush1.msra.mxu0 0.0
    %1272 = vmatprep.subr.mxu0 0.0
    %1273 = vmatpush1.msra.mxu0 0.0
    %1274 = vmatprep.subr.mxu0 0.0
    %1275 = vmatpush1.msra.mxu0 0.0
    %1276 = vmatprep.subr.mxu0 0.0
    %1277 = vmatpush1.msra.mxu0 0.0
    %1278 = vmatprep.subr.mxu0 0.0
    %1279 = vmatpush1.msra.mxu0 0.0
    %1280 = vmatprep.subr.mxu0 0.0
    %1281 = vmatpush1.msra.mxu0 0.0
    %1282 = vmatprep.subr.mxu0 0.0
    %1283 = vmatpush1.msra.mxu0 0.0
    %1284 = vmatprep.subr.mxu0 0.0
    %1285 = vmatpush1.msra.mxu0 0.0
    %1286 = vmatprep.mubr.f32.mxu0 0.0
    %1287 = vmatmul.mubr.f32.gmra.mrb[0].mxu0 %v368
    %v1288 = vpop.f32.mrb[0].mxu0
    %v1289 = vadd.f32 0.0, %v1288
    %v1290 = vpop.f32.mrb[0].mxu0
    %1291 = vmatprep.mubr.f32.mxu0 0.0
    %1292 = vmatmul.mubr.f32.gmra.mrb[0].mxu0 %v371
    %v1293 = vpop.f32.mrb[0].mxu0
    %v1294 = vadd.f32 0.0, %v1293
    %v1295 = vpop.f32.mrb[0].mxu0
    %1296 = vdwg.mxu0
    %s1297 = scalar_lea.vmem %s11, 24
    %v1298 = vld [vmem:[%s1297] sm:$0xf]
    %s1299 = scalar_lea.vmem %s11, 28
    %v1300 = vld [vmem:[%s1299] sm:$0xf]
    %v1302 = vsel %vm451, %v1143, 0
    %v1305 = vsel %vm451, %v1144, 0
    %v1308 = vsel %vm458, %v1300, 0
    %1310 = vmatprep.subr.mxu0 0.0
    %1311 = vmatpush1.msra.mxu0 %v1308
    %1312 = vmatprep.subr.mxu0 0.0
    %1313 = vmatpush1.msra.mxu0 0.0
    %1314 = vmatprep.subr.mxu0 0.0
    %1315 = vmatpush1.msra.mxu0 0.0
    %1316 = vmatprep.subr.mxu0 0.0
    %1317 = vmatpush1.msra.mxu0 0.0
    %1318 = vmatprep.subr.mxu0 0.0
    %1319 = vmatpush1.msra.mxu0 0.0
    %1320 = vmatprep.subr.mxu0 0.0
    %1321 = vmatpush1.msra.mxu0 0.0
    %1322 = vmatprep.subr.mxu0 0.0
    %1323 = vmatpush1.msra.mxu0 0.0
    %1324 = vmatprep.subr.mxu0 0.0
    %1325 = vmatpush1.msra.mxu0 0.0
    %1326 = vmatprep.subr.mxu0 0.0
    %1327 = vmatpush1.msra.mxu0 0.0
    %1328 = vmatprep.subr.mxu0 0.0
    %1329 = vmatpush1.msra.mxu0 0.0
    %1330 = vmatprep.subr.mxu0 0.0
    %1331 = vmatpush1.msra.mxu0 0.0
    %1332 = vmatprep.subr.mxu0 0.0
    %1333 = vmatpush1.msra.mxu0 0.0
    %1334 = vmatprep.subr.mxu0 0.0
    %1335 = vmatpush1.msra.mxu0 0.0
    %1336 = vmatprep.subr.mxu0 0.0
    %1337 = vmatpush1.msra.mxu0 0.0
    %1338 = vmatprep.subr.mxu0 0.0
    %1339 = vmatpush1.msra.mxu0 0.0
    %1340 = vmatprep.subr.mxu0 0.0
    %1341 = vmatpush1.msra.mxu0 0.0
    %1342 = vmatprep.subr.mxu0 0.0
    %1343 = vmatpush1.msra.mxu0 0.0
    %1344 = vmatprep.subr.mxu0 0.0
    %1345 = vmatpush1.msra.mxu0 0.0
    %1346 = vmatprep.subr.mxu0 0.0
    %1347 = vmatpush1.msra.mxu0 0.0
    %1348 = vmatprep.subr.mxu0 0.0
    %1349 = vmatpush1.msra.mxu0 0.0
    %1350 = vmatprep.subr.mxu0 0.0
    %1351 = vmatpush1.msra.mxu0 0.0
    %1352 = vmatprep.subr.mxu0 0.0
    %1353 = vmatpush1.msra.mxu0 0.0
    %1354 = vmatprep.subr.mxu0 0.0
    %1355 = vmatpush1.msra.mxu0 0.0
    %1356 = vmatprep.subr.mxu0 0.0
    %1357 = vmatpush1.msra.mxu0 0.0
    %1358 = vmatprep.subr.mxu0 0.0
    %1359 = vmatpush1.msra.mxu0 0.0
    %1360 = vmatprep.subr.mxu0 0.0
    %1361 = vmatpush1.msra.mxu0 0.0
    %1362 = vmatprep.subr.mxu0 0.0
    %1363 = vmatpush1.msra.mxu0 0.0
    %1364 = vmatprep.subr.mxu0 0.0
    %1365 = vmatpush1.msra.mxu0 0.0
    %1366 = vmatprep.subr.mxu0 0.0
    %1367 = vmatpush1.msra.mxu0 0.0
    %1368 = vmatprep.subr.mxu0 0.0
    %1369 = vmatpush1.msra.mxu0 0.0
    %1370 = vmatprep.subr.mxu0 0.0
    %1371 = vmatpush1.msra.mxu0 0.0
    %1372 = vmatprep.subr.mxu0 0.0
    %1373 = vmatpush1.msra.mxu0 0.0
    %1374 = vmatprep.mubr.f32.mxu0 0.0
    %1375 = vmatmul.mubr.f32.gmra.mrb[0].mxu0 %v1302
    %v1376 = vpop.f32.mrb[0].mxu0
    %v1377 = vadd.f32 0.0, %v1376
    %v1378 = vpop.f32.mrb[0].mxu0
    %1379 = vmatprep.mubr.f32.mxu0 0.0
    %1380 = vmatmul.mubr.f32.gmra.mrb[0].mxu0 %v1305
    %v1381 = vpop.f32.mrb[0].mxu0
    %v1382 = vadd.f32 0.0, %v1381
    %v1383 = vpop.f32.mrb[0].mxu0
    %1384 = vdwg.mxu0
    %v1386 = vsel %vm451, %v1214, 0
    %v1389 = vsel %vm451, %v1219, 0
    %v1392 = vsel %vm458, %v1298, 0
    %1394 = vmatprep.subr.mxu0 0.0
    %1395 = vmatpush1.msra.mxu0 %v1392
    %1396 = vmatprep.subr.mxu0 0.0
    %1397 = vmatpush1.msra.mxu0 0.0
    %1398 = vmatprep.subr.mxu0 0.0
    %1399 = vmatpush1.msra.mxu0 0.0
    %1400 = vmatprep.subr.mxu0 0.0
    %1401 = vmatpush1.msra.mxu0 0.0
    %1402 = vmatprep.subr.mxu0 0.0
    %1403 = vmatpush1.msra.mxu0 0.0
    %1404 = vmatprep.subr.mxu0 0.0
    %1405 = vmatpush1.msra.mxu0 0.0
    %1406 = vmatprep.subr.mxu0 0.0
    %1407 = vmatpush1.msra.mxu0 0.0
    %1408 = vmatprep.subr.mxu0 0.0
    %1409 = vmatpush1.msra.mxu0 0.0
    %1410 = vmatprep.subr.mxu0 0.0
    %1411 = vmatpush1.msra.mxu0 0.0
    %1412 = vmatprep.subr.mxu0 0.0
    %1413 = vmatpush1.msra.mxu0 0.0
    %1414 = vmatprep.subr.mxu0 0.0
    %1415 = vmatpush1.msra.mxu0 0.0
    %1416 = vmatprep.subr.mxu0 0.0
    %1417 = vmatpush1.msra.mxu0 0.0
    %1418 = vmatprep.subr.mxu0 0.0
    %1419 = vmatpush1.msra.mxu0 0.0
    %1420 = vmatprep.subr.mxu0 0.0
    %1421 = vmatpush1.msra.mxu0 0.0
    %1422 = vmatprep.subr.mxu0 0.0
    %1423 = vmatpush1.msra.mxu0 0.0
    %1424 = vmatprep.subr.mxu0 0.0
    %1425 = vmatpush1.msra.mxu0 0.0
    %1426 = vmatprep.subr.mxu0 0.0
    %1427 = vmatpush1.msra.mxu0 0.0
    %1428 = vmatprep.subr.mxu0 0.0
    %1429 = vmatpush1.msra.mxu0 0.0
    %1430 = vmatprep.subr.mxu0 0.0
    %1431 = vmatpush1.msra.mxu0 0.0
    %1432 = vmatprep.subr.mxu0 0.0
    %1433 = vmatpush1.msra.mxu0 0.0
    %1434 = vmatprep.subr.mxu0 0.0
    %1435 = vmatpush1.msra.mxu0 0.0
    %1436 = vmatprep.subr.mxu0 0.0
    %1437 = vmatpush1.msra.mxu0 0.0
    %1438 = vmatprep.subr.mxu0 0.0
    %1439 = vmatpush1.msra.mxu0 0.0
    %1440 = vmatprep.subr.mxu0 0.0
    %1441 = vmatpush1.msra.mxu0 0.0
    %1442 = vmatprep.subr.mxu0 0.0
    %1443 = vmatpush1.msra.mxu0 0.0
    %1444 = vmatprep.subr.mxu0 0.0
    %1445 = vmatpush1.msra.mxu0 0.0
    %1446 = vmatprep.subr.mxu0 0.0
    %1447 = vmatpush1.msra.mxu0 0.0
    %1448 = vmatprep.subr.mxu0 0.0
    %1449 = vmatpush1.msra.mxu0 0.0
    %1450 = vmatprep.subr.mxu0 0.0
    %1451 = vmatpush1.msra.mxu0 0.0
    %1452 = vmatprep.subr.mxu0 0.0
    %1453 = vmatpush1.msra.mxu0 0.0
    %1454 = vmatprep.subr.mxu0 0.0
    %1455 = vmatpush1.msra.mxu0 0.0
    %1456 = vmatprep.subr.mxu0 0.0
    %1457 = vmatpush1.msra.mxu0 0.0
    %1458 = vmatprep.mubr.f32.mxu0 0.0
    %1459 = vmatmul.mubr.f32.gmra.mrb[0].mxu0 %v1386
    %v1460 = vpop.f32.mrb[0].mxu0
    %v1461 = vadd.f32 %v1377, %v1460
    %v1462 = vpop.f32.mrb[0].mxu0
    %1463 = vmatprep.mubr.f32.mxu0 0.0
    %1464 = vmatmul.mubr.f32.gmra.mrb[0].mxu0 %v1389
    %v1465 = vpop.f32.mrb[0].mxu0
    %v1466 = vadd.f32 %v1382, %v1465
    %v1467 = vpop.f32.mrb[0].mxu0
    %1468 = vdwg.mxu0
    %s1469 = scalar_lea.vmem %s11, 32
    %v1470 = vld [vmem:[%s1469] sm:$0xf]
    %v1472 = vsel %vm451, %v1289, 0
    %v1475 = vsel %vm451, %v1294, 0
    %v1478 = vsel %vm458, %v1470, 0
    %1480 = vmatprep.subr.mxu0 0.0
    %1481 = vmatpush1.msra.mxu0 %v1478
    %1482 = vmatprep.subr.mxu0 0.0
    %1483 = vmatpush1.msra.mxu0 0.0
    %1484 = vmatprep.subr.mxu0 0.0
    %1485 = vmatpush1.msra.mxu0 0.0
    %1486 = vmatprep.subr.mxu0 0.0
    %1487 = vmatpush1.msra.mxu0 0.0
    %1488 = vmatprep.subr.mxu0 0.0
    %1489 = vmatpush1.msra.mxu0 0.0
    %1490 = vmatprep.subr.mxu0 0.0
    %1491 = vmatpush1.msra.mxu0 0.0
    %1492 = vmatprep.subr.mxu0 0.0
    %1493 = vmatpush1.msra.mxu0 0.0
    %1494 = vmatprep.subr.mxu0 0.0
    %1495 = vmatpush1.msra.mxu0 0.0
    %1496 = vmatprep.subr.mxu0 0.0
    %1497 = vmatpush1.msra.mxu0 0.0
    %1498 = vmatprep.subr.mxu0 0.0
    %1499 = vmatpush1.msra.mxu0 0.0
    %1500 = vmatprep.subr.mxu0 0.0
    %1501 = vmatpush1.msra.mxu0 0.0
    %1502 = vmatprep.subr.mxu0 0.0
    %1503 = vmatpush1.msra.mxu0 0.0
    %1504 = vmatprep.subr.mxu0 0.0
    %1505 = vmatpush1.msra.mxu0 0.0
    %1506 = vmatprep.subr.mxu0 0.0
    %1507 = vmatpush1.msra.mxu0 0.0
    %1508 = vmatprep.subr.mxu0 0.0
    %1509 = vmatpush1.msra.mxu0 0.0
    %1510 = vmatprep.subr.mxu0 0.0
    %1511 = vmatpush1.msra.mxu0 0.0
    %1512 = vmatprep.subr.mxu0 0.0
    %1513 = vmatpush1.msra.mxu0 0.0
    %1514 = vmatprep.subr.mxu0 0.0
    %1515 = vmatpush1.msra.mxu0 0.0
    %1516 = vmatprep.subr.mxu0 0.0
    %1517 = vmatpush1.msra.mxu0 0.0
    %1518 = vmatprep.subr.mxu0 0.0
    %1519 = vmatpush1.msra.mxu0 0.0
    %1520 = vmatprep.subr.mxu0 0.0
    %1521 = vmatpush1.msra.mxu0 0.0
    %1522 = vmatprep.subr.mxu0 0.0
    %1523 = vmatpush1.msra.mxu0 0.0
    %1524 = vmatprep.subr.mxu0 0.0
    %1525 = vmatpush1.msra.mxu0 0.0
    %1526 = vmatprep.subr.mxu0 0.0
    %1527 = vmatpush1.msra.mxu0 0.0
    %1528 = vmatprep.subr.mxu0 0.0
    %1529 = vmatpush1.msra.mxu0 0.0
    %1530 = vmatprep.subr.mxu0 0.0
    %1531 = vmatpush1.msra.mxu0 0.0
    %1532 = vmatprep.subr.mxu0 0.0
    %1533 = vmatpush1.msra.mxu0 0.0
    %1534 = vmatprep.subr.mxu0 0.0
    %1535 = vmatpush1.msra.mxu0 0.0
    %1536 = vmatprep.subr.mxu0 0.0
    %1537 = vmatpush1.msra.mxu0 0.0
    %1538 = vmatprep.subr.mxu0 0.0
    %1539 = vmatpush1.msra.mxu0 0.0
    %1540 = vmatprep.subr.mxu0 0.0
    %1541 = vmatpush1.msra.mxu0 0.0
    %1542 = vmatprep.subr.mxu0 0.0
    %1543 = vmatpush1.msra.mxu0 0.0
    %1544 = vmatprep.mubr.f32.mxu0 0.0
    %1545 = vmatmul.mubr.f32.gmra.mrb[0].mxu0 %v1472
    %v1546 = vpop.f32.mrb[0].mxu0
    %v1547 = vadd.f32 0.0, %v1546
    %v1548 = vpop.f32.mrb[0].mxu0
    %1549 = vmatprep.mubr.f32.mxu0 0.0
    %1550 = vmatmul.mubr.f32.gmra.mrb[0].mxu0 %v1475
    %v1551 = vpop.f32.mrb[0].mxu0
    %v1552 = vadd.f32 0.0, %v1551
    %v1553 = vpop.f32.mrb[0].mxu0
    %1554 = vdwg.mxu0
    %v1555 = vadd.f32 %v1461, %v1547
    %v1556 = vadd.f32 %v1466, %v1552
    %v1558 = vlaneseq
    %v1559 = vshrl.u32 %v1558, 7
    %v1560 = vsub.s32 0, %v1559
    %v1561 = vrot.slane %v1146, %v1560
    %v1563 = vadd.f32 %v1555, %v1561
    %v1564 = vadd.f32 %v1556, %v1561
    %v1565 = vmax.f32 %v1563, 0.0
    %v1566 = vmax.f32 %v1564, 0.0
    %v1567 = vadd.f32 %v1143, %v1565
    %v1568 = vadd.f32 %v1144, %v1566
    %v1570 = vsel %vm285, %v274, 0
    %v1573 = vsel %vm285, %v275, 0
    %1575 = vmatprep.subr.mxu0 0.0
    %1576 = vmatpush1.msra.mxu0 %v1567
    %1577 = vmatprep.subr.mxu0 0.0
    %1578 = vmatpush1.msra.mxu0 %v1568
    %1579 = vmatprep.subr.mxu0 0.0
    %1580 = vmatpush1.msra.mxu0 0.0
    %1581 = vmatprep.subr.mxu0 0.0
    %1582 = vmatpush1.msra.mxu0 0.0
    %1583 = vmatprep.subr.mxu0 0.0
    %1584 = vmatpush1.msra.mxu0 0.0
    %1585 = vmatprep.subr.mxu0 0.0
    %1586 = vmatpush1.msra.mxu0 0.0
    %1587 = vmatprep.subr.mxu0 0.0
    %1588 = vmatpush1.msra.mxu0 0.0
    %1589 = vmatprep.subr.mxu0 0.0
    %1590 = vmatpush1.msra.mxu0 0.0
    %1591 = vmatprep.subr.mxu0 0.0
    %1592 = vmatpush1.msra.mxu0 0.0
    %1593 = vmatprep.subr.mxu0 0.0
    %1594 = vmatpush1.msra.mxu0 0.0
    %1595 = vmatprep.subr.mxu0 0.0
    %1596 = vmatpush1.msra.mxu0 0.0
    %1597 = vmatprep.subr.mxu0 0.0
    %1598 = vmatpush1.msra.mxu0 0.0
    %1599 = vmatprep.subr.mxu0 0.0
    %1600 = vmatpush1.msra.mxu0 0.0
    %1601 = vmatprep.subr.mxu0 0.0
    %1602 = vmatpush1.msra.mxu0 0.0
    %1603 = vmatprep.subr.mxu0 0.0
    %1604 = vmatpush1.msra.mxu0 0.0
    %1605 = vmatprep.subr.mxu0 0.0
    %1606 = vmatpush1.msra.mxu0 0.0
    %1607 = vmatprep.subr.mxu0 0.0
    %1608 = vmatpush1.msra.mxu0 0.0
    %1609 = vmatprep.subr.mxu0 0.0
    %1610 = vmatpush1.msra.mxu0 0.0
    %1611 = vmatprep.subr.mxu0 0.0
    %1612 = vmatpush1.msra.mxu0 0.0
    %1613 = vmatprep.subr.mxu0 0.0
    %1614 = vmatpush1.msra.mxu0 0.0
    %1615 = vmatprep.subr.mxu0 0.0
    %1616 = vmatpush1.msra.mxu0 0.0
    %1617 = vmatprep.subr.mxu0 0.0
    %1618 = vmatpush1.msra.mxu0 0.0
    %1619 = vmatprep.subr.mxu0 0.0
    %1620 = vmatpush1.msra.mxu0 0.0
    %1621 = vmatprep.subr.mxu0 0.0
    %1622 = vmatpush1.msra.mxu0 0.0
    %1623 = vmatprep.subr.mxu0 0.0
    %1624 = vmatpush1.msra.mxu0 0.0
    %1625 = vmatprep.subr.mxu0 0.0
    %1626 = vmatpush1.msra.mxu0 0.0
    %1627 = vmatprep.subr.mxu0 0.0
    %1628 = vmatpush1.msra.mxu0 0.0
    %1629 = vmatprep.subr.mxu0 0.0
    %1630 = vmatpush1.msra.mxu0 0.0
    %1631 = vmatprep.subr.mxu0 0.0
    %1632 = vmatpush1.msra.mxu0 0.0
    %1633 = vmatprep.subr.mxu0 0.0
    %1634 = vmatpush1.msra.mxu0 0.0
    %1635 = vmatprep.subr.mxu0 0.0
    %1636 = vmatpush1.msra.mxu0 0.0
    %1637 = vmatprep.subr.mxu0 0.0
    %1638 = vmatpush1.msra.mxu0 0.0
    %1639 = vmatprep.mubr.f32.mxu0 0.0
    %1640 = vmatmul.mubr.f32.gmra.mrb[0].mxu0 %v1570
    %v1641 = vpop.f32.mrb[0].mxu0
    %v1642 = vadd.f32 0.0, %v1641
    %v1643 = vpop.f32.mrb[0].mxu0
    %1644 = vmatprep.mubr.f32.mxu0 0.0
    %1645 = vmatmul.mubr.f32.gmra.mrb[0].mxu0 %v1573
    %v1646 = vpop.f32.mrb[0].mxu0
    %v1647 = vadd.f32 0.0, %v1646
    %v1648 = vpop.f32.mrb[0].mxu0
    %1649 = vdwg.mxu0
    %v1651 = vsel %vm285, %v277, 0
    %v1654 = vsel %vm285, %v278, 0
    %1656 = vmatprep.subr.mxu0 0.0
    %1657 = vmatpush1.msra.mxu0 %v1567
    %1658 = vmatprep.subr.mxu0 0.0
    %1659 = vmatpush1.msra.mxu0 %v1568
    %1660 = vmatprep.subr.mxu0 0.0
    %1661 = vmatpush1.msra.mxu0 0.0
    %1662 = vmatprep.subr.mxu0 0.0
    %1663 = vmatpush1.msra.mxu0 0.0
    %1664 = vmatprep.subr.mxu0 0.0
    %1665 = vmatpush1.msra.mxu0 0.0
    %1666 = vmatprep.subr.mxu0 0.0
    %1667 = vmatpush1.msra.mxu0 0.0
    %1668 = vmatprep.subr.mxu0 0.0
    %1669 = vmatpush1.msra.mxu0 0.0
    %1670 = vmatprep.subr.mxu0 0.0
    %1671 = vmatpush1.msra.mxu0 0.0
    %1672 = vmatprep.subr.mxu0 0.0
    %1673 = vmatpush1.msra.mxu0 0.0
    %1674 = vmatprep.subr.mxu0 0.0
    %1675 = vmatpush1.msra.mxu0 0.0
    %1676 = vmatprep.subr.mxu0 0.0
    %1677 = vmatpush1.msra.mxu0 0.0
    %1678 = vmatprep.subr.mxu0 0.0
    %1679 = vmatpush1.msra.mxu0 0.0
    %1680 = vmatprep.subr.mxu0 0.0
    %1681 = vmatpush1.msra.mxu0 0.0
    %1682 = vmatprep.subr.mxu0 0.0
    %1683 = vmatpush1.msra.mxu0 0.0
    %1684 = vmatprep.subr.mxu0 0.0
    %1685 = vmatpush1.msra.mxu0 0.0
    %1686 = vmatprep.subr.mxu0 0.0
    %1687 = vmatpush1.msra.mxu0 0.0
    %1688 = vmatprep.subr.mxu0 0.0
    %1689 = vmatpush1.msra.mxu0 0.0
    %1690 = vmatprep.subr.mxu0 0.0
    %1691 = vmatpush1.msra.mxu0 0.0
    %1692 = vmatprep.subr.mxu0 0.0
    %1693 = vmatpush1.msra.mxu0 0.0
    %1694 = vmatprep.subr.mxu0 0.0
    %1695 = vmatpush1.msra.mxu0 0.0
    %1696 = vmatprep.subr.mxu0 0.0
    %1697 = vmatpush1.msra.mxu0 0.0
    %1698 = vmatprep.subr.mxu0 0.0
    %1699 = vmatpush1.msra.mxu0 0.0
    %1700 = vmatprep.subr.mxu0 0.0
    %1701 = vmatpush1.msra.mxu0 0.0
    %1702 = vmatprep.subr.mxu0 0.0
    %1703 = vmatpush1.msra.mxu0 0.0
    %1704 = vmatprep.subr.mxu0 0.0
    %1705 = vmatpush1.msra.mxu0 0.0
    %1706 = vmatprep.subr.mxu0 0.0
    %1707 = vmatpush1.msra.mxu0 0.0
    %1708 = vmatprep.subr.mxu0 0.0
    %1709 = vmatpush1.msra.mxu0 0.0
    %1710 = vmatprep.subr.mxu0 0.0
    %1711 = vmatpush1.msra.mxu0 0.0
    %1712 = vmatprep.subr.mxu0 0.0
    %1713 = vmatpush1.msra.mxu0 0.0
    %1714 = vmatprep.subr.mxu0 0.0
    %1715 = vmatpush1.msra.mxu0 0.0
    %1716 = vmatprep.subr.mxu0 0.0
    %1717 = vmatpush1.msra.mxu0 0.0
    %1718 = vmatprep.subr.mxu0 0.0
    %1719 = vmatpush1.msra.mxu0 0.0
    %1720 = vmatprep.mubr.f32.mxu0 0.0
    %1721 = vmatmul.mubr.f32.gmra.mrb[0].mxu0 %v1651
    %v1722 = vpop.f32.mrb[0].mxu0
    %v1723 = vadd.f32 0.0, %v1722
    %v1724 = vpop.f32.mrb[0].mxu0
    %1725 = vmatprep.mubr.f32.mxu0 0.0
    %1726 = vmatmul.mubr.f32.gmra.mrb[0].mxu0 %v1654
    %v1727 = vpop.f32.mrb[0].mxu0
    %v1728 = vadd.f32 0.0, %v1727
    %v1729 = vpop.f32.mrb[0].mxu0
    %1730 = vdwg.mxu0
    %v1731 = vld [vmem:[%s15] sm:$0xf]
    %s1732 = scalar_lea.vmem %s15, 4
    %v1733 = vld [vmem:[%s1732] sm:$0xf]
    %v1735 = vsel %vm451, %v1567, 0
    %v1738 = vsel %vm451, %v1568, 0
    %v1741 = vsel %vm458, %v1733, 0
    %1743 = vmatprep.subr.mxu0 0.0
    %1744 = vmatpush1.msra.mxu0 %v1741
    %1745 = vmatprep.subr.mxu0 0.0
    %1746 = vmatpush1.msra.mxu0 0.0
    %1747 = vmatprep.subr.mxu0 0.0
    %1748 = vmatpush1.msra.mxu0 0.0
    %1749 = vmatprep.subr.mxu0 0.0
    %1750 = vmatpush1.msra.mxu0 0.0
    %1751 = vmatprep.subr.mxu0 0.0
    %1752 = vmatpush1.msra.mxu0 0.0
    %1753 = vmatprep.subr.mxu0 0.0
    %1754 = vmatpush1.msra.mxu0 0.0
    %1755 = vmatprep.subr.mxu0 0.0
    %1756 = vmatpush1.msra.mxu0 0.0
    %1757 = vmatprep.subr.mxu0 0.0
    %1758 = vmatpush1.msra.mxu0 0.0
    %1759 = vmatprep.subr.mxu0 0.0
    %1760 = vmatpush1.msra.mxu0 0.0
    %1761 = vmatprep.subr.mxu0 0.0
    %1762 = vmatpush1.msra.mxu0 0.0
    %1763 = vmatprep.subr.mxu0 0.0
    %1764 = vmatpush1.msra.mxu0 0.0
    %1765 = vmatprep.subr.mxu0 0.0
    %1766 = vmatpush1.msra.mxu0 0.0
    %1767 = vmatprep.subr.mxu0 0.0
    %1768 = vmatpush1.msra.mxu0 0.0
    %1769 = vmatprep.subr.mxu0 0.0
    %1770 = vmatpush1.msra.mxu0 0.0
    %1771 = vmatprep.subr.mxu0 0.0
    %1772 = vmatpush1.msra.mxu0 0.0
    %1773 = vmatprep.subr.mxu0 0.0
    %1774 = vmatpush1.msra.mxu0 0.0
    %1775 = vmatprep.subr.mxu0 0.0
    %1776 = vmatpush1.msra.mxu0 0.0
    %1777 = vmatprep.subr.mxu0 0.0
    %1778 = vmatpush1.msra.mxu0 0.0
    %1779 = vmatprep.subr.mxu0 0.0
    %1780 = vmatpush1.msra.mxu0 0.0
    %1781 = vmatprep.subr.mxu0 0.0
    %1782 = vmatpush1.msra.mxu0 0.0
    %1783 = vmatprep.subr.mxu0 0.0
    %1784 = vmatpush1.msra.mxu0 0.0
    %1785 = vmatprep.subr.mxu0 0.0
    %1786 = vmatpush1.msra.mxu0 0.0
    %1787 = vmatprep.subr.mxu0 0.0
    %1788 = vmatpush1.msra.mxu0 0.0
    %1789 = vmatprep.subr.mxu0 0.0
    %1790 = vmatpush1.msra.mxu0 0.0
    %1791 = vmatprep.subr.mxu0 0.0
    %1792 = vmatpush1.msra.mxu0 0.0
    %1793 = vmatprep.subr.mxu0 0.0
    %1794 = vmatpush1.msra.mxu0 0.0
    %1795 = vmatprep.subr.mxu0 0.0
    %1796 = vmatpush1.msra.mxu0 0.0
    %1797 = vmatprep.subr.mxu0 0.0
    %1798 = vmatpush1.msra.mxu0 0.0
    %1799 = vmatprep.subr.mxu0 0.0
    %1800 = vmatpush1.msra.mxu0 0.0
    %1801 = vmatprep.subr.mxu0 0.0
    %1802 = vmatpush1.msra.mxu0 0.0
    %1803 = vmatprep.subr.mxu0 0.0
    %1804 = vmatpush1.msra.mxu0 0.0
    %1805 = vmatprep.subr.mxu0 0.0
    %1806 = vmatpush1.msra.mxu0 0.0
    %1807 = vmatprep.mubr.f32.mxu0 0.0
    %1808 = vmatmul.mubr.f32.gmra.mrb[0].mxu0 %v1735
    %v1809 = vpop.f32.mrb[0].mxu0
    %v1810 = vadd.f32 0.0, %v1809
    %v1811 = vpop.f32.mrb[0].mxu0
    %1812 = vmatprep.mubr.f32.mxu0 0.0
    %1813 = vmatmul.mubr.f32.gmra.mrb[0].mxu0 %v1738
    %v1814 = vpop.f32.mrb[0].mxu0
    %v1815 = vadd.f32 0.0, %v1814
    %v1816 = vpop.f32.mrb[0].mxu0
    %1817 = vdwg.mxu0
    %v1819 = vsel %vm451, %v1642, 0
    %v1822 = vsel %vm451, %v1647, 0
    %v1825 = vsel %vm458, %v1731, 0
    %1827 = vmatprep.subr.mxu0 0.0
    %1828 = vmatpush1.msra.mxu0 %v1825
    %1829 = vmatprep.subr.mxu0 0.0
    %1830 = vmatpush1.msra.mxu0 0.0
    %1831 = vmatprep.subr.mxu0 0.0
    %1832 = vmatpush1.msra.mxu0 0.0
    %1833 = vmatprep.subr.mxu0 0.0
    %1834 = vmatpush1.msra.mxu0 0.0
    %1835 = vmatprep.subr.mxu0 0.0
    %1836 = vmatpush1.msra.mxu0 0.0
    %1837 = vmatprep.subr.mxu0 0.0
    %1838 = vmatpush1.msra.mxu0 0.0
    %1839 = vmatprep.subr.mxu0 0.0
    %1840 = vmatpush1.msra.mxu0 0.0
    %1841 = vmatprep.subr.mxu0 0.0
    %1842 = vmatpush1.msra.mxu0 0.0
    %1843 = vmatprep.subr.mxu0 0.0
    %1844 = vmatpush1.msra.mxu0 0.0
    %1845 = vmatprep.subr.mxu0 0.0
    %1846 = vmatpush1.msra.mxu0 0.0
    %1847 = vmatprep.subr.mxu0 0.0
    %1848 = vmatpush1.msra.mxu0 0.0
    %1849 = vmatprep.subr.mxu0 0.0
    %1850 = vmatpush1.msra.mxu0 0.0
    %1851 = vmatprep.subr.mxu0 0.0
    %1852 = vmatpush1.msra.mxu0 0.0
    %1853 = vmatprep.subr.mxu0 0.0
    %1854 = vmatpush1.msra.mxu0 0.0
    %1855 = vmatprep.subr.mxu0 0.0
    %1856 = vmatpush1.msra.mxu0 0.0
    %1857 = vmatprep.subr.mxu0 0.0
    %1858 = vmatpush1.msra.mxu0 0.0
    %1859 = vmatprep.subr.mxu0 0.0
    %1860 = vmatpush1.msra.mxu0 0.0
    %1861 = vmatprep.subr.mxu0 0.0
    %1862 = vmatpush1.msra.mxu0 0.0
    %1863 = vmatprep.subr.mxu0 0.0
    %1864 = vmatpush1.msra.mxu0 0.0
    %1865 = vmatprep.subr.mxu0 0.0
    %1866 = vmatpush1.msra.mxu0 0.0
    %1867 = vmatprep.subr.mxu0 0.0
    %1868 = vmatpush1.msra.mxu0 0.0
    %1869 = vmatprep.subr.mxu0 0.0
    %1870 = vmatpush1.msra.mxu0 0.0
    %1871 = vmatprep.subr.mxu0 0.0
    %1872 = vmatpush1.msra.mxu0 0.0
    %1873 = vmatprep.subr.mxu0 0.0
    %1874 = vmatpush1.msra.mxu0 0.0
    %1875 = vmatprep.subr.mxu0 0.0
    %1876 = vmatpush1.msra.mxu0 0.0
    %1877 = vmatprep.subr.mxu0 0.0
    %1878 = vmatpush1.msra.mxu0 0.0
    %1879 = vmatprep.subr.mxu0 0.0
    %1880 = vmatpush1.msra.mxu0 0.0
    %1881 = vmatprep.subr.mxu0 0.0
    %1882 = vmatpush1.msra.mxu0 0.0
    %1883 = vmatprep.subr.mxu0 0.0
    %1884 = vmatpush1.msra.mxu0 0.0
    %1885 = vmatprep.subr.mxu0 0.0
    %1886 = vmatpush1.msra.mxu0 0.0
    %1887 = vmatprep.subr.mxu0 0.0
    %1888 = vmatpush1.msra.mxu0 0.0
    %1889 = vmatprep.subr.mxu0 0.0
    %1890 = vmatpush1.msra.mxu0 0.0
    %1891 = vmatprep.mubr.f32.mxu0 0.0
    %1892 = vmatmul.mubr.f32.gmra.mrb[0].mxu0 %v1819
    %v1893 = vpop.f32.mrb[0].mxu0
    %v1894 = vadd.f32 %v1810, %v1893
    %v1895 = vpop.f32.mrb[0].mxu0
    %1896 = vmatprep.mubr.f32.mxu0 0.0
    %1897 = vmatmul.mubr.f32.gmra.mrb[0].mxu0 %v1822
    %v1898 = vpop.f32.mrb[0].mxu0
    %v1899 = vadd.f32 %v1815, %v1898
    %v1900 = vpop.f32.mrb[0].mxu0
    %1901 = vdwg.mxu0
    %s1902 = scalar_lea.vmem %s15, 8
    %v1903 = vld [vmem:[%s1902] sm:$0xf]
    %v1905 = vsel %vm451, %v1723, 0
    %v1908 = vsel %vm451, %v1728, 0
    %v1911 = vsel %vm458, %v1903, 0
    %1913 = vmatprep.subr.mxu0 0.0
    %1914 = vmatpush1.msra.mxu0 %v1911
    %1915 = vmatprep.subr.mxu0 0.0
    %1916 = vmatpush1.msra.mxu0 0.0
    %1917 = vmatprep.subr.mxu0 0.0
    %1918 = vmatpush1.msra.mxu0 0.0
    %1919 = vmatprep.subr.mxu0 0.0
    %1920 = vmatpush1.msra.mxu0 0.0
    %1921 = vmatprep.subr.mxu0 0.0
    %1922 = vmatpush1.msra.mxu0 0.0
    %1923 = vmatprep.subr.mxu0 0.0
    %1924 = vmatpush1.msra.mxu0 0.0
    %1925 = vmatprep.subr.mxu0 0.0
    %1926 = vmatpush1.msra.mxu0 0.0
    %1927 = vmatprep.subr.mxu0 0.0
    %1928 = vmatpush1.msra.mxu0 0.0
    %1929 = vmatprep.subr.mxu0 0.0
    %1930 = vmatpush1.msra.mxu0 0.0
    %1931 = vmatprep.subr.mxu0 0.0
    %1932 = vmatpush1.msra.mxu0 0.0
    %1933 = vmatprep.subr.mxu0 0.0
    %1934 = vmatpush1.msra.mxu0 0.0
    %1935 = vmatprep.subr.mxu0 0.0
    %1936 = vmatpush1.msra.mxu0 0.0
    %1937 = vmatprep.subr.mxu0 0.0
    %1938 = vmatpush1.msra.mxu0 0.0
    %1939 = vmatprep.subr.mxu0 0.0
    %1940 = vmatpush1.msra.mxu0 0.0
    %1941 = vmatprep.subr.mxu0 0.0
    %1942 = vmatpush1.msra.mxu0 0.0
    %1943 = vmatprep.subr.mxu0 0.0
    %1944 = vmatpush1.msra.mxu0 0.0
    %1945 = vmatprep.subr.mxu0 0.0
    %1946 = vmatpush1.msra.mxu0 0.0
    %1947 = vmatprep.subr.mxu0 0.0
    %1948 = vmatpush1.msra.mxu0 0.0
    %1949 = vmatprep.subr.mxu0 0.0
    %1950 = vmatpush1.msra.mxu0 0.0
    %1951 = vmatprep.subr.mxu0 0.0
    %1952 = vmatpush1.msra.mxu0 0.0
    %1953 = vmatprep.subr.mxu0 0.0
    %1954 = vmatpush1.msra.mxu0 0.0
    %1955 = vmatprep.subr.mxu0 0.0
    %1956 = vmatpush1.msra.mxu0 0.0
    %1957 = vmatprep.subr.mxu0 0.0
    %1958 = vmatpush1.msra.mxu0 0.0
    %1959 = vmatprep.subr.mxu0 0.0
    %1960 = vmatpush1.msra.mxu0 0.0
    %1961 = vmatprep.subr.mxu0 0.0
    %1962 = vmatpush1.msra.mxu0 0.0
    %1963 = vmatprep.subr.mxu0 0.0
    %1964 = vmatpush1.msra.mxu0 0.0
    %1965 = vmatprep.subr.mxu0 0.0
    %1966 = vmatpush1.msra.mxu0 0.0
    %1967 = vmatprep.subr.mxu0 0.0
    %1968 = vmatpush1.msra.mxu0 0.0
    %1969 = vmatprep.subr.mxu0 0.0
    %1970 = vmatpush1.msra.mxu0 0.0
    %1971 = vmatprep.subr.mxu0 0.0
    %1972 = vmatpush1.msra.mxu0 0.0
    %1973 = vmatprep.subr.mxu0 0.0
    %1974 = vmatpush1.msra.mxu0 0.0
    %1975 = vmatprep.subr.mxu0 0.0
    %1976 = vmatpush1.msra.mxu0 0.0
    %1977 = vmatprep.mubr.f32.mxu0 0.0
    %1978 = vmatmul.mubr.f32.gmra.mrb[0].mxu0 %v1905
    %v1979 = vpop.f32.mrb[0].mxu0
    %v1980 = vadd.f32 0.0, %v1979
    %v1981 = vpop.f32.mrb[0].mxu0
    %1982 = vmatprep.mubr.f32.mxu0 0.0
    %1983 = vmatmul.mubr.f32.gmra.mrb[0].mxu0 %v1908
    %v1984 = vpop.f32.mrb[0].mxu0
    %v1985 = vadd.f32 0.0, %v1984
    %v1986 = vpop.f32.mrb[0].mxu0
    %1987 = vdwg.mxu0
    %v1988 = vadd.f32 %v1894, %v1980
    %v1989 = vadd.f32 %v1899, %v1985
    %v1990 = vadd.f32 %v1988, %v279
    %v1991 = vadd.f32 %v1989, %v280
    %v1992 = vld [vmem:[%s3] sm:$0xff]
    %v1993 = vld [vmem:[%s3 + $0x8] sm:$0xff]
    %1994 = vmatprep.subr.mxu0 0.0
    %1995 = vmatpush1.msra.mxu0 %v1992
    %1996 = vmatprep.subr.mxu0 0.0
    %1997 = vmatpush1.msra.mxu0 %v1993
    %1998 = vmatprep.subr.mxu0 0.0
    %1999 = vmatpush1.msra.mxu0 0.0
    %2000 = vmatprep.subr.mxu0 0.0
    %2001 = vmatpush1.msra.mxu0 0.0
    %2002 = vmatprep.subr.mxu0 0.0
    %2003 = vmatpush1.msra.mxu0 0.0
    %2004 = vmatprep.subr.mxu0 0.0
    %2005 = vmatpush1.msra.mxu0 0.0
    %2006 = vmatprep.subr.mxu0 0.0
    %2007 = vmatpush1.msra.mxu0 0.0
    %2008 = vmatprep.subr.mxu0 0.0
    %2009 = vmatpush1.msra.mxu0 0.0
    %2010 = vmatprep.subr.mxu0 0.0
    %2011 = vmatpush1.msra.mxu0 0.0
    %2012 = vmatprep.subr.mxu0 0.0
    %2013 = vmatpush1.msra.mxu0 0.0
    %2014 = vmatprep.subr.mxu0 0.0
    %2015 = vmatpush1.msra.mxu0 0.0
    %2016 = vmatprep.subr.mxu0 0.0
    %2017 = vmatpush1.msra.mxu0 0.0
    %2018 = vmatprep.subr.mxu0 0.0
    %2019 = vmatpush1.msra.mxu0 0.0
    %2020 = vmatprep.subr.mxu0 0.0
    %2021 = vmatpush1.msra.mxu0 0.0
    %2022 = vmatprep.subr.mxu0 0.0
    %2023 = vmatpush1.msra.mxu0 0.0
    %2024 = vmatprep.subr.mxu0 0.0
    %2025 = vmatpush1.msra.mxu0 0.0
    %2026 = vmatprep.subr.mxu0 0.0
    %2027 = vmatpush1.msra.mxu0 0.0
    %2028 = vmatprep.subr.mxu0 0.0
    %2029 = vmatpush1.msra.mxu0 0.0
    %2030 = vmatprep.subr.mxu0 0.0
    %2031 = vmatpush1.msra.mxu0 0.0
    %2032 = vmatprep.subr.mxu0 0.0
    %2033 = vmatpush1.msra.mxu0 0.0
    %2034 = vmatprep.subr.mxu0 0.0
    %2035 = vmatpush1.msra.mxu0 0.0
    %2036 = vmatprep.subr.mxu0 0.0
    %2037 = vmatpush1.msra.mxu0 0.0
    %2038 = vmatprep.subr.mxu0 0.0
    %2039 = vmatpush1.msra.mxu0 0.0
    %2040 = vmatprep.subr.mxu0 0.0
    %2041 = vmatpush1.msra.mxu0 0.0
    %2042 = vmatprep.subr.mxu0 0.0
    %2043 = vmatpush1.msra.mxu0 0.0
    %2044 = vmatprep.subr.mxu0 0.0
    %2045 = vmatpush1.msra.mxu0 0.0
    %2046 = vmatprep.subr.mxu0 0.0
    %2047 = vmatpush1.msra.mxu0 0.0
    %2048 = vmatprep.subr.mxu0 0.0
    %2049 = vmatpush1.msra.mxu0 0.0
    %2050 = vmatprep.subr.mxu0 0.0
    %2051 = vmatpush1.msra.mxu0 0.0
    %2052 = vmatprep.subr.mxu0 0.0
    %2053 = vmatpush1.msra.mxu0 0.0
    %2054 = vmatprep.subr.mxu0 0.0
    %2055 = vmatpush1.msra.mxu0 0.0
    %2056 = vmatprep.subr.mxu0 0.0
    %2057 = vmatpush1.msra.mxu0 0.0
    %2058 = vmatprep.mubr.f32.mxu0 0.0
    %2059 = vmatmul.mubr.f32.gmra.mrb[0].mxu0 %v287
    %v2060 = vpop.f32.mrb[0].mxu0
    %v2061 = vadd.f32 0.0, %v2060
    %v2062 = vpop.f32.mrb[0].mxu0
    %2063 = vmatprep.mubr.f32.mxu0 0.0
    %2064 = vmatmul.mubr.f32.gmra.mrb[0].mxu0 %v290
    %v2065 = vpop.f32.mrb[0].mxu0
    %v2066 = vadd.f32 0.0, %v2065
    %v2067 = vpop.f32.mrb[0].mxu0
    %2068 = vdwg.mxu0
    %2069 = vmatprep.subr.mxu0 0.0
    %2070 = vmatpush1.msra.mxu0 %v1992
    %2071 = vmatprep.subr.mxu0 0.0
    %2072 = vmatpush1.msra.mxu0 %v1993
    %2073 = vmatprep.subr.mxu0 0.0
    %2074 = vmatpush1.msra.mxu0 0.0
    %2075 = vmatprep.subr.mxu0 0.0
    %2076 = vmatpush1.msra.mxu0 0.0
    %2077 = vmatprep.subr.mxu0 0.0
    %2078 = vmatpush1.msra.mxu0 0.0
    %2079 = vmatprep.subr.mxu0 0.0
    %2080 = vmatpush1.msra.mxu0 0.0
    %2081 = vmatprep.subr.mxu0 0.0
    %2082 = vmatpush1.msra.mxu0 0.0
    %2083 = vmatprep.subr.mxu0 0.0
    %2084 = vmatpush1.msra.mxu0 0.0
    %2085 = vmatprep.subr.mxu0 0.0
    %2086 = vmatpush1.msra.mxu0 0.0
    %2087 = vmatprep.subr.mxu0 0.0
    %2088 = vmatpush1.msra.mxu0 0.0
    %2089 = vmatprep.subr.mxu0 0.0
    %2090 = vmatpush1.msra.mxu0 0.0
    %2091 = vmatprep.subr.mxu0 0.0
    %2092 = vmatpush1.msra.mxu0 0.0
    %2093 = vmatprep.subr.mxu0 0.0
    %2094 = vmatpush1.msra.mxu0 0.0
    %2095 = vmatprep.subr.mxu0 0.0
    %2096 = vmatpush1.msra.mxu0 0.0
    %2097 = vmatprep.subr.mxu0 0.0
    %2098 = vmatpush1.msra.mxu0 0.0
    %2099 = vmatprep.subr.mxu0 0.0
    %2100 = vmatpush1.msra.mxu0 0.0
    %2101 = vmatprep.subr.mxu0 0.0
    %2102 = vmatpush1.msra.mxu0 0.0
    %2103 = vmatprep.subr.mxu0 0.0
    %2104 = vmatpush1.msra.mxu0 0.0
    %2105 = vmatprep.subr.mxu0 0.0
    %2106 = vmatpush1.msra.mxu0 0.0
    %2107 = vmatprep.subr.mxu0 0.0
    %2108 = vmatpush1.msra.mxu0 0.0
    %2109 = vmatprep.subr.mxu0 0.0
    %2110 = vmatpush1.msra.mxu0 0.0
    %2111 = vmatprep.subr.mxu0 0.0
    %2112 = vmatpush1.msra.mxu0 0.0
    %2113 = vmatprep.subr.mxu0 0.0
    %2114 = vmatpush1.msra.mxu0 0.0
    %2115 = vmatprep.subr.mxu0 0.0
    %2116 = vmatpush1.msra.mxu0 0.0
    %2117 = vmatprep.subr.mxu0 0.0
    %2118 = vmatpush1.msra.mxu0 0.0
    %2119 = vmatprep.subr.mxu0 0.0
    %2120 = vmatpush1.msra.mxu0 0.0
    %2121 = vmatprep.subr.mxu0 0.0
    %2122 = vmatpush1.msra.mxu0 0.0
    %2123 = vmatprep.subr.mxu0 0.0
    %2124 = vmatpush1.msra.mxu0 0.0
    %2125 = vmatprep.subr.mxu0 0.0
    %2126 = vmatpush1.msra.mxu0 0.0
    %2127 = vmatprep.subr.mxu0 0.0
    %2128 = vmatpush1.msra.mxu0 0.0
    %2129 = vmatprep.subr.mxu0 0.0
    %2130 = vmatpush1.msra.mxu0 0.0
    %2131 = vmatprep.subr.mxu0 0.0
    %2132 = vmatpush1.msra.mxu0 0.0
    %2133 = vmatprep.mubr.f32.mxu0 0.0
    %2134 = vmatmul.mubr.f32.gmra.mrb[0].mxu0 %v368
    %v2135 = vpop.f32.mrb[0].mxu0
    %v2136 = vadd.f32 0.0, %v2135
    %v2137 = vpop.f32.mrb[0].mxu0
    %2138 = vmatprep.mubr.f32.mxu0 0.0
    %2139 = vmatmul.mubr.f32.gmra.mrb[0].mxu0 %v371
    %v2140 = vpop.f32.mrb[0].mxu0
    %v2141 = vadd.f32 0.0, %v2140
    %v2142 = vpop.f32.mrb[0].mxu0
    %2143 = vdwg.mxu0
    %v2145 = vsel %vm451, %v1992, 0
    %v2148 = vsel %vm451, %v1993, 0
    %2150 = vmatprep.subr.mxu0 0.0
    %2151 = vmatpush1.msra.mxu0 %v460
    %2152 = vmatprep.subr.mxu0 0.0
    %2153 = vmatpush1.msra.mxu0 0.0
    %2154 = vmatprep.subr.mxu0 0.0
    %2155 = vmatpush1.msra.mxu0 0.0
    %2156 = vmatprep.subr.mxu0 0.0
    %2157 = vmatpush1.msra.mxu0 0.0
    %2158 = vmatprep.subr.mxu0 0.0
    %2159 = vmatpush1.msra.mxu0 0.0
    %2160 = vmatprep.subr.mxu0 0.0
    %2161 = vmatpush1.msra.mxu0 0.0
    %2162 = vmatprep.subr.mxu0 0.0
    %2163 = vmatpush1.msra.mxu0 0.0
    %2164 = vmatprep.subr.mxu0 0.0
    %2165 = vmatpush1.msra.mxu0 0.0
    %2166 = vmatprep.subr.mxu0 0.0
    %2167 = vmatpush1.msra.mxu0 0.0
    %2168 = vmatprep.subr.mxu0 0.0
    %2169 = vmatpush1.msra.mxu0 0.0
    %2170 = vmatprep.subr.mxu0 0.0
    %2171 = vmatpush1.msra.mxu0 0.0
    %2172 = vmatprep.subr.mxu0 0.0
    %2173 = vmatpush1.msra.mxu0 0.0
    %2174 = vmatprep.subr.mxu0 0.0
    %2175 = vmatpush1.msra.mxu0 0.0
    %2176 = vmatprep.subr.mxu0 0.0
    %2177 = vmatpush1.msra.mxu0 0.0
    %2178 = vmatprep.subr.mxu0 0.0
    %2179 = vmatpush1.msra.mxu0 0.0
    %2180 = vmatprep.subr.mxu0 0.0
    %2181 = vmatpush1.msra.mxu0 0.0
    %2182 = vmatprep.subr.mxu0 0.0
    %2183 = vmatpush1.msra.mxu0 0.0
    %2184 = vmatprep.subr.mxu0 0.0
    %2185 = vmatpush1.msra.mxu0 0.0
    %2186 = vmatprep.subr.mxu0 0.0
    %2187 = vmatpush1.msra.mxu0 0.0
    %2188 = vmatprep.subr.mxu0 0.0
    %2189 = vmatpush1.msra.mxu0 0.0
    %2190 = vmatprep.subr.mxu0 0.0
    %2191 = vmatpush1.msra.mxu0 0.0
    %2192 = vmatprep.subr.mxu0 0.0
    %2193 = vmatpush1.msra.mxu0 0.0
    %2194 = vmatprep.subr.mxu0 0.0
    %2195 = vmatpush1.msra.mxu0 0.0
    %2196 = vmatprep.subr.mxu0 0.0
    %2197 = vmatpush1.msra.mxu0 0.0
    %2198 = vmatprep.subr.mxu0 0.0
    %2199 = vmatpush1.msra.mxu0 0.0
    %2200 = vmatprep.subr.mxu0 0.0
    %2201 = vmatpush1.msra.mxu0 0.0
    %2202 = vmatprep.subr.mxu0 0.0
    %2203 = vmatpush1.msra.mxu0 0.0
    %2204 = vmatprep.subr.mxu0 0.0
    %2205 = vmatpush1.msra.mxu0 0.0
    %2206 = vmatprep.subr.mxu0 0.0
    %2207 = vmatpush1.msra.mxu0 0.0
    %2208 = vmatprep.subr.mxu0 0.0
    %2209 = vmatpush1.msra.mxu0 0.0
    %2210 = vmatprep.subr.mxu0 0.0
    %2211 = vmatpush1.msra.mxu0 0.0
    %2212 = vmatprep.subr.mxu0 0.0
    %2213 = vmatpush1.msra.mxu0 0.0
    %2214 = vmatprep.mubr.f32.mxu0 0.0
    %2215 = vmatmul.mubr.f32.gmra.mrb[0].mxu0 %v2145
    %v2216 = vpop.f32.mrb[0].mxu0
    %v2217 = vadd.f32 0.0, %v2216
    %v2218 = vpop.f32.mrb[0].mxu0
    %2219 = vmatprep.mubr.f32.mxu0 0.0
    %2220 = vmatmul.mubr.f32.gmra.mrb[0].mxu0 %v2148
    %v2221 = vpop.f32.mrb[0].mxu0
    %v2222 = vadd.f32 0.0, %v2221
    %v2223 = vpop.f32.mrb[0].mxu0
    %2224 = vdwg.mxu0
    %v2226 = vsel %vm451, %v2061, 0
    %v2229 = vsel %vm451, %v2066, 0
    %2231 = vmatprep.subr.mxu0 0.0
    %2232 = vmatpush1.msra.mxu0 %v544
    %2233 = vmatprep.subr.mxu0 0.0
    %2234 = vmatpush1.msra.mxu0 0.0
    %2235 = vmatprep.subr.mxu0 0.0
    %2236 = vmatpush1.msra.mxu0 0.0
    %2237 = vmatprep.subr.mxu0 0.0
    %2238 = vmatpush1.msra.mxu0 0.0
    %2239 = vmatprep.subr.mxu0 0.0
    %2240 = vmatpush1.msra.mxu0 0.0
    %2241 = vmatprep.subr.mxu0 0.0
    %2242 = vmatpush1.msra.mxu0 0.0
    %2243 = vmatprep.subr.mxu0 0.0
    %2244 = vmatpush1.msra.mxu0 0.0
    %2245 = vmatprep.subr.mxu0 0.0
    %2246 = vmatpush1.msra.mxu0 0.0
    %2247 = vmatprep.subr.mxu0 0.0
    %2248 = vmatpush1.msra.mxu0 0.0
    %2249 = vmatprep.subr.mxu0 0.0
    %2250 = vmatpush1.msra.mxu0 0.0
    %2251 = vmatprep.subr.mxu0 0.0
    %2252 = vmatpush1.msra.mxu0 0.0
    %2253 = vmatprep.subr.mxu0 0.0
    %2254 = vmatpush1.msra.mxu0 0.0
    %2255 = vmatprep.subr.mxu0 0.0
    %2256 = vmatpush1.msra.mxu0 0.0
    %2257 = vmatprep.subr.mxu0 0.0
    %2258 = vmatpush1.msra.mxu0 0.0
    %2259 = vmatprep.subr.mxu0 0.0
    %2260 = vmatpush1.msra.mxu0 0.0
    %2261 = vmatprep.subr.mxu0 0.0
    %2262 = vmatpush1.msra.mxu0 0.0
    %2263 = vmatprep.subr.mxu0 0.0
    %2264 = vmatpush1.msra.mxu0 0.0
    %2265 = vmatprep.subr.mxu0 0.0
    %2266 = vmatpush1.msra.mxu0 0.0
    %2267 = vmatprep.subr.mxu0 0.0
    %2268 = vmatpush1.msra.mxu0 0.0
    %2269 = vmatprep.subr.mxu0 0.0
    %2270 = vmatpush1.msra.mxu0 0.0
    %2271 = vmatprep.subr.mxu0 0.0
    %2272 = vmatpush1.msra.mxu0 0.0
    %2273 = vmatprep.subr.mxu0 0.0
    %2274 = vmatpush1.msra.mxu0 0.0
    %2275 = vmatprep.subr.mxu0 0.0
    %2276 = vmatpush1.msra.mxu0 0.0
    %2277 = vmatprep.subr.mxu0 0.0
    %2278 = vmatpush1.msra.mxu0 0.0
    %2279 = vmatprep.subr.mxu0 0.0
    %2280 = vmatpush1.msra.mxu0 0.0
    %2281 = vmatprep.subr.mxu0 0.0
    %2282 = vmatpush1.msra.mxu0 0.0
    %2283 = vmatprep.subr.mxu0 0.0
    %2284 = vmatpush1.msra.mxu0 0.0
    %2285 = vmatprep.subr.mxu0 0.0
    %2286 = vmatpush1.msra.mxu0 0.0
    %2287 = vmatprep.subr.mxu0 0.0
    %2288 = vmatpush1.msra.mxu0 0.0
    %2289 = vmatprep.subr.mxu0 0.0
    %2290 = vmatpush1.msra.mxu0 0.0
    %2291 = vmatprep.subr.mxu0 0.0
    %2292 = vmatpush1.msra.mxu0 0.0
    %2293 = vmatprep.subr.mxu0 0.0
    %2294 = vmatpush1.msra.mxu0 0.0
    %2295 = vmatprep.mubr.f32.mxu0 0.0
    %2296 = vmatmul.mubr.f32.gmra.mrb[0].mxu0 %v2226
    %v2297 = vpop.f32.mrb[0].mxu0
    %v2298 = vadd.f32 %v2217, %v2297
    %v2299 = vpop.f32.mrb[0].mxu0
    %2300 = vmatprep.mubr.f32.mxu0 0.0
    %2301 = vmatmul.mubr.f32.gmra.mrb[0].mxu0 %v2229
    %v2302 = vpop.f32.mrb[0].mxu0
    %v2303 = vadd.f32 %v2222, %v2302
    %v2304 = vpop.f32.mrb[0].mxu0
    %2305 = vdwg.mxu0
    %v2307 = vsel %vm451, %v2136, 0
    %v2310 = vsel %vm451, %v2141, 0
    %2312 = vmatprep.subr.mxu0 0.0
    %2313 = vmatpush1.msra.mxu0 %v630
    %2314 = vmatprep.subr.mxu0 0.0
    %2315 = vmatpush1.msra.mxu0 0.0
    %2316 = vmatprep.subr.mxu0 0.0
    %2317 = vmatpush1.msra.mxu0 0.0
    %2318 = vmatprep.subr.mxu0 0.0
    %2319 = vmatpush1.msra.mxu0 0.0
    %2320 = vmatprep.subr.mxu0 0.0
    %2321 = vmatpush1.msra.mxu0 0.0
    %2322 = vmatprep.subr.mxu0 0.0
    %2323 = vmatpush1.msra.mxu0 0.0
    %2324 = vmatprep.subr.mxu0 0.0
    %2325 = vmatpush1.msra.mxu0 0.0
    %2326 = vmatprep.subr.mxu0 0.0
    %2327 = vmatpush1.msra.mxu0 0.0
    %2328 = vmatprep.subr.mxu0 0.0
    %2329 = vmatpush1.msra.mxu0 0.0
    %2330 = vmatprep.subr.mxu0 0.0
    %2331 = vmatpush1.msra.mxu0 0.0
    %2332 = vmatprep.subr.mxu0 0.0
    %2333 = vmatpush1.msra.mxu0 0.0
    %2334 = vmatprep.subr.mxu0 0.0
    %2335 = vmatpush1.msra.mxu0 0.0
    %2336 = vmatprep.subr.mxu0 0.0
    %2337 = vmatpush1.msra.mxu0 0.0
    %2338 = vmatprep.subr.mxu0 0.0
    %2339 = vmatpush1.msra.mxu0 0.0
    %2340 = vmatprep.subr.mxu0 0.0
    %2341 = vmatpush1.msra.mxu0 0.0
    %2342 = vmatprep.subr.mxu0 0.0
    %2343 = vmatpush1.msra.mxu0 0.0
    %2344 = vmatprep.subr.mxu0 0.0
    %2345 = vmatpush1.msra.mxu0 0.0
    %2346 = vmatprep.subr.mxu0 0.0
    %2347 = vmatpush1.msra.mxu0 0.0
    %2348 = vmatprep.subr.mxu0 0.0
    %2349 = vmatpush1.msra.mxu0 0.0
    %2350 = vmatprep.subr.mxu0 0.0
    %2351 = vmatpush1.msra.mxu0 0.0
    %2352 = vmatprep.subr.mxu0 0.0
    %2353 = vmatpush1.msra.mxu0 0.0
    %2354 = vmatprep.subr.mxu0 0.0
    %2355 = vmatpush1.msra.mxu0 0.0
    %2356 = vmatprep.subr.mxu0 0.0
    %2357 = vmatpush1.msra.mxu0 0.0
    %2358 = vmatprep.subr.mxu0 0.0
    %2359 = vmatpush1.msra.mxu0 0.0
    %2360 = vmatprep.subr.mxu0 0.0
    %2361 = vmatpush1.msra.mxu0 0.0
    %2362 = vmatprep.subr.mxu0 0.0
    %2363 = vmatpush1.msra.mxu0 0.0
    %2364 = vmatprep.subr.mxu0 0.0
    %2365 = vmatpush1.msra.mxu0 0.0
    %2366 = vmatprep.subr.mxu0 0.0
    %2367 = vmatpush1.msra.mxu0 0.0
    %2368 = vmatprep.subr.mxu0 0.0
    %2369 = vmatpush1.msra.mxu0 0.0
    %2370 = vmatprep.subr.mxu0 0.0
    %2371 = vmatpush1.msra.mxu0 0.0
    %2372 = vmatprep.subr.mxu0 0.0
    %2373 = vmatpush1.msra.mxu0 0.0
    %2374 = vmatprep.subr.mxu0 0.0
    %2375 = vmatpush1.msra.mxu0 0.0
    %2376 = vmatprep.mubr.f32.mxu0 0.0
    %2377 = vmatmul.mubr.f32.gmra.mrb[0].mxu0 %v2307
    %v2378 = vpop.f32.mrb[0].mxu0
    %v2379 = vadd.f32 0.0, %v2378
    %v2380 = vpop.f32.mrb[0].mxu0
    %2381 = vmatprep.mubr.f32.mxu0 0.0
    %2382 = vmatmul.mubr.f32.gmra.mrb[0].mxu0 %v2310
    %v2383 = vpop.f32.mrb[0].mxu0
    %v2384 = vadd.f32 0.0, %v2383
    %v2385 = vpop.f32.mrb[0].mxu0
    %2386 = vdwg.mxu0
    %v2387 = vadd.f32 %v2298, %v2379
    %v2388 = vadd.f32 %v2303, %v2384
    %v2389 = vadd.f32 %v2387, %v713
    %v2390 = vadd.f32 %v2388, %v713
    %v2391 = vmax.f32 %v2389, 0.0
    %v2392 = vmax.f32 %v2390, 0.0
    %v2393 = vadd.f32 %v1992, %v2391
    %v2394 = vadd.f32 %v1993, %v2392
    %2395 = vmatprep.subr.mxu0 0.0
    %2396 = vmatpush1.msra.mxu0 %v2393
    %2397 = vmatprep.subr.mxu0 0.0
    %2398 = vmatpush1.msra.mxu0 %v2394
    %2399 = vmatprep.subr.mxu0 0.0
    %2400 = vmatpush1.msra.mxu0 0.0
    %2401 = vmatprep.subr.mxu0 0.0
    %2402 = vmatpush1.msra.mxu0 0.0
    %2403 = vmatprep.subr.mxu0 0.0
    %2404 = vmatpush1.msra.mxu0 0.0
    %2405 = vmatprep.subr.mxu0 0.0
    %2406 = vmatpush1.msra.mxu0 0.0
    %2407 = vmatprep.subr.mxu0 0.0
    %2408 = vmatpush1.msra.mxu0 0.0
    %2409 = vmatprep.subr.mxu0 0.0
    %2410 = vmatpush1.msra.mxu0 0.0
    %2411 = vmatprep.subr.mxu0 0.0
    %2412 = vmatpush1.msra.mxu0 0.0
    %2413 = vmatprep.subr.mxu0 0.0
    %2414 = vmatpush1.msra.mxu0 0.0
    %2415 = vmatprep.subr.mxu0 0.0
    %2416 = vmatpush1.msra.mxu0 0.0
    %2417 = vmatprep.subr.mxu0 0.0
    %2418 = vmatpush1.msra.mxu0 0.0
    %2419 = vmatprep.subr.mxu0 0.0
    %2420 = vmatpush1.msra.mxu0 0.0
    %2421 = vmatprep.subr.mxu0 0.0
    %2422 = vmatpush1.msra.mxu0 0.0
    %2423 = vmatprep.subr.mxu0 0.0
    %2424 = vmatpush1.msra.mxu0 0.0
    %2425 = vmatprep.subr.mxu0 0.0
    %2426 = vmatpush1.msra.mxu0 0.0
    %2427 = vmatprep.subr.mxu0 0.0
    %2428 = vmatpush1.msra.mxu0 0.0
    %2429 = vmatprep.subr.mxu0 0.0
    %2430 = vmatpush1.msra.mxu0 0.0
    %2431 = vmatprep.subr.mxu0 0.0
    %2432 = vmatpush1.msra.mxu0 0.0
    %2433 = vmatprep.subr.mxu0 0.0
    %2434 = vmatpush1.msra.mxu0 0.0
    %2435 = vmatprep.subr.mxu0 0.0
    %2436 = vmatpush1.msra.mxu0 0.0
    %2437 = vmatprep.subr.mxu0 0.0
    %2438 = vmatpush1.msra.mxu0 0.0
    %2439 = vmatprep.subr.mxu0 0.0
    %2440 = vmatpush1.msra.mxu0 0.0
    %2441 = vmatprep.subr.mxu0 0.0
    %2442 = vmatpush1.msra.mxu0 0.0
    %2443 = vmatprep.subr.mxu0 0.0
    %2444 = vmatpush1.msra.mxu0 0.0
    %2445 = vmatprep.subr.mxu0 0.0
    %2446 = vmatpush1.msra.mxu0 0.0
    %2447 = vmatprep.subr.mxu0 0.0
    %2448 = vmatpush1.msra.mxu0 0.0
    %2449 = vmatprep.subr.mxu0 0.0
    %2450 = vmatpush1.msra.mxu0 0.0
    %2451 = vmatprep.subr.mxu0 0.0
    %2452 = vmatpush1.msra.mxu0 0.0
    %2453 = vmatprep.subr.mxu0 0.0
    %2454 = vmatpush1.msra.mxu0 0.0
    %2455 = vmatprep.subr.mxu0 0.0
    %2456 = vmatpush1.msra.mxu0 0.0
    %2457 = vmatprep.subr.mxu0 0.0
    %2458 = vmatpush1.msra.mxu0 0.0
    %2459 = vmatprep.mubr.f32.mxu0 0.0
    %2460 = vmatmul.mubr.f32.gmra.mrb[0].mxu0 %v287
    %v2461 = vpop.f32.mrb[0].mxu0
    %v2462 = vadd.f32 0.0, %v2461
    %v2463 = vpop.f32.mrb[0].mxu0
    %2464 = vmatprep.mubr.f32.mxu0 0.0
    %2465 = vmatmul.mubr.f32.gmra.mrb[0].mxu0 %v290
    %v2466 = vpop.f32.mrb[0].mxu0
    %v2467 = vadd.f32 0.0, %v2466
    %v2468 = vpop.f32.mrb[0].mxu0
    %2469 = vdwg.mxu0
    %2470 = vmatprep.subr.mxu0 0.0
    %2471 = vmatpush1.msra.mxu0 %v2393
    %2472 = vmatprep.subr.mxu0 0.0
    %2473 = vmatpush1.msra.mxu0 %v2394
    %2474 = vmatprep.subr.mxu0 0.0
    %2475 = vmatpush1.msra.mxu0 0.0
    %2476 = vmatprep.subr.mxu0 0.0
    %2477 = vmatpush1.msra.mxu0 0.0
    %2478 = vmatprep.subr.mxu0 0.0
    %2479 = vmatpush1.msra.mxu0 0.0
    %2480 = vmatprep.subr.mxu0 0.0
    %2481 = vmatpush1.msra.mxu0 0.0
    %2482 = vmatprep.subr.mxu0 0.0
    %2483 = vmatpush1.msra.mxu0 0.0
    %2484 = vmatprep.subr.mxu0 0.0
    %2485 = vmatpush1.msra.mxu0 0.0
    %2486 = vmatprep.subr.mxu0 0.0
    %2487 = vmatpush1.msra.mxu0 0.0
    %2488 = vmatprep.subr.mxu0 0.0
    %2489 = vmatpush1.msra.mxu0 0.0
    %2490 = vmatprep.subr.mxu0 0.0
    %2491 = vmatpush1.msra.mxu0 0.0
    %2492 = vmatprep.subr.mxu0 0.0
    %2493 = vmatpush1.msra.mxu0 0.0
    %2494 = vmatprep.subr.mxu0 0.0
    %2495 = vmatpush1.msra.mxu0 0.0
    %2496 = vmatprep.subr.mxu0 0.0
    %2497 = vmatpush1.msra.mxu0 0.0
    %2498 = vmatprep.subr.mxu0 0.0
    %2499 = vmatpush1.msra.mxu0 0.0
    %2500 = vmatprep.subr.mxu0 0.0
    %2501 = vmatpush1.msra.mxu0 0.0
    %2502 = vmatprep.subr.mxu0 0.0
    %2503 = vmatpush1.msra.mxu0 0.0
    %2504 = vmatprep.subr.mxu0 0.0
    %2505 = vmatpush1.msra.mxu0 0.0
    %2506 = vmatprep.subr.mxu0 0.0
    %2507 = vmatpush1.msra.mxu0 0.0
    %2508 = vmatprep.subr.mxu0 0.0
    %2509 = vmatpush1.msra.mxu0 0.0
    %2510 = vmatprep.subr.mxu0 0.0
    %2511 = vmatpush1.msra.mxu0 0.0
    %2512 = vmatprep.subr.mxu0 0.0
    %2513 = vmatpush1.msra.mxu0 0.0
    %2514 = vmatprep.subr.mxu0 0.0
    %2515 = vmatpush1.msra.mxu0 0.0
    %2516 = vmatprep.subr.mxu0 0.0
    %2517 = vmatpush1.msra.mxu0 0.0
    %2518 = vmatprep.subr.mxu0 0.0
    %2519 = vmatpush1.msra.mxu0 0.0
    %2520 = vmatprep.subr.mxu0 0.0
    %2521 = vmatpush1.msra.mxu0 0.0
    %2522 = vmatprep.subr.mxu0 0.0
    %2523 = vmatpush1.msra.mxu0 0.0
    %2524 = vmatprep.subr.mxu0 0.0
    %2525 = vmatpush1.msra.mxu0 0.0
    %2526 = vmatprep.subr.mxu0 0.0
    %2527 = vmatpush1.msra.mxu0 0.0
    %2528 = vmatprep.subr.mxu0 0.0
    %2529 = vmatpush1.msra.mxu0 0.0
    %2530 = vmatprep.subr.mxu0 0.0
    %2531 = vmatpush1.msra.mxu0 0.0
    %2532 = vmatprep.subr.mxu0 0.0
    %2533 = vmatpush1.msra.mxu0 0.0
    %2534 = vmatprep.mubr.f32.mxu0 0.0
    %2535 = vmatmul.mubr.f32.gmra.mrb[0].mxu0 %v368
    %v2536 = vpop.f32.mrb[0].mxu0
    %v2537 = vadd.f32 0.0, %v2536
    %v2538 = vpop.f32.mrb[0].mxu0
    %2539 = vmatprep.mubr.f32.mxu0 0.0
    %2540 = vmatmul.mubr.f32.gmra.mrb[0].mxu0 %v371
    %v2541 = vpop.f32.mrb[0].mxu0
    %v2542 = vadd.f32 0.0, %v2541
    %v2543 = vpop.f32.mrb[0].mxu0
    %2544 = vdwg.mxu0
    %v2546 = vsel %vm451, %v2393, 0
    %v2549 = vsel %vm451, %v2394, 0
    %2551 = vmatprep.subr.mxu0 0.0
    %2552 = vmatpush1.msra.mxu0 %v884
    %2553 = vmatprep.subr.mxu0 0.0
    %2554 = vmatpush1.msra.mxu0 0.0
    %2555 = vmatprep.subr.mxu0 0.0
    %2556 = vmatpush1.msra.mxu0 0.0
    %2557 = vmatprep.subr.mxu0 0.0
    %2558 = vmatpush1.msra.mxu0 0.0
    %2559 = vmatprep.subr.mxu0 0.0
    %2560 = vmatpush1.msra.mxu0 0.0
    %2561 = vmatprep.subr.mxu0 0.0
    %2562 = vmatpush1.msra.mxu0 0.0
    %2563 = vmatprep.subr.mxu0 0.0
    %2564 = vmatpush1.msra.mxu0 0.0
    %2565 = vmatprep.subr.mxu0 0.0
    %2566 = vmatpush1.msra.mxu0 0.0
    %2567 = vmatprep.subr.mxu0 0.0
    %2568 = vmatpush1.msra.mxu0 0.0
    %2569 = vmatprep.subr.mxu0 0.0
    %2570 = vmatpush1.msra.mxu0 0.0
    %2571 = vmatprep.subr.mxu0 0.0
    %2572 = vmatpush1.msra.mxu0 0.0
    %2573 = vmatprep.subr.mxu0 0.0
    %2574 = vmatpush1.msra.mxu0 0.0
    %2575 = vmatprep.subr.mxu0 0.0
    %2576 = vmatpush1.msra.mxu0 0.0
    %2577 = vmatprep.subr.mxu0 0.0
    %2578 = vmatpush1.msra.mxu0 0.0
    %2579 = vmatprep.subr.mxu0 0.0
    %2580 = vmatpush1.msra.mxu0 0.0
    %2581 = vmatprep.subr.mxu0 0.0
    %2582 = vmatpush1.msra.mxu0 0.0
    %2583 = vmatprep.subr.mxu0 0.0
    %2584 = vmatpush1.msra.mxu0 0.0
    %2585 = vmatprep.subr.mxu0 0.0
    %2586 = vmatpush1.msra.mxu0 0.0
    %2587 = vmatprep.subr.mxu0 0.0
    %2588 = vmatpush1.msra.mxu0 0.0
    %2589 = vmatprep.subr.mxu0 0.0
    %2590 = vmatpush1.msra.mxu0 0.0
    %2591 = vmatprep.subr.mxu0 0.0
    %2592 = vmatpush1.msra.mxu0 0.0
    %2593 = vmatprep.subr.mxu0 0.0
    %2594 = vmatpush1.msra.mxu0 0.0
    %2595 = vmatprep.subr.mxu0 0.0
    %2596 = vmatpush1.msra.mxu0 0.0
    %2597 = vmatprep.subr.mxu0 0.0
    %2598 = vmatpush1.msra.mxu0 0.0
    %2599 = vmatprep.subr.mxu0 0.0
    %2600 = vmatpush1.msra.mxu0 0.0
    %2601 = vmatprep.subr.mxu0 0.0
    %2602 = vmatpush1.msra.mxu0 0.0
    %2603 = vmatprep.subr.mxu0 0.0
    %2604 = vmatpush1.msra.mxu0 0.0
    %2605 = vmatprep.subr.mxu0 0.0
    %2606 = vmatpush1.msra.mxu0 0.0
    %2607 = vmatprep.subr.mxu0 0.0
    %2608 = vmatpush1.msra.mxu0 0.0
    %2609 = vmatprep.subr.mxu0 0.0
    %2610 = vmatpush1.msra.mxu0 0.0
    %2611 = vmatprep.subr.mxu0 0.0
    %2612 = vmatpush1.msra.mxu0 0.0
    %2613 = vmatprep.subr.mxu0 0.0
    %2614 = vmatpush1.msra.mxu0 0.0
    %2615 = vmatprep.mubr.f32.mxu0 0.0
    %2616 = vmatmul.mubr.f32.gmra.mrb[0].mxu0 %v2546
    %v2617 = vpop.f32.mrb[0].mxu0
    %v2618 = vadd.f32 0.0, %v2617
    %v2619 = vpop.f32.mrb[0].mxu0
    %2620 = vmatprep.mubr.f32.mxu0 0.0
    %2621 = vmatmul.mubr.f32.gmra.mrb[0].mxu0 %v2549
    %v2622 = vpop.f32.mrb[0].mxu0
    %v2623 = vadd.f32 0.0, %v2622
    %v2624 = vpop.f32.mrb[0].mxu0
    %2625 = vdwg.mxu0
    %v2627 = vsel %vm451, %v2462, 0
    %v2630 = vsel %vm451, %v2467, 0
    %2632 = vmatprep.subr.mxu0 0.0
    %2633 = vmatpush1.msra.mxu0 %v968
    %2634 = vmatprep.subr.mxu0 0.0
    %2635 = vmatpush1.msra.mxu0 0.0
    %2636 = vmatprep.subr.mxu0 0.0
    %2637 = vmatpush1.msra.mxu0 0.0
    %2638 = vmatprep.subr.mxu0 0.0
    %2639 = vmatpush1.msra.mxu0 0.0
    %2640 = vmatprep.subr.mxu0 0.0
    %2641 = vmatpush1.msra.mxu0 0.0
    %2642 = vmatprep.subr.mxu0 0.0
    %2643 = vmatpush1.msra.mxu0 0.0
    %2644 = vmatprep.subr.mxu0 0.0
    %2645 = vmatpush1.msra.mxu0 0.0
    %2646 = vmatprep.subr.mxu0 0.0
    %2647 = vmatpush1.msra.mxu0 0.0
    %2648 = vmatprep.subr.mxu0 0.0
    %2649 = vmatpush1.msra.mxu0 0.0
    %2650 = vmatprep.subr.mxu0 0.0
    %2651 = vmatpush1.msra.mxu0 0.0
    %2652 = vmatprep.subr.mxu0 0.0
    %2653 = vmatpush1.msra.mxu0 0.0
    %2654 = vmatprep.subr.mxu0 0.0
    %2655 = vmatpush1.msra.mxu0 0.0
    %2656 = vmatprep.subr.mxu0 0.0
    %2657 = vmatpush1.msra.mxu0 0.0
    %2658 = vmatprep.subr.mxu0 0.0
    %2659 = vmatpush1.msra.mxu0 0.0
    %2660 = vmatprep.subr.mxu0 0.0
    %2661 = vmatpush1.msra.mxu0 0.0
    %2662 = vmatprep.subr.mxu0 0.0
    %2663 = vmatpush1.msra.mxu0 0.0
    %2664 = vmatprep.subr.mxu0 0.0
    %2665 = vmatpush1.msra.mxu0 0.0
    %2666 = vmatprep.subr.mxu0 0.0
    %2667 = vmatpush1.msra.mxu0 0.0
    %2668 = vmatprep.subr.mxu0 0.0
    %2669 = vmatpush1.msra.mxu0 0.0
    %2670 = vmatprep.subr.mxu0 0.0
    %2671 = vmatpush1.msra.mxu0 0.0
    %2672 = vmatprep.subr.mxu0 0.0
    %2673 = vmatpush1.msra.mxu0 0.0
    %2674 = vmatprep.subr.mxu0 0.0
    %2675 = vmatpush1.msra.mxu0 0.0
    %2676 = vmatprep.subr.mxu0 0.0
    %2677 = vmatpush1.msra.mxu0 0.0
    %2678 = vmatprep.subr.mxu0 0.0
    %2679 = vmatpush1.msra.mxu0 0.0
    %2680 = vmatprep.subr.mxu0 0.0
    %2681 = vmatpush1.msra.mxu0 0.0
    %2682 = vmatprep.subr.mxu0 0.0
    %2683 = vmatpush1.msra.mxu0 0.0
    %2684 = vmatprep.subr.mxu0 0.0
    %2685 = vmatpush1.msra.mxu0 0.0
    %2686 = vmatprep.subr.mxu0 0.0
    %2687 = vmatpush1.msra.mxu0 0.0
    %2688 = vmatprep.subr.mxu0 0.0
    %2689 = vmatpush1.msra.mxu0 0.0
    %2690 = vmatprep.subr.mxu0 0.0
    %2691 = vmatpush1.msra.mxu0 0.0
    %2692 = vmatprep.subr.mxu0 0.0
    %2693 = vmatpush1.msra.mxu0 0.0
    %2694 = vmatprep.subr.mxu0 0.0
    %2695 = vmatpush1.msra.mxu0 0.0
    %2696 = vmatprep.mubr.f32.mxu0 0.0
    %2697 = vmatmul.mubr.f32.gmra.mrb[0].mxu0 %v2627
    %v2698 = vpop.f32.mrb[0].mxu0
    %v2699 = vadd.f32 %v2618, %v2698
    %v2700 = vpop.f32.mrb[0].mxu0
    %2701 = vmatprep.mubr.f32.mxu0 0.0
    %2702 = vmatmul.mubr.f32.gmra.mrb[0].mxu0 %v2630
    %v2703 = vpop.f32.mrb[0].mxu0
    %v2704 = vadd.f32 %v2623, %v2703
    %v2705 = vpop.f32.mrb[0].mxu0
    %2706 = vdwg.mxu0
    %v2708 = vsel %vm451, %v2537, 0
    %v2711 = vsel %vm451, %v2542, 0
    %2713 = vmatprep.subr.mxu0 0.0
    %2714 = vmatpush1.msra.mxu0 %v1054
    %2715 = vmatprep.subr.mxu0 0.0
    %2716 = vmatpush1.msra.mxu0 0.0
    %2717 = vmatprep.subr.mxu0 0.0
    %2718 = vmatpush1.msra.mxu0 0.0
    %2719 = vmatprep.subr.mxu0 0.0
    %2720 = vmatpush1.msra.mxu0 0.0
    %2721 = vmatprep.subr.mxu0 0.0
    %2722 = vmatpush1.msra.mxu0 0.0
    %2723 = vmatprep.subr.mxu0 0.0
    %2724 = vmatpush1.msra.mxu0 0.0
    %2725 = vmatprep.subr.mxu0 0.0
    %2726 = vmatpush1.msra.mxu0 0.0
    %2727 = vmatprep.subr.mxu0 0.0
    %2728 = vmatpush1.msra.mxu0 0.0
    %2729 = vmatprep.subr.mxu0 0.0
    %2730 = vmatpush1.msra.mxu0 0.0
    %2731 = vmatprep.subr.mxu0 0.0
    %2732 = vmatpush1.msra.mxu0 0.0
    %2733 = vmatprep.subr.mxu0 0.0
    %2734 = vmatpush1.msra.mxu0 0.0
    %2735 = vmatprep.subr.mxu0 0.0
    %2736 = vmatpush1.msra.mxu0 0.0
    %2737 = vmatprep.subr.mxu0 0.0
    %2738 = vmatpush1.msra.mxu0 0.0
    %2739 = vmatprep.subr.mxu0 0.0
    %2740 = vmatpush1.msra.mxu0 0.0
    %2741 = vmatprep.subr.mxu0 0.0
    %2742 = vmatpush1.msra.mxu0 0.0
    %2743 = vmatprep.subr.mxu0 0.0
    %2744 = vmatpush1.msra.mxu0 0.0
    %2745 = vmatprep.subr.mxu0 0.0
    %2746 = vmatpush1.msra.mxu0 0.0
    %2747 = vmatprep.subr.mxu0 0.0
    %2748 = vmatpush1.msra.mxu0 0.0
    %2749 = vmatprep.subr.mxu0 0.0
    %2750 = vmatpush1.msra.mxu0 0.0
    %2751 = vmatprep.subr.mxu0 0.0
    %2752 = vmatpush1.msra.mxu0 0.0
    %2753 = vmatprep.subr.mxu0 0.0
    %2754 = vmatpush1.msra.mxu0 0.0
    %2755 = vmatprep.subr.mxu0 0.0
    %2756 = vmatpush1.msra.mxu0 0.0
    %2757 = vmatprep.subr.mxu0 0.0
    %2758 = vmatpush1.msra.mxu0 0.0
    %2759 = vmatprep.subr.mxu0 0.0
    %2760 = vmatpush1.msra.mxu0 0.0
    %2761 = vmatprep.subr.mxu0 0.0
    %2762 = vmatpush1.msra.mxu0 0.0
    %2763 = vmatprep.subr.mxu0 0.0
    %2764 = vmatpush1.msra.mxu0 0.0
    %2765 = vmatprep.subr.mxu0 0.0
    %2766 = vmatpush1.msra.mxu0 0.0
    %2767 = vmatprep.subr.mxu0 0.0
    %2768 = vmatpush1.msra.mxu0 0.0
    %2769 = vmatprep.subr.mxu0 0.0
    %2770 = vmatpush1.msra.mxu0 0.0
    %2771 = vmatprep.subr.mxu0 0.0
    %2772 = vmatpush1.msra.mxu0 0.0
    %2773 = vmatprep.subr.mxu0 0.0
    %2774 = vmatpush1.msra.mxu0 0.0
    %2775 = vmatprep.subr.mxu0 0.0
    %2776 = vmatpush1.msra.mxu0 0.0
    %2777 = vmatprep.mubr.f32.mxu0 0.0
    %2778 = vmatmul.mubr.f32.gmra.mrb[0].mxu0 %v2708
    %v2779 = vpop.f32.mrb[0].mxu0
    %v2780 = vadd.f32 0.0, %v2779
    %v2781 = vpop.f32.mrb[0].mxu0
    %2782 = vmatprep.mubr.f32.mxu0 0.0
    %2783 = vmatmul.mubr.f32.gmra.mrb[0].mxu0 %v2711
    %v2784 = vpop.f32.mrb[0].mxu0
    %v2785 = vadd.f32 0.0, %v2784
    %v2786 = vpop.f32.mrb[0].mxu0
    %2787 = vdwg.mxu0
    %v2788 = vadd.f32 %v2699, %v2780
    %v2789 = vadd.f32 %v2704, %v2785
    %v2790 = vadd.f32 %v2788, %v1137
    %v2791 = vadd.f32 %v2789, %v1137
    %v2792 = vmax.f32 %v2790, 0.0
    %v2793 = vmax.f32 %v2791, 0.0
    %v2794 = vadd.f32 %v2393, %v2792
    %v2795 = vadd.f32 %v2394, %v2793
    %2796 = vmatprep.subr.mxu0 0.0
    %2797 = vmatpush1.msra.mxu0 %v2794
    %2798 = vmatprep.subr.mxu0 0.0
    %2799 = vmatpush1.msra.mxu0 %v2795
    %2800 = vmatprep.subr.mxu0 0.0
    %2801 = vmatpush1.msra.mxu0 0.0
    %2802 = vmatprep.subr.mxu0 0.0
    %2803 = vmatpush1.msra.mxu0 0.0
    %2804 = vmatprep.subr.mxu0 0.0
    %2805 = vmatpush1.msra.mxu0 0.0
    %2806 = vmatprep.subr.mxu0 0.0
    %2807 = vmatpush1.msra.mxu0 0.0
    %2808 = vmatprep.subr.mxu0 0.0
    %2809 = vmatpush1.msra.mxu0 0.0
    %2810 = vmatprep.subr.mxu0 0.0
    %2811 = vmatpush1.msra.mxu0 0.0
    %2812 = vmatprep.subr.mxu0 0.0
    %2813 = vmatpush1.msra.mxu0 0.0
    %2814 = vmatprep.subr.mxu0 0.0
    %2815 = vmatpush1.msra.mxu0 0.0
    %2816 = vmatprep.subr.mxu0 0.0
    %2817 = vmatpush1.msra.mxu0 0.0
    %2818 = vmatprep.subr.mxu0 0.0
    %2819 = vmatpush1.msra.mxu0 0.0
    %2820 = vmatprep.subr.mxu0 0.0
    %2821 = vmatpush1.msra.mxu0 0.0
    %2822 = vmatprep.subr.mxu0 0.0
    %2823 = vmatpush1.msra.mxu0 0.0
    %2824 = vmatprep.subr.mxu0 0.0
    %2825 = vmatpush1.msra.mxu0 0.0
    %2826 = vmatprep.subr.mxu0 0.0
    %2827 = vmatpush1.msra.mxu0 0.0
    %2828 = vmatprep.subr.mxu0 0.0
    %2829 = vmatpush1.msra.mxu0 0.0
    %2830 = vmatprep.subr.mxu0 0.0
    %2831 = vmatpush1.msra.mxu0 0.0
    %2832 = vmatprep.subr.mxu0 0.0
    %2833 = vmatpush1.msra.mxu0 0.0
    %2834 = vmatprep.subr.mxu0 0.0
    %2835 = vmatpush1.msra.mxu0 0.0
    %2836 = vmatprep.subr.mxu0 0.0
    %2837 = vmatpush1.msra.mxu0 0.0
    %2838 = vmatprep.subr.mxu0 0.0
    %2839 = vmatpush1.msra.mxu0 0.0
    %2840 = vmatprep.subr.mxu0 0.0
    %2841 = vmatpush1.msra.mxu0 0.0
    %2842 = vmatprep.subr.mxu0 0.0
    %2843 = vmatpush1.msra.mxu0 0.0
    %2844 = vmatprep.subr.mxu0 0.0
    %2845 = vmatpush1.msra.mxu0 0.0
    %2846 = vmatprep.subr.mxu0 0.0
    %2847 = vmatpush1.msra.mxu0 0.0
    %2848 = vmatprep.subr.mxu0 0.0
    %2849 = vmatpush1.msra.mxu0 0.0
    %2850 = vmatprep.subr.mxu0 0.0
    %2851 = vmatpush1.msra.mxu0 0.0
    %2852 = vmatprep.subr.mxu0 0.0
    %2853 = vmatpush1.msra.mxu0 0.0
    %2854 = vmatprep.subr.mxu0 0.0
    %2855 = vmatpush1.msra.mxu0 0.0
    %2856 = vmatprep.subr.mxu0 0.0
    %2857 = vmatpush1.msra.mxu0 0.0
    %2858 = vmatprep.subr.mxu0 0.0
    %2859 = vmatpush1.msra.mxu0 0.0
    %2860 = vmatprep.mubr.f32.mxu0 0.0
    %2861 = vmatmul.mubr.f32.gmra.mrb[0].mxu0 %v287
    %v2862 = vpop.f32.mrb[0].mxu0
    %v2863 = vadd.f32 0.0, %v2862
    %v2864 = vpop.f32.mrb[0].mxu0
    %2865 = vmatprep.mubr.f32.mxu0 0.0
    %2866 = vmatmul.mubr.f32.gmra.mrb[0].mxu0 %v290
    %v2867 = vpop.f32.mrb[0].mxu0
    %v2868 = vadd.f32 0.0, %v2867
    %v2869 = vpop.f32.mrb[0].mxu0
    %2870 = vdwg.mxu0
    %2871 = vmatprep.subr.mxu0 0.0
    %2872 = vmatpush1.msra.mxu0 %v2794
    %2873 = vmatprep.subr.mxu0 0.0
    %2874 = vmatpush1.msra.mxu0 %v2795
    %2875 = vmatprep.subr.mxu0 0.0
    %2876 = vmatpush1.msra.mxu0 0.0
    %2877 = vmatprep.subr.mxu0 0.0
    %2878 = vmatpush1.msra.mxu0 0.0
    %2879 = vmatprep.subr.mxu0 0.0
    %2880 = vmatpush1.msra.mxu0 0.0
    %2881 = vmatprep.subr.mxu0 0.0
    %2882 = vmatpush1.msra.mxu0 0.0
    %2883 = vmatprep.subr.mxu0 0.0
    %2884 = vmatpush1.msra.mxu0 0.0
    %2885 = vmatprep.subr.mxu0 0.0
    %2886 = vmatpush1.msra.mxu0 0.0
    %2887 = vmatprep.subr.mxu0 0.0
    %2888 = vmatpush1.msra.mxu0 0.0
    %2889 = vmatprep.subr.mxu0 0.0
    %2890 = vmatpush1.msra.mxu0 0.0
    %2891 = vmatprep.subr.mxu0 0.0
    %2892 = vmatpush1.msra.mxu0 0.0
    %2893 = vmatprep.subr.mxu0 0.0
    %2894 = vmatpush1.msra.mxu0 0.0
    %2895 = vmatprep.subr.mxu0 0.0
    %2896 = vmatpush1.msra.mxu0 0.0
    %2897 = vmatprep.subr.mxu0 0.0
    %2898 = vmatpush1.msra.mxu0 0.0
    %2899 = vmatprep.subr.mxu0 0.0
    %2900 = vmatpush1.msra.mxu0 0.0
    %2901 = vmatprep.subr.mxu0 0.0
    %2902 = vmatpush1.msra.mxu0 0.0
    %2903 = vmatprep.subr.mxu0 0.0
    %2904 = vmatpush1.msra.mxu0 0.0
    %2905 = vmatprep.subr.mxu0 0.0
    %2906 = vmatpush1.msra.mxu0 0.0
    %2907 = vmatprep.subr.mxu0 0.0
    %2908 = vmatpush1.msra.mxu0 0.0
    %2909 = vmatprep.subr.mxu0 0.0
    %2910 = vmatpush1.msra.mxu0 0.0
    %2911 = vmatprep.subr.mxu0 0.0
    %2912 = vmatpush1.msra.mxu0 0.0
    %2913 = vmatprep.subr.mxu0 0.0
    %2914 = vmatpush1.msra.mxu0 0.0
    %2915 = vmatprep.subr.mxu0 0.0
    %2916 = vmatpush1.msra.mxu0 0.0
    %2917 = vmatprep.subr.mxu0 0.0
    %2918 = vmatpush1.msra.mxu0 0.0
    %2919 = vmatprep.subr.mxu0 0.0
    %2920 = vmatpush1.msra.mxu0 0.0
    %2921 = vmatprep.subr.mxu0 0.0
    %2922 = vmatpush1.msra.mxu0 0.0
    %2923 = vmatprep.subr.mxu0 0.0
    %2924 = vmatpush1.msra.mxu0 0.0
    %2925 = vmatprep.subr.mxu0 0.0
    %2926 = vmatpush1.msra.mxu0 0.0
    %2927 = vmatprep.subr.mxu0 0.0
    %2928 = vmatpush1.msra.mxu0 0.0
    %2929 = vmatprep.subr.mxu0 0.0
    %2930 = vmatpush1.msra.mxu0 0.0
    %2931 = vmatprep.subr.mxu0 0.0
    %2932 = vmatpush1.msra.mxu0 0.0
    %2933 = vmatprep.subr.mxu0 0.0
    %2934 = vmatpush1.msra.mxu0 0.0
    %2935 = vmatprep.mubr.f32.mxu0 0.0
    %2936 = vmatmul.mubr.f32.gmra.mrb[0].mxu0 %v368
    %v2937 = vpop.f32.mrb[0].mxu0
    %v2938 = vadd.f32 0.0, %v2937
    %v2939 = vpop.f32.mrb[0].mxu0
    %2940 = vmatprep.mubr.f32.mxu0 0.0
    %2941 = vmatmul.mubr.f32.gmra.mrb[0].mxu0 %v371
    %v2942 = vpop.f32.mrb[0].mxu0
    %v2943 = vadd.f32 0.0, %v2942
    %v2944 = vpop.f32.mrb[0].mxu0
    %2945 = vdwg.mxu0
    %v2947 = vsel %vm451, %v2794, 0
    %v2950 = vsel %vm451, %v2795, 0
    %2952 = vmatprep.subr.mxu0 0.0
    %2953 = vmatpush1.msra.mxu0 %v1308
    %2954 = vmatprep.subr.mxu0 0.0
    %2955 = vmatpush1.msra.mxu0 0.0
    %2956 = vmatprep.subr.mxu0 0.0
    %2957 = vmatpush1.msra.mxu0 0.0
    %2958 = vmatprep.subr.mxu0 0.0
    %2959 = vmatpush1.msra.mxu0 0.0
    %2960 = vmatprep.subr.mxu0 0.0
    %2961 = vmatpush1.msra.mxu0 0.0
    %2962 = vmatprep.subr.mxu0 0.0
    %2963 = vmatpush1.msra.mxu0 0.0
    %2964 = vmatprep.subr.mxu0 0.0
    %2965 = vmatpush1.msra.mxu0 0.0
    %2966 = vmatprep.subr.mxu0 0.0
    %2967 = vmatpush1.msra.mxu0 0.0
    %2968 = vmatprep.subr.mxu0 0.0
    %2969 = vmatpush1.msra.mxu0 0.0
    %2970 = vmatprep.subr.mxu0 0.0
    %2971 = vmatpush1.msra.mxu0 0.0
    %2972 = vmatprep.subr.mxu0 0.0
    %2973 = vmatpush1.msra.mxu0 0.0
    %2974 = vmatprep.subr.mxu0 0.0
    %2975 = vmatpush1.msra.mxu0 0.0
    %2976 = vmatprep.subr.mxu0 0.0
    %2977 = vmatpush1.msra.mxu0 0.0
    %2978 = vmatprep.subr.mxu0 0.0
    %2979 = vmatpush1.msra.mxu0 0.0
    %2980 = vmatprep.subr.mxu0 0.0
    %2981 = vmatpush1.msra.mxu0 0.0
    %2982 = vmatprep.subr.mxu0 0.0
    %2983 = vmatpush1.msra.mxu0 0.0
    %2984 = vmatprep.subr.mxu0 0.0
    %2985 = vmatpush1.msra.mxu0 0.0
    %2986 = vmatprep.subr.mxu0 0.0
    %2987 = vmatpush1.msra.mxu0 0.0
    %2988 = vmatprep.subr.mxu0 0.0
    %2989 = vmatpush1.msra.mxu0 0.0
    %2990 = vmatprep.subr.mxu0 0.0
    %2991 = vmatpush1.msra.mxu0 0.0
    %2992 = vmatprep.subr.mxu0 0.0
    %2993 = vmatpush1.msra.mxu0 0.0
    %2994 = vmatprep.subr.mxu0 0.0
    %2995 = vmatpush1.msra.mxu0 0.0
    %2996 = vmatprep.subr.mxu0 0.0
    %2997 = vmatpush1.msra.mxu0 0.0
    %2998 = vmatprep.subr.mxu0 0.0
    %2999 = vmatpush1.msra.mxu0 0.0
    %3000 = vmatprep.subr.mxu0 0.0
    %3001 = vmatpush1.msra.mxu0 0.0
    %3002 = vmatprep.subr.mxu0 0.0
    %3003 = vmatpush1.msra.mxu0 0.0
    %3004 = vmatprep.subr.mxu0 0.0
    %3005 = vmatpush1.msra.mxu0 0.0
    %3006 = vmatprep.subr.mxu0 0.0
    %3007 = vmatpush1.msra.mxu0 0.0
    %3008 = vmatprep.subr.mxu0 0.0
    %3009 = vmatpush1.msra.mxu0 0.0
    %3010 = vmatprep.subr.mxu0 0.0
    %3011 = vmatpush1.msra.mxu0 0.0
    %3012 = vmatprep.subr.mxu0 0.0
    %3013 = vmatpush1.msra.mxu0 0.0
    %3014 = vmatprep.subr.mxu0 0.0
    %3015 = vmatpush1.msra.mxu0 0.0
    %3016 = vmatprep.mubr.f32.mxu0 0.0
    %3017 = vmatmul.mubr.f32.gmra.mrb[0].mxu0 %v2947
    %v3018 = vpop.f32.mrb[0].mxu0
    %v3019 = vadd.f32 0.0, %v3018
    %v3020 = vpop.f32.mrb[0].mxu0
    %3021 = vmatprep.mubr.f32.mxu0 0.0
    %3022 = vmatmul.mubr.f32.gmra.mrb[0].mxu0 %v2950
    %v3023 = vpop.f32.mrb[0].mxu0
    %v3024 = vadd.f32 0.0, %v3023
    %v3025 = vpop.f32.mrb[0].mxu0
    %3026 = vdwg.mxu0
    %v3028 = vsel %vm451, %v2863, 0
    %v3031 = vsel %vm451, %v2868, 0
    %3033 = vmatprep.subr.mxu0 0.0
    %3034 = vmatpush1.msra.mxu0 %v1392
    %3035 = vmatprep.subr.mxu0 0.0
    %3036 = vmatpush1.msra.mxu0 0.0
    %3037 = vmatprep.subr.mxu0 0.0
    %3038 = vmatpush1.msra.mxu0 0.0
    %3039 = vmatprep.subr.mxu0 0.0
    %3040 = vmatpush1.msra.mxu0 0.0
    %3041 = vmatprep.subr.mxu0 0.0
    %3042 = vmatpush1.msra.mxu0 0.0
    %3043 = vmatprep.subr.mxu0 0.0
    %3044 = vmatpush1.msra.mxu0 0.0
    %3045 = vmatprep.subr.mxu0 0.0
    %3046 = vmatpush1.msra.mxu0 0.0
    %3047 = vmatprep.subr.mxu0 0.0
    %3048 = vmatpush1.msra.mxu0 0.0
    %3049 = vmatprep.subr.mxu0 0.0
    %3050 = vmatpush1.msra.mxu0 0.0
    %3051 = vmatprep.subr.mxu0 0.0
    %3052 = vmatpush1.msra.mxu0 0.0
    %3053 = vmatprep.subr.mxu0 0.0
    %3054 = vmatpush1.msra.mxu0 0.0
    %3055 = vmatprep.subr.mxu0 0.0
    %3056 = vmatpush1.msra.mxu0 0.0
    %3057 = vmatprep.subr.mxu0 0.0
    %3058 = vmatpush1.msra.mxu0 0.0
    %3059 = vmatprep.subr.mxu0 0.0
    %3060 = vmatpush1.msra.mxu0 0.0
    %3061 = vmatprep.subr.mxu0 0.0
    %3062 = vmatpush1.msra.mxu0 0.0
    %3063 = vmatprep.subr.mxu0 0.0
    %3064 = vmatpush1.msra.mxu0 0.0
    %3065 = vmatprep.subr.mxu0 0.0
    %3066 = vmatpush1.msra.mxu0 0.0
    %3067 = vmatprep.subr.mxu0 0.0
    %3068 = vmatpush1.msra.mxu0 0.0
    %3069 = vmatprep.subr.mxu0 0.0
    %3070 = vmatpush1.msra.mxu0 0.0
    %3071 = vmatprep.subr.mxu0 0.0
    %3072 = vmatpush1.msra.mxu0 0.0
    %3073 = vmatprep.subr.mxu0 0.0
    %3074 = vmatpush1.msra.mxu0 0.0
    %3075 = vmatprep.subr.mxu0 0.0
    %3076 = vmatpush1.msra.mxu0 0.0
    %3077 = vmatprep.subr.mxu0 0.0
    %3078 = vmatpush1.msra.mxu0 0.0
    %3079 = vmatprep.subr.mxu0 0.0
    %3080 = vmatpush1.msra.mxu0 0.0
    %3081 = vmatprep.subr.mxu0 0.0
    %3082 = vmatpush1.msra.mxu0 0.0
    %3083 = vmatprep.subr.mxu0 0.0
    %3084 = vmatpush1.msra.mxu0 0.0
    %3085 = vmatprep.subr.mxu0 0.0
    %3086 = vmatpush1.msra.mxu0 0.0
    %3087 = vmatprep.subr.mxu0 0.0
    %3088 = vmatpush1.msra.mxu0 0.0
    %3089 = vmatprep.subr.mxu0 0.0
    %3090 = vmatpush1.msra.mxu0 0.0
    %3091 = vmatprep.subr.mxu0 0.0
    %3092 = vmatpush1.msra.mxu0 0.0
    %3093 = vmatprep.subr.mxu0 0.0
    %3094 = vmatpush1.msra.mxu0 0.0
    %3095 = vmatprep.subr.mxu0 0.0
    %3096 = vmatpush1.msra.mxu0 0.0
    %3097 = vmatprep.mubr.f32.mxu0 0.0
    %3098 = vmatmul.mubr.f32.gmra.mrb[0].mxu0 %v3028
    %v3099 = vpop.f32.mrb[0].mxu0
    %v3100 = vadd.f32 %v3019, %v3099
    %v3101 = vpop.f32.mrb[0].mxu0
    %3102 = vmatprep.mubr.f32.mxu0 0.0
    %3103 = vmatmul.mubr.f32.gmra.mrb[0].mxu0 %v3031
    %v3104 = vpop.f32.mrb[0].mxu0
    %v3105 = vadd.f32 %v3024, %v3104
    %v3106 = vpop.f32.mrb[0].mxu0
    %3107 = vdwg.mxu0
    %v3109 = vsel %vm451, %v2938, 0
    %v3112 = vsel %vm451, %v2943, 0
    %3114 = vmatprep.subr.mxu0 0.0
    %3115 = vmatpush1.msra.mxu0 %v1478
    %3116 = vmatprep.subr.mxu0 0.0
    %3117 = vmatpush1.msra.mxu0 0.0
    %3118 = vmatprep.subr.mxu0 0.0
    %3119 = vmatpush1.msra.mxu0 0.0
    %3120 = vmatprep.subr.mxu0 0.0
    %3121 = vmatpush1.msra.mxu0 0.0
    %3122 = vmatprep.subr.mxu0 0.0
    %3123 = vmatpush1.msra.mxu0 0.0
    %3124 = vmatprep.subr.mxu0 0.0
    %3125 = vmatpush1.msra.mxu0 0.0
    %3126 = vmatprep.subr.mxu0 0.0
    %3127 = vmatpush1.msra.mxu0 0.0
    %3128 = vmatprep.subr.mxu0 0.0
    %3129 = vmatpush1.msra.mxu0 0.0
    %3130 = vmatprep.subr.mxu0 0.0
    %3131 = vmatpush1.msra.mxu0 0.0
    %3132 = vmatprep.subr.mxu0 0.0
    %3133 = vmatpush1.msra.mxu0 0.0
    %3134 = vmatprep.subr.mxu0 0.0
    %3135 = vmatpush1.msra.mxu0 0.0
    %3136 = vmatprep.subr.mxu0 0.0
    %3137 = vmatpush1.msra.mxu0 0.0
    %3138 = vmatprep.subr.mxu0 0.0
    %3139 = vmatpush1.msra.mxu0 0.0
    %3140 = vmatprep.subr.mxu0 0.0
    %3141 = vmatpush1.msra.mxu0 0.0
    %3142 = vmatprep.subr.mxu0 0.0
    %3143 = vmatpush1.msra.mxu0 0.0
    %3144 = vmatprep.subr.mxu0 0.0
    %3145 = vmatpush1.msra.mxu0 0.0
    %3146 = vmatprep.subr.mxu0 0.0
    %3147 = vmatpush1.msra.mxu0 0.0
    %3148 = vmatprep.subr.mxu0 0.0
    %3149 = vmatpush1.msra.mxu0 0.0
    %3150 = vmatprep.subr.mxu0 0.0
    %3151 = vmatpush1.msra.mxu0 0.0
    %3152 = vmatprep.subr.mxu0 0.0
    %3153 = vmatpush1.msra.mxu0 0.0
    %3154 = vmatprep.subr.mxu0 0.0
    %3155 = vmatpush1.msra.mxu0 0.0
    %3156 = vmatprep.subr.mxu0 0.0
    %3157 = vmatpush1.msra.mxu0 0.0
    %3158 = vmatprep.subr.mxu0 0.0
    %3159 = vmatpush1.msra.mxu0 0.0
    %3160 = vmatprep.subr.mxu0 0.0
    %3161 = vmatpush1.msra.mxu0 0.0
    %3162 = vmatprep.subr.mxu0 0.0
    %3163 = vmatpush1.msra.mxu0 0.0
    %3164 = vmatprep.subr.mxu0 0.0
    %3165 = vmatpush1.msra.mxu0 0.0
    %3166 = vmatprep.subr.mxu0 0.0
    %3167 = vmatpush1.msra.mxu0 0.0
    %3168 = vmatprep.subr.mxu0 0.0
    %3169 = vmatpush1.msra.mxu0 0.0
    %3170 = vmatprep.subr.mxu0 0.0
    %3171 = vmatpush1.msra.mxu0 0.0
    %3172 = vmatprep.subr.mxu0 0.0
    %3173 = vmatpush1.msra.mxu0 0.0
    %3174 = vmatprep.subr.mxu0 0.0
    %3175 = vmatpush1.msra.mxu0 0.0
    %3176 = vmatprep.subr.mxu0 0.0
    %3177 = vmatpush1.msra.mxu0 0.0
    %3178 = vmatprep.mubr.f32.mxu0 0.0
    %3179 = vmatmul.mubr.f32.gmra.mrb[0].mxu0 %v3109
    %v3180 = vpop.f32.mrb[0].mxu0
    %v3181 = vadd.f32 0.0, %v3180
    %v3182 = vpop.f32.mrb[0].mxu0
    %3183 = vmatprep.mubr.f32.mxu0 0.0
    %3184 = vmatmul.mubr.f32.gmra.mrb[0].mxu0 %v3112
    %v3185 = vpop.f32.mrb[0].mxu0
    %v3186 = vadd.f32 0.0, %v3185
    %v3187 = vpop.f32.mrb[0].mxu0
    %3188 = vdwg.mxu0
    %v3189 = vadd.f32 %v3100, %v3181
    %v3190 = vadd.f32 %v3105, %v3186
    %v3191 = vadd.f32 %v3189, %v1561
    %v3192 = vadd.f32 %v3190, %v1561
    %v3193 = vmax.f32 %v3191, 0.0
    %v3194 = vmax.f32 %v3192, 0.0
    %v3195 = vadd.f32 %v2794, %v3193
    %v3196 = vadd.f32 %v2795, %v3194
    %3197 = vmatprep.subr.mxu0 0.0
    %3198 = vmatpush1.msra.mxu0 %v3195
    %3199 = vmatprep.subr.mxu0 0.0
    %3200 = vmatpush1.msra.mxu0 %v3196
    %3201 = vmatprep.subr.mxu0 0.0
    %3202 = vmatpush1.msra.mxu0 0.0
    %3203 = vmatprep.subr.mxu0 0.0
    %3204 = vmatpush1.msra.mxu0 0.0
    %3205 = vmatprep.subr.mxu0 0.0
    %3206 = vmatpush1.msra.mxu0 0.0
    %3207 = vmatprep.subr.mxu0 0.0
    %3208 = vmatpush1.msra.mxu0 0.0
    %3209 = vmatprep.subr.mxu0 0.0
    %3210 = vmatpush1.msra.mxu0 0.0
    %3211 = vmatprep.subr.mxu0 0.0
    %3212 = vmatpush1.msra.mxu0 0.0
    %3213 = vmatprep.subr.mxu0 0.0
    %3214 = vmatpush1.msra.mxu0 0.0
    %3215 = vmatprep.subr.mxu0 0.0
    %3216 = vmatpush1.msra.mxu0 0.0
    %3217 = vmatprep.subr.mxu0 0.0
    %3218 = vmatpush1.msra.mxu0 0.0
    %3219 = vmatprep.subr.mxu0 0.0
    %3220 = vmatpush1.msra.mxu0 0.0
    %3221 = vmatprep.subr.mxu0 0.0
    %3222 = vmatpush1.msra.mxu0 0.0
    %3223 = vmatprep.subr.mxu0 0.0
    %3224 = vmatpush1.msra.mxu0 0.0
    %3225 = vmatprep.subr.mxu0 0.0
    %3226 = vmatpush1.msra.mxu0 0.0
    %3227 = vmatprep.subr.mxu0 0.0
    %3228 = vmatpush1.msra.mxu0 0.0
    %3229 = vmatprep.subr.mxu0 0.0
    %3230 = vmatpush1.msra.mxu0 0.0
    %3231 = vmatprep.subr.mxu0 0.0
    %3232 = vmatpush1.msra.mxu0 0.0
    %3233 = vmatprep.subr.mxu0 0.0
    %3234 = vmatpush1.msra.mxu0 0.0
    %3235 = vmatprep.subr.mxu0 0.0
    %3236 = vmatpush1.msra.mxu0 0.0
    %3237 = vmatprep.subr.mxu0 0.0
    %3238 = vmatpush1.msra.mxu0 0.0
    %3239 = vmatprep.subr.mxu0 0.0
    %3240 = vmatpush1.msra.mxu0 0.0
    %3241 = vmatprep.subr.mxu0 0.0
    %3242 = vmatpush1.msra.mxu0 0.0
    %3243 = vmatprep.subr.mxu0 0.0
    %3244 = vmatpush1.msra.mxu0 0.0
    %3245 = vmatprep.subr.mxu0 0.0
    %3246 = vmatpush1.msra.mxu0 0.0
    %3247 = vmatprep.subr.mxu0 0.0
    %3248 = vmatpush1.msra.mxu0 0.0
    %3249 = vmatprep.subr.mxu0 0.0
    %3250 = vmatpush1.msra.mxu0 0.0
    %3251 = vmatprep.subr.mxu0 0.0
    %3252 = vmatpush1.msra.mxu0 0.0
    %3253 = vmatprep.subr.mxu0 0.0
    %3254 = vmatpush1.msra.mxu0 0.0
    %3255 = vmatprep.subr.mxu0 0.0
    %3256 = vmatpush1.msra.mxu0 0.0
    %3257 = vmatprep.subr.mxu0 0.0
    %3258 = vmatpush1.msra.mxu0 0.0
    %3259 = vmatprep.subr.mxu0 0.0
    %3260 = vmatpush1.msra.mxu0 0.0
    %3261 = vmatprep.mubr.f32.mxu0 0.0
    %3262 = vmatmul.mubr.f32.gmra.mrb[0].mxu0 %v1570
    %v3263 = vpop.f32.mrb[0].mxu0
    %v3264 = vadd.f32 0.0, %v3263
    %v3265 = vpop.f32.mrb[0].mxu0
    %3266 = vmatprep.mubr.f32.mxu0 0.0
    %3267 = vmatmul.mubr.f32.gmra.mrb[0].mxu0 %v1573
    %v3268 = vpop.f32.mrb[0].mxu0
    %v3269 = vadd.f32 0.0, %v3268
    %v3270 = vpop.f32.mrb[0].mxu0
    %3271 = vdwg.mxu0
    %3272 = vmatprep.subr.mxu0 0.0
    %3273 = vmatpush1.msra.mxu0 %v3195
    %3274 = vmatprep.subr.mxu0 0.0
    %3275 = vmatpush1.msra.mxu0 %v3196
    %3276 = vmatprep.subr.mxu0 0.0
    %3277 = vmatpush1.msra.mxu0 0.0
    %3278 = vmatprep.subr.mxu0 0.0
    %3279 = vmatpush1.msra.mxu0 0.0
    %3280 = vmatprep.subr.mxu0 0.0
    %3281 = vmatpush1.msra.mxu0 0.0
    %3282 = vmatprep.subr.mxu0 0.0
    %3283 = vmatpush1.msra.mxu0 0.0
    %3284 = vmatprep.subr.mxu0 0.0
    %3285 = vmatpush1.msra.mxu0 0.0
    %3286 = vmatprep.subr.mxu0 0.0
    %3287 = vmatpush1.msra.mxu0 0.0
    %3288 = vmatprep.subr.mxu0 0.0
    %3289 = vmatpush1.msra.mxu0 0.0
    %3290 = vmatprep.subr.mxu0 0.0
    %3291 = vmatpush1.msra.mxu0 0.0
    %3292 = vmatprep.subr.mxu0 0.0
    %3293 = vmatpush1.msra.mxu0 0.0
    %3294 = vmatprep.subr.mxu0 0.0
    %3295 = vmatpush1.msra.mxu0 0.0
    %3296 = vmatprep.subr.mxu0 0.0
    %3297 = vmatpush1.msra.mxu0 0.0
    %3298 = vmatprep.subr.mxu0 0.0
    %3299 = vmatpush1.msra.mxu0 0.0
    %3300 = vmatprep.subr.mxu0 0.0
    %3301 = vmatpush1.msra.mxu0 0.0
    %3302 = vmatprep.subr.mxu0 0.0
    %3303 = vmatpush1.msra.mxu0 0.0
    %3304 = vmatprep.subr.mxu0 0.0
    %3305 = vmatpush1.msra.mxu0 0.0
    %3306 = vmatprep.subr.mxu0 0.0
    %3307 = vmatpush1.msra.mxu0 0.0
    %3308 = vmatprep.subr.mxu0 0.0
    %3309 = vmatpush1.msra.mxu0 0.0
    %3310 = vmatprep.subr.mxu0 0.0
    %3311 = vmatpush1.msra.mxu0 0.0
    %3312 = vmatprep.subr.mxu0 0.0
    %3313 = vmatpush1.msra.mxu0 0.0
    %3314 = vmatprep.subr.mxu0 0.0
    %3315 = vmatpush1.msra.mxu0 0.0
    %3316 = vmatprep.subr.mxu0 0.0
    %3317 = vmatpush1.msra.mxu0 0.0
    %3318 = vmatprep.subr.mxu0 0.0
    %3319 = vmatpush1.msra.mxu0 0.0
    %3320 = vmatprep.subr.mxu0 0.0
    %3321 = vmatpush1.msra.mxu0 0.0
    %3322 = vmatprep.subr.mxu0 0.0
    %3323 = vmatpush1.msra.mxu0 0.0
    %3324 = vmatprep.subr.mxu0 0.0
    %3325 = vmatpush1.msra.mxu0 0.0
    %3326 = vmatprep.subr.mxu0 0.0
    %3327 = vmatpush1.msra.mxu0 0.0
    %3328 = vmatprep.subr.mxu0 0.0
    %3329 = vmatpush1.msra.mxu0 0.0
    %3330 = vmatprep.subr.mxu0 0.0
    %3331 = vmatpush1.msra.mxu0 0.0
    %3332 = vmatprep.subr.mxu0 0.0
    %3333 = vmatpush1.msra.mxu0 0.0
    %3334 = vmatprep.subr.mxu0 0.0
    %3335 = vmatpush1.msra.mxu0 0.0
    %3336 = vmatprep.mubr.f32.mxu0 0.0
    %3337 = vmatmul.mubr.f32.gmra.mrb[0].mxu0 %v1651
    %v3338 = vpop.f32.mrb[0].mxu0
    %v3339 = vadd.f32 0.0, %v3338
    %v3340 = vpop.f32.mrb[0].mxu0
    %3341 = vmatprep.mubr.f32.mxu0 0.0
    %3342 = vmatmul.mubr.f32.gmra.mrb[0].mxu0 %v1654
    %v3343 = vpop.f32.mrb[0].mxu0
    %v3344 = vadd.f32 0.0, %v3343
    %v3345 = vpop.f32.mrb[0].mxu0
    %3346 = vdwg.mxu0
    %v3347 = vld [vmem:[%s17] sm:$0xf]
    %s3348 = scalar_lea.vmem %s17, 4
    %v3349 = vld [vmem:[%s3348] sm:$0xf]
    %v3351 = vsel %vm451, %v3195, 0
    %v3354 = vsel %vm451, %v3196, 0
    %v3357 = vsel %vm458, %v3349, 0
    %3359 = vmatprep.subr.mxu0 0.0
    %3360 = vmatpush1.msra.mxu0 %v3357
    %3361 = vmatprep.subr.mxu0 0.0
    %3362 = vmatpush1.msra.mxu0 0.0
    %3363 = vmatprep.subr.mxu0 0.0
    %3364 = vmatpush1.msra.mxu0 0.0
    %3365 = vmatprep.subr.mxu0 0.0
    %3366 = vmatpush1.msra.mxu0 0.0
    %3367 = vmatprep.subr.mxu0 0.0
    %3368 = vmatpush1.msra.mxu0 0.0
    %3369 = vmatprep.subr.mxu0 0.0
    %3370 = vmatpush1.msra.mxu0 0.0
    %3371 = vmatprep.subr.mxu0 0.0
    %3372 = vmatpush1.msra.mxu0 0.0
    %3373 = vmatprep.subr.mxu0 0.0
    %3374 = vmatpush1.msra.mxu0 0.0
    %3375 = vmatprep.subr.mxu0 0.0
    %3376 = vmatpush1.msra.mxu0 0.0
    %3377 = vmatprep.subr.mxu0 0.0
    %3378 = vmatpush1.msra.mxu0 0.0
    %3379 = vmatprep.subr.mxu0 0.0
    %3380 = vmatpush1.msra.mxu0 0.0
    %3381 = vmatprep.subr.mxu0 0.0
    %3382 = vmatpush1.msra.mxu0 0.0
    %3383 = vmatprep.subr.mxu0 0.0
    %3384 = vmatpush1.msra.mxu0 0.0
    %3385 = vmatprep.subr.mxu0 0.0
    %3386 = vmatpush1.msra.mxu0 0.0
    %3387 = vmatprep.subr.mxu0 0.0
    %3388 = vmatpush1.msra.mxu0 0.0
    %3389 = vmatprep.subr.mxu0 0.0
    %3390 = vmatpush1.msra.mxu0 0.0
    %3391 = vmatprep.subr.mxu0 0.0
    %3392 = vmatpush1.msra.mxu0 0.0
    %3393 = vmatprep.subr.mxu0 0.0
    %3394 = vmatpush1.msra.mxu0 0.0
    %3395 = vmatprep.subr.mxu0 0.0
    %3396 = vmatpush1.msra.mxu0 0.0
    %3397 = vmatprep.subr.mxu0 0.0
    %3398 = vmatpush1.msra.mxu0 0.0
    %3399 = vmatprep.subr.mxu0 0.0
    %3400 = vmatpush1.msra.mxu0 0.0
    %3401 = vmatprep.subr.mxu0 0.0
    %3402 = vmatpush1.msra.mxu0 0.0
    %3403 = vmatprep.subr.mxu0 0.0
    %3404 = vmatpush1.msra.mxu0 0.0
    %3405 = vmatprep.subr.mxu0 0.0
    %3406 = vmatpush1.msra.mxu0 0.0
    %3407 = vmatprep.subr.mxu0 0.0
    %3408 = vmatpush1.msra.mxu0 0.0
    %3409 = vmatprep.subr.mxu0 0.0
    %3410 = vmatpush1.msra.mxu0 0.0
    %3411 = vmatprep.subr.mxu0 0.0
    %3412 = vmatpush1.msra.mxu0 0.0
    %3413 = vmatprep.subr.mxu0 0.0
    %3414 = vmatpush1.msra.mxu0 0.0
    %3415 = vmatprep.subr.mxu0 0.0
    %3416 = vmatpush1.msra.mxu0 0.0
    %3417 = vmatprep.subr.mxu0 0.0
    %3418 = vmatpush1.msra.mxu0 0.0
    %3419 = vmatprep.subr.mxu0 0.0
    %3420 = vmatpush1.msra.mxu0 0.0
    %3421 = vmatprep.subr.mxu0 0.0
    %3422 = vmatpush1.msra.mxu0 0.0
    %3423 = vmatprep.mubr.f32.mxu0 0.0
    %3424 = vmatmul.mubr.f32.gmra.mrb[0].mxu0 %v3351
    %v3425 = vpop.f32.mrb[0].mxu0
    %v3426 = vadd.f32 0.0, %v3425
    %v3427 = vpop.f32.mrb[0].mxu0
    %3428 = vmatprep.mubr.f32.mxu0 0.0
    %3429 = vmatmul.mubr.f32.gmra.mrb[0].mxu0 %v3354
    %v3430 = vpop.f32.mrb[0].mxu0
    %v3431 = vadd.f32 0.0, %v3430
    %v3432 = vpop.f32.mrb[0].mxu0
    %3433 = vdwg.mxu0
    %v3435 = vsel %vm451, %v3264, 0
    %v3438 = vsel %vm451, %v3269, 0
    %v3441 = vsel %vm458, %v3347, 0
    %3443 = vmatprep.subr.mxu0 0.0
    %3444 = vmatpush1.msra.mxu0 %v3441
    %3445 = vmatprep.subr.mxu0 0.0
    %3446 = vmatpush1.msra.mxu0 0.0
    %3447 = vmatprep.subr.mxu0 0.0
    %3448 = vmatpush1.msra.mxu0 0.0
    %3449 = vmatprep.subr.mxu0 0.0
    %3450 = vmatpush1.msra.mxu0 0.0
    %3451 = vmatprep.subr.mxu0 0.0
    %3452 = vmatpush1.msra.mxu0 0.0
    %3453 = vmatprep.subr.mxu0 0.0
    %3454 = vmatpush1.msra.mxu0 0.0
    %3455 = vmatprep.subr.mxu0 0.0
    %3456 = vmatpush1.msra.mxu0 0.0
    %3457 = vmatprep.subr.mxu0 0.0
    %3458 = vmatpush1.msra.mxu0 0.0
    %3459 = vmatprep.subr.mxu0 0.0
    %3460 = vmatpush1.msra.mxu0 0.0
    %3461 = vmatprep.subr.mxu0 0.0
    %3462 = vmatpush1.msra.mxu0 0.0
    %3463 = vmatprep.subr.mxu0 0.0
    %3464 = vmatpush1.msra.mxu0 0.0
    %3465 = vmatprep.subr.mxu0 0.0
    %3466 = vmatpush1.msra.mxu0 0.0
    %3467 = vmatprep.subr.mxu0 0.0
    %3468 = vmatpush1.msra.mxu0 0.0
    %3469 = vmatprep.subr.mxu0 0.0
    %3470 = vmatpush1.msra.mxu0 0.0
    %3471 = vmatprep.subr.mxu0 0.0
    %3472 = vmatpush1.msra.mxu0 0.0
    %3473 = vmatprep.subr.mxu0 0.0
    %3474 = vmatpush1.msra.mxu0 0.0
    %3475 = vmatprep.subr.mxu0 0.0
    %3476 = vmatpush1.msra.mxu0 0.0
    %3477 = vmatprep.subr.mxu0 0.0
    %3478 = vmatpush1.msra.mxu0 0.0
    %3479 = vmatprep.subr.mxu0 0.0
    %3480 = vmatpush1.msra.mxu0 0.0
    %3481 = vmatprep.subr.mxu0 0.0
    %3482 = vmatpush1.msra.mxu0 0.0
    %3483 = vmatprep.subr.mxu0 0.0
    %3484 = vmatpush1.msra.mxu0 0.0
    %3485 = vmatprep.subr.mxu0 0.0
    %3486 = vmatpush1.msra.mxu0 0.0
    %3487 = vmatprep.subr.mxu0 0.0
    %3488 = vmatpush1.msra.mxu0 0.0
    %3489 = vmatprep.subr.mxu0 0.0
    %3490 = vmatpush1.msra.mxu0 0.0
    %3491 = vmatprep.subr.mxu0 0.0
    %3492 = vmatpush1.msra.mxu0 0.0
    %3493 = vmatprep.subr.mxu0 0.0
    %3494 = vmatpush1.msra.mxu0 0.0
    %3495 = vmatprep.subr.mxu0 0.0
    %3496 = vmatpush1.msra.mxu0 0.0
    %3497 = vmatprep.subr.mxu0 0.0
    %3498 = vmatpush1.msra.mxu0 0.0
    %3499 = vmatprep.subr.mxu0 0.0
    %3500 = vmatpush1.msra.mxu0 0.0
    %3501 = vmatprep.subr.mxu0 0.0
    %3502 = vmatpush1.msra.mxu0 0.0
    %3503 = vmatprep.subr.mxu0 0.0
    %3504 = vmatpush1.msra.mxu0 0.0
    %3505 = vmatprep.subr.mxu0 0.0
    %3506 = vmatpush1.msra.mxu0 0.0
    %3507 = vmatprep.mubr.f32.mxu0 0.0
    %3508 = vmatmul.mubr.f32.gmra.mrb[0].mxu0 %v3435
    %v3509 = vpop.f32.mrb[0].mxu0
    %v3510 = vadd.f32 %v3426, %v3509
    %v3511 = vpop.f32.mrb[0].mxu0
    %3512 = vmatprep.mubr.f32.mxu0 0.0
    %3513 = vmatmul.mubr.f32.gmra.mrb[0].mxu0 %v3438
    %v3514 = vpop.f32.mrb[0].mxu0
    %v3515 = vadd.f32 %v3431, %v3514
    %v3516 = vpop.f32.mrb[0].mxu0
    %3517 = vdwg.mxu0
    %s3518 = scalar_lea.vmem %s17, 8
    %v3519 = vld [vmem:[%s3518] sm:$0xf]
    %v3521 = vsel %vm451, %v3339, 0
    %v3524 = vsel %vm451, %v3344, 0
    %v3527 = vsel %vm458, %v3519, 0
    %3529 = vmatprep.subr.mxu0 0.0
    %3530 = vmatpush1.msra.mxu0 %v3527
    %3531 = vmatprep.subr.mxu0 0.0
    %3532 = vmatpush1.msra.mxu0 0.0
    %3533 = vmatprep.subr.mxu0 0.0
    %3534 = vmatpush1.msra.mxu0 0.0
    %3535 = vmatprep.subr.mxu0 0.0
    %3536 = vmatpush1.msra.mxu0 0.0
    %3537 = vmatprep.subr.mxu0 0.0
    %3538 = vmatpush1.msra.mxu0 0.0
    %3539 = vmatprep.subr.mxu0 0.0
    %3540 = vmatpush1.msra.mxu0 0.0
    %3541 = vmatprep.subr.mxu0 0.0
    %3542 = vmatpush1.msra.mxu0 0.0
    %3543 = vmatprep.subr.mxu0 0.0
    %3544 = vmatpush1.msra.mxu0 0.0
    %3545 = vmatprep.subr.mxu0 0.0
    %3546 = vmatpush1.msra.mxu0 0.0
    %3547 = vmatprep.subr.mxu0 0.0
    %3548 = vmatpush1.msra.mxu0 0.0
    %3549 = vmatprep.subr.mxu0 0.0
    %3550 = vmatpush1.msra.mxu0 0.0
    %3551 = vmatprep.subr.mxu0 0.0
    %3552 = vmatpush1.msra.mxu0 0.0
    %3553 = vmatprep.subr.mxu0 0.0
    %3554 = vmatpush1.msra.mxu0 0.0
    %3555 = vmatprep.subr.mxu0 0.0
    %3556 = vmatpush1.msra.mxu0 0.0
    %3557 = vmatprep.subr.mxu0 0.0
    %3558 = vmatpush1.msra.mxu0 0.0
    %3559 = vmatprep.subr.mxu0 0.0
    %3560 = vmatpush1.msra.mxu0 0.0
    %3561 = vmatprep.subr.mxu0 0.0
    %3562 = vmatpush1.msra.mxu0 0.0
    %3563 = vmatprep.subr.mxu0 0.0
    %3564 = vmatpush1.msra.mxu0 0.0
    %3565 = vmatprep.subr.mxu0 0.0
    %3566 = vmatpush1.msra.mxu0 0.0
    %3567 = vmatprep.subr.mxu0 0.0
    %3568 = vmatpush1.msra.mxu0 0.0
    %3569 = vmatprep.subr.mxu0 0.0
    %3570 = vmatpush1.msra.mxu0 0.0
    %3571 = vmatprep.subr.mxu0 0.0
    %3572 = vmatpush1.msra.mxu0 0.0
    %3573 = vmatprep.subr.mxu0 0.0
    %3574 = vmatpush1.msra.mxu0 0.0
    %3575 = vmatprep.subr.mxu0 0.0
    %3576 = vmatpush1.msra.mxu0 0.0
    %3577 = vmatprep.subr.mxu0 0.0
    %3578 = vmatpush1.msra.mxu0 0.0
    %3579 = vmatprep.subr.mxu0 0.0
    %3580 = vmatpush1.msra.mxu0 0.0
    %3581 = vmatprep.subr.mxu0 0.0
    %3582 = vmatpush1.msra.mxu0 0.0
    %3583 = vmatprep.subr.mxu0 0.0
    %3584 = vmatpush1.msra.mxu0 0.0
    %3585 = vmatprep.subr.mxu0 0.0
    %3586 = vmatpush1.msra.mxu0 0.0
    %3587 = vmatprep.subr.mxu0 0.0
    %3588 = vmatpush1.msra.mxu0 0.0
    %3589 = vmatprep.subr.mxu0 0.0
    %3590 = vmatpush1.msra.mxu0 0.0
    %3591 = vmatprep.subr.mxu0 0.0
    %3592 = vmatpush1.msra.mxu0 0.0
    %3593 = vmatprep.mubr.f32.mxu0 0.0
    %3594 = vmatmul.mubr.f32.gmra.mrb[0].mxu0 %v3521
    %v3595 = vpop.f32.mrb[0].mxu0
    %v3596 = vadd.f32 0.0, %v3595
    %v3597 = vpop.f32.mrb[0].mxu0
    %3598 = vmatprep.mubr.f32.mxu0 0.0
    %3599 = vmatmul.mubr.f32.gmra.mrb[0].mxu0 %v3524
    %v3600 = vpop.f32.mrb[0].mxu0
    %v3601 = vadd.f32 0.0, %v3600
    %v3602 = vpop.f32.mrb[0].mxu0
    %3603 = vdwg.mxu0
    %v3604 = vadd.f32 %v3510, %v3596
    %v3605 = vadd.f32 %v3515, %v3601
    %v3606 = vadd.f32 %v3604, %v279
    %v3607 = vadd.f32 %v3605, %v280
    %v3608 = vld [vmem:[#allocation11] sm:$0xff]
    %v3609 = vld [vmem:[%s19] sm:$0xff]
    %v3610 = vld [vmem:[%s19 + $0x8] sm:$0xff]
    %v3611 = vld [vmem:[%s19 + $0x10] sm:$0xff]
    %v3612 = vld [vmem:[%s19 + $0x18] sm:$0xff]
    %v3613 = vld [vmem:[%s21] sm:$0x1]
    %v3615 = vlaneseq
    %v3616 = vshrl.u32 %v3615, 7
    %v3617 = vsub.s32 0, %v3616
    %v3618 = vrot.slane %v3613, %v3617
    %vm3620 = vcmask 261120
    %v3622 = vsel %vm3620, %v3606, 0
    %v3625 = vsel %vm3620, %v3607, 0
    %3627 = vmatprep.subr.mxu0 0.0
    %3628 = vmatpush1.msra.mxu0 %v3609
    %3629 = vmatprep.subr.mxu0 0.0
    %3630 = vmatpush1.msra.mxu0 %v3610
    %3631 = vmatprep.subr.mxu0 0.0
    %3632 = vmatpush1.msra.mxu0 %v3611
    %3633 = vmatprep.subr.mxu0 0.0
    %3634 = vmatpush1.msra.mxu0 %v3612
    %3635 = vmatprep.subr.mxu0 0.0
    %3636 = vmatpush1.msra.mxu0 0.0
    %3637 = vmatprep.subr.mxu0 0.0
    %3638 = vmatpush1.msra.mxu0 0.0
    %3639 = vmatprep.subr.mxu0 0.0
    %3640 = vmatpush1.msra.mxu0 0.0
    %3641 = vmatprep.subr.mxu0 0.0
    %3642 = vmatpush1.msra.mxu0 0.0
    %3643 = vmatprep.subr.mxu0 0.0
    %3644 = vmatpush1.msra.mxu0 0.0
    %3645 = vmatprep.subr.mxu0 0.0
    %3646 = vmatpush1.msra.mxu0 0.0
    %3647 = vmatprep.subr.mxu0 0.0
    %3648 = vmatpush1.msra.mxu0 0.0
    %3649 = vmatprep.subr.mxu0 0.0
    %3650 = vmatpush1.msra.mxu0 0.0
    %3651 = vmatprep.subr.mxu0 0.0
    %3652 = vmatpush1.msra.mxu0 0.0
    %3653 = vmatprep.subr.mxu0 0.0
    %3654 = vmatpush1.msra.mxu0 0.0
    %3655 = vmatprep.subr.mxu0 0.0
    %3656 = vmatpush1.msra.mxu0 0.0
    %3657 = vmatprep.subr.mxu0 0.0
    %3658 = vmatpush1.msra.mxu0 0.0
    %3659 = vmatprep.subr.mxu0 0.0
    %3660 = vmatpush1.msra.mxu0 0.0
    %3661 = vmatprep.subr.mxu0 0.0
    %3662 = vmatpush1.msra.mxu0 0.0
    %3663 = vmatprep.subr.mxu0 0.0
    %3664 = vmatpush1.msra.mxu0 0.0
    %3665 = vmatprep.subr.mxu0 0.0
    %3666 = vmatpush1.msra.mxu0 0.0
    %3667 = vmatprep.subr.mxu0 0.0
    %3668 = vmatpush1.msra.mxu0 0.0
    %3669 = vmatprep.subr.mxu0 0.0
    %3670 = vmatpush1.msra.mxu0 0.0
    %3671 = vmatprep.subr.mxu0 0.0
    %3672 = vmatpush1.msra.mxu0 0.0
    %3673 = vmatprep.subr.mxu0 0.0
    %3674 = vmatpush1.msra.mxu0 0.0
    %3675 = vmatprep.subr.mxu0 0.0
    %3676 = vmatpush1.msra.mxu0 0.0
    %3677 = vmatprep.subr.mxu0 0.0
    %3678 = vmatpush1.msra.mxu0 0.0
    %3679 = vmatprep.subr.mxu0 0.0
    %3680 = vmatpush1.msra.mxu0 0.0
    %3681 = vmatprep.subr.mxu0 0.0
    %3682 = vmatpush1.msra.mxu0 0.0
    %3683 = vmatprep.subr.mxu0 0.0
    %3684 = vmatpush1.msra.mxu0 0.0
    %3685 = vmatprep.subr.mxu0 0.0
    %3686 = vmatpush1.msra.mxu0 0.0
    %3687 = vmatprep.subr.mxu0 0.0
    %3688 = vmatpush1.msra.mxu0 0.0
    %3689 = vmatprep.subr.mxu0 0.0
    %3690 = vmatpush1.msra.mxu0 0.0
    %3691 = vmatprep.mubr.f32.mxu0 0.0
    %3692 = vmatmul.mubr.f32.gmra.mrb[0].mxu0 %v3622
    %v3693 = vpop.f32.mrb[0].mxu0
    %v3694 = vadd.f32 %v3618, %v3693
    %v3695 = vpop.f32.mrb[0].mxu0
    %3696 = vmatprep.mubr.f32.mxu0 0.0
    %3697 = vmatmul.mubr.f32.gmra.mrb[0].mxu0 %v3625
    %v3698 = vpop.f32.mrb[0].mxu0
    %v3699 = vadd.f32 %v3618, %v3698
    %v3700 = vpop.f32.mrb[0].mxu0
    %3701 = vdwg.mxu0
    %v3702 = vld [vmem:[%s23] sm:$0xff]
    %v3703 = vld [vmem:[%s23 + $0x8] sm:$0xff]
    %v3704 = vld [vmem:[%s23 + $0x10] sm:$0xff]
    %v3705 = vld [vmem:[%s23 + $0x18] sm:$0xff]
    %v3706 = vld [vmem:[#allocation3] sm:$0x1]
    %v3708 = vlaneseq
    %v3709 = vshrl.u32 %v3708, 7
    %v3710 = vsub.s32 0, %v3709
    %v3711 = vrot.slane %v3706, %v3710
    %v3714 = vsel %vm3620, %v1990, 0
    %v3717 = vsel %vm3620, %v1991, 0
    %3719 = vmatprep.subr.mxu0 0.0
    %3720 = vmatpush1.msra.mxu0 %v3702
    %3721 = vmatprep.subr.mxu0 0.0
    %3722 = vmatpush1.msra.mxu0 %v3703
    %3723 = vmatprep.subr.mxu0 0.0
    %3724 = vmatpush1.msra.mxu0 %v3704
    %3725 = vmatprep.subr.mxu0 0.0
    %3726 = vmatpush1.msra.mxu0 %v3705
    %3727 = vmatprep.subr.mxu0 0.0
    %3728 = vmatpush1.msra.mxu0 0.0
    %3729 = vmatprep.subr.mxu0 0.0
    %3730 = vmatpush1.msra.mxu0 0.0
    %3731 = vmatprep.subr.mxu0 0.0
    %3732 = vmatpush1.msra.mxu0 0.0
    %3733 = vmatprep.subr.mxu0 0.0
    %3734 = vmatpush1.msra.mxu0 0.0
    %3735 = vmatprep.subr.mxu0 0.0
    %3736 = vmatpush1.msra.mxu0 0.0
    %3737 = vmatprep.subr.mxu0 0.0
    %3738 = vmatpush1.msra.mxu0 0.0
    %3739 = vmatprep.subr.mxu0 0.0
    %3740 = vmatpush1.msra.mxu0 0.0
    %3741 = vmatprep.subr.mxu0 0.0
    %3742 = vmatpush1.msra.mxu0 0.0
    %3743 = vmatprep.subr.mxu0 0.0
    %3744 = vmatpush1.msra.mxu0 0.0
    %3745 = vmatprep.subr.mxu0 0.0
    %3746 = vmatpush1.msra.mxu0 0.0
    %3747 = vmatprep.subr.mxu0 0.0
    %3748 = vmatpush1.msra.mxu0 0.0
    %3749 = vmatprep.subr.mxu0 0.0
    %3750 = vmatpush1.msra.mxu0 0.0
    %3751 = vmatprep.subr.mxu0 0.0
    %3752 = vmatpush1.msra.mxu0 0.0
    %3753 = vmatprep.subr.mxu0 0.0
    %3754 = vmatpush1.msra.mxu0 0.0
    %3755 = vmatprep.subr.mxu0 0.0
    %3756 = vmatpush1.msra.mxu0 0.0
    %3757 = vmatprep.subr.mxu0 0.0
    %3758 = vmatpush1.msra.mxu0 0.0
    %3759 = vmatprep.subr.mxu0 0.0
    %3760 = vmatpush1.msra.mxu0 0.0
    %3761 = vmatprep.subr.mxu0 0.0
    %3762 = vmatpush1.msra.mxu0 0.0
    %3763 = vmatprep.subr.mxu0 0.0
    %3764 = vmatpush1.msra.mxu0 0.0
    %3765 = vmatprep.subr.mxu0 0.0
    %3766 = vmatpush1.msra.mxu0 0.0
    %3767 = vmatprep.subr.mxu0 0.0
    %3768 = vmatpush1.msra.mxu0 0.0
    %3769 = vmatprep.subr.mxu0 0.0
    %3770 = vmatpush1.msra.mxu0 0.0
    %3771 = vmatprep.subr.mxu0 0.0
    %3772 = vmatpush1.msra.mxu0 0.0
    %3773 = vmatprep.subr.mxu0 0.0
    %3774 = vmatpush1.msra.mxu0 0.0
    %3775 = vmatprep.subr.mxu0 0.0
    %3776 = vmatpush1.msra.mxu0 0.0
    %3777 = vmatprep.subr.mxu0 0.0
    %3778 = vmatpush1.msra.mxu0 0.0
    %3779 = vmatprep.subr.mxu0 0.0
    %3780 = vmatpush1.msra.mxu0 0.0
    %3781 = vmatprep.subr.mxu0 0.0
    %3782 = vmatpush1.msra.mxu0 0.0
    %3783 = vmatprep.mubr.f32.mxu0 0.0
    %3784 = vmatmul.mubr.f32.gmra.mrb[0].mxu0 %v3714
    %v3785 = vpop.f32.mrb[0].mxu0
    %v3786 = vadd.f32 %v3711, %v3785
    %v3787 = vpop.f32.mrb[0].mxu0
    %3788 = vmatprep.mubr.f32.mxu0 0.0
    %3789 = vmatmul.mubr.f32.gmra.mrb[0].mxu0 %v3717
    %v3790 = vpop.f32.mrb[0].mxu0
    %v3791 = vadd.f32 %v3711, %v3790
    %v3792 = vpop.f32.mrb[0].mxu0
    %3793 = vdwg.mxu0
    %v3794 = vld [vmem:[%s27] sm:$0xff]
    %v3795 = vld [vmem:[%s27 + $0x8] sm:$0xff]
    %v3796 = vld [vmem:[%s27 + $0x10] sm:$0xff]
    %v3797 = vld [vmem:[%s27 + $0x18] sm:$0xff]
    %v3798 = vld [vmem:[#allocation5] sm:$0x1]
    %v3800 = vlaneseq
    %v3801 = vshrl.u32 %v3800, 7
    %v3802 = vsub.s32 0, %v3801
    %v3803 = vrot.slane %v3798, %v3802
    %3805 = vmatprep.subr.mxu0 0.0
    %3806 = vmatpush1.msra.mxu0 %v3794
    %3807 = vmatprep.subr.mxu0 0.0
    %3808 = vmatpush1.msra.mxu0 %v3795
    %3809 = vmatprep.subr.mxu0 0.0
    %3810 = vmatpush1.msra.mxu0 %v3796
    %3811 = vmatprep.subr.mxu0 0.0
    %3812 = vmatpush1.msra.mxu0 %v3797
    %3813 = vmatprep.subr.mxu0 0.0
    %3814 = vmatpush1.msra.mxu0 0.0
    %3815 = vmatprep.subr.mxu0 0.0
    %3816 = vmatpush1.msra.mxu0 0.0
    %3817 = vmatprep.subr.mxu0 0.0
    %3818 = vmatpush1.msra.mxu0 0.0
    %3819 = vmatprep.subr.mxu0 0.0
    %3820 = vmatpush1.msra.mxu0 0.0
    %3821 = vmatprep.subr.mxu0 0.0
    %3822 = vmatpush1.msra.mxu0 0.0
    %3823 = vmatprep.subr.mxu0 0.0
    %3824 = vmatpush1.msra.mxu0 0.0
    %3825 = vmatprep.subr.mxu0 0.0
    %3826 = vmatpush1.msra.mxu0 0.0
    %3827 = vmatprep.subr.mxu0 0.0
    %3828 = vmatpush1.msra.mxu0 0.0
    %3829 = vmatprep.subr.mxu0 0.0
    %3830 = vmatpush1.msra.mxu0 0.0
    %3831 = vmatprep.subr.mxu0 0.0
    %3832 = vmatpush1.msra.mxu0 0.0
    %3833 = vmatprep.subr.mxu0 0.0
    %3834 = vmatpush1.msra.mxu0 0.0
    %3835 = vmatprep.subr.mxu0 0.0
    %3836 = vmatpush1.msra.mxu0 0.0
    %3837 = vmatprep.subr.mxu0 0.0
    %3838 = vmatpush1.msra.mxu0 0.0
    %3839 = vmatprep.subr.mxu0 0.0
    %3840 = vmatpush1.msra.mxu0 0.0
    %3841 = vmatprep.subr.mxu0 0.0
    %3842 = vmatpush1.msra.mxu0 0.0
    %3843 = vmatprep.subr.mxu0 0.0
    %3844 = vmatpush1.msra.mxu0 0.0
    %3845 = vmatprep.subr.mxu0 0.0
    %3846 = vmatpush1.msra.mxu0 0.0
    %3847 = vmatprep.subr.mxu0 0.0
    %3848 = vmatpush1.msra.mxu0 0.0
    %3849 = vmatprep.subr.mxu0 0.0
    %3850 = vmatpush1.msra.mxu0 0.0
    %3851 = vmatprep.subr.mxu0 0.0
    %3852 = vmatpush1.msra.mxu0 0.0
    %3853 = vmatprep.subr.mxu0 0.0
    %3854 = vmatpush1.msra.mxu0 0.0
    %3855 = vmatprep.subr.mxu0 0.0
    %3856 = vmatpush1.msra.mxu0 0.0
    %3857 = vmatprep.subr.mxu0 0.0
    %3858 = vmatpush1.msra.mxu0 0.0
    %3859 = vmatprep.subr.mxu0 0.0
    %3860 = vmatpush1.msra.mxu0 0.0
    %3861 = vmatprep.subr.mxu0 0.0
    %3862 = vmatpush1.msra.mxu0 0.0
    %3863 = vmatprep.subr.mxu0 0.0
    %3864 = vmatpush1.msra.mxu0 0.0
    %3865 = vmatprep.subr.mxu0 0.0
    %3866 = vmatpush1.msra.mxu0 0.0
    %3867 = vmatprep.subr.mxu0 0.0
    %3868 = vmatpush1.msra.mxu0 0.0
    %3869 = vmatprep.mubr.f32.mxu0 0.0
    %3870 = vmatmul.mubr.f32.gmra.mrb[0].mxu0 %v3714
    %v3871 = vpop.f32.mrb[0].mxu0
    %v3872 = vadd.f32 %v3803, %v3871
    %v3873 = vpop.f32.mrb[0].mxu0
    %3874 = vmatprep.mubr.f32.mxu0 0.0
    %3875 = vmatmul.mubr.f32.gmra.mrb[0].mxu0 %v3717
    %v3876 = vpop.f32.mrb[0].mxu0
    %v3877 = vadd.f32 %v3803, %v3876
    %v3878 = vpop.f32.mrb[0].mxu0
    %3879 = vdwg.mxu0
    %v3880 = vld [vmem:[%s31] sm:$0xff]
    %v3881 = vld [vmem:[%s31 + $0x8] sm:$0xff]
    %v3882 = vld [vmem:[%s31 + $0x10] sm:$0xff]
    %v3883 = vld [vmem:[%s31 + $0x18] sm:$0xff]
    %v3884 = vld [vmem:[#allocation7] sm:$0x1]
    %v3886 = vlaneseq
    %v3887 = vshrl.u32 %v3886, 7
    %v3888 = vsub.s32 0, %v3887
    %v3889 = vrot.slane %v3884, %v3888
    %3891 = vmatprep.subr.mxu0 0.0
    %3892 = vmatpush1.msra.mxu0 %v3880
    %3893 = vmatprep.subr.mxu0 0.0
    %3894 = vmatpush1.msra.mxu0 %v3881
    %3895 = vmatprep.subr.mxu0 0.0
    %3896 = vmatpush1.msra.mxu0 %v3882
    %3897 = vmatprep.subr.mxu0 0.0
    %3898 = vmatpush1.msra.mxu0 %v3883
    %3899 = vmatprep.subr.mxu0 0.0
    %3900 = vmatpush1.msra.mxu0 0.0
    %3901 = vmatprep.subr.mxu0 0.0
    %3902 = vmatpush1.msra.mxu0 0.0
    %3903 = vmatprep.subr.mxu0 0.0
    %3904 = vmatpush1.msra.mxu0 0.0
    %3905 = vmatprep.subr.mxu0 0.0
    %3906 = vmatpush1.msra.mxu0 0.0
    %3907 = vmatprep.subr.mxu0 0.0
    %3908 = vmatpush1.msra.mxu0 0.0
    %3909 = vmatprep.subr.mxu0 0.0
    %3910 = vmatpush1.msra.mxu0 0.0
    %3911 = vmatprep.subr.mxu0 0.0
    %3912 = vmatpush1.msra.mxu0 0.0
    %3913 = vmatprep.subr.mxu0 0.0
    %3914 = vmatpush1.msra.mxu0 0.0
    %3915 = vmatprep.subr.mxu0 0.0
    %3916 = vmatpush1.msra.mxu0 0.0
    %3917 = vmatprep.subr.mxu0 0.0
    %3918 = vmatpush1.msra.mxu0 0.0
    %3919 = vmatprep.subr.mxu0 0.0
    %3920 = vmatpush1.msra.mxu0 0.0
    %3921 = vmatprep.subr.mxu0 0.0
    %3922 = vmatpush1.msra.mxu0 0.0
    %3923 = vmatprep.subr.mxu0 0.0
    %3924 = vmatpush1.msra.mxu0 0.0
    %3925 = vmatprep.subr.mxu0 0.0
    %3926 = vmatpush1.msra.mxu0 0.0
    %3927 = vmatprep.subr.mxu0 0.0
    %3928 = vmatpush1.msra.mxu0 0.0
    %3929 = vmatprep.subr.mxu0 0.0
    %3930 = vmatpush1.msra.mxu0 0.0
    %3931 = vmatprep.subr.mxu0 0.0
    %3932 = vmatpush1.msra.mxu0 0.0
    %3933 = vmatprep.subr.mxu0 0.0
    %3934 = vmatpush1.msra.mxu0 0.0
    %3935 = vmatprep.subr.mxu0 0.0
    %3936 = vmatpush1.msra.mxu0 0.0
    %3937 = vmatprep.subr.mxu0 0.0
    %3938 = vmatpush1.msra.mxu0 0.0
    %3939 = vmatprep.subr.mxu0 0.0
    %3940 = vmatpush1.msra.mxu0 0.0
    %3941 = vmatprep.subr.mxu0 0.0
    %3942 = vmatpush1.msra.mxu0 0.0
    %3943 = vmatprep.subr.mxu0 0.0
    %3944 = vmatpush1.msra.mxu0 0.0
    %3945 = vmatprep.subr.mxu0 0.0
    %3946 = vmatpush1.msra.mxu0 0.0
    %3947 = vmatprep.subr.mxu0 0.0
    %3948 = vmatpush1.msra.mxu0 0.0
    %3949 = vmatprep.subr.mxu0 0.0
    %3950 = vmatpush1.msra.mxu0 0.0
    %3951 = vmatprep.subr.mxu0 0.0
    %3952 = vmatpush1.msra.mxu0 0.0
    %3953 = vmatprep.subr.mxu0 0.0
    %3954 = vmatpush1.msra.mxu0 0.0
    %3955 = vmatprep.mubr.f32.mxu0 0.0
    %3956 = vmatmul.mubr.f32.gmra.mrb[0].mxu0 %v3714
    %v3957 = vpop.f32.mrb[0].mxu0
    %v3958 = vadd.f32 %v3889, %v3957
    %v3959 = vpop.f32.mrb[0].mxu0
    %3960 = vmatprep.mubr.f32.mxu0 0.0
    %3961 = vmatmul.mubr.f32.gmra.mrb[0].mxu0 %v3717
    %v3962 = vpop.f32.mrb[0].mxu0
    %v3963 = vadd.f32 %v3889, %v3962
    %v3964 = vpop.f32.mrb[0].mxu0
    %3965 = vdwg.mxu0
    %v3966 = vmul.f32 %v3958, -5.0
    %v3967 = vmul.f32 %v3963, -5.0
    %v3968 = vmul.f32 %v3966, 1.442695
    %v3969 = vpow.pop %v3968
    %v3970 = vmul.f32 %v3967, 1.442695
    %v3971 = vpow.pop %v3970
    %v3972 = vadd.f32 %v3969, 1.0
    %v3973 = vadd.f32 %v3971, 1.0
    %v3974 = vrcp.pop %v3972
    %v3975 = vmul.f32 1.0, %v3974
    %v3976 = vrcp.pop %v3973
    %v3977 = vmul.f32 1.0, %v3976
    %v3978 = vadd.f32 %v3975, 1e-05
    %v3979 = vadd.f32 %v3977, 1e-05
    %v3980 = vmul.f32 %v3978, 1.0986123
    %v3981 = vmul.f32 %v3979, 1.0986123
    %v3982 = vmul.f32 %v3980, 1.442695
    %v3983 = vpow.pop %v3982
    %v3984 = vmul.f32 %v3981, 1.442695
    %v3985 = vpow.pop %v3984
    %v3986 = vsub.f32 %v3983, 1.0
    %v3987 = vsub.f32 %v3985, 1.0
    %v3988 = vrcp.pop %v3986
    %v3989 = vmul.f32 1.0, %v3988
    %v3990 = vrcp.pop %v3987
    %v3991 = vmul.f32 1.0, %v3990
    %3992 = vst.msk [vmem:[%s63] sm:$0xff] %vm451, %v3986
    %3993 = vst.msk [vmem:[%s63 + $0x8] sm:$0xff] %vm451, %v3987
    %vm3994 = vcmask 64512
    %v3996 = vsel %vm3994, %v3694, 0
    %v3999 = vsel %vm3994, %v3786, 0
    %4001 = vmatprep.subr.mxu0 0.0
    %4002 = vmatpush1.xpose.msra.mxu0 %v3999
    %4003 = vmatprep.subr.mxu0 0.0
    %4004 = vmatpush1.xpose.msra.mxu0 0.0
    %4005 = vmatprep.subr.mxu0 0.0
    %4006 = vmatpush1.xpose.msra.mxu0 0.0
    %4007 = vmatprep.subr.mxu0 0.0
    %4008 = vmatpush1.xpose.msra.mxu0 0.0
    %4009 = vmatprep.subr.mxu0 0.0
    %4010 = vmatpush1.xpose.msra.mxu0 0.0
    %4011 = vmatprep.subr.mxu0 0.0
    %4012 = vmatpush1.xpose.msra.mxu0 0.0
    %4013 = vmatprep.subr.mxu0 0.0
    %4014 = vmatpush1.xpose.msra.mxu0 0.0
    %4015 = vmatprep.subr.mxu0 0.0
    %4016 = vmatpush1.xpose.msra.mxu0 0.0
    %4017 = vmatprep.subr.mxu0 0.0
    %4018 = vmatpush1.xpose.msra.mxu0 0.0
    %4019 = vmatprep.subr.mxu0 0.0
    %4020 = vmatpush1.xpose.msra.mxu0 0.0
    %4021 = vmatprep.subr.mxu0 0.0
    %4022 = vmatpush1.xpose.msra.mxu0 0.0
    %4023 = vmatprep.subr.mxu0 0.0
    %4024 = vmatpush1.xpose.msra.mxu0 0.0
    %4025 = vmatprep.subr.mxu0 0.0
    %4026 = vmatpush1.xpose.msra.mxu0 0.0
    %4027 = vmatprep.subr.mxu0 0.0
    %4028 = vmatpush1.xpose.msra.mxu0 0.0
    %4029 = vmatprep.subr.mxu0 0.0
    %4030 = vmatpush1.xpose.msra.mxu0 0.0
    %4031 = vmatprep.subr.mxu0 0.0
    %4032 = vmatpush1.xpose.msra.mxu0 0.0
    %4033 = vmatprep.subr.mxu0 0.0
    %4034 = vmatpush1.xpose.msra.mxu0 0.0
    %4035 = vmatprep.subr.mxu0 0.0
    %4036 = vmatpush1.xpose.msra.mxu0 0.0
    %4037 = vmatprep.subr.mxu0 0.0
    %4038 = vmatpush1.xpose.msra.mxu0 0.0
    %4039 = vmatprep.subr.mxu0 0.0
    %4040 = vmatpush1.xpose.msra.mxu0 0.0
    %4041 = vmatprep.subr.mxu0 0.0
    %4042 = vmatpush1.xpose.msra.mxu0 0.0
    %4043 = vmatprep.subr.mxu0 0.0
    %4044 = vmatpush1.xpose.msra.mxu0 0.0
    %4045 = vmatprep.subr.mxu0 0.0
    %4046 = vmatpush1.xpose.msra.mxu0 0.0
    %4047 = vmatprep.subr.mxu0 0.0
    %4048 = vmatpush1.xpose.msra.mxu0 0.0
    %4049 = vmatprep.subr.mxu0 0.0
    %4050 = vmatpush1.xpose.msra.mxu0 0.0
    %4051 = vmatprep.subr.mxu0 0.0
    %4052 = vmatpush1.xpose.msra.mxu0 0.0
    %4053 = vmatprep.subr.mxu0 0.0
    %4054 = vmatpush1.xpose.msra.mxu0 0.0
    %4055 = vmatprep.subr.mxu0 0.0
    %4056 = vmatpush1.xpose.msra.mxu0 0.0
    %4057 = vmatprep.subr.mxu0 0.0
    %4058 = vmatpush1.xpose.msra.mxu0 0.0
    %4059 = vmatprep.subr.mxu0 0.0
    %4060 = vmatpush1.xpose.msra.mxu0 0.0
    %4061 = vmatprep.subr.mxu0 0.0
    %4062 = vmatpush1.xpose.msra.mxu0 0.0
    %4063 = vmatprep.subr.mxu0 0.0
    %4064 = vmatpush1.xpose.msra.mxu0 0.0
    %4065 = vmatprep.mubr.f32.mxu0 0.0
    %4066 = vmatmul.mubr.f32.gmra.mrb[0].mxu0 %v3996
    %v4067 = vpop.f32.mrb[0].mxu0
    %v4068 = vadd.f32 0.0, %v4067
    %v4069 = vpop.f32.mrb[0].mxu0
    %4070 = vdwg.mxu0
    %v4072 = vsel %vm3994, %v3699, 0
    %v4075 = vsel %vm3994, %v3791, 0
    %4077 = vmatprep.subr.mxu0 0.0
    %4078 = vmatpush1.xpose.msra.mxu0 %v4075
    %4079 = vmatprep.subr.mxu0 0.0
    %4080 = vmatpush1.xpose.msra.mxu0 0.0
    %4081 = vmatprep.subr.mxu0 0.0
    %4082 = vmatpush1.xpose.msra.mxu0 0.0
    %4083 = vmatprep.subr.mxu0 0.0
    %4084 = vmatpush1.xpose.msra.mxu0 0.0
    %4085 = vmatprep.subr.mxu0 0.0
    %4086 = vmatpush1.xpose.msra.mxu0 0.0
    %4087 = vmatprep.subr.mxu0 0.0
    %4088 = vmatpush1.xpose.msra.mxu0 0.0
    %4089 = vmatprep.subr.mxu0 0.0
    %4090 = vmatpush1.xpose.msra.mxu0 0.0
    %4091 = vmatprep.subr.mxu0 0.0
    %4092 = vmatpush1.xpose.msra.mxu0 0.0
    %4093 = vmatprep.subr.mxu0 0.0
    %4094 = vmatpush1.xpose.msra.mxu0 0.0
    %4095 = vmatprep.subr.mxu0 0.0
    %4096 = vmatpush1.xpose.msra.mxu0 0.0
    %4097 = vmatprep.subr.mxu0 0.0
    %4098 = vmatpush1.xpose.msra.mxu0 0.0
    %4099 = vmatprep.subr.mxu0 0.0
    %4100 = vmatpush1.xpose.msra.mxu0 0.0
    %4101 = vmatprep.subr.mxu0 0.0
    %4102 = vmatpush1.xpose.msra.mxu0 0.0
    %4103 = vmatprep.subr.mxu0 0.0
    %4104 = vmatpush1.xpose.msra.mxu0 0.0
    %4105 = vmatprep.subr.mxu0 0.0
    %4106 = vmatpush1.xpose.msra.mxu0 0.0
    %4107 = vmatprep.subr.mxu0 0.0
    %4108 = vmatpush1.xpose.msra.mxu0 0.0
    %4109 = vmatprep.subr.mxu0 0.0
    %4110 = vmatpush1.xpose.msra.mxu0 0.0
    %4111 = vmatprep.subr.mxu0 0.0
    %4112 = vmatpush1.xpose.msra.mxu0 0.0
    %4113 = vmatprep.subr.mxu0 0.0
    %4114 = vmatpush1.xpose.msra.mxu0 0.0
    %4115 = vmatprep.subr.mxu0 0.0
    %4116 = vmatpush1.xpose.msra.mxu0 0.0
    %4117 = vmatprep.subr.mxu0 0.0
    %4118 = vmatpush1.xpose.msra.mxu0 0.0
    %4119 = vmatprep.subr.mxu0 0.0
    %4120 = vmatpush1.xpose.msra.mxu0 0.0
    %4121 = vmatprep.subr.mxu0 0.0
    %4122 = vmatpush1.xpose.msra.mxu0 0.0
    %4123 = vmatprep.subr.mxu0 0.0
    %4124 = vmatpush1.xpose.msra.mxu0 0.0
    %4125 = vmatprep.subr.mxu0 0.0
    %4126 = vmatpush1.xpose.msra.mxu0 0.0
    %4127 = vmatprep.subr.mxu0 0.0
    %4128 = vmatpush1.xpose.msra.mxu0 0.0
    %4129 = vmatprep.subr.mxu0 0.0
    %4130 = vmatpush1.xpose.msra.mxu0 0.0
    %4131 = vmatprep.subr.mxu0 0.0
    %4132 = vmatpush1.xpose.msra.mxu0 0.0
    %4133 = vmatprep.subr.mxu0 0.0
    %4134 = vmatpush1.xpose.msra.mxu0 0.0
    %4135 = vmatprep.subr.mxu0 0.0
    %4136 = vmatpush1.xpose.msra.mxu0 0.0
    %4137 = vmatprep.subr.mxu0 0.0
    %4138 = vmatpush1.xpose.msra.mxu0 0.0
    %4139 = vmatprep.subr.mxu0 0.0
    %4140 = vmatpush1.xpose.msra.mxu0 0.0
    %4141 = vmatprep.mubr.f32.mxu0 0.0
    %4142 = vmatmul.mubr.f32.gmra.mrb[0].mxu0 %v4072
    %v4143 = vpop.f32.mrb[0].mxu0
    %v4144 = vadd.f32 0.0, %v4143
    %v4145 = vpop.f32.mrb[0].mxu0
    %4146 = vdwg.mxu0
    %v4147 = vmul.f32 %v4068, 0.35355338
    %v4148 = vmul.f32 %v4144, 0.35355338
    %v4149 = vsel %vm3994, %v4147, -inf
    %4150 = vmax.xlane.f32.xlu0 %v4149
    %v4151 = vpop.xlane.xlu0 %4150
    %v4152 = vsel %vm3994, %v4148, -inf
    %4153 = vmax.xlane.f32.xlu0 %v4152
    %v4154 = vpop.xlane.xlu0 %4153
    %v4155 = vsub.f32 %v4147, %v4151
    %v4156 = vsub.f32 %v4148, %v4154
    %v4157 = vmul.f32 %v4155, 1.442695
    %v4158 = vpow.pop %v4157
    %v4159 = vmul.f32 %v4156, 1.442695
    %v4160 = vpow.pop %v4159
    %v4161 = vsel %vm3994, %v4158, 0.0
    %4162 = vadd.xlane.f32.xlu0 %v4161
    %v4163 = vpop.xlane.xlu0 %4162
    %v4164 = vsel %vm3994, %v4160, 0.0
    %4165 = vadd.xlane.f32.xlu0 %v4164
    %v4166 = vpop.xlane.xlu0 %4165
    %v4167 = vrcp.pop %v4163
    %v4168 = vmul.f32 %v4158, %v4167
    %v4169 = vrcp.pop %v4166
    %v4170 = vmul.f32 %v4160, %v4169
    %v4171 = vmul.f32 %v3989, 0.3989423
    %v4172 = vmul.f32 %v3991, 0.3989423
    %4174 = vset.pattern.permute.xlu0 0
    %4175 = vperm.xlu0 %4174, %v3989
    %v4176 = vpop.permute.xlu0 %4175
    %4179 = vset.pattern.permute.xlu0 0
    %4180 = vperm.xlu0 %4179, %v3991
    %v4181 = vpop.permute.xlu0 %4180
    %v4183 = vmul.f32 %v281, %v4176
    %v4184 = vmul.f32 %v281, %v4181
    %v4185 = vmul.f32 %v4183, %v4176
    %v4186 = vmul.f32 %v4184, %v4181
    %v4187 = vmul.f32 %v4185, 1.442695
    %v4188 = vpow.pop %v4187
    %v4189 = vmul.f32 %v4186, 1.442695
    %v4190 = vpow.pop %v4189
    %4192 = vset.pattern.permute.xlu0 0
    %4193 = vperm.xlu0 %4192, %v4171
    %v4194 = vpop.permute.xlu0 %4193
    %4197 = vset.pattern.permute.xlu0 0
    %4198 = vperm.xlu0 %4197, %v4172
    %v4199 = vpop.permute.xlu0 %4198
    %v4201 = vmul.f32 %v4194, %v4188
    %v4202 = vmul.f32 %v4199, %v4190
    %v4204 = vsel %vm3994, %v4168, 0
    %4206 = vmatprep.subr.mxu0 0.0
    %4207 = vmatpush1.msra.mxu0 %v3872
    %4208 = vmatprep.subr.mxu0 0.0
    %4209 = vmatpush1.msra.mxu0 0.0
    %4210 = vmatprep.subr.mxu0 0.0
    %4211 = vmatpush1.msra.mxu0 0.0
    %4212 = vmatprep.subr.mxu0 0.0
    %4213 = vmatpush1.msra.mxu0 0.0
    %4214 = vmatprep.subr.mxu0 0.0
    %4215 = vmatpush1.msra.mxu0 0.0
    %4216 = vmatprep.subr.mxu0 0.0
    %4217 = vmatpush1.msra.mxu0 0.0
    %4218 = vmatprep.subr.mxu0 0.0
    %4219 = vmatpush1.msra.mxu0 0.0
    %4220 = vmatprep.subr.mxu0 0.0
    %4221 = vmatpush1.msra.mxu0 0.0
    %4222 = vmatprep.subr.mxu0 0.0
    %4223 = vmatpush1.msra.mxu0 0.0
    %4224 = vmatprep.subr.mxu0 0.0
    %4225 = vmatpush1.msra.mxu0 0.0
    %4226 = vmatprep.subr.mxu0 0.0
    %4227 = vmatpush1.msra.mxu0 0.0
    %4228 = vmatprep.subr.mxu0 0.0
    %4229 = vmatpush1.msra.mxu0 0.0
    %4230 = vmatprep.subr.mxu0 0.0
    %4231 = vmatpush1.msra.mxu0 0.0
    %4232 = vmatprep.subr.mxu0 0.0
    %4233 = vmatpush1.msra.mxu0 0.0
    %4234 = vmatprep.subr.mxu0 0.0
    %4235 = vmatpush1.msra.mxu0 0.0
    %4236 = vmatprep.subr.mxu0 0.0
    %4237 = vmatpush1.msra.mxu0 0.0
    %4238 = vmatprep.subr.mxu0 0.0
    %4239 = vmatpush1.msra.mxu0 0.0
    %4240 = vmatprep.subr.mxu0 0.0
    %4241 = vmatpush1.msra.mxu0 0.0
    %4242 = vmatprep.subr.mxu0 0.0
    %4243 = vmatpush1.msra.mxu0 0.0
    %4244 = vmatprep.subr.mxu0 0.0
    %4245 = vmatpush1.msra.mxu0 0.0
    %4246 = vmatprep.subr.mxu0 0.0
    %4247 = vmatpush1.msra.mxu0 0.0
    %4248 = vmatprep.subr.mxu0 0.0
    %4249 = vmatpush1.msra.mxu0 0.0
    %4250 = vmatprep.subr.mxu0 0.0
    %4251 = vmatpush1.msra.mxu0 0.0
    %4252 = vmatprep.subr.mxu0 0.0
    %4253 = vmatpush1.msra.mxu0 0.0
    %4254 = vmatprep.subr.mxu0 0.0
    %4255 = vmatpush1.msra.mxu0 0.0
    %4256 = vmatprep.subr.mxu0 0.0
    %4257 = vmatpush1.msra.mxu0 0.0
    %4258 = vmatprep.subr.mxu0 0.0
    %4259 = vmatpush1.msra.mxu0 0.0
    %4260 = vmatprep.subr.mxu0 0.0
    %4261 = vmatpush1.msra.mxu0 0.0
    %4262 = vmatprep.subr.mxu0 0.0
    %4263 = vmatpush1.msra.mxu0 0.0
    %4264 = vmatprep.subr.mxu0 0.0
    %4265 = vmatpush1.msra.mxu0 0.0
    %4266 = vmatprep.subr.mxu0 0.0
    %4267 = vmatpush1.msra.mxu0 0.0
    %4268 = vmatprep.subr.mxu0 0.0
    %4269 = vmatpush1.msra.mxu0 0.0
    %4270 = vmatprep.mubr.f32.mxu0 0.0
    %4271 = vmatmul.mubr.f32.gmra.mrb[0].mxu0 %v4204
    %v4272 = vpop.f32.mrb[0].mxu0
    %v4273 = vadd.f32 0.0, %v4272
    %v4274 = vpop.f32.mrb[0].mxu0
    %4275 = vdwg.mxu0
    %v4277 = vsel %vm3994, %v4170, 0
    %4279 = vmatprep.subr.mxu0 0.0
    %4280 = vmatpush1.msra.mxu0 %v3877
    %4281 = vmatprep.subr.mxu0 0.0
    %4282 = vmatpush1.msra.mxu0 0.0
    %4283 = vmatprep.subr.mxu0 0.0
    %4284 = vmatpush1.msra.mxu0 0.0
    %4285 = vmatprep.subr.mxu0 0.0
    %4286 = vmatpush1.msra.mxu0 0.0
    %4287 = vmatprep.subr.mxu0 0.0
    %4288 = vmatpush1.msra.mxu0 0.0
    %4289 = vmatprep.subr.mxu0 0.0
    %4290 = vmatpush1.msra.mxu0 0.0
    %4291 = vmatprep.subr.mxu0 0.0
    %4292 = vmatpush1.msra.mxu0 0.0
    %4293 = vmatprep.subr.mxu0 0.0
    %4294 = vmatpush1.msra.mxu0 0.0
    %4295 = vmatprep.subr.mxu0 0.0
    %4296 = vmatpush1.msra.mxu0 0.0
    %4297 = vmatprep.subr.mxu0 0.0
    %4298 = vmatpush1.msra.mxu0 0.0
    %4299 = vmatprep.subr.mxu0 0.0
    %4300 = vmatpush1.msra.mxu0 0.0
    %4301 = vmatprep.subr.mxu0 0.0
    %4302 = vmatpush1.msra.mxu0 0.0
    %4303 = vmatprep.subr.mxu0 0.0
    %4304 = vmatpush1.msra.mxu0 0.0
    %4305 = vmatprep.subr.mxu0 0.0
    %4306 = vmatpush1.msra.mxu0 0.0
    %4307 = vmatprep.subr.mxu0 0.0
    %4308 = vmatpush1.msra.mxu0 0.0
    %4309 = vmatprep.subr.mxu0 0.0
    %4310 = vmatpush1.msra.mxu0 0.0
    %4311 = vmatprep.subr.mxu0 0.0
    %4312 = vmatpush1.msra.mxu0 0.0
    %4313 = vmatprep.subr.mxu0 0.0
    %4314 = vmatpush1.msra.mxu0 0.0
    %4315 = vmatprep.subr.mxu0 0.0
    %4316 = vmatpush1.msra.mxu0 0.0
    %4317 = vmatprep.subr.mxu0 0.0
    %4318 = vmatpush1.msra.mxu0 0.0
    %4319 = vmatprep.subr.mxu0 0.0
    %4320 = vmatpush1.msra.mxu0 0.0
    %4321 = vmatprep.subr.mxu0 0.0
    %4322 = vmatpush1.msra.mxu0 0.0
    %4323 = vmatprep.subr.mxu0 0.0
    %4324 = vmatpush1.msra.mxu0 0.0
    %4325 = vmatprep.subr.mxu0 0.0
    %4326 = vmatpush1.msra.mxu0 0.0
    %4327 = vmatprep.subr.mxu0 0.0
    %4328 = vmatpush1.msra.mxu0 0.0
    %4329 = vmatprep.subr.mxu0 0.0
    %4330 = vmatpush1.msra.mxu0 0.0
    %4331 = vmatprep.subr.mxu0 0.0
    %4332 = vmatpush1.msra.mxu0 0.0
    %4333 = vmatprep.subr.mxu0 0.0
    %4334 = vmatpush1.msra.mxu0 0.0
    %4335 = vmatprep.subr.mxu0 0.0
    %4336 = vmatpush1.msra.mxu0 0.0
    %4337 = vmatprep.subr.mxu0 0.0
    %4338 = vmatpush1.msra.mxu0 0.0
    %4339 = vmatprep.subr.mxu0 0.0
    %4340 = vmatpush1.msra.mxu0 0.0
    %4341 = vmatprep.subr.mxu0 0.0
    %4342 = vmatpush1.msra.mxu0 0.0
    %4343 = vmatprep.mubr.f32.mxu0 0.0
    %4344 = vmatmul.mubr.f32.gmra.mrb[0].mxu0 %v4277
    %v4345 = vpop.f32.mrb[0].mxu0
    %v4346 = vadd.f32 0.0, %v4345
    %v4347 = vpop.f32.mrb[0].mxu0
    %4348 = vdwg.mxu0
    %4349 = vst.msk [vmem:[#allocation2] sm:$0xff] %vm3994, %v4273
    %4350 = vst.msk [vmem:[#allocation2 + $0x8] sm:$0xff] %vm3994, %v4346
    %4351 = vst.msk [vmem:[%s59] sm:$0xff] %vm3994, %v4168
    %4352 = vst.msk [vmem:[%s61] sm:$0xff] %vm3994, %v4201
    %s4353 = scalar_lea.vmem %s59, 32
    %4354 = vst.msk [vmem:[%s4353] sm:$0xff] %vm3994, %v4170
    %s4355 = scalar_lea.vmem %s61, 32
    %4356 = vst.msk [vmem:[%s4355] sm:$0xff] %vm3994, %v4202
    %4357 = vrot.lane.b32.xlu0 %v3694, 120
    %v4358 = vpop.permute.xlu0 %4357
    %4359 = vrot.lane.b32.xlu0 %v3786, 120
    %v4360 = vpop.permute.xlu0 %4359
    %v4361 = vsel %vm3994, %v4358, 0
    %v4363 = vsel %vm3994, %v4360, 0
    %4365 = vmatprep.subr.mxu0 0.0
    %4366 = vmatpush1.xpose.msra.mxu0 %v4363
    %4367 = vmatprep.subr.mxu0 0.0
    %4368 = vmatpush1.xpose.msra.mxu0 0.0
    %4369 = vmatprep.subr.mxu0 0.0
    %4370 = vmatpush1.xpose.msra.mxu0 0.0
    %4371 = vmatprep.subr.mxu0 0.0
    %4372 = vmatpush1.xpose.msra.mxu0 0.0
    %4373 = vmatprep.subr.mxu0 0.0
    %4374 = vmatpush1.xpose.msra.mxu0 0.0
    %4375 = vmatprep.subr.mxu0 0.0
    %4376 = vmatpush1.xpose.msra.mxu0 0.0
    %4377 = vmatprep.subr.mxu0 0.0
    %4378 = vmatpush1.xpose.msra.mxu0 0.0
    %4379 = vmatprep.subr.mxu0 0.0
    %4380 = vmatpush1.xpose.msra.mxu0 0.0
    %4381 = vmatprep.subr.mxu0 0.0
    %4382 = vmatpush1.xpose.msra.mxu0 0.0
    %4383 = vmatprep.subr.mxu0 0.0
    %4384 = vmatpush1.xpose.msra.mxu0 0.0
    %4385 = vmatprep.subr.mxu0 0.0
    %4386 = vmatpush1.xpose.msra.mxu0 0.0
    %4387 = vmatprep.subr.mxu0 0.0
    %4388 = vmatpush1.xpose.msra.mxu0 0.0
    %4389 = vmatprep.subr.mxu0 0.0
    %4390 = vmatpush1.xpose.msra.mxu0 0.0
    %4391 = vmatprep.subr.mxu0 0.0
    %4392 = vmatpush1.xpose.msra.mxu0 0.0
    %4393 = vmatprep.subr.mxu0 0.0
    %4394 = vmatpush1.xpose.msra.mxu0 0.0
    %4395 = vmatprep.subr.mxu0 0.0
    %4396 = vmatpush1.xpose.msra.mxu0 0.0
    %4397 = vmatprep.subr.mxu0 0.0
    %4398 = vmatpush1.xpose.msra.mxu0 0.0
    %4399 = vmatprep.subr.mxu0 0.0
    %4400 = vmatpush1.xpose.msra.mxu0 0.0
    %4401 = vmatprep.subr.mxu0 0.0
    %4402 = vmatpush1.xpose.msra.mxu0 0.0
    %4403 = vmatprep.subr.mxu0 0.0
    %4404 = vmatpush1.xpose.msra.mxu0 0.0
    %4405 = vmatprep.subr.mxu0 0.0
    %4406 = vmatpush1.xpose.msra.mxu0 0.0
    %4407 = vmatprep.subr.mxu0 0.0
    %4408 = vmatpush1.xpose.msra.mxu0 0.0
    %4409 = vmatprep.subr.mxu0 0.0
    %4410 = vmatpush1.xpose.msra.mxu0 0.0
    %4411 = vmatprep.subr.mxu0 0.0
    %4412 = vmatpush1.xpose.msra.mxu0 0.0
    %4413 = vmatprep.subr.mxu0 0.0
    %4414 = vmatpush1.xpose.msra.mxu0 0.0
    %4415 = vmatprep.subr.mxu0 0.0
    %4416 = vmatpush1.xpose.msra.mxu0 0.0
    %4417 = vmatprep.subr.mxu0 0.0
    %4418 = vmatpush1.xpose.msra.mxu0 0.0
    %4419 = vmatprep.subr.mxu0 0.0
    %4420 = vmatpush1.xpose.msra.mxu0 0.0
    %4421 = vmatprep.subr.mxu0 0.0
    %4422 = vmatpush1.xpose.msra.mxu0 0.0
    %4423 = vmatprep.subr.mxu0 0.0
    %4424 = vmatpush1.xpose.msra.mxu0 0.0
    %4425 = vmatprep.subr.mxu0 0.0
    %4426 = vmatpush1.xpose.msra.mxu0 0.0
    %4427 = vmatprep.subr.mxu0 0.0
    %4428 = vmatpush1.xpose.msra.mxu0 0.0
    %4429 = vmatprep.mubr.f32.mxu0 0.0
    %4430 = vmatmul.mubr.f32.gmra.mrb[0].mxu0 %v4361
    %v4431 = vpop.f32.mrb[0].mxu0
    %v4432 = vadd.f32 0.0, %v4431
    %v4433 = vpop.f32.mrb[0].mxu0
    %4434 = vdwg.mxu0
    %4435 = vrot.lane.b32.xlu0 %v3699, 120
    %v4436 = vpop.permute.xlu0 %4435
    %4437 = vrot.lane.b32.xlu0 %v3791, 120
    %v4438 = vpop.permute.xlu0 %4437
    %v4439 = vsel %vm3994, %v4436, 0
    %v4441 = vsel %vm3994, %v4438, 0
    %4443 = vmatprep.subr.mxu0 0.0
    %4444 = vmatpush1.xpose.msra.mxu0 %v4441
    %4445 = vmatprep.subr.mxu0 0.0
    %4446 = vmatpush1.xpose.msra.mxu0 0.0
    %4447 = vmatprep.subr.mxu0 0.0
    %4448 = vmatpush1.xpose.msra.mxu0 0.0
    %4449 = vmatprep.subr.mxu0 0.0
    %4450 = vmatpush1.xpose.msra.mxu0 0.0
    %4451 = vmatprep.subr.mxu0 0.0
    %4452 = vmatpush1.xpose.msra.mxu0 0.0
    %4453 = vmatprep.subr.mxu0 0.0
    %4454 = vmatpush1.xpose.msra.mxu0 0.0
    %4455 = vmatprep.subr.mxu0 0.0
    %4456 = vmatpush1.xpose.msra.mxu0 0.0
    %4457 = vmatprep.subr.mxu0 0.0
    %4458 = vmatpush1.xpose.msra.mxu0 0.0
    %4459 = vmatprep.subr.mxu0 0.0
    %4460 = vmatpush1.xpose.msra.mxu0 0.0
    %4461 = vmatprep.subr.mxu0 0.0
    %4462 = vmatpush1.xpose.msra.mxu0 0.0
    %4463 = vmatprep.subr.mxu0 0.0
    %4464 = vmatpush1.xpose.msra.mxu0 0.0
    %4465 = vmatprep.subr.mxu0 0.0
    %4466 = vmatpush1.xpose.msra.mxu0 0.0
    %4467 = vmatprep.subr.mxu0 0.0
    %4468 = vmatpush1.xpose.msra.mxu0 0.0
    %4469 = vmatprep.subr.mxu0 0.0
    %4470 = vmatpush1.xpose.msra.mxu0 0.0
    %4471 = vmatprep.subr.mxu0 0.0
    %4472 = vmatpush1.xpose.msra.mxu0 0.0
    %4473 = vmatprep.subr.mxu0 0.0
    %4474 = vmatpush1.xpose.msra.mxu0 0.0
    %4475 = vmatprep.subr.mxu0 0.0
    %4476 = vmatpush1.xpose.msra.mxu0 0.0
    %4477 = vmatprep.subr.mxu0 0.0
    %4478 = vmatpush1.xpose.msra.mxu0 0.0
    %4479 = vmatprep.subr.mxu0 0.0
    %4480 = vmatpush1.xpose.msra.mxu0 0.0
    %4481 = vmatprep.subr.mxu0 0.0
    %4482 = vmatpush1.xpose.msra.mxu0 0.0
    %4483 = vmatprep.subr.mxu0 0.0
    %4484 = vmatpush1.xpose.msra.mxu0 0.0
    %4485 = vmatprep.subr.mxu0 0.0
    %4486 = vmatpush1.xpose.msra.mxu0 0.0
    %4487 = vmatprep.subr.mxu0 0.0
    %4488 = vmatpush1.xpose.msra.mxu0 0.0
    %4489 = vmatprep.subr.mxu0 0.0
    %4490 = vmatpush1.xpose.msra.mxu0 0.0
    %4491 = vmatprep.subr.mxu0 0.0
    %4492 = vmatpush1.xpose.msra.mxu0 0.0
    %4493 = vmatprep.subr.mxu0 0.0
    %4494 = vmatpush1.xpose.msra.mxu0 0.0
    %4495 = vmatprep.subr.mxu0 0.0
    %4496 = vmatpush1.xpose.msra.mxu0 0.0
    %4497 = vmatprep.subr.mxu0 0.0
    %4498 = vmatpush1.xpose.msra.mxu0 0.0
    %4499 = vmatprep.subr.mxu0 0.0
    %4500 = vmatpush1.xpose.msra.mxu0 0.0
    %4501 = vmatprep.subr.mxu0 0.0
    %4502 = vmatpush1.xpose.msra.mxu0 0.0
    %4503 = vmatprep.subr.mxu0 0.0
    %4504 = vmatpush1.xpose.msra.mxu0 0.0
    %4505 = vmatprep.subr.mxu0 0.0
    %4506 = vmatpush1.xpose.msra.mxu0 0.0
    %4507 = vmatprep.mubr.f32.mxu0 0.0
    %4508 = vmatmul.mubr.f32.gmra.mrb[0].mxu0 %v4439
    %v4509 = vpop.f32.mrb[0].mxu0
    %v4510 = vadd.f32 0.0, %v4509
    %v4511 = vpop.f32.mrb[0].mxu0
    %4512 = vdwg.mxu0
    %v4513 = vmul.f32 %v4432, 0.35355338
    %v4514 = vmul.f32 %v4510, 0.35355338
    %v4515 = vsel %vm3994, %v4513, -inf
    %4516 = vmax.xlane.f32.xlu0 %v4515
    %v4517 = vpop.xlane.xlu0 %4516
    %v4518 = vsel %vm3994, %v4514, -inf
    %4519 = vmax.xlane.f32.xlu0 %v4518
    %v4520 = vpop.xlane.xlu0 %4519
    %v4521 = vsub.f32 %v4513, %v4517
    %v4522 = vsub.f32 %v4514, %v4520
    %v4523 = vmul.f32 %v4521, 1.442695
    %v4524 = vpow.pop %v4523
    %v4525 = vmul.f32 %v4522, 1.442695
    %v4526 = vpow.pop %v4525
    %v4527 = vsel %vm3994, %v4524, 0.0
    %4528 = vadd.xlane.f32.xlu0 %v4527
    %v4529 = vpop.xlane.xlu0 %4528
    %v4530 = vsel %vm3994, %v4526, 0.0
    %4531 = vadd.xlane.f32.xlu0 %v4530
    %v4532 = vpop.xlane.xlu0 %4531
    %v4533 = vrcp.pop %v4529
    %v4534 = vmul.f32 %v4524, %v4533
    %v4535 = vrcp.pop %v4532
    %v4536 = vmul.f32 %v4526, %v4535
    %4537 = vset.pattern.permute.xlu0 1
    %4538 = vperm.xlu0 %4537, %v3989
    %v4539 = vpop.permute.xlu0 %4538
    %4541 = vset.pattern.permute.xlu0 1
    %4542 = vperm.xlu0 %4541, %v3991
    %v4543 = vpop.permute.xlu0 %4542
    %v4545 = vmul.f32 %v281, %v4539
    %v4546 = vmul.f32 %v281, %v4543
    %v4547 = vmul.f32 %v4545, %v4539
    %v4548 = vmul.f32 %v4546, %v4543
    %v4549 = vmul.f32 %v4547, 1.442695
    %v4550 = vpow.pop %v4549
    %v4551 = vmul.f32 %v4548, 1.442695
    %v4552 = vpow.pop %v4551
    %4553 = vset.pattern.permute.xlu0 1
    %4554 = vperm.xlu0 %4553, %v4171
    %v4555 = vpop.permute.xlu0 %4554
    %4557 = vset.pattern.permute.xlu0 1
    %4558 = vperm.xlu0 %4557, %v4172
    %v4559 = vpop.permute.xlu0 %4558
    %v4561 = vmul.f32 %v4555, %v4550
    %v4562 = vmul.f32 %v4559, %v4552
    %4564 = vrot.lane.b32.xlu0 %v3872, 120
    %v4565 = vpop.permute.xlu0 %4564
    %v4568 = vsel %vm3994, %v4534, 0
    %4570 = vmatprep.subr.mxu0 0.0
    %4571 = vmatpush1.msra.mxu0 %v4565
    %4572 = vmatprep.subr.mxu0 0.0
    %4573 = vmatpush1.msra.mxu0 0.0
    %4574 = vmatprep.subr.mxu0 0.0
    %4575 = vmatpush1.msra.mxu0 0.0
    %4576 = vmatprep.subr.mxu0 0.0
    %4577 = vmatpush1.msra.mxu0 0.0
    %4578 = vmatprep.subr.mxu0 0.0
    %4579 = vmatpush1.msra.mxu0 0.0
    %4580 = vmatprep.subr.mxu0 0.0
    %4581 = vmatpush1.msra.mxu0 0.0
    %4582 = vmatprep.subr.mxu0 0.0
    %4583 = vmatpush1.msra.mxu0 0.0
    %4584 = vmatprep.subr.mxu0 0.0
    %4585 = vmatpush1.msra.mxu0 0.0
    %4586 = vmatprep.subr.mxu0 0.0
    %4587 = vmatpush1.msra.mxu0 0.0
    %4588 = vmatprep.subr.mxu0 0.0
    %4589 = vmatpush1.msra.mxu0 0.0
    %4590 = vmatprep.subr.mxu0 0.0
    %4591 = vmatpush1.msra.mxu0 0.0
    %4592 = vmatprep.subr.mxu0 0.0
    %4593 = vmatpush1.msra.mxu0 0.0
    %4594 = vmatprep.subr.mxu0 0.0
    %4595 = vmatpush1.msra.mxu0 0.0
    %4596 = vmatprep.subr.mxu0 0.0
    %4597 = vmatpush1.msra.mxu0 0.0
    %4598 = vmatprep.subr.mxu0 0.0
    %4599 = vmatpush1.msra.mxu0 0.0
    %4600 = vmatprep.subr.mxu0 0.0
    %4601 = vmatpush1.msra.mxu0 0.0
    %4602 = vmatprep.subr.mxu0 0.0
    %4603 = vmatpush1.msra.mxu0 0.0
    %4604 = vmatprep.subr.mxu0 0.0
    %4605 = vmatpush1.msra.mxu0 0.0
    %4606 = vmatprep.subr.mxu0 0.0
    %4607 = vmatpush1.msra.mxu0 0.0
    %4608 = vmatprep.subr.mxu0 0.0
    %4609 = vmatpush1.msra.mxu0 0.0
    %4610 = vmatprep.subr.mxu0 0.0
    %4611 = vmatpush1.msra.mxu0 0.0
    %4612 = vmatprep.subr.mxu0 0.0
    %4613 = vmatpush1.msra.mxu0 0.0
    %4614 = vmatprep.subr.mxu0 0.0
    %4615 = vmatpush1.msra.mxu0 0.0
    %4616 = vmatprep.subr.mxu0 0.0
    %4617 = vmatpush1.msra.mxu0 0.0
    %4618 = vmatprep.subr.mxu0 0.0
    %4619 = vmatpush1.msra.mxu0 0.0
    %4620 = vmatprep.subr.mxu0 0.0
    %4621 = vmatpush1.msra.mxu0 0.0
    %4622 = vmatprep.subr.mxu0 0.0
    %4623 = vmatpush1.msra.mxu0 0.0
    %4624 = vmatprep.subr.mxu0 0.0
    %4625 = vmatpush1.msra.mxu0 0.0
    %4626 = vmatprep.subr.mxu0 0.0
    %4627 = vmatpush1.msra.mxu0 0.0
    %4628 = vmatprep.subr.mxu0 0.0
    %4629 = vmatpush1.msra.mxu0 0.0
    %4630 = vmatprep.subr.mxu0 0.0
    %4631 = vmatpush1.msra.mxu0 0.0
    %4632 = vmatprep.subr.mxu0 0.0
    %4633 = vmatpush1.msra.mxu0 0.0
    %4634 = vmatprep.mubr.f32.mxu0 0.0
    %4635 = vmatmul.mubr.f32.gmra.mrb[0].mxu0 %v4568
    %v4636 = vpop.f32.mrb[0].mxu0
    %v4637 = vadd.f32 0.0, %v4636
    %v4638 = vpop.f32.mrb[0].mxu0
    %4639 = vdwg.mxu0
    %4641 = vrot.lane.b32.xlu0 %v3877, 120
    %v4642 = vpop.permute.xlu0 %4641
    %v4645 = vsel %vm3994, %v4536, 0
    %4647 = vmatprep.subr.mxu0 0.0
    %4648 = vmatpush1.msra.mxu0 %v4642
    %4649 = vmatprep.subr.mxu0 0.0
    %4650 = vmatpush1.msra.mxu0 0.0
    %4651 = vmatprep.subr.mxu0 0.0
    %4652 = vmatpush1.msra.mxu0 0.0
    %4653 = vmatprep.subr.mxu0 0.0
    %4654 = vmatpush1.msra.mxu0 0.0
    %4655 = vmatprep.subr.mxu0 0.0
    %4656 = vmatpush1.msra.mxu0 0.0
    %4657 = vmatprep.subr.mxu0 0.0
    %4658 = vmatpush1.msra.mxu0 0.0
    %4659 = vmatprep.subr.mxu0 0.0
    %4660 = vmatpush1.msra.mxu0 0.0
    %4661 = vmatprep.subr.mxu0 0.0
    %4662 = vmatpush1.msra.mxu0 0.0
    %4663 = vmatprep.subr.mxu0 0.0
    %4664 = vmatpush1.msra.mxu0 0.0
    %4665 = vmatprep.subr.mxu0 0.0
    %4666 = vmatpush1.msra.mxu0 0.0
    %4667 = vmatprep.subr.mxu0 0.0
    %4668 = vmatpush1.msra.mxu0 0.0
    %4669 = vmatprep.subr.mxu0 0.0
    %4670 = vmatpush1.msra.mxu0 0.0
    %4671 = vmatprep.subr.mxu0 0.0
    %4672 = vmatpush1.msra.mxu0 0.0
    %4673 = vmatprep.subr.mxu0 0.0
    %4674 = vmatpush1.msra.mxu0 0.0
    %4675 = vmatprep.subr.mxu0 0.0
    %4676 = vmatpush1.msra.mxu0 0.0
    %4677 = vmatprep.subr.mxu0 0.0
    %4678 = vmatpush1.msra.mxu0 0.0
    %4679 = vmatprep.subr.mxu0 0.0
    %4680 = vmatpush1.msra.mxu0 0.0
    %4681 = vmatprep.subr.mxu0 0.0
    %4682 = vmatpush1.msra.mxu0 0.0
    %4683 = vmatprep.subr.mxu0 0.0
    %4684 = vmatpush1.msra.mxu0 0.0
    %4685 = vmatprep.subr.mxu0 0.0
    %4686 = vmatpush1.msra.mxu0 0.0
    %4687 = vmatprep.subr.mxu0 0.0
    %4688 = vmatpush1.msra.mxu0 0.0
    %4689 = vmatprep.subr.mxu0 0.0
    %4690 = vmatpush1.msra.mxu0 0.0
    %4691 = vmatprep.subr.mxu0 0.0
    %4692 = vmatpush1.msra.mxu0 0.0
    %4693 = vmatprep.subr.mxu0 0.0
    %4694 = vmatpush1.msra.mxu0 0.0
    %4695 = vmatprep.subr.mxu0 0.0
    %4696 = vmatpush1.msra.mxu0 0.0
    %4697 = vmatprep.subr.mxu0 0.0
    %4698 = vmatpush1.msra.mxu0 0.0
    %4699 = vmatprep.subr.mxu0 0.0
    %4700 = vmatpush1.msra.mxu0 0.0
    %4701 = vmatprep.subr.mxu0 0.0
    %4702 = vmatpush1.msra.mxu0 0.0
    %4703 = vmatprep.subr.mxu0 0.0
    %4704 = vmatpush1.msra.mxu0 0.0
    %4705 = vmatprep.subr.mxu0 0.0
    %4706 = vmatpush1.msra.mxu0 0.0
    %4707 = vmatprep.subr.mxu0 0.0
    %4708 = vmatpush1.msra.mxu0 0.0
    %4709 = vmatprep.subr.mxu0 0.0
    %4710 = vmatpush1.msra.mxu0 0.0
    %4711 = vmatprep.mubr.f32.mxu0 0.0
    %4712 = vmatmul.mubr.f32.gmra.mrb[0].mxu0 %v4645
    %v4713 = vpop.f32.mrb[0].mxu0
    %v4714 = vadd.f32 0.0, %v4713
    %v4715 = vpop.f32.mrb[0].mxu0
    %4716 = vdwg.mxu0
    %4719 = vrot.lane.b32.xlu0 %v4637, 8
    %v4720 = vpop.permute.xlu0 %4719
    %4721 = vrot.lane.b32.xlu0 %v4714, 8
    %v4722 = vpop.permute.xlu0 %4721
    %vm4725 = vcmask 130112
    %4726 = vst.msk [vmem:[#allocation2] sm:$0xff] %vm4725, %v4720
    %4727 = vst.msk [vmem:[#allocation2 + $0x8] sm:$0xff] %vm4725, %v4722
    %s4728 = scalar_lea.vmem %s59, 8
    %4729 = vst.msk [vmem:[%s4728] sm:$0xff] %vm3994, %v4534
    %s4730 = scalar_lea.vmem %s61, 8
    %4731 = vst.msk [vmem:[%s4730] sm:$0xff] %vm3994, %v4561
    %s4732 = scalar_lea.vmem %s59, 40
    %4733 = vst.msk [vmem:[%s4732] sm:$0xff] %vm3994, %v4536
    %s4734 = scalar_lea.vmem %s61, 40
    %4735 = vst.msk [vmem:[%s4734] sm:$0xff] %vm3994, %v4562
    %4736 = vrot.lane.b32.xlu0 %v3694, 112
    %v4737 = vpop.permute.xlu0 %4736
    %4738 = vrot.lane.b32.xlu0 %v3786, 112
    %v4739 = vpop.permute.xlu0 %4738
    %v4740 = vsel %vm3994, %v4737, 0
    %v4742 = vsel %vm3994, %v4739, 0
    %4744 = vmatprep.subr.mxu0 0.0
    %4745 = vmatpush1.xpose.msra.mxu0 %v4742
    %4746 = vmatprep.subr.mxu0 0.0
    %4747 = vmatpush1.xpose.msra.mxu0 0.0
    %4748 = vmatprep.subr.mxu0 0.0
    %4749 = vmatpush1.xpose.msra.mxu0 0.0
    %4750 = vmatprep.subr.mxu0 0.0
    %4751 = vmatpush1.xpose.msra.mxu0 0.0
    %4752 = vmatprep.subr.mxu0 0.0
    %4753 = vmatpush1.xpose.msra.mxu0 0.0
    %4754 = vmatprep.subr.mxu0 0.0
    %4755 = vmatpush1.xpose.msra.mxu0 0.0
    %4756 = vmatprep.subr.mxu0 0.0
    %4757 = vmatpush1.xpose.msra.mxu0 0.0
    %4758 = vmatprep.subr.mxu0 0.0
    %4759 = vmatpush1.xpose.msra.mxu0 0.0
    %4760 = vmatprep.subr.mxu0 0.0
    %4761 = vmatpush1.xpose.msra.mxu0 0.0
    %4762 = vmatprep.subr.mxu0 0.0
    %4763 = vmatpush1.xpose.msra.mxu0 0.0
    %4764 = vmatprep.subr.mxu0 0.0
    %4765 = vmatpush1.xpose.msra.mxu0 0.0
    %4766 = vmatprep.subr.mxu0 0.0
    %4767 = vmatpush1.xpose.msra.mxu0 0.0
    %4768 = vmatprep.subr.mxu0 0.0
    %4769 = vmatpush1.xpose.msra.mxu0 0.0
    %4770 = vmatprep.subr.mxu0 0.0
    %4771 = vmatpush1.xpose.msra.mxu0 0.0
    %4772 = vmatprep.subr.mxu0 0.0
    %4773 = vmatpush1.xpose.msra.mxu0 0.0
    %4774 = vmatprep.subr.mxu0 0.0
    %4775 = vmatpush1.xpose.msra.mxu0 0.0
    %4776 = vmatprep.subr.mxu0 0.0
    %4777 = vmatpush1.xpose.msra.mxu0 0.0
    %4778 = vmatprep.subr.mxu0 0.0
    %4779 = vmatpush1.xpose.msra.mxu0 0.0
    %4780 = vmatprep.subr.mxu0 0.0
    %4781 = vmatpush1.xpose.msra.mxu0 0.0
    %4782 = vmatprep.subr.mxu0 0.0
    %4783 = vmatpush1.xpose.msra.mxu0 0.0
    %4784 = vmatprep.subr.mxu0 0.0
    %4785 = vmatpush1.xpose.msra.mxu0 0.0
    %4786 = vmatprep.subr.mxu0 0.0
    %4787 = vmatpush1.xpose.msra.mxu0 0.0
    %4788 = vmatprep.subr.mxu0 0.0
    %4789 = vmatpush1.xpose.msra.mxu0 0.0
    %4790 = vmatprep.subr.mxu0 0.0
    %4791 = vmatpush1.xpose.msra.mxu0 0.0
    %4792 = vmatprep.subr.mxu0 0.0
    %4793 = vmatpush1.xpose.msra.mxu0 0.0
    %4794 = vmatprep.subr.mxu0 0.0
    %4795 = vmatpush1.xpose.msra.mxu0 0.0
    %4796 = vmatprep.subr.mxu0 0.0
    %4797 = vmatpush1.xpose.msra.mxu0 0.0
    %4798 = vmatprep.subr.mxu0 0.0
    %4799 = vmatpush1.xpose.msra.mxu0 0.0
    %4800 = vmatprep.subr.mxu0 0.0
    %4801 = vmatpush1.xpose.msra.mxu0 0.0
    %4802 = vmatprep.subr.mxu0 0.0
    %4803 = vmatpush1.xpose.msra.mxu0 0.0
    %4804 = vmatprep.subr.mxu0 0.0
    %4805 = vmatpush1.xpose.msra.mxu0 0.0
    %4806 = vmatprep.subr.mxu0 0.0
    %4807 = vmatpush1.xpose.msra.mxu0 0.0
    %4808 = vmatprep.mubr.f32.mxu0 0.0
    %4809 = vmatmul.mubr.f32.gmra.mrb[0].mxu0 %v4740
    %v4810 = vpop.f32.mrb[0].mxu0
    %v4811 = vadd.f32 0.0, %v4810
    %v4812 = vpop.f32.mrb[0].mxu0
    %4813 = vdwg.mxu0
    %4814 = vrot.lane.b32.xlu0 %v3699, 112
    %v4815 = vpop.permute.xlu0 %4814
    %4816 = vrot.lane.b32.xlu0 %v3791, 112
    %v4817 = vpop.permute.xlu0 %4816
    %v4818 = vsel %vm3994, %v4815, 0
    %v4820 = vsel %vm3994, %v4817, 0
    %4822 = vmatprep.subr.mxu0 0.0
    %4823 = vmatpush1.xpose.msra.mxu0 %v4820
    %4824 = vmatprep.subr.mxu0 0.0
    %4825 = vmatpush1.xpose.msra.mxu0 0.0
    %4826 = vmatprep.subr.mxu0 0.0
    %4827 = vmatpush1.xpose.msra.mxu0 0.0
    %4828 = vmatprep.subr.mxu0 0.0
    %4829 = vmatpush1.xpose.msra.mxu0 0.0
    %4830 = vmatprep.subr.mxu0 0.0
    %4831 = vmatpush1.xpose.msra.mxu0 0.0
    %4832 = vmatprep.subr.mxu0 0.0
    %4833 = vmatpush1.xpose.msra.mxu0 0.0
    %4834 = vmatprep.subr.mxu0 0.0
    %4835 = vmatpush1.xpose.msra.mxu0 0.0
    %4836 = vmatprep.subr.mxu0 0.0
    %4837 = vmatpush1.xpose.msra.mxu0 0.0
    %4838 = vmatprep.subr.mxu0 0.0
    %4839 = vmatpush1.xpose.msra.mxu0 0.0
    %4840 = vmatprep.subr.mxu0 0.0
    %4841 = vmatpush1.xpose.msra.mxu0 0.0
    %4842 = vmatprep.subr.mxu0 0.0
    %4843 = vmatpush1.xpose.msra.mxu0 0.0
    %4844 = vmatprep.subr.mxu0 0.0
    %4845 = vmatpush1.xpose.msra.mxu0 0.0
    %4846 = vmatprep.subr.mxu0 0.0
    %4847 = vmatpush1.xpose.msra.mxu0 0.0
    %4848 = vmatprep.subr.mxu0 0.0
    %4849 = vmatpush1.xpose.msra.mxu0 0.0
    %4850 = vmatprep.subr.mxu0 0.0
    %4851 = vmatpush1.xpose.msra.mxu0 0.0
    %4852 = vmatprep.subr.mxu0 0.0
    %4853 = vmatpush1.xpose.msra.mxu0 0.0
    %4854 = vmatprep.subr.mxu0 0.0
    %4855 = vmatpush1.xpose.msra.mxu0 0.0
    %4856 = vmatprep.subr.mxu0 0.0
    %4857 = vmatpush1.xpose.msra.mxu0 0.0
    %4858 = vmatprep.subr.mxu0 0.0
    %4859 = vmatpush1.xpose.msra.mxu0 0.0
    %4860 = vmatprep.subr.mxu0 0.0
    %4861 = vmatpush1.xpose.msra.mxu0 0.0
    %4862 = vmatprep.subr.mxu0 0.0
    %4863 = vmatpush1.xpose.msra.mxu0 0.0
    %4864 = vmatprep.subr.mxu0 0.0
    %4865 = vmatpush1.xpose.msra.mxu0 0.0
    %4866 = vmatprep.subr.mxu0 0.0
    %4867 = vmatpush1.xpose.msra.mxu0 0.0
    %4868 = vmatprep.subr.mxu0 0.0
    %4869 = vmatpush1.xpose.msra.mxu0 0.0
    %4870 = vmatprep.subr.mxu0 0.0
    %4871 = vmatpush1.xpose.msra.mxu0 0.0
    %4872 = vmatprep.subr.mxu0 0.0
    %4873 = vmatpush1.xpose.msra.mxu0 0.0
    %4874 = vmatprep.subr.mxu0 0.0
    %4875 = vmatpush1.xpose.msra.mxu0 0.0
    %4876 = vmatprep.subr.mxu0 0.0
    %4877 = vmatpush1.xpose.msra.mxu0 0.0
    %4878 = vmatprep.subr.mxu0 0.0
    %4879 = vmatpush1.xpose.msra.mxu0 0.0
    %4880 = vmatprep.subr.mxu0 0.0
    %4881 = vmatpush1.xpose.msra.mxu0 0.0
    %4882 = vmatprep.subr.mxu0 0.0
    %4883 = vmatpush1.xpose.msra.mxu0 0.0
    %4884 = vmatprep.subr.mxu0 0.0
    %4885 = vmatpush1.xpose.msra.mxu0 0.0
    %4886 = vmatprep.mubr.f32.mxu0 0.0
    %4887 = vmatmul.mubr.f32.gmra.mrb[0].mxu0 %v4818
    %v4888 = vpop.f32.mrb[0].mxu0
    %v4889 = vadd.f32 0.0, %v4888
    %v4890 = vpop.f32.mrb[0].mxu0
    %4891 = vdwg.mxu0
    %v4892 = vmul.f32 %v4811, 0.35355338
    %v4893 = vmul.f32 %v4889, 0.35355338
    %v4894 = vsel %vm3994, %v4892, -inf
    %4895 = vmax.xlane.f32.xlu0 %v4894
    %v4896 = vpop.xlane.xlu0 %4895
    %v4897 = vsel %vm3994, %v4893, -inf
    %4898 = vmax.xlane.f32.xlu0 %v4897
    %v4899 = vpop.xlane.xlu0 %4898
    %v4900 = vsub.f32 %v4892, %v4896
    %v4901 = vsub.f32 %v4893, %v4899
    %v4902 = vmul.f32 %v4900, 1.442695
    %v4903 = vpow.pop %v4902
    %v4904 = vmul.f32 %v4901, 1.442695
    %v4905 = vpow.pop %v4904
    %v4906 = vsel %vm3994, %v4903, 0.0
    %4907 = vadd.xlane.f32.xlu0 %v4906
    %v4908 = vpop.xlane.xlu0 %4907
    %v4909 = vsel %vm3994, %v4905, 0.0
    %4910 = vadd.xlane.f32.xlu0 %v4909
    %v4911 = vpop.xlane.xlu0 %4910
    %v4912 = vrcp.pop %v4908
    %v4913 = vmul.f32 %v4903, %v4912
    %v4914 = vrcp.pop %v4911
    %v4915 = vmul.f32 %v4905, %v4914
    %4916 = vset.pattern.permute.xlu0 2
    %4917 = vperm.xlu0 %4916, %v3989
    %v4918 = vpop.permute.xlu0 %4917
    %4920 = vset.pattern.permute.xlu0 2
    %4921 = vperm.xlu0 %4920, %v3991
    %v4922 = vpop.permute.xlu0 %4921
    %v4924 = vmul.f32 %v281, %v4918
    %v4925 = vmul.f32 %v281, %v4922
    %v4926 = vmul.f32 %v4924, %v4918
    %v4927 = vmul.f32 %v4925, %v4922
    %v4928 = vmul.f32 %v4926, 1.442695
    %v4929 = vpow.pop %v4928
    %v4930 = vmul.f32 %v4927, 1.442695
    %v4931 = vpow.pop %v4930
    %4932 = vset.pattern.permute.xlu0 2
    %4933 = vperm.xlu0 %4932, %v4171
    %v4934 = vpop.permute.xlu0 %4933
    %4936 = vset.pattern.permute.xlu0 2
    %4937 = vperm.xlu0 %4936, %v4172
    %v4938 = vpop.permute.xlu0 %4937
    %v4940 = vmul.f32 %v4934, %v4929
    %v4941 = vmul.f32 %v4938, %v4931
    %4942 = vrot.lane.b32.xlu0 %v3872, 112
    %v4943 = vpop.permute.xlu0 %4942
    %v4946 = vsel %vm3994, %v4913, 0
    %4948 = vmatprep.subr.mxu0 0.0
    %4949 = vmatpush1.msra.mxu0 %v4943
    %4950 = vmatprep.subr.mxu0 0.0
    %4951 = vmatpush1.msra.mxu0 0.0
    %4952 = vmatprep.subr.mxu0 0.0
    %4953 = vmatpush1.msra.mxu0 0.0
    %4954 = vmatprep.subr.mxu0 0.0
    %4955 = vmatpush1.msra.mxu0 0.0
    %4956 = vmatprep.subr.mxu0 0.0
    %4957 = vmatpush1.msra.mxu0 0.0
    %4958 = vmatprep.subr.mxu0 0.0
    %4959 = vmatpush1.msra.mxu0 0.0
    %4960 = vmatprep.subr.mxu0 0.0
    %4961 = vmatpush1.msra.mxu0 0.0
    %4962 = vmatprep.subr.mxu0 0.0
    %4963 = vmatpush1.msra.mxu0 0.0
    %4964 = vmatprep.subr.mxu0 0.0
    %4965 = vmatpush1.msra.mxu0 0.0
    %4966 = vmatprep.subr.mxu0 0.0
    %4967 = vmatpush1.msra.mxu0 0.0
    %4968 = vmatprep.subr.mxu0 0.0
    %4969 = vmatpush1.msra.mxu0 0.0
    %4970 = vmatprep.subr.mxu0 0.0
    %4971 = vmatpush1.msra.mxu0 0.0
    %4972 = vmatprep.subr.mxu0 0.0
    %4973 = vmatpush1.msra.mxu0 0.0
    %4974 = vmatprep.subr.mxu0 0.0
    %4975 = vmatpush1.msra.mxu0 0.0
    %4976 = vmatprep.subr.mxu0 0.0
    %4977 = vmatpush1.msra.mxu0 0.0
    %4978 = vmatprep.subr.mxu0 0.0
    %4979 = vmatpush1.msra.mxu0 0.0
    %4980 = vmatprep.subr.mxu0 0.0
    %4981 = vmatpush1.msra.mxu0 0.0
    %4982 = vmatprep.subr.mxu0 0.0
    %4983 = vmatpush1.msra.mxu0 0.0
    %4984 = vmatprep.subr.mxu0 0.0
    %4985 = vmatpush1.msra.mxu0 0.0
    %4986 = vmatprep.subr.mxu0 0.0
    %4987 = vmatpush1.msra.mxu0 0.0
    %4988 = vmatprep.subr.mxu0 0.0
    %4989 = vmatpush1.msra.mxu0 0.0
    %4990 = vmatprep.subr.mxu0 0.0
    %4991 = vmatpush1.msra.mxu0 0.0
    %4992 = vmatprep.subr.mxu0 0.0
    %4993 = vmatpush1.msra.mxu0 0.0
    %4994 = vmatprep.subr.mxu0 0.0
    %4995 = vmatpush1.msra.mxu0 0.0
    %4996 = vmatprep.subr.mxu0 0.0
    %4997 = vmatpush1.msra.mxu0 0.0
    %4998 = vmatprep.subr.mxu0 0.0
    %4999 = vmatpush1.msra.mxu0 0.0
    %5000 = vmatprep.subr.mxu0 0.0
    %5001 = vmatpush1.msra.mxu0 0.0
    %5002 = vmatprep.subr.mxu0 0.0
    %5003 = vmatpush1.msra.mxu0 0.0
    %5004 = vmatprep.subr.mxu0 0.0
    %5005 = vmatpush1.msra.mxu0 0.0
    %5006 = vmatprep.subr.mxu0 0.0
    %5007 = vmatpush1.msra.mxu0 0.0
    %5008 = vmatprep.subr.mxu0 0.0
    %5009 = vmatpush1.msra.mxu0 0.0
    %5010 = vmatprep.subr.mxu0 0.0
    %5011 = vmatpush1.msra.mxu0 0.0
    %5012 = vmatprep.mubr.f32.mxu0 0.0
    %5013 = vmatmul.mubr.f32.gmra.mrb[0].mxu0 %v4946
    %v5014 = vpop.f32.mrb[0].mxu0
    %v5015 = vadd.f32 0.0, %v5014
    %v5016 = vpop.f32.mrb[0].mxu0
    %5017 = vdwg.mxu0
    %5018 = vrot.lane.b32.xlu0 %v3877, 112
    %v5019 = vpop.permute.xlu0 %5018
    %v5022 = vsel %vm3994, %v4915, 0
    %5024 = vmatprep.subr.mxu0 0.0
    %5025 = vmatpush1.msra.mxu0 %v5019
    %5026 = vmatprep.subr.mxu0 0.0
    %5027 = vmatpush1.msra.mxu0 0.0
    %5028 = vmatprep.subr.mxu0 0.0
    %5029 = vmatpush1.msra.mxu0 0.0
    %5030 = vmatprep.subr.mxu0 0.0
    %5031 = vmatpush1.msra.mxu0 0.0
    %5032 = vmatprep.subr.mxu0 0.0
    %5033 = vmatpush1.msra.mxu0 0.0
    %5034 = vmatprep.subr.mxu0 0.0
    %5035 = vmatpush1.msra.mxu0 0.0
    %5036 = vmatprep.subr.mxu0 0.0
    %5037 = vmatpush1.msra.mxu0 0.0
    %5038 = vmatprep.subr.mxu0 0.0
    %5039 = vmatpush1.msra.mxu0 0.0
    %5040 = vmatprep.subr.mxu0 0.0
    %5041 = vmatpush1.msra.mxu0 0.0
    %5042 = vmatprep.subr.mxu0 0.0
    %5043 = vmatpush1.msra.mxu0 0.0
    %5044 = vmatprep.subr.mxu0 0.0
    %5045 = vmatpush1.msra.mxu0 0.0
    %5046 = vmatprep.subr.mxu0 0.0
    %5047 = vmatpush1.msra.mxu0 0.0
    %5048 = vmatprep.subr.mxu0 0.0
    %5049 = vmatpush1.msra.mxu0 0.0
    %5050 = vmatprep.subr.mxu0 0.0
    %5051 = vmatpush1.msra.mxu0 0.0
    %5052 = vmatprep.subr.mxu0 0.0
    %5053 = vmatpush1.msra.mxu0 0.0
    %5054 = vmatprep.subr.mxu0 0.0
    %5055 = vmatpush1.msra.mxu0 0.0
    %5056 = vmatprep.subr.mxu0 0.0
    %5057 = vmatpush1.msra.mxu0 0.0
    %5058 = vmatprep.subr.mxu0 0.0
    %5059 = vmatpush1.msra.mxu0 0.0
    %5060 = vmatprep.subr.mxu0 0.0
    %5061 = vmatpush1.msra.mxu0 0.0
    %5062 = vmatprep.subr.mxu0 0.0
    %5063 = vmatpush1.msra.mxu0 0.0
    %5064 = vmatprep.subr.mxu0 0.0
    %5065 = vmatpush1.msra.mxu0 0.0
    %5066 = vmatprep.subr.mxu0 0.0
    %5067 = vmatpush1.msra.mxu0 0.0
    %5068 = vmatprep.subr.mxu0 0.0
    %5069 = vmatpush1.msra.mxu0 0.0
    %5070 = vmatprep.subr.mxu0 0.0
    %5071 = vmatpush1.msra.mxu0 0.0
    %5072 = vmatprep.subr.mxu0 0.0
    %5073 = vmatpush1.msra.mxu0 0.0
    %5074 = vmatprep.subr.mxu0 0.0
    %5075 = vmatpush1.msra.mxu0 0.0
    %5076 = vmatprep.subr.mxu0 0.0
    %5077 = vmatpush1.msra.mxu0 0.0
    %5078 = vmatprep.subr.mxu0 0.0
    %5079 = vmatpush1.msra.mxu0 0.0
    %5080 = vmatprep.subr.mxu0 0.0
    %5081 = vmatpush1.msra.mxu0 0.0
    %5082 = vmatprep.subr.mxu0 0.0
    %5083 = vmatpush1.msra.mxu0 0.0
    %5084 = vmatprep.subr.mxu0 0.0
    %5085 = vmatpush1.msra.mxu0 0.0
    %5086 = vmatprep.subr.mxu0 0.0
    %5087 = vmatpush1.msra.mxu0 0.0
    %5088 = vmatprep.mubr.f32.mxu0 0.0
    %5089 = vmatmul.mubr.f32.gmra.mrb[0].mxu0 %v5022
    %v5090 = vpop.f32.mrb[0].mxu0
    %v5091 = vadd.f32 0.0, %v5090
    %v5092 = vpop.f32.mrb[0].mxu0
    %5093 = vdwg.mxu0
    %5096 = vrot.lane.b32.xlu0 %v5015, 16
    %v5097 = vpop.permute.xlu0 %5096
    %5098 = vrot.lane.b32.xlu0 %v5091, 16
    %v5099 = vpop.permute.xlu0 %5098
    %vm5102 = vcmask 195712
    %5103 = vst.msk [vmem:[#allocation2] sm:$0xff] %vm5102, %v5097
    %5104 = vst.msk [vmem:[#allocation2 + $0x8] sm:$0xff] %vm5102, %v5099
    %s5105 = scalar_lea.vmem %s59, 16
    %5106 = vst.msk [vmem:[%s5105] sm:$0xff] %vm3994, %v4913
    %s5107 = scalar_lea.vmem %s61, 16
    %5108 = vst.msk [vmem:[%s5107] sm:$0xff] %vm3994, %v4940
    %s5109 = scalar_lea.vmem %s59, 48
    %5110 = vst.msk [vmem:[%s5109] sm:$0xff] %vm3994, %v4915
    %s5111 = scalar_lea.vmem %s61, 48
    %5112 = vst.msk [vmem:[%s5111] sm:$0xff] %vm3994, %v4941
    %5113 = vrot.lane.b32.xlu0 %v3694, 104
    %v5114 = vpop.permute.xlu0 %5113
    %5115 = vrot.lane.b32.xlu0 %v3786, 104
    %v5116 = vpop.permute.xlu0 %5115
    %v5117 = vsel %vm3994, %v5114, 0
    %v5119 = vsel %vm3994, %v5116, 0
    %5121 = vmatprep.subr.mxu0 0.0
    %5122 = vmatpush1.xpose.msra.mxu0 %v5119
    %5123 = vmatprep.subr.mxu0 0.0
    %5124 = vmatpush1.xpose.msra.mxu0 0.0
    %5125 = vmatprep.subr.mxu0 0.0
    %5126 = vmatpush1.xpose.msra.mxu0 0.0
    %5127 = vmatprep.subr.mxu0 0.0
    %5128 = vmatpush1.xpose.msra.mxu0 0.0
    %5129 = vmatprep.subr.mxu0 0.0
    %5130 = vmatpush1.xpose.msra.mxu0 0.0
    %5131 = vmatprep.subr.mxu0 0.0
    %5132 = vmatpush1.xpose.msra.mxu0 0.0
    %5133 = vmatprep.subr.mxu0 0.0
    %5134 = vmatpush1.xpose.msra.mxu0 0.0
    %5135 = vmatprep.subr.mxu0 0.0
    %5136 = vmatpush1.xpose.msra.mxu0 0.0
    %5137 = vmatprep.subr.mxu0 0.0
    %5138 = vmatpush1.xpose.msra.mxu0 0.0
    %5139 = vmatprep.subr.mxu0 0.0
    %5140 = vmatpush1.xpose.msra.mxu0 0.0
    %5141 = vmatprep.subr.mxu0 0.0
    %5142 = vmatpush1.xpose.msra.mxu0 0.0
    %5143 = vmatprep.subr.mxu0 0.0
    %5144 = vmatpush1.xpose.msra.mxu0 0.0
    %5145 = vmatprep.subr.mxu0 0.0
    %5146 = vmatpush1.xpose.msra.mxu0 0.0
    %5147 = vmatprep.subr.mxu0 0.0
    %5148 = vmatpush1.xpose.msra.mxu0 0.0
    %5149 = vmatprep.subr.mxu0 0.0
    %5150 = vmatpush1.xpose.msra.mxu0 0.0
    %5151 = vmatprep.subr.mxu0 0.0
    %5152 = vmatpush1.xpose.msra.mxu0 0.0
    %5153 = vmatprep.subr.mxu0 0.0
    %5154 = vmatpush1.xpose.msra.mxu0 0.0
    %5155 = vmatprep.subr.mxu0 0.0
    %5156 = vmatpush1.xpose.msra.mxu0 0.0
    %5157 = vmatprep.subr.mxu0 0.0
    %5158 = vmatpush1.xpose.msra.mxu0 0.0
    %5159 = vmatprep.subr.mxu0 0.0
    %5160 = vmatpush1.xpose.msra.mxu0 0.0
    %5161 = vmatprep.subr.mxu0 0.0
    %5162 = vmatpush1.xpose.msra.mxu0 0.0
    %5163 = vmatprep.subr.mxu0 0.0
    %5164 = vmatpush1.xpose.msra.mxu0 0.0
    %5165 = vmatprep.subr.mxu0 0.0
    %5166 = vmatpush1.xpose.msra.mxu0 0.0
    %5167 = vmatprep.subr.mxu0 0.0
    %5168 = vmatpush1.xpose.msra.mxu0 0.0
    %5169 = vmatprep.subr.mxu0 0.0
    %5170 = vmatpush1.xpose.msra.mxu0 0.0
    %5171 = vmatprep.subr.mxu0 0.0
    %5172 = vmatpush1.xpose.msra.mxu0 0.0
    %5173 = vmatprep.subr.mxu0 0.0
    %5174 = vmatpush1.xpose.msra.mxu0 0.0
    %5175 = vmatprep.subr.mxu0 0.0
    %5176 = vmatpush1.xpose.msra.mxu0 0.0
    %5177 = vmatprep.subr.mxu0 0.0
    %5178 = vmatpush1.xpose.msra.mxu0 0.0
    %5179 = vmatprep.subr.mxu0 0.0
    %5180 = vmatpush1.xpose.msra.mxu0 0.0
    %5181 = vmatprep.subr.mxu0 0.0
    %5182 = vmatpush1.xpose.msra.mxu0 0.0
    %5183 = vmatprep.subr.mxu0 0.0
    %5184 = vmatpush1.xpose.msra.mxu0 0.0
    %5185 = vmatprep.mubr.f32.mxu0 0.0
    %5186 = vmatmul.mubr.f32.gmra.mrb[0].mxu0 %v5117
    %v5187 = vpop.f32.mrb[0].mxu0
    %v5188 = vadd.f32 0.0, %v5187
    %v5189 = vpop.f32.mrb[0].mxu0
    %5190 = vdwg.mxu0
    %5191 = vrot.lane.b32.xlu0 %v3699, 104
    %v5192 = vpop.permute.xlu0 %5191
    %5193 = vrot.lane.b32.xlu0 %v3791, 104
    %v5194 = vpop.permute.xlu0 %5193
    %v5195 = vsel %vm3994, %v5192, 0
    %v5197 = vsel %vm3994, %v5194, 0
    %5199 = vmatprep.subr.mxu0 0.0
    %5200 = vmatpush1.xpose.msra.mxu0 %v5197
    %5201 = vmatprep.subr.mxu0 0.0
    %5202 = vmatpush1.xpose.msra.mxu0 0.0
    %5203 = vmatprep.subr.mxu0 0.0
    %5204 = vmatpush1.xpose.msra.mxu0 0.0
    %5205 = vmatprep.subr.mxu0 0.0
    %5206 = vmatpush1.xpose.msra.mxu0 0.0
    %5207 = vmatprep.subr.mxu0 0.0
    %5208 = vmatpush1.xpose.msra.mxu0 0.0
    %5209 = vmatprep.subr.mxu0 0.0
    %5210 = vmatpush1.xpose.msra.mxu0 0.0
    %5211 = vmatprep.subr.mxu0 0.0
    %5212 = vmatpush1.xpose.msra.mxu0 0.0
    %5213 = vmatprep.subr.mxu0 0.0
    %5214 = vmatpush1.xpose.msra.mxu0 0.0
    %5215 = vmatprep.subr.mxu0 0.0
    %5216 = vmatpush1.xpose.msra.mxu0 0.0
    %5217 = vmatprep.subr.mxu0 0.0
    %5218 = vmatpush1.xpose.msra.mxu0 0.0
    %5219 = vmatprep.subr.mxu0 0.0
    %5220 = vmatpush1.xpose.msra.mxu0 0.0
    %5221 = vmatprep.subr.mxu0 0.0
    %5222 = vmatpush1.xpose.msra.mxu0 0.0
    %5223 = vmatprep.subr.mxu0 0.0
    %5224 = vmatpush1.xpose.msra.mxu0 0.0
    %5225 = vmatprep.subr.mxu0 0.0
    %5226 = vmatpush1.xpose.msra.mxu0 0.0
    %5227 = vmatprep.subr.mxu0 0.0
    %5228 = vmatpush1.xpose.msra.mxu0 0.0
    %5229 = vmatprep.subr.mxu0 0.0
    %5230 = vmatpush1.xpose.msra.mxu0 0.0
    %5231 = vmatprep.subr.mxu0 0.0
    %5232 = vmatpush1.xpose.msra.mxu0 0.0
    %5233 = vmatprep.subr.mxu0 0.0
    %5234 = vmatpush1.xpose.msra.mxu0 0.0
    %5235 = vmatprep.subr.mxu0 0.0
    %5236 = vmatpush1.xpose.msra.mxu0 0.0
    %5237 = vmatprep.subr.mxu0 0.0
    %5238 = vmatpush1.xpose.msra.mxu0 0.0
    %5239 = vmatprep.subr.mxu0 0.0
    %5240 = vmatpush1.xpose.msra.mxu0 0.0
    %5241 = vmatprep.subr.mxu0 0.0
    %5242 = vmatpush1.xpose.msra.mxu0 0.0
    %5243 = vmatprep.subr.mxu0 0.0
    %5244 = vmatpush1.xpose.msra.mxu0 0.0
    %5245 = vmatprep.subr.mxu0 0.0
    %5246 = vmatpush1.xpose.msra.mxu0 0.0
    %5247 = vmatprep.subr.mxu0 0.0
    %5248 = vmatpush1.xpose.msra.mxu0 0.0
    %5249 = vmatprep.subr.mxu0 0.0
    %5250 = vmatpush1.xpose.msra.mxu0 0.0
    %5251 = vmatprep.subr.mxu0 0.0
    %5252 = vmatpush1.xpose.msra.mxu0 0.0
    %5253 = vmatprep.subr.mxu0 0.0
    %5254 = vmatpush1.xpose.msra.mxu0 0.0
    %5255 = vmatprep.subr.mxu0 0.0
    %5256 = vmatpush1.xpose.msra.mxu0 0.0
    %5257 = vmatprep.subr.mxu0 0.0
    %5258 = vmatpush1.xpose.msra.mxu0 0.0
    %5259 = vmatprep.subr.mxu0 0.0
    %5260 = vmatpush1.xpose.msra.mxu0 0.0
    %5261 = vmatprep.subr.mxu0 0.0
    %5262 = vmatpush1.xpose.msra.mxu0 0.0
    %5263 = vmatprep.mubr.f32.mxu0 0.0
    %5264 = vmatmul.mubr.f32.gmra.mrb[0].mxu0 %v5195
    %v5265 = vpop.f32.mrb[0].mxu0
    %v5266 = vadd.f32 0.0, %v5265
    %v5267 = vpop.f32.mrb[0].mxu0
    %5268 = vdwg.mxu0
    %v5269 = vmul.f32 %v5188, 0.35355338
    %v5270 = vmul.f32 %v5266, 0.35355338
    %v5271 = vsel %vm3994, %v5269, -inf
    %5272 = vmax.xlane.f32.xlu0 %v5271
    %v5273 = vpop.xlane.xlu0 %5272
    %v5274 = vsel %vm3994, %v5270, -inf
    %5275 = vmax.xlane.f32.xlu0 %v5274
    %v5276 = vpop.xlane.xlu0 %5275
    %v5277 = vsub.f32 %v5269, %v5273
    %v5278 = vsub.f32 %v5270, %v5276
    %v5279 = vmul.f32 %v5277, 1.442695
    %v5280 = vpow.pop %v5279
    %v5281 = vmul.f32 %v5278, 1.442695
    %v5282 = vpow.pop %v5281
    %v5283 = vsel %vm3994, %v5280, 0.0
    %5284 = vadd.xlane.f32.xlu0 %v5283
    %v5285 = vpop.xlane.xlu0 %5284
    %v5286 = vsel %vm3994, %v5282, 0.0
    %5287 = vadd.xlane.f32.xlu0 %v5286
    %v5288 = vpop.xlane.xlu0 %5287
    %v5289 = vrcp.pop %v5285
    %v5290 = vmul.f32 %v5280, %v5289
    %v5291 = vrcp.pop %v5288
    %v5292 = vmul.f32 %v5282, %v5291
    %5293 = vset.pattern.permute.xlu0 3
    %5294 = vperm.xlu0 %5293, %v3989
    %v5295 = vpop.permute.xlu0 %5294
    %5297 = vset.pattern.permute.xlu0 3
    %5298 = vperm.xlu0 %5297, %v3991
    %v5299 = vpop.permute.xlu0 %5298
    %v5301 = vmul.f32 %v281, %v5295
    %v5302 = vmul.f32 %v281, %v5299
    %v5303 = vmul.f32 %v5301, %v5295
    %v5304 = vmul.f32 %v5302, %v5299
    %v5305 = vmul.f32 %v5303, 1.442695
    %v5306 = vpow.pop %v5305
    %v5307 = vmul.f32 %v5304, 1.442695
    %v5308 = vpow.pop %v5307
    %5309 = vset.pattern.permute.xlu0 3
    %5310 = vperm.xlu0 %5309, %v4171
    %v5311 = vpop.permute.xlu0 %5310
    %5313 = vset.pattern.permute.xlu0 3
    %5314 = vperm.xlu0 %5313, %v4172
    %v5315 = vpop.permute.xlu0 %5314
    %v5317 = vmul.f32 %v5311, %v5306
    %v5318 = vmul.f32 %v5315, %v5308
    %5319 = vrot.lane.b32.xlu0 %v3872, 104
    %v5320 = vpop.permute.xlu0 %5319
    %v5323 = vsel %vm3994, %v5290, 0
    %5325 = vmatprep.subr.mxu0 0.0
    %5326 = vmatpush1.msra.mxu0 %v5320
    %5327 = vmatprep.subr.mxu0 0.0
    %5328 = vmatpush1.msra.mxu0 0.0
    %5329 = vmatprep.subr.mxu0 0.0
    %5330 = vmatpush1.msra.mxu0 0.0
    %5331 = vmatprep.subr.mxu0 0.0
    %5332 = vmatpush1.msra.mxu0 0.0
    %5333 = vmatprep.subr.mxu0 0.0
    %5334 = vmatpush1.msra.mxu0 0.0
    %5335 = vmatprep.subr.mxu0 0.0
    %5336 = vmatpush1.msra.mxu0 0.0
    %5337 = vmatprep.subr.mxu0 0.0
    %5338 = vmatpush1.msra.mxu0 0.0
    %5339 = vmatprep.subr.mxu0 0.0
    %5340 = vmatpush1.msra.mxu0 0.0
    %5341 = vmatprep.subr.mxu0 0.0
    %5342 = vmatpush1.msra.mxu0 0.0
    %5343 = vmatprep.subr.mxu0 0.0
    %5344 = vmatpush1.msra.mxu0 0.0
    %5345 = vmatprep.subr.mxu0 0.0
    %5346 = vmatpush1.msra.mxu0 0.0
    %5347 = vmatprep.subr.mxu0 0.0
    %5348 = vmatpush1.msra.mxu0 0.0
    %5349 = vmatprep.subr.mxu0 0.0
    %5350 = vmatpush1.msra.mxu0 0.0
    %5351 = vmatprep.subr.mxu0 0.0
    %5352 = vmatpush1.msra.mxu0 0.0
    %5353 = vmatprep.subr.mxu0 0.0
    %5354 = vmatpush1.msra.mxu0 0.0
    %5355 = vmatprep.subr.mxu0 0.0
    %5356 = vmatpush1.msra.mxu0 0.0
    %5357 = vmatprep.subr.mxu0 0.0
    %5358 = vmatpush1.msra.mxu0 0.0
    %5359 = vmatprep.subr.mxu0 0.0
    %5360 = vmatpush1.msra.mxu0 0.0
    %5361 = vmatprep.subr.mxu0 0.0
    %5362 = vmatpush1.msra.mxu0 0.0
    %5363 = vmatprep.subr.mxu0 0.0
    %5364 = vmatpush1.msra.mxu0 0.0
    %5365 = vmatprep.subr.mxu0 0.0
    %5366 = vmatpush1.msra.mxu0 0.0
    %5367 = vmatprep.subr.mxu0 0.0
    %5368 = vmatpush1.msra.mxu0 0.0
    %5369 = vmatprep.subr.mxu0 0.0
    %5370 = vmatpush1.msra.mxu0 0.0
    %5371 = vmatprep.subr.mxu0 0.0
    %5372 = vmatpush1.msra.mxu0 0.0
    %5373 = vmatprep.subr.mxu0 0.0
    %5374 = vmatpush1.msra.mxu0 0.0
    %5375 = vmatprep.subr.mxu0 0.0
    %5376 = vmatpush1.msra.mxu0 0.0
    %5377 = vmatprep.subr.mxu0 0.0
    %5378 = vmatpush1.msra.mxu0 0.0
    %5379 = vmatprep.subr.mxu0 0.0
    %5380 = vmatpush1.msra.mxu0 0.0
    %5381 = vmatprep.subr.mxu0 0.0
    %5382 = vmatpush1.msra.mxu0 0.0
    %5383 = vmatprep.subr.mxu0 0.0
    %5384 = vmatpush1.msra.mxu0 0.0
    %5385 = vmatprep.subr.mxu0 0.0
    %5386 = vmatpush1.msra.mxu0 0.0
    %5387 = vmatprep.subr.mxu0 0.0
    %5388 = vmatpush1.msra.mxu0 0.0
    %5389 = vmatprep.mubr.f32.mxu0 0.0
    %5390 = vmatmul.mubr.f32.gmra.mrb[0].mxu0 %v5323
    %v5391 = vpop.f32.mrb[0].mxu0
    %v5392 = vadd.f32 0.0, %v5391
    %v5393 = vpop.f32.mrb[0].mxu0
    %5394 = vdwg.mxu0
    %5395 = vrot.lane.b32.xlu0 %v3877, 104
    %v5396 = vpop.permute.xlu0 %5395
    %v5399 = vsel %vm3994, %v5292, 0
    %5401 = vmatprep.subr.mxu0 0.0
    %5402 = vmatpush1.msra.mxu0 %v5396
    %5403 = vmatprep.subr.mxu0 0.0
    %5404 = vmatpush1.msra.mxu0 0.0
    %5405 = vmatprep.subr.mxu0 0.0
    %5406 = vmatpush1.msra.mxu0 0.0
    %5407 = vmatprep.subr.mxu0 0.0
    %5408 = vmatpush1.msra.mxu0 0.0
    %5409 = vmatprep.subr.mxu0 0.0
    %5410 = vmatpush1.msra.mxu0 0.0
    %5411 = vmatprep.subr.mxu0 0.0
    %5412 = vmatpush1.msra.mxu0 0.0
    %5413 = vmatprep.subr.mxu0 0.0
    %5414 = vmatpush1.msra.mxu0 0.0
    %5415 = vmatprep.subr.mxu0 0.0
    %5416 = vmatpush1.msra.mxu0 0.0
    %5417 = vmatprep.subr.mxu0 0.0
    %5418 = vmatpush1.msra.mxu0 0.0
    %5419 = vmatprep.subr.mxu0 0.0
    %5420 = vmatpush1.msra.mxu0 0.0
    %5421 = vmatprep.subr.mxu0 0.0
    %5422 = vmatpush1.msra.mxu0 0.0
    %5423 = vmatprep.subr.mxu0 0.0
    %5424 = vmatpush1.msra.mxu0 0.0
    %5425 = vmatprep.subr.mxu0 0.0
    %5426 = vmatpush1.msra.mxu0 0.0
    %5427 = vmatprep.subr.mxu0 0.0
    %5428 = vmatpush1.msra.mxu0 0.0
    %5429 = vmatprep.subr.mxu0 0.0
    %5430 = vmatpush1.msra.mxu0 0.0
    %5431 = vmatprep.subr.mxu0 0.0
    %5432 = vmatpush1.msra.mxu0 0.0
    %5433 = vmatprep.subr.mxu0 0.0
    %5434 = vmatpush1.msra.mxu0 0.0
    %5435 = vmatprep.subr.mxu0 0.0
    %5436 = vmatpush1.msra.mxu0 0.0
    %5437 = vmatprep.subr.mxu0 0.0
    %5438 = vmatpush1.msra.mxu0 0.0
    %5439 = vmatprep.subr.mxu0 0.0
    %5440 = vmatpush1.msra.mxu0 0.0
    %5441 = vmatprep.subr.mxu0 0.0
    %5442 = vmatpush1.msra.mxu0 0.0
    %5443 = vmatprep.subr.mxu0 0.0
    %5444 = vmatpush1.msra.mxu0 0.0
    %5445 = vmatprep.subr.mxu0 0.0
    %5446 = vmatpush1.msra.mxu0 0.0
    %5447 = vmatprep.subr.mxu0 0.0
    %5448 = vmatpush1.msra.mxu0 0.0
    %5449 = vmatprep.subr.mxu0 0.0
    %5450 = vmatpush1.msra.mxu0 0.0
    %5451 = vmatprep.subr.mxu0 0.0
    %5452 = vmatpush1.msra.mxu0 0.0
    %5453 = vmatprep.subr.mxu0 0.0
    %5454 = vmatpush1.msra.mxu0 0.0
    %5455 = vmatprep.subr.mxu0 0.0
    %5456 = vmatpush1.msra.mxu0 0.0
    %5457 = vmatprep.subr.mxu0 0.0
    %5458 = vmatpush1.msra.mxu0 0.0
    %5459 = vmatprep.subr.mxu0 0.0
    %5460 = vmatpush1.msra.mxu0 0.0
    %5461 = vmatprep.subr.mxu0 0.0
    %5462 = vmatpush1.msra.mxu0 0.0
    %5463 = vmatprep.subr.mxu0 0.0
    %5464 = vmatpush1.msra.mxu0 0.0
    %5465 = vmatprep.mubr.f32.mxu0 0.0
    %5466 = vmatmul.mubr.f32.gmra.mrb[0].mxu0 %v5399
    %v5467 = vpop.f32.mrb[0].mxu0
    %v5468 = vadd.f32 0.0, %v5467
    %v5469 = vpop.f32.mrb[0].mxu0
    %5470 = vdwg.mxu0
    %5473 = vrot.lane.b32.xlu0 %v5392, 24
    %v5474 = vpop.permute.xlu0 %5473
    %5475 = vrot.lane.b32.xlu0 %v5468, 24
    %v5476 = vpop.permute.xlu0 %5475
    %vm5479 = vcmask 261312
    %5480 = vst.msk [vmem:[#allocation2] sm:$0xff] %vm5479, %v5474
    %5481 = vst.msk [vmem:[#allocation2 + $0x8] sm:$0xff] %vm5479, %v5476
    %s5482 = scalar_lea.vmem %s59, 24
    %5483 = vst.msk [vmem:[%s5482] sm:$0xff] %vm3994, %v5290
    %s5484 = scalar_lea.vmem %s61, 24
    %5485 = vst.msk [vmem:[%s5484] sm:$0xff] %vm3994, %v5317
    %s5486 = scalar_lea.vmem %s59, 56
    %5487 = vst.msk [vmem:[%s5486] sm:$0xff] %vm3994, %v5292
    %s5488 = scalar_lea.vmem %s61, 56
    %5489 = vst.msk [vmem:[%s5488] sm:$0xff] %vm3994, %v5318
    %v5490 = vld [vmem:[#allocation2] sm:$0xff]
    %v5491 = vld [vmem:[#allocation2 + $0x8] sm:$0xff]
    %v5492 = vld [vmem:[#allocation8] sm:$0xff]
    %v5493 = vld [vmem:[#allocation8 + $0x8] sm:$0xff]
    %v5494 = vld [vmem:[#allocation8 + $0x10] sm:$0xff]
    %v5495 = vld [vmem:[#allocation8 + $0x18] sm:$0xff]
    %v5496 = vld [vmem:[#allocation10] sm:$0x1]
    %v5498 = vlaneseq
    %v5499 = vshrl.u32 %v5498, 7
    %v5500 = vsub.s32 0, %v5499
    %v5501 = vrot.slane %v5496, %v5500
    %v5504 = vsel %vm3620, %v5490, 0
    %v5507 = vsel %vm3620, %v5491, 0
    %5509 = vmatprep.subr.mxu0 0.0
    %5510 = vmatpush1.msra.mxu0 %v5492
    %5511 = vmatprep.subr.mxu0 0.0
    %5512 = vmatpush1.msra.mxu0 %v5493
    %5513 = vmatprep.subr.mxu0 0.0
    %5514 = vmatpush1.msra.mxu0 %v5494
    %5515 = vmatprep.subr.mxu0 0.0
    %5516 = vmatpush1.msra.mxu0 %v5495
    %5517 = vmatprep.subr.mxu0 0.0
    %5518 = vmatpush1.msra.mxu0 0.0
    %5519 = vmatprep.subr.mxu0 0.0
    %5520 = vmatpush1.msra.mxu0 0.0
    %5521 = vmatprep.subr.mxu0 0.0
    %5522 = vmatpush1.msra.mxu0 0.0
    %5523 = vmatprep.subr.mxu0 0.0
    %5524 = vmatpush1.msra.mxu0 0.0
    %5525 = vmatprep.subr.mxu0 0.0
    %5526 = vmatpush1.msra.mxu0 0.0
    %5527 = vmatprep.subr.mxu0 0.0
    %5528 = vmatpush1.msra.mxu0 0.0
    %5529 = vmatprep.subr.mxu0 0.0
    %5530 = vmatpush1.msra.mxu0 0.0
    %5531 = vmatprep.subr.mxu0 0.0
    %5532 = vmatpush1.msra.mxu0 0.0
    %5533 = vmatprep.subr.mxu0 0.0
    %5534 = vmatpush1.msra.mxu0 0.0
    %5535 = vmatprep.subr.mxu0 0.0
    %5536 = vmatpush1.msra.mxu0 0.0
    %5537 = vmatprep.subr.mxu0 0.0
    %5538 = vmatpush1.msra.mxu0 0.0
    %5539 = vmatprep.subr.mxu0 0.0
    %5540 = vmatpush1.msra.mxu0 0.0
    %5541 = vmatprep.subr.mxu0 0.0
    %5542 = vmatpush1.msra.mxu0 0.0
    %5543 = vmatprep.subr.mxu0 0.0
    %5544 = vmatpush1.msra.mxu0 0.0
    %5545 = vmatprep.subr.mxu0 0.0
    %5546 = vmatpush1.msra.mxu0 0.0
    %5547 = vmatprep.subr.mxu0 0.0
    %5548 = vmatpush1.msra.mxu0 0.0
    %5549 = vmatprep.subr.mxu0 0.0
    %5550 = vmatpush1.msra.mxu0 0.0
    %5551 = vmatprep.subr.mxu0 0.0
    %5552 = vmatpush1.msra.mxu0 0.0
    %5553 = vmatprep.subr.mxu0 0.0
    %5554 = vmatpush1.msra.mxu0 0.0
    %5555 = vmatprep.subr.mxu0 0.0
    %5556 = vmatpush1.msra.mxu0 0.0
    %5557 = vmatprep.subr.mxu0 0.0
    %5558 = vmatpush1.msra.mxu0 0.0
    %5559 = vmatprep.subr.mxu0 0.0
    %5560 = vmatpush1.msra.mxu0 0.0
    %5561 = vmatprep.subr.mxu0 0.0
    %5562 = vmatpush1.msra.mxu0 0.0
    %5563 = vmatprep.subr.mxu0 0.0
    %5564 = vmatpush1.msra.mxu0 0.0
    %5565 = vmatprep.subr.mxu0 0.0
    %5566 = vmatpush1.msra.mxu0 0.0
    %5567 = vmatprep.subr.mxu0 0.0
    %5568 = vmatpush1.msra.mxu0 0.0
    %5569 = vmatprep.subr.mxu0 0.0
    %5570 = vmatpush1.msra.mxu0 0.0
    %5571 = vmatprep.subr.mxu0 0.0
    %5572 = vmatpush1.msra.mxu0 0.0
    %5573 = vmatprep.mubr.f32.mxu0 0.0
    %5574 = vmatmul.mubr.f32.gmra.mrb[0].mxu0 %v5504
    %v5575 = vpop.f32.mrb[0].mxu0
    %v5576 = vadd.f32 %v5501, %v5575
    %v5577 = vpop.f32.mrb[0].mxu0
    %5578 = vmatprep.mubr.f32.mxu0 0.0
    %5579 = vmatmul.mubr.f32.gmra.mrb[0].mxu0 %v5507
    %v5580 = vpop.f32.mrb[0].mxu0
    %v5581 = vadd.f32 %v5501, %v5580
    %v5582 = vpop.f32.mrb[0].mxu0
    %5583 = vdwg.mxu0
    %v5584 = vadd.f32 %v1990, %v5576
    %v5585 = vadd.f32 %v1991, %v5581
    %v5586 = vsel %vm3620, %v5584, 0.0
    %5587 = vadd.xlane.f32.xlu0 %v5586
    %v5588 = vpop.xlane.xlu0 %5587
    %v5589 = vsel %vm3620, %v5585, 0.0
    %5590 = vadd.xlane.f32.xlu0 %v5589
    %v5591 = vpop.xlane.xlu0 %5590
    %v5592 = vrcp.pop 32.0
    %v5593 = vmul.f32 %v5588, %v5592
    %v5594 = vmul.f32 %v5591, %v5592
    %v5595 = vsub.f32 %v5584, %v5593
    %v5596 = vsub.f32 %v5585, %v5594
    %v5597 = vmul.f32 %v5595, %v5595
    %v5598 = vmul.f32 %v5596, %v5596
    %v5599 = vsel %vm3620, %v5597, 0.0
    %5600 = vadd.xlane.f32.xlu0 %v5599
    %v5601 = vpop.xlane.xlu0 %5600
    %v5602 = vsel %vm3620, %v5598, 0.0
    %5603 = vadd.xlane.f32.xlu0 %v5602
    %v5604 = vpop.xlane.xlu0 %5603
    %v5605 = vmul.f32 %v5601, %v5592
    %v5606 = vmul.f32 %v5604, %v5592
    %v5607 = vadd.f32 %v5605, 1e-05
    %v5608 = vadd.f32 %v5606, 1e-05
    %v5609 = vrsqrt.pop %v5607
    %v5610 = vrsqrt.pop %v5608
    %v5611 = vmul.f32 %v5595, %v5609
    %v5612 = vmul.f32 %v5596, %v5610
    %v5613 = vlaneseq
    %v5614 = vshrl.u32 %v5613, 7
    %v5615 = vsub.s32 0, %v5614
    %v5616 = vrot.slane %v3608, %v5615
    %v5617 = vmul.f32 %v5611, %v5616
    %v5618 = vmul.f32 %v5612, %v5616
    %v5619 = vlaneseq
    %v5620 = vshrl.u32 %v5619, 7
    %v5621 = vsub.s32 1, %v5620
    %v5622 = vrot.slane %v3608, %v5621
    %v5623 = vadd.f32 %v5617, %v5622
    %v5624 = vadd.f32 %v5618, %v5622
    %5627 = vrot.lane.b32.xlu0 %v5576, 96
    %v5628 = vpop.permute.xlu0 %5627
    %5629 = vrot.lane.b32.xlu0 %v5581, 96
    %v5630 = vpop.permute.xlu0 %5629
    %v5633 = vadd.f32 %v3606, %v5628
    %v5634 = vadd.f32 %v3607, %v5630
    %v5635 = vsel %vm3620, %v5633, 0.0
    %5636 = vadd.xlane.f32.xlu0 %v5635
    %v5637 = vpop.xlane.xlu0 %5636
    %v5638 = vsel %vm3620, %v5634, 0.0
    %5639 = vadd.xlane.f32.xlu0 %v5638
    %v5640 = vpop.xlane.xlu0 %5639
    %v5641 = vmul.f32 %v5637, %v5592
    %v5642 = vmul.f32 %v5640, %v5592
    %v5643 = vsub.f32 %v5633, %v5641
    %v5644 = vsub.f32 %v5634, %v5642
    %v5645 = vmul.f32 %v5643, %v5643
    %v5646 = vmul.f32 %v5644, %v5644
    %v5647 = vsel %vm3620, %v5645, 0.0
    %5648 = vadd.xlane.f32.xlu0 %v5647
    %v5649 = vpop.xlane.xlu0 %5648
    %v5650 = vsel %vm3620, %v5646, 0.0
    %5651 = vadd.xlane.f32.xlu0 %v5650
    %v5652 = vpop.xlane.xlu0 %5651
    %v5653 = vmul.f32 %v5649, %v5592
    %v5654 = vmul.f32 %v5652, %v5592
    %v5655 = vadd.f32 %v5653, 1e-05
    %v5656 = vadd.f32 %v5654, 1e-05
    %v5657 = vrsqrt.pop %v5655
    %v5658 = vrsqrt.pop %v5656
    %v5659 = vmul.f32 %v5643, %v5657
    %v5660 = vmul.f32 %v5644, %v5658
    %v5661 = vlaneseq
    %v5662 = vshrl.u32 %v5661, 7
    %v5663 = vsub.s32 2, %v5662
    %v5664 = vrot.slane %v3608, %v5663
    %v5665 = vmul.f32 %v5659, %v5664
    %v5666 = vmul.f32 %v5660, %v5664
    %v5667 = vlaneseq
    %v5668 = vshrl.u32 %v5667, 7
    %v5669 = vsub.s32 3, %v5668
    %v5670 = vrot.slane %v3608, %v5669
    %v5671 = vadd.f32 %v5665, %v5670
    %v5672 = vadd.f32 %v5666, %v5670
    %v5673 = vld [vmem:[%s41] sm:$0xff]
    %v5674 = vld [vmem:[%s41 + $0x8] sm:$0xff]
    %v5675 = vld [vmem:[%s41 + $0x10] sm:$0xff]
    %v5676 = vld [vmem:[%s41 + $0x18] sm:$0xff]
    %v5677 = vld [vmem:[#allocation13] sm:$0x1]
    %v5679 = vlaneseq
    %v5680 = vshrl.u32 %v5679, 7
    %v5681 = vsub.s32 0, %v5680
    %v5682 = vrot.slane %v5677, %v5681
    %v5685 = vsel %vm3620, %v5623, 0
    %v5688 = vsel %vm3620, %v5624, 0
    %5690 = vmatprep.subr.mxu0 0.0
    %5691 = vmatpush1.msra.mxu0 %v5673
    %5692 = vmatprep.subr.mxu0 0.0
    %5693 = vmatpush1.msra.mxu0 %v5674
    %5694 = vmatprep.subr.mxu0 0.0
    %5695 = vmatpush1.msra.mxu0 %v5675
    %5696 = vmatprep.subr.mxu0 0.0
    %5697 = vmatpush1.msra.mxu0 %v5676
    %5698 = vmatprep.subr.mxu0 0.0
    %5699 = vmatpush1.msra.mxu0 0.0
    %5700 = vmatprep.subr.mxu0 0.0
    %5701 = vmatpush1.msra.mxu0 0.0
    %5702 = vmatprep.subr.mxu0 0.0
    %5703 = vmatpush1.msra.mxu0 0.0
    %5704 = vmatprep.subr.mxu0 0.0
    %5705 = vmatpush1.msra.mxu0 0.0
    %5706 = vmatprep.subr.mxu0 0.0
    %5707 = vmatpush1.msra.mxu0 0.0
    %5708 = vmatprep.subr.mxu0 0.0
    %5709 = vmatpush1.msra.mxu0 0.0
    %5710 = vmatprep.subr.mxu0 0.0
    %5711 = vmatpush1.msra.mxu0 0.0
    %5712 = vmatprep.subr.mxu0 0.0
    %5713 = vmatpush1.msra.mxu0 0.0
    %5714 = vmatprep.subr.mxu0 0.0
    %5715 = vmatpush1.msra.mxu0 0.0
    %5716 = vmatprep.subr.mxu0 0.0
    %5717 = vmatpush1.msra.mxu0 0.0
    %5718 = vmatprep.subr.mxu0 0.0
    %5719 = vmatpush1.msra.mxu0 0.0
    %5720 = vmatprep.subr.mxu0 0.0
    %5721 = vmatpush1.msra.mxu0 0.0
    %5722 = vmatprep.subr.mxu0 0.0
    %5723 = vmatpush1.msra.mxu0 0.0
    %5724 = vmatprep.subr.mxu0 0.0
    %5725 = vmatpush1.msra.mxu0 0.0
    %5726 = vmatprep.subr.mxu0 0.0
    %5727 = vmatpush1.msra.mxu0 0.0
    %5728 = vmatprep.subr.mxu0 0.0
    %5729 = vmatpush1.msra.mxu0 0.0
    %5730 = vmatprep.subr.mxu0 0.0
    %5731 = vmatpush1.msra.mxu0 0.0
    %5732 = vmatprep.subr.mxu0 0.0
    %5733 = vmatpush1.msra.mxu0 0.0
    %5734 = vmatprep.subr.mxu0 0.0
    %5735 = vmatpush1.msra.mxu0 0.0
    %5736 = vmatprep.subr.mxu0 0.0
    %5737 = vmatpush1.msra.mxu0 0.0
    %5738 = vmatprep.subr.mxu0 0.0
    %5739 = vmatpush1.msra.mxu0 0.0
    %5740 = vmatprep.subr.mxu0 0.0
    %5741 = vmatpush1.msra.mxu0 0.0
    %5742 = vmatprep.subr.mxu0 0.0
    %5743 = vmatpush1.msra.mxu0 0.0
    %5744 = vmatprep.subr.mxu0 0.0
    %5745 = vmatpush1.msra.mxu0 0.0
    %5746 = vmatprep.subr.mxu0 0.0
    %5747 = vmatpush1.msra.mxu0 0.0
    %5748 = vmatprep.subr.mxu0 0.0
    %5749 = vmatpush1.msra.mxu0 0.0
    %5750 = vmatprep.subr.mxu0 0.0
    %5751 = vmatpush1.msra.mxu0 0.0
    %5752 = vmatprep.subr.mxu0 0.0
    %5753 = vmatpush1.msra.mxu0 0.0
    %5754 = vmatprep.mubr.f32.mxu0 0.0
    %5755 = vmatmul.mubr.f32.gmra.mrb[0].mxu0 %v5685
    %v5756 = vpop.f32.mrb[0].mxu0
    %v5757 = vadd.f32 %v5682, %v5756
    %v5758 = vpop.f32.mrb[0].mxu0
    %5759 = vmatprep.mubr.f32.mxu0 0.0
    %5760 = vmatmul.mubr.f32.gmra.mrb[0].mxu0 %v5688
    %v5761 = vpop.f32.mrb[0].mxu0
    %v5762 = vadd.f32 %v5682, %v5761
    %v5763 = vpop.f32.mrb[0].mxu0
    %5764 = vdwg.mxu0
    %v5765 = vmul.f32 %v5757, 0.5
    %v5766 = vmul.f32 %v5762, 0.5
    %v5767 = vmul.f32 %v5757, 0.044715
    %v5768 = vmul.f32 %v5762, 0.044715
    %v5769 = vmul.f32 %v5767, %v5757
    %v5770 = vmul.f32 %v5768, %v5762
    %v5771 = vmul.f32 %v5769, %v5757
    %v5772 = vmul.f32 %v5770, %v5762
    %v5773 = vadd.f32 %v5757, %v5771
    %v5774 = vadd.f32 %v5762, %v5772
    %v5775 = vmul.f32 %v5773, 0.7978846
    %v5776 = vmul.f32 %v5774, 0.7978846
    %v5777 = vtanh.pop %v5775
    %v5778 = vtanh.pop %v5776
    %v5779 = vadd.f32 %v5777, 1.0
    %v5780 = vadd.f32 %v5778, 1.0
    %v5781 = vmul.f32 %v5765, %v5779
    %v5782 = vmul.f32 %v5766, %v5780
    %v5783 = vld [vmem:[%s45] sm:$0xff]
    %v5784 = vld [vmem:[%s45 + $0x8] sm:$0xff]
    %v5785 = vld [vmem:[%s45 + $0x10] sm:$0xff]
    %v5786 = vld [vmem:[%s45 + $0x18] sm:$0xff]
    %v5787 = vld [vmem:[#allocation14] sm:$0x1]
    %v5789 = vlaneseq
    %v5790 = vshrl.u32 %v5789, 7
    %v5791 = vsub.s32 0, %v5790
    %v5792 = vrot.slane %v5787, %v5791
    %v5795 = vsel %vm3620, %v5781, 0
    %v5798 = vsel %vm3620, %v5782, 0
    %5800 = vmatprep.subr.mxu0 0.0
    %5801 = vmatpush1.msra.mxu0 %v5783
    %5802 = vmatprep.subr.mxu0 0.0
    %5803 = vmatpush1.msra.mxu0 %v5784
    %5804 = vmatprep.subr.mxu0 0.0
    %5805 = vmatpush1.msra.mxu0 %v5785
    %5806 = vmatprep.subr.mxu0 0.0
    %5807 = vmatpush1.msra.mxu0 %v5786
    %5808 = vmatprep.subr.mxu0 0.0
    %5809 = vmatpush1.msra.mxu0 0.0
    %5810 = vmatprep.subr.mxu0 0.0
    %5811 = vmatpush1.msra.mxu0 0.0
    %5812 = vmatprep.subr.mxu0 0.0
    %5813 = vmatpush1.msra.mxu0 0.0
    %5814 = vmatprep.subr.mxu0 0.0
    %5815 = vmatpush1.msra.mxu0 0.0
    %5816 = vmatprep.subr.mxu0 0.0
    %5817 = vmatpush1.msra.mxu0 0.0
    %5818 = vmatprep.subr.mxu0 0.0
    %5819 = vmatpush1.msra.mxu0 0.0
    %5820 = vmatprep.subr.mxu0 0.0
    %5821 = vmatpush1.msra.mxu0 0.0
    %5822 = vmatprep.subr.mxu0 0.0
    %5823 = vmatpush1.msra.mxu0 0.0
    %5824 = vmatprep.subr.mxu0 0.0
    %5825 = vmatpush1.msra.mxu0 0.0
    %5826 = vmatprep.subr.mxu0 0.0
    %5827 = vmatpush1.msra.mxu0 0.0
    %5828 = vmatprep.subr.mxu0 0.0
    %5829 = vmatpush1.msra.mxu0 0.0
    %5830 = vmatprep.subr.mxu0 0.0
    %5831 = vmatpush1.msra.mxu0 0.0
    %5832 = vmatprep.subr.mxu0 0.0
    %5833 = vmatpush1.msra.mxu0 0.0
    %5834 = vmatprep.subr.mxu0 0.0
    %5835 = vmatpush1.msra.mxu0 0.0
    %5836 = vmatprep.subr.mxu0 0.0
    %5837 = vmatpush1.msra.mxu0 0.0
    %5838 = vmatprep.subr.mxu0 0.0
    %5839 = vmatpush1.msra.mxu0 0.0
    %5840 = vmatprep.subr.mxu0 0.0
    %5841 = vmatpush1.msra.mxu0 0.0
    %5842 = vmatprep.subr.mxu0 0.0
    %5843 = vmatpush1.msra.mxu0 0.0
    %5844 = vmatprep.subr.mxu0 0.0
    %5845 = vmatpush1.msra.mxu0 0.0
    %5846 = vmatprep.subr.mxu0 0.0
    %5847 = vmatpush1.msra.mxu0 0.0
    %5848 = vmatprep.subr.mxu0 0.0
    %5849 = vmatpush1.msra.mxu0 0.0
    %5850 = vmatprep.subr.mxu0 0.0
    %5851 = vmatpush1.msra.mxu0 0.0
    %5852 = vmatprep.subr.mxu0 0.0
    %5853 = vmatpush1.msra.mxu0 0.0
    %5854 = vmatprep.subr.mxu0 0.0
    %5855 = vmatpush1.msra.mxu0 0.0
    %5856 = vmatprep.subr.mxu0 0.0
    %5857 = vmatpush1.msra.mxu0 0.0
    %5858 = vmatprep.subr.mxu0 0.0
    %5859 = vmatpush1.msra.mxu0 0.0
    %5860 = vmatprep.subr.mxu0 0.0
    %5861 = vmatpush1.msra.mxu0 0.0
    %5862 = vmatprep.subr.mxu0 0.0
    %5863 = vmatpush1.msra.mxu0 0.0
    %5864 = vmatprep.mubr.f32.mxu0 0.0
    %5865 = vmatmul.mubr.f32.gmra.mrb[0].mxu0 %v5795
    %v5866 = vpop.f32.mrb[0].mxu0
    %v5867 = vadd.f32 %v5792, %v5866
    %v5868 = vpop.f32.mrb[0].mxu0
    %5869 = vmatprep.mubr.f32.mxu0 0.0
    %5870 = vmatmul.mubr.f32.gmra.mrb[0].mxu0 %v5798
    %v5871 = vpop.f32.mrb[0].mxu0
    %v5872 = vadd.f32 %v5792, %v5871
    %v5873 = vpop.f32.mrb[0].mxu0
    %5874 = vdwg.mxu0
    %v5875 = vadd.f32 %v5623, %v5867
    %v5876 = vadd.f32 %v5624, %v5872
    %v5877 = vsel %vm3620, %v5875, 0.0
    %5878 = vadd.xlane.f32.xlu0 %v5877
    %v5879 = vpop.xlane.xlu0 %5878
    %v5880 = vsel %vm3620, %v5876, 0.0
    %5881 = vadd.xlane.f32.xlu0 %v5880
    %v5882 = vpop.xlane.xlu0 %5881
    %v5883 = vmul.f32 %v5879, %v5592
    %v5884 = vmul.f32 %v5882, %v5592
    %v5885 = vsub.f32 %v5875, %v5883
    %v5886 = vsub.f32 %v5876, %v5884
    %v5887 = vmul.f32 %v5885, %v5885
    %v5888 = vmul.f32 %v5886, %v5886
    %v5889 = vsel %vm3620, %v5887, 0.0
    %5890 = vadd.xlane.f32.xlu0 %v5889
    %v5891 = vpop.xlane.xlu0 %5890
    %v5892 = vsel %vm3620, %v5888, 0.0
    %5893 = vadd.xlane.f32.xlu0 %v5892
    %v5894 = vpop.xlane.xlu0 %5893
    %v5895 = vmul.f32 %v5891, %v5592
    %v5896 = vmul.f32 %v5894, %v5592
    %v5897 = vadd.f32 %v5895, 1e-05
    %v5898 = vadd.f32 %v5896, 1e-05
    %v5899 = vrsqrt.pop %v5897
    %v5900 = vrsqrt.pop %v5898
    %v5901 = vmul.f32 %v5885, %v5899
    %v5902 = vmul.f32 %v5886, %v5900
    %v5903 = vlaneseq
    %v5904 = vshrl.u32 %v5903, 7
    %v5905 = vsub.s32 4, %v5904
    %v5906 = vrot.slane %v3608, %v5905
    %v5907 = vmul.f32 %v5901, %v5906
    %v5908 = vmul.f32 %v5902, %v5906
    %v5909 = vlaneseq
    %v5910 = vshrl.u32 %v5909, 7
    %v5911 = vsub.s32 5, %v5910
    %v5912 = vrot.slane %v3608, %v5911
    %v5913 = vadd.f32 %v5907, %v5912
    %v5914 = vadd.f32 %v5908, %v5912
    %s5915 = scalar_lea.vmem %s41, 32
    %v5916 = vld [vmem:[%s5915] sm:$0xff]
    %v5917 = vld [vmem:[%s5915 + $0x8] sm:$0xff]
    %v5918 = vld [vmem:[%s5915 + $0x10] sm:$0xff]
    %v5919 = vld [vmem:[%s5915 + $0x18] sm:$0xff]
    %s5920 = scalar_lea.vmem [#allocation13], 1
    %v5921 = vld [vmem:[%s5920] sm:$0x1]
    %v5923 = vlaneseq
    %v5924 = vshrl.u32 %v5923, 7
    %v5925 = vsub.s32 0, %v5924
    %v5926 = vrot.slane %v5921, %v5925
    %v5929 = vsel %vm3620, %v5671, 0
    %v5932 = vsel %vm3620, %v5672, 0
    %5934 = vmatprep.subr.mxu0 0.0
    %5935 = vmatpush1.msra.mxu0 %v5916
    %5936 = vmatprep.subr.mxu0 0.0
    %5937 = vmatpush1.msra.mxu0 %v5917
    %5938 = vmatprep.subr.mxu0 0.0
    %5939 = vmatpush1.msra.mxu0 %v5918
    %5940 = vmatprep.subr.mxu0 0.0
    %5941 = vmatpush1.msra.mxu0 %v5919
    %5942 = vmatprep.subr.mxu0 0.0
    %5943 = vmatpush1.msra.mxu0 0.0
    %5944 = vmatprep.subr.mxu0 0.0
    %5945 = vmatpush1.msra.mxu0 0.0
    %5946 = vmatprep.subr.mxu0 0.0
    %5947 = vmatpush1.msra.mxu0 0.0
    %5948 = vmatprep.subr.mxu0 0.0
    %5949 = vmatpush1.msra.mxu0 0.0
    %5950 = vmatprep.subr.mxu0 0.0
    %5951 = vmatpush1.msra.mxu0 0.0
    %5952 = vmatprep.subr.mxu0 0.0
    %5953 = vmatpush1.msra.mxu0 0.0
    %5954 = vmatprep.subr.mxu0 0.0
    %5955 = vmatpush1.msra.mxu0 0.0
    %5956 = vmatprep.subr.mxu0 0.0
    %5957 = vmatpush1.msra.mxu0 0.0
    %5958 = vmatprep.subr.mxu0 0.0
    %5959 = vmatpush1.msra.mxu0 0.0
    %5960 = vmatprep.subr.mxu0 0.0
    %5961 = vmatpush1.msra.mxu0 0.0
    %5962 = vmatprep.subr.mxu0 0.0
    %5963 = vmatpush1.msra.mxu0 0.0
    %5964 = vmatprep.subr.mxu0 0.0
    %5965 = vmatpush1.msra.mxu0 0.0
    %5966 = vmatprep.subr.mxu0 0.0
    %5967 = vmatpush1.msra.mxu0 0.0
    %5968 = vmatprep.subr.mxu0 0.0
    %5969 = vmatpush1.msra.mxu0 0.0
    %5970 = vmatprep.subr.mxu0 0.0
    %5971 = vmatpush1.msra.mxu0 0.0
    %5972 = vmatprep.subr.mxu0 0.0
    %5973 = vmatpush1.msra.mxu0 0.0
    %5974 = vmatprep.subr.mxu0 0.0
    %5975 = vmatpush1.msra.mxu0 0.0
    %5976 = vmatprep.subr.mxu0 0.0
    %5977 = vmatpush1.msra.mxu0 0.0
    %5978 = vmatprep.subr.mxu0 0.0
    %5979 = vmatpush1.msra.mxu0 0.0
    %5980 = vmatprep.subr.mxu0 0.0
    %5981 = vmatpush1.msra.mxu0 0.0
    %5982 = vmatprep.subr.mxu0 0.0
    %5983 = vmatpush1.msra.mxu0 0.0
    %5984 = vmatprep.subr.mxu0 0.0
    %5985 = vmatpush1.msra.mxu0 0.0
    %5986 = vmatprep.subr.mxu0 0.0
    %5987 = vmatpush1.msra.mxu0 0.0
    %5988 = vmatprep.subr.mxu0 0.0
    %5989 = vmatpush1.msra.mxu0 0.0
    %5990 = vmatprep.subr.mxu0 0.0
    %5991 = vmatpush1.msra.mxu0 0.0
    %5992 = vmatprep.subr.mxu0 0.0
    %5993 = vmatpush1.msra.mxu0 0.0
    %5994 = vmatprep.subr.mxu0 0.0
    %5995 = vmatpush1.msra.mxu0 0.0
    %5996 = vmatprep.subr.mxu0 0.0
    %5997 = vmatpush1.msra.mxu0 0.0
    %5998 = vmatprep.mubr.f32.mxu0 0.0
    %5999 = vmatmul.mubr.f32.gmra.mrb[0].mxu0 %v5929
    %v6000 = vpop.f32.mrb[0].mxu0
    %v6001 = vadd.f32 %v5926, %v6000
    %v6002 = vpop.f32.mrb[0].mxu0
    %6003 = vmatprep.mubr.f32.mxu0 0.0
    %6004 = vmatmul.mubr.f32.gmra.mrb[0].mxu0 %v5932
    %v6005 = vpop.f32.mrb[0].mxu0
    %v6006 = vadd.f32 %v5926, %v6005
    %v6007 = vpop.f32.mrb[0].mxu0
    %6008 = vdwg.mxu0
    %v6009 = vmul.f32 %v6001, 0.5
    %v6010 = vmul.f32 %v6006, 0.5
    %v6011 = vmul.f32 %v6001, 0.044715
    %v6012 = vmul.f32 %v6006, 0.044715
    %v6013 = vmul.f32 %v6011, %v6001
    %v6014 = vmul.f32 %v6012, %v6006
    %v6015 = vmul.f32 %v6013, %v6001
    %v6016 = vmul.f32 %v6014, %v6006
    %v6017 = vadd.f32 %v6001, %v6015
    %v6018 = vadd.f32 %v6006, %v6016
    %v6019 = vmul.f32 %v6017, 0.7978846
    %v6020 = vmul.f32 %v6018, 0.7978846
    %v6021 = vtanh.pop %v6019
    %v6022 = vtanh.pop %v6020
    %v6023 = vadd.f32 %v6021, 1.0
    %v6024 = vadd.f32 %v6022, 1.0
    %v6025 = vmul.f32 %v6009, %v6023
    %v6026 = vmul.f32 %v6010, %v6024
    %s6027 = scalar_lea.vmem %s45, 32
    %v6028 = vld [vmem:[%s6027] sm:$0xff]
    %v6029 = vld [vmem:[%s6027 + $0x8] sm:$0xff]
    %v6030 = vld [vmem:[%s6027 + $0x10] sm:$0xff]
    %v6031 = vld [vmem:[%s6027 + $0x18] sm:$0xff]
    %s6032 = scalar_lea.vmem [#allocation14], 1
    %v6033 = vld [vmem:[%s6032] sm:$0x1]
    %v6035 = vlaneseq
    %v6036 = vshrl.u32 %v6035, 7
    %v6037 = vsub.s32 0, %v6036
    %v6038 = vrot.slane %v6033, %v6037
    %v6041 = vsel %vm3620, %v6025, 0
    %v6044 = vsel %vm3620, %v6026, 0
    %6046 = vmatprep.subr.mxu0 0.0
    %6047 = vmatpush1.msra.mxu0 %v6028
    %6048 = vmatprep.subr.mxu0 0.0
    %6049 = vmatpush1.msra.mxu0 %v6029
    %6050 = vmatprep.subr.mxu0 0.0
    %6051 = vmatpush1.msra.mxu0 %v6030
    %6052 = vmatprep.subr.mxu0 0.0
    %6053 = vmatpush1.msra.mxu0 %v6031
    %6054 = vmatprep.subr.mxu0 0.0
    %6055 = vmatpush1.msra.mxu0 0.0
    %6056 = vmatprep.subr.mxu0 0.0
    %6057 = vmatpush1.msra.mxu0 0.0
    %6058 = vmatprep.subr.mxu0 0.0
    %6059 = vmatpush1.msra.mxu0 0.0
    %6060 = vmatprep.subr.mxu0 0.0
    %6061 = vmatpush1.msra.mxu0 0.0
    %6062 = vmatprep.subr.mxu0 0.0
    %6063 = vmatpush1.msra.mxu0 0.0
    %6064 = vmatprep.subr.mxu0 0.0
    %6065 = vmatpush1.msra.mxu0 0.0
    %6066 = vmatprep.subr.mxu0 0.0
    %6067 = vmatpush1.msra.mxu0 0.0
    %6068 = vmatprep.subr.mxu0 0.0
    %6069 = vmatpush1.msra.mxu0 0.0
    %6070 = vmatprep.subr.mxu0 0.0
    %6071 = vmatpush1.msra.mxu0 0.0
    %6072 = vmatprep.subr.mxu0 0.0
    %6073 = vmatpush1.msra.mxu0 0.0
    %6074 = vmatprep.subr.mxu0 0.0
    %6075 = vmatpush1.msra.mxu0 0.0
    %6076 = vmatprep.subr.mxu0 0.0
    %6077 = vmatpush1.msra.mxu0 0.0
    %6078 = vmatprep.subr.mxu0 0.0
    %6079 = vmatpush1.msra.mxu0 0.0
    %6080 = vmatprep.subr.mxu0 0.0
    %6081 = vmatpush1.msra.mxu0 0.0
    %6082 = vmatprep.subr.mxu0 0.0
    %6083 = vmatpush1.msra.mxu0 0.0
    %6084 = vmatprep.subr.mxu0 0.0
    %6085 = vmatpush1.msra.mxu0 0.0
    %6086 = vmatprep.subr.mxu0 0.0
    %6087 = vmatpush1.msra.mxu0 0.0
    %6088 = vmatprep.subr.mxu0 0.0
    %6089 = vmatpush1.msra.mxu0 0.0
    %6090 = vmatprep.subr.mxu0 0.0
    %6091 = vmatpush1.msra.mxu0 0.0
    %6092 = vmatprep.subr.mxu0 0.0
    %6093 = vmatpush1.msra.mxu0 0.0
    %6094 = vmatprep.subr.mxu0 0.0
    %6095 = vmatpush1.msra.mxu0 0.0
    %6096 = vmatprep.subr.mxu0 0.0
    %6097 = vmatpush1.msra.mxu0 0.0
    %6098 = vmatprep.subr.mxu0 0.0
    %6099 = vmatpush1.msra.mxu0 0.0
    %6100 = vmatprep.subr.mxu0 0.0
    %6101 = vmatpush1.msra.mxu0 0.0
    %6102 = vmatprep.subr.mxu0 0.0
    %6103 = vmatpush1.msra.mxu0 0.0
    %6104 = vmatprep.subr.mxu0 0.0
    %6105 = vmatpush1.msra.mxu0 0.0
    %6106 = vmatprep.subr.mxu0 0.0
    %6107 = vmatpush1.msra.mxu0 0.0
    %6108 = vmatprep.subr.mxu0 0.0
    %6109 = vmatpush1.msra.mxu0 0.0
    %6110 = vmatprep.mubr.f32.mxu0 0.0
    %6111 = vmatmul.mubr.f32.gmra.mrb[0].mxu0 %v6041
    %v6112 = vpop.f32.mrb[0].mxu0
    %v6113 = vadd.f32 %v6038, %v6112
    %v6114 = vpop.f32.mrb[0].mxu0
    %6115 = vmatprep.mubr.f32.mxu0 0.0
    %6116 = vmatmul.mubr.f32.gmra.mrb[0].mxu0 %v6044
    %v6117 = vpop.f32.mrb[0].mxu0
    %v6118 = vadd.f32 %v6038, %v6117
    %v6119 = vpop.f32.mrb[0].mxu0
    %6120 = vdwg.mxu0
    %v6121 = vadd.f32 %v5671, %v6113
    %v6122 = vadd.f32 %v5672, %v6118
    %v6123 = vsel %vm3620, %v6121, 0.0
    %6124 = vadd.xlane.f32.xlu0 %v6123
    %v6125 = vpop.xlane.xlu0 %6124
    %v6126 = vsel %vm3620, %v6122, 0.0
    %6127 = vadd.xlane.f32.xlu0 %v6126
    %v6128 = vpop.xlane.xlu0 %6127
    %v6129 = vmul.f32 %v6125, %v5592
    %v6130 = vmul.f32 %v6128, %v5592
    %v6131 = vsub.f32 %v6121, %v6129
    %v6132 = vsub.f32 %v6122, %v6130
    %v6133 = vmul.f32 %v6131, %v6131
    %v6134 = vmul.f32 %v6132, %v6132
    %v6135 = vsel %vm3620, %v6133, 0.0
    %6136 = vadd.xlane.f32.xlu0 %v6135
    %v6137 = vpop.xlane.xlu0 %6136
    %v6138 = vsel %vm3620, %v6134, 0.0
    %6139 = vadd.xlane.f32.xlu0 %v6138
    %v6140 = vpop.xlane.xlu0 %6139
    %v6141 = vmul.f32 %v6137, %v5592
    %v6142 = vmul.f32 %v6140, %v5592
    %v6143 = vadd.f32 %v6141, 1e-05
    %v6144 = vadd.f32 %v6142, 1e-05
    %v6145 = vrsqrt.pop %v6143
    %v6146 = vrsqrt.pop %v6144
    %v6147 = vmul.f32 %v6131, %v6145
    %v6148 = vmul.f32 %v6132, %v6146
    %v6149 = vlaneseq
    %v6150 = vshrl.u32 %v6149, 7
    %v6151 = vsub.s32 6, %v6150
    %v6152 = vrot.slane %v3608, %v6151
    %v6153 = vmul.f32 %v6147, %v6152
    %v6154 = vmul.f32 %v6148, %v6152
    %v6155 = vlaneseq
    %v6156 = vshrl.u32 %v6155, 7
    %v6157 = vsub.s32 7, %v6156
    %v6158 = vrot.slane %v3608, %v6157
    %v6159 = vadd.f32 %v6153, %v6158
    %v6160 = vadd.f32 %v6154, %v6158
    %s6161 = scalar_lea.vmem [#allocation11], 8
    %v6162 = vld [vmem:[%s6161] sm:$0xff]
    %s6163 = scalar_lea.vmem %s19, 32
    %v6164 = vld [vmem:[%s6163] sm:$0xff]
    %v6165 = vld [vmem:[%s6163 + $0x8] sm:$0xff]
    %v6166 = vld [vmem:[%s6163 + $0x10] sm:$0xff]
    %v6167 = vld [vmem:[%s6163 + $0x18] sm:$0xff]
    %s6168 = scalar_lea.vmem %s21, 1
    %v6169 = vld [vmem:[%s6168] sm:$0x1]
    %v6171 = vlaneseq
    %v6172 = vshrl.u32 %v6171, 7
    %v6173 = vsub.s32 0, %v6172
    %v6174 = vrot.slane %v6169, %v6173
    %v6177 = vsel %vm3620, %v6159, 0
    %v6180 = vsel %vm3620, %v6160, 0
    %6182 = vmatprep.subr.mxu0 0.0
    %6183 = vmatpush1.msra.mxu0 %v6164
    %6184 = vmatprep.subr.mxu0 0.0
    %6185 = vmatpush1.msra.mxu0 %v6165
    %6186 = vmatprep.subr.mxu0 0.0
    %6187 = vmatpush1.msra.mxu0 %v6166
    %6188 = vmatprep.subr.mxu0 0.0
    %6189 = vmatpush1.msra.mxu0 %v6167
    %6190 = vmatprep.subr.mxu0 0.0
    %6191 = vmatpush1.msra.mxu0 0.0
    %6192 = vmatprep.subr.mxu0 0.0
    %6193 = vmatpush1.msra.mxu0 0.0
    %6194 = vmatprep.subr.mxu0 0.0
    %6195 = vmatpush1.msra.mxu0 0.0
    %6196 = vmatprep.subr.mxu0 0.0
    %6197 = vmatpush1.msra.mxu0 0.0
    %6198 = vmatprep.subr.mxu0 0.0
    %6199 = vmatpush1.msra.mxu0 0.0
    %6200 = vmatprep.subr.mxu0 0.0
    %6201 = vmatpush1.msra.mxu0 0.0
    %6202 = vmatprep.subr.mxu0 0.0
    %6203 = vmatpush1.msra.mxu0 0.0
    %6204 = vmatprep.subr.mxu0 0.0
    %6205 = vmatpush1.msra.mxu0 0.0
    %6206 = vmatprep.subr.mxu0 0.0
    %6207 = vmatpush1.msra.mxu0 0.0
    %6208 = vmatprep.subr.mxu0 0.0
    %6209 = vmatpush1.msra.mxu0 0.0
    %6210 = vmatprep.subr.mxu0 0.0
    %6211 = vmatpush1.msra.mxu0 0.0
    %6212 = vmatprep.subr.mxu0 0.0
    %6213 = vmatpush1.msra.mxu0 0.0
    %6214 = vmatprep.subr.mxu0 0.0
    %6215 = vmatpush1.msra.mxu0 0.0
    %6216 = vmatprep.subr.mxu0 0.0
    %6217 = vmatpush1.msra.mxu0 0.0
    %6218 = vmatprep.subr.mxu0 0.0
    %6219 = vmatpush1.msra.mxu0 0.0
    %6220 = vmatprep.subr.mxu0 0.0
    %6221 = vmatpush1.msra.mxu0 0.0
    %6222 = vmatprep.subr.mxu0 0.0
    %6223 = vmatpush1.msra.mxu0 0.0
    %6224 = vmatprep.subr.mxu0 0.0
    %6225 = vmatpush1.msra.mxu0 0.0
    %6226 = vmatprep.subr.mxu0 0.0
    %6227 = vmatpush1.msra.mxu0 0.0
    %6228 = vmatprep.subr.mxu0 0.0
    %6229 = vmatpush1.msra.mxu0 0.0
    %6230 = vmatprep.subr.mxu0 0.0
    %6231 = vmatpush1.msra.mxu0 0.0
    %6232 = vmatprep.subr.mxu0 0.0
    %6233 = vmatpush1.msra.mxu0 0.0
    %6234 = vmatprep.subr.mxu0 0.0
    %6235 = vmatpush1.msra.mxu0 0.0
    %6236 = vmatprep.subr.mxu0 0.0
    %6237 = vmatpush1.msra.mxu0 0.0
    %6238 = vmatprep.subr.mxu0 0.0
    %6239 = vmatpush1.msra.mxu0 0.0
    %6240 = vmatprep.subr.mxu0 0.0
    %6241 = vmatpush1.msra.mxu0 0.0
    %6242 = vmatprep.subr.mxu0 0.0
    %6243 = vmatpush1.msra.mxu0 0.0
    %6244 = vmatprep.subr.mxu0 0.0
    %6245 = vmatpush1.msra.mxu0 0.0
    %6246 = vmatprep.mubr.f32.mxu0 0.0
    %6247 = vmatmul.mubr.f32.gmra.mrb[0].mxu0 %v6177
    %v6248 = vpop.f32.mrb[0].mxu0
    %v6249 = vadd.f32 %v6174, %v6248
    %v6250 = vpop.f32.mrb[0].mxu0
    %6251 = vmatprep.mubr.f32.mxu0 0.0
    %6252 = vmatmul.mubr.f32.gmra.mrb[0].mxu0 %v6180
    %v6253 = vpop.f32.mrb[0].mxu0
    %v6254 = vadd.f32 %v6174, %v6253
    %v6255 = vpop.f32.mrb[0].mxu0
    %6256 = vdwg.mxu0
    %s6257 = scalar_lea.vmem %s23, 32
    %v6258 = vld [vmem:[%s6257] sm:$0xff]
    %v6259 = vld [vmem:[%s6257 + $0x8] sm:$0xff]
    %v6260 = vld [vmem:[%s6257 + $0x10] sm:$0xff]
    %v6261 = vld [vmem:[%s6257 + $0x18] sm:$0xff]
    %s6262 = scalar_lea.vmem [#allocation3], 1
    %v6263 = vld [vmem:[%s6262] sm:$0x1]
    %v6265 = vlaneseq
    %v6266 = vshrl.u32 %v6265, 7
    %v6267 = vsub.s32 0, %v6266
    %v6268 = vrot.slane %v6263, %v6267
    %v6271 = vsel %vm3620, %v5913, 0
    %v6274 = vsel %vm3620, %v5914, 0
    %6276 = vmatprep.subr.mxu0 0.0
    %6277 = vmatpush1.msra.mxu0 %v6258
    %6278 = vmatprep.subr.mxu0 0.0
    %6279 = vmatpush1.msra.mxu0 %v6259
    %6280 = vmatprep.subr.mxu0 0.0
    %6281 = vmatpush1.msra.mxu0 %v6260
    %6282 = vmatprep.subr.mxu0 0.0
    %6283 = vmatpush1.msra.mxu0 %v6261
    %6284 = vmatprep.subr.mxu0 0.0
    %6285 = vmatpush1.msra.mxu0 0.0
    %6286 = vmatprep.subr.mxu0 0.0
    %6287 = vmatpush1.msra.mxu0 0.0
    %6288 = vmatprep.subr.mxu0 0.0
    %6289 = vmatpush1.msra.mxu0 0.0
    %6290 = vmatprep.subr.mxu0 0.0
    %6291 = vmatpush1.msra.mxu0 0.0
    %6292 = vmatprep.subr.mxu0 0.0
    %6293 = vmatpush1.msra.mxu0 0.0
    %6294 = vmatprep.subr.mxu0 0.0
    %6295 = vmatpush1.msra.mxu0 0.0
    %6296 = vmatprep.subr.mxu0 0.0
    %6297 = vmatpush1.msra.mxu0 0.0
    %6298 = vmatprep.subr.mxu0 0.0
    %6299 = vmatpush1.msra.mxu0 0.0
    %6300 = vmatprep.subr.mxu0 0.0
    %6301 = vmatpush1.msra.mxu0 0.0
    %6302 = vmatprep.subr.mxu0 0.0
    %6303 = vmatpush1.msra.mxu0 0.0
    %6304 = vmatprep.subr.mxu0 0.0
    %6305 = vmatpush1.msra.mxu0 0.0
    %6306 = vmatprep.subr.mxu0 0.0
    %6307 = vmatpush1.msra.mxu0 0.0
    %6308 = vmatprep.subr.mxu0 0.0
    %6309 = vmatpush1.msra.mxu0 0.0
    %6310 = vmatprep.subr.mxu0 0.0
    %6311 = vmatpush1.msra.mxu0 0.0
    %6312 = vmatprep.subr.mxu0 0.0
    %6313 = vmatpush1.msra.mxu0 0.0
    %6314 = vmatprep.subr.mxu0 0.0
    %6315 = vmatpush1.msra.mxu0 0.0
    %6316 = vmatprep.subr.mxu0 0.0
    %6317 = vmatpush1.msra.mxu0 0.0
    %6318 = vmatprep.subr.mxu0 0.0
    %6319 = vmatpush1.msra.mxu0 0.0
    %6320 = vmatprep.subr.mxu0 0.0
    %6321 = vmatpush1.msra.mxu0 0.0
    %6322 = vmatprep.subr.mxu0 0.0
    %6323 = vmatpush1.msra.mxu0 0.0
    %6324 = vmatprep.subr.mxu0 0.0
    %6325 = vmatpush1.msra.mxu0 0.0
    %6326 = vmatprep.subr.mxu0 0.0
    %6327 = vmatpush1.msra.mxu0 0.0
    %6328 = vmatprep.subr.mxu0 0.0
    %6329 = vmatpush1.msra.mxu0 0.0
    %6330 = vmatprep.subr.mxu0 0.0
    %6331 = vmatpush1.msra.mxu0 0.0
    %6332 = vmatprep.subr.mxu0 0.0
    %6333 = vmatpush1.msra.mxu0 0.0
    %6334 = vmatprep.subr.mxu0 0.0
    %6335 = vmatpush1.msra.mxu0 0.0
    %6336 = vmatprep.subr.mxu0 0.0
    %6337 = vmatpush1.msra.mxu0 0.0
    %6338 = vmatprep.subr.mxu0 0.0
    %6339 = vmatpush1.msra.mxu0 0.0
    %6340 = vmatprep.mubr.f32.mxu0 0.0
    %6341 = vmatmul.mubr.f32.gmra.mrb[0].mxu0 %v6271
    %v6342 = vpop.f32.mrb[0].mxu0
    %v6343 = vadd.f32 %v6268, %v6342
    %v6344 = vpop.f32.mrb[0].mxu0
    %6345 = vmatprep.mubr.f32.mxu0 0.0
    %6346 = vmatmul.mubr.f32.gmra.mrb[0].mxu0 %v6274
    %v6347 = vpop.f32.mrb[0].mxu0
    %v6348 = vadd.f32 %v6268, %v6347
    %v6349 = vpop.f32.mrb[0].mxu0
    %6350 = vdwg.mxu0
    %s6351 = scalar_lea.vmem %s27, 32
    %v6352 = vld [vmem:[%s6351] sm:$0xff]
    %v6353 = vld [vmem:[%s6351 + $0x8] sm:$0xff]
    %v6354 = vld [vmem:[%s6351 + $0x10] sm:$0xff]
    %v6355 = vld [vmem:[%s6351 + $0x18] sm:$0xff]
    %s6356 = scalar_lea.vmem [#allocation5], 1
    %v6357 = vld [vmem:[%s6356] sm:$0x1]
    %v6359 = vlaneseq
    %v6360 = vshrl.u32 %v6359, 7
    %v6361 = vsub.s32 0, %v6360
    %v6362 = vrot.slane %v6357, %v6361
    %6364 = vmatprep.subr.mxu0 0.0
    %6365 = vmatpush1.msra.mxu0 %v6352
    %6366 = vmatprep.subr.mxu0 0.0
    %6367 = vmatpush1.msra.mxu0 %v6353
    %6368 = vmatprep.subr.mxu0 0.0
    %6369 = vmatpush1.msra.mxu0 %v6354
    %6370 = vmatprep.subr.mxu0 0.0
    %6371 = vmatpush1.msra.mxu0 %v6355
    %6372 = vmatprep.subr.mxu0 0.0
    %6373 = vmatpush1.msra.mxu0 0.0
    %6374 = vmatprep.subr.mxu0 0.0
    %6375 = vmatpush1.msra.mxu0 0.0
    %6376 = vmatprep.subr.mxu0 0.0
    %6377 = vmatpush1.msra.mxu0 0.0
    %6378 = vmatprep.subr.mxu0 0.0
    %6379 = vmatpush1.msra.mxu0 0.0
    %6380 = vmatprep.subr.mxu0 0.0
    %6381 = vmatpush1.msra.mxu0 0.0
    %6382 = vmatprep.subr.mxu0 0.0
    %6383 = vmatpush1.msra.mxu0 0.0
    %6384 = vmatprep.subr.mxu0 0.0
    %6385 = vmatpush1.msra.mxu0 0.0
    %6386 = vmatprep.subr.mxu0 0.0
    %6387 = vmatpush1.msra.mxu0 0.0
    %6388 = vmatprep.subr.mxu0 0.0
    %6389 = vmatpush1.msra.mxu0 0.0
    %6390 = vmatprep.subr.mxu0 0.0
    %6391 = vmatpush1.msra.mxu0 0.0
    %6392 = vmatprep.subr.mxu0 0.0
    %6393 = vmatpush1.msra.mxu0 0.0
    %6394 = vmatprep.subr.mxu0 0.0
    %6395 = vmatpush1.msra.mxu0 0.0
    %6396 = vmatprep.subr.mxu0 0.0
    %6397 = vmatpush1.msra.mxu0 0.0
    %6398 = vmatprep.subr.mxu0 0.0
    %6399 = vmatpush1.msra.mxu0 0.0
    %6400 = vmatprep.subr.mxu0 0.0
    %6401 = vmatpush1.msra.mxu0 0.0
    %6402 = vmatprep.subr.mxu0 0.0
    %6403 = vmatpush1.msra.mxu0 0.0
    %6404 = vmatprep.subr.mxu0 0.0
    %6405 = vmatpush1.msra.mxu0 0.0
    %6406 = vmatprep.subr.mxu0 0.0
    %6407 = vmatpush1.msra.mxu0 0.0
    %6408 = vmatprep.subr.mxu0 0.0
    %6409 = vmatpush1.msra.mxu0 0.0
    %6410 = vmatprep.subr.mxu0 0.0
    %6411 = vmatpush1.msra.mxu0 0.0
    %6412 = vmatprep.subr.mxu0 0.0
    %6413 = vmatpush1.msra.mxu0 0.0
    %6414 = vmatprep.subr.mxu0 0.0
    %6415 = vmatpush1.msra.mxu0 0.0
    %6416 = vmatprep.subr.mxu0 0.0
    %6417 = vmatpush1.msra.mxu0 0.0
    %6418 = vmatprep.subr.mxu0 0.0
    %6419 = vmatpush1.msra.mxu0 0.0
    %6420 = vmatprep.subr.mxu0 0.0
    %6421 = vmatpush1.msra.mxu0 0.0
    %6422 = vmatprep.subr.mxu0 0.0
    %6423 = vmatpush1.msra.mxu0 0.0
    %6424 = vmatprep.subr.mxu0 0.0
    %6425 = vmatpush1.msra.mxu0 0.0
    %6426 = vmatprep.subr.mxu0 0.0
    %6427 = vmatpush1.msra.mxu0 0.0
    %6428 = vmatprep.mubr.f32.mxu0 0.0
    %6429 = vmatmul.mubr.f32.gmra.mrb[0].mxu0 %v6271
    %v6430 = vpop.f32.mrb[0].mxu0
    %v6431 = vadd.f32 %v6362, %v6430
    %v6432 = vpop.f32.mrb[0].mxu0
    %6433 = vmatprep.mubr.f32.mxu0 0.0
    %6434 = vmatmul.mubr.f32.gmra.mrb[0].mxu0 %v6274
    %v6435 = vpop.f32.mrb[0].mxu0
    %v6436 = vadd.f32 %v6362, %v6435
    %v6437 = vpop.f32.mrb[0].mxu0
    %6438 = vdwg.mxu0
    %s6439 = scalar_lea.vmem %s31, 32
    %v6440 = vld [vmem:[%s6439] sm:$0xff]
    %v6441 = vld [vmem:[%s6439 + $0x8] sm:$0xff]
    %v6442 = vld [vmem:[%s6439 + $0x10] sm:$0xff]
    %v6443 = vld [vmem:[%s6439 + $0x18] sm:$0xff]
    %s6444 = scalar_lea.vmem [#allocation7], 1
    %v6445 = vld [vmem:[%s6444] sm:$0x1]
    %v6447 = vlaneseq
    %v6448 = vshrl.u32 %v6447, 7
    %v6449 = vsub.s32 0, %v6448
    %v6450 = vrot.slane %v6445, %v6449
    %6452 = vmatprep.subr.mxu0 0.0
    %6453 = vmatpush1.msra.mxu0 %v6440
    %6454 = vmatprep.subr.mxu0 0.0
    %6455 = vmatpush1.msra.mxu0 %v6441
    %6456 = vmatprep.subr.mxu0 0.0
    %6457 = vmatpush1.msra.mxu0 %v6442
    %6458 = vmatprep.subr.mxu0 0.0
    %6459 = vmatpush1.msra.mxu0 %v6443
    %6460 = vmatprep.subr.mxu0 0.0
    %6461 = vmatpush1.msra.mxu0 0.0
    %6462 = vmatprep.subr.mxu0 0.0
    %6463 = vmatpush1.msra.mxu0 0.0
    %6464 = vmatprep.subr.mxu0 0.0
    %6465 = vmatpush1.msra.mxu0 0.0
    %6466 = vmatprep.subr.mxu0 0.0
    %6467 = vmatpush1.msra.mxu0 0.0
    %6468 = vmatprep.subr.mxu0 0.0
    %6469 = vmatpush1.msra.mxu0 0.0
    %6470 = vmatprep.subr.mxu0 0.0
    %6471 = vmatpush1.msra.mxu0 0.0
    %6472 = vmatprep.subr.mxu0 0.0
    %6473 = vmatpush1.msra.mxu0 0.0
    %6474 = vmatprep.subr.mxu0 0.0
    %6475 = vmatpush1.msra.mxu0 0.0
    %6476 = vmatprep.subr.mxu0 0.0
    %6477 = vmatpush1.msra.mxu0 0.0
    %6478 = vmatprep.subr.mxu0 0.0
    %6479 = vmatpush1.msra.mxu0 0.0
    %6480 = vmatprep.subr.mxu0 0.0
    %6481 = vmatpush1.msra.mxu0 0.0
    %6482 = vmatprep.subr.mxu0 0.0
    %6483 = vmatpush1.msra.mxu0 0.0
    %6484 = vmatprep.subr.mxu0 0.0
    %6485 = vmatpush1.msra.mxu0 0.0
    %6486 = vmatprep.subr.mxu0 0.0
    %6487 = vmatpush1.msra.mxu0 0.0
    %6488 = vmatprep.subr.mxu0 0.0
    %6489 = vmatpush1.msra.mxu0 0.0
    %6490 = vmatprep.subr.mxu0 0.0
    %6491 = vmatpush1.msra.mxu0 0.0
    %6492 = vmatprep.subr.mxu0 0.0
    %6493 = vmatpush1.msra.mxu0 0.0
    %6494 = vmatprep.subr.mxu0 0.0
    %6495 = vmatpush1.msra.mxu0 0.0
    %6496 = vmatprep.subr.mxu0 0.0
    %6497 = vmatpush1.msra.mxu0 0.0
    %6498 = vmatprep.subr.mxu0 0.0
    %6499 = vmatpush1.msra.mxu0 0.0
    %6500 = vmatprep.subr.mxu0 0.0
    %6501 = vmatpush1.msra.mxu0 0.0
    %6502 = vmatprep.subr.mxu0 0.0
    %6503 = vmatpush1.msra.mxu0 0.0
    %6504 = vmatprep.subr.mxu0 0.0
    %6505 = vmatpush1.msra.mxu0 0.0
    %6506 = vmatprep.subr.mxu0 0.0
    %6507 = vmatpush1.msra.mxu0 0.0
    %6508 = vmatprep.subr.mxu0 0.0
    %6509 = vmatpush1.msra.mxu0 0.0
    %6510 = vmatprep.subr.mxu0 0.0
    %6511 = vmatpush1.msra.mxu0 0.0
    %6512 = vmatprep.subr.mxu0 0.0
    %6513 = vmatpush1.msra.mxu0 0.0
    %6514 = vmatprep.subr.mxu0 0.0
    %6515 = vmatpush1.msra.mxu0 0.0
    %6516 = vmatprep.mubr.f32.mxu0 0.0
    %6517 = vmatmul.mubr.f32.gmra.mrb[0].mxu0 %v6271
    %v6518 = vpop.f32.mrb[0].mxu0
    %v6519 = vadd.f32 %v6450, %v6518
    %v6520 = vpop.f32.mrb[0].mxu0
    %6521 = vmatprep.mubr.f32.mxu0 0.0
    %6522 = vmatmul.mubr.f32.gmra.mrb[0].mxu0 %v6274
    %v6523 = vpop.f32.mrb[0].mxu0
    %v6524 = vadd.f32 %v6450, %v6523
    %v6525 = vpop.f32.mrb[0].mxu0
    %6526 = vdwg.mxu0
    %v6527 = vmul.f32 %v6519, -5.0
    %v6528 = vmul.f32 %v6524, -5.0
    %v6529 = vmul.f32 %v6527, 1.442695
    %v6530 = vpow.pop %v6529
    %v6531 = vmul.f32 %v6528, 1.442695
    %v6532 = vpow.pop %v6531
    %v6533 = vadd.f32 %v6530, 1.0
    %v6534 = vadd.f32 %v6532, 1.0
    %v6535 = vrcp.pop %v6533
    %v6536 = vmul.f32 1.0, %v6535
    %v6537 = vrcp.pop %v6534
    %v6538 = vmul.f32 1.0, %v6537
    %v6539 = vadd.f32 %v6536, 1e-05
    %v6540 = vadd.f32 %v6538, 1e-05
    %v6541 = vmul.f32 %v6539, 1.0986123
    %v6542 = vmul.f32 %v6540, 1.0986123
    %v6543 = vmul.f32 %v6541, 1.442695
    %v6544 = vpow.pop %v6543
    %v6545 = vmul.f32 %v6542, 1.442695
    %v6546 = vpow.pop %v6545
    %v6547 = vsub.f32 %v6544, 1.0
    %v6548 = vsub.f32 %v6546, 1.0
    %v6549 = vrcp.pop %v6547
    %v6550 = vmul.f32 1.0, %v6549
    %v6551 = vrcp.pop %v6548
    %v6552 = vmul.f32 1.0, %v6551
    %s6553 = scalar_lea.vmem %s63, 16
    %6554 = vst.msk [vmem:[%s6553] sm:$0xff] %vm451, %v6547
    %6555 = vst.msk [vmem:[%s6553 + $0x8] sm:$0xff] %vm451, %v6548
    %v6557 = vsel %vm3994, %v6249, 0
    %v6560 = vsel %vm3994, %v6343, 0
    %6562 = vmatprep.subr.mxu0 0.0
    %6563 = vmatpush1.xpose.msra.mxu0 %v6560
    %6564 = vmatprep.subr.mxu0 0.0
    %6565 = vmatpush1.xpose.msra.mxu0 0.0
    %6566 = vmatprep.subr.mxu0 0.0
    %6567 = vmatpush1.xpose.msra.mxu0 0.0
    %6568 = vmatprep.subr.mxu0 0.0
    %6569 = vmatpush1.xpose.msra.mxu0 0.0
    %6570 = vmatprep.subr.mxu0 0.0
    %6571 = vmatpush1.xpose.msra.mxu0 0.0
    %6572 = vmatprep.subr.mxu0 0.0
    %6573 = vmatpush1.xpose.msra.mxu0 0.0
    %6574 = vmatprep.subr.mxu0 0.0
    %6575 = vmatpush1.xpose.msra.mxu0 0.0
    %6576 = vmatprep.subr.mxu0 0.0
    %6577 = vmatpush1.xpose.msra.mxu0 0.0
    %6578 = vmatprep.subr.mxu0 0.0
    %6579 = vmatpush1.xpose.msra.mxu0 0.0
    %6580 = vmatprep.subr.mxu0 0.0
    %6581 = vmatpush1.xpose.msra.mxu0 0.0
    %6582 = vmatprep.subr.mxu0 0.0
    %6583 = vmatpush1.xpose.msra.mxu0 0.0
    %6584 = vmatprep.subr.mxu0 0.0
    %6585 = vmatpush1.xpose.msra.mxu0 0.0
    %6586 = vmatprep.subr.mxu0 0.0
    %6587 = vmatpush1.xpose.msra.mxu0 0.0
    %6588 = vmatprep.subr.mxu0 0.0
    %6589 = vmatpush1.xpose.msra.mxu0 0.0
    %6590 = vmatprep.subr.mxu0 0.0
    %6591 = vmatpush1.xpose.msra.mxu0 0.0
    %6592 = vmatprep.subr.mxu0 0.0
    %6593 = vmatpush1.xpose.msra.mxu0 0.0
    %6594 = vmatprep.subr.mxu0 0.0
    %6595 = vmatpush1.xpose.msra.mxu0 0.0
    %6596 = vmatprep.subr.mxu0 0.0
    %6597 = vmatpush1.xpose.msra.mxu0 0.0
    %6598 = vmatprep.subr.mxu0 0.0
    %6599 = vmatpush1.xpose.msra.mxu0 0.0
    %6600 = vmatprep.subr.mxu0 0.0
    %6601 = vmatpush1.xpose.msra.mxu0 0.0
    %6602 = vmatprep.subr.mxu0 0.0
    %6603 = vmatpush1.xpose.msra.mxu0 0.0
    %6604 = vmatprep.subr.mxu0 0.0
    %6605 = vmatpush1.xpose.msra.mxu0 0.0
    %6606 = vmatprep.subr.mxu0 0.0
    %6607 = vmatpush1.xpose.msra.mxu0 0.0
    %6608 = vmatprep.subr.mxu0 0.0
    %6609 = vmatpush1.xpose.msra.mxu0 0.0
    %6610 = vmatprep.subr.mxu0 0.0
    %6611 = vmatpush1.xpose.msra.mxu0 0.0
    %6612 = vmatprep.subr.mxu0 0.0
    %6613 = vmatpush1.xpose.msra.mxu0 0.0
    %6614 = vmatprep.subr.mxu0 0.0
    %6615 = vmatpush1.xpose.msra.mxu0 0.0
    %6616 = vmatprep.subr.mxu0 0.0
    %6617 = vmatpush1.xpose.msra.mxu0 0.0
    %6618 = vmatprep.subr.mxu0 0.0
    %6619 = vmatpush1.xpose.msra.mxu0 0.0
    %6620 = vmatprep.subr.mxu0 0.0
    %6621 = vmatpush1.xpose.msra.mxu0 0.0
    %6622 = vmatprep.subr.mxu0 0.0
    %6623 = vmatpush1.xpose.msra.mxu0 0.0
    %6624 = vmatprep.subr.mxu0 0.0
    %6625 = vmatpush1.xpose.msra.mxu0 0.0
    %6626 = vmatprep.mubr.f32.mxu0 0.0
    %6627 = vmatmul.mubr.f32.gmra.mrb[0].mxu0 %v6557
    %v6628 = vpop.f32.mrb[0].mxu0
    %v6629 = vadd.f32 0.0, %v6628
    %v6630 = vpop.f32.mrb[0].mxu0
    %6631 = vdwg.mxu0
    %v6633 = vsel %vm3994, %v6254, 0
    %v6636 = vsel %vm3994, %v6348, 0
    %6638 = vmatprep.subr.mxu0 0.0
    %6639 = vmatpush1.xpose.msra.mxu0 %v6636
    %6640 = vmatprep.subr.mxu0 0.0
    %6641 = vmatpush1.xpose.msra.mxu0 0.0
    %6642 = vmatprep.subr.mxu0 0.0
    %6643 = vmatpush1.xpose.msra.mxu0 0.0
    %6644 = vmatprep.subr.mxu0 0.0
    %6645 = vmatpush1.xpose.msra.mxu0 0.0
    %6646 = vmatprep.subr.mxu0 0.0
    %6647 = vmatpush1.xpose.msra.mxu0 0.0
    %6648 = vmatprep.subr.mxu0 0.0
    %6649 = vmatpush1.xpose.msra.mxu0 0.0
    %6650 = vmatprep.subr.mxu0 0.0
    %6651 = vmatpush1.xpose.msra.mxu0 0.0
    %6652 = vmatprep.subr.mxu0 0.0
    %6653 = vmatpush1.xpose.msra.mxu0 0.0
    %6654 = vmatprep.subr.mxu0 0.0
    %6655 = vmatpush1.xpose.msra.mxu0 0.0
    %6656 = vmatprep.subr.mxu0 0.0
    %6657 = vmatpush1.xpose.msra.mxu0 0.0
    %6658 = vmatprep.subr.mxu0 0.0
    %6659 = vmatpush1.xpose.msra.mxu0 0.0
    %6660 = vmatprep.subr.mxu0 0.0
    %6661 = vmatpush1.xpose.msra.mxu0 0.0
    %6662 = vmatprep.subr.mxu0 0.0
    %6663 = vmatpush1.xpose.msra.mxu0 0.0
    %6664 = vmatprep.subr.mxu0 0.0
    %6665 = vmatpush1.xpose.msra.mxu0 0.0
    %6666 = vmatprep.subr.mxu0 0.0
    %6667 = vmatpush1.xpose.msra.mxu0 0.0
    %6668 = vmatprep.subr.mxu0 0.0
    %6669 = vmatpush1.xpose.msra.mxu0 0.0
    %6670 = vmatprep.subr.mxu0 0.0
    %6671 = vmatpush1.xpose.msra.mxu0 0.0
    %6672 = vmatprep.subr.mxu0 0.0
    %6673 = vmatpush1.xpose.msra.mxu0 0.0
    %6674 = vmatprep.subr.mxu0 0.0
    %6675 = vmatpush1.xpose.msra.mxu0 0.0
    %6676 = vmatprep.subr.mxu0 0.0
    %6677 = vmatpush1.xpose.msra.mxu0 0.0
    %6678 = vmatprep.subr.mxu0 0.0
    %6679 = vmatpush1.xpose.msra.mxu0 0.0
    %6680 = vmatprep.subr.mxu0 0.0
    %6681 = vmatpush1.xpose.msra.mxu0 0.0
    %6682 = vmatprep.subr.mxu0 0.0
    %6683 = vmatpush1.xpose.msra.mxu0 0.0
    %6684 = vmatprep.subr.mxu0 0.0
    %6685 = vmatpush1.xpose.msra.mxu0 0.0
    %6686 = vmatprep.subr.mxu0 0.0
    %6687 = vmatpush1.xpose.msra.mxu0 0.0
    %6688 = vmatprep.subr.mxu0 0.0
    %6689 = vmatpush1.xpose.msra.mxu0 0.0
    %6690 = vmatprep.subr.mxu0 0.0
    %6691 = vmatpush1.xpose.msra.mxu0 0.0
    %6692 = vmatprep.subr.mxu0 0.0
    %6693 = vmatpush1.xpose.msra.mxu0 0.0
    %6694 = vmatprep.subr.mxu0 0.0
    %6695 = vmatpush1.xpose.msra.mxu0 0.0
    %6696 = vmatprep.subr.mxu0 0.0
    %6697 = vmatpush1.xpose.msra.mxu0 0.0
    %6698 = vmatprep.subr.mxu0 0.0
    %6699 = vmatpush1.xpose.msra.mxu0 0.0
    %6700 = vmatprep.subr.mxu0 0.0
    %6701 = vmatpush1.xpose.msra.mxu0 0.0
    %6702 = vmatprep.mubr.f32.mxu0 0.0
    %6703 = vmatmul.mubr.f32.gmra.mrb[0].mxu0 %v6633
    %v6704 = vpop.f32.mrb[0].mxu0
    %v6705 = vadd.f32 0.0, %v6704
    %v6706 = vpop.f32.mrb[0].mxu0
    %6707 = vdwg.mxu0
    %v6708 = vmul.f32 %v6629, 0.35355338
    %v6709 = vmul.f32 %v6705, 0.35355338
    %v6710 = vsel %vm3994, %v6708, -inf
    %6711 = vmax.xlane.f32.xlu0 %v6710
    %v6712 = vpop.xlane.xlu0 %6711
    %v6713 = vsel %vm3994, %v6709, -inf
    %6714 = vmax.xlane.f32.xlu0 %v6713
    %v6715 = vpop.xlane.xlu0 %6714
    %v6716 = vsub.f32 %v6708, %v6712
    %v6717 = vsub.f32 %v6709, %v6715
    %v6718 = vmul.f32 %v6716, 1.442695
    %v6719 = vpow.pop %v6718
    %v6720 = vmul.f32 %v6717, 1.442695
    %v6721 = vpow.pop %v6720
    %v6722 = vsel %vm3994, %v6719, 0.0
    %6723 = vadd.xlane.f32.xlu0 %v6722
    %v6724 = vpop.xlane.xlu0 %6723
    %v6725 = vsel %vm3994, %v6721, 0.0
    %6726 = vadd.xlane.f32.xlu0 %v6725
    %v6727 = vpop.xlane.xlu0 %6726
    %v6728 = vrcp.pop %v6724
    %v6729 = vmul.f32 %v6719, %v6728
    %v6730 = vrcp.pop %v6727
    %v6731 = vmul.f32 %v6721, %v6730
    %v6732 = vmul.f32 %v6550, 0.3989423
    %v6733 = vmul.f32 %v6552, 0.3989423
    %6735 = vset.pattern.permute.xlu0 0
    %6736 = vperm.xlu0 %6735, %v6550
    %v6737 = vpop.permute.xlu0 %6736
    %6740 = vset.pattern.permute.xlu0 0
    %6741 = vperm.xlu0 %6740, %v6552
    %v6742 = vpop.permute.xlu0 %6741
    %v6744 = vmul.f32 %v281, %v6737
    %v6745 = vmul.f32 %v281, %v6742
    %v6746 = vmul.f32 %v6744, %v6737
    %v6747 = vmul.f32 %v6745, %v6742
    %v6748 = vmul.f32 %v6746, 1.442695
    %v6749 = vpow.pop %v6748
    %v6750 = vmul.f32 %v6747, 1.442695
    %v6751 = vpow.pop %v6750
    %6753 = vset.pattern.permute.xlu0 0
    %6754 = vperm.xlu0 %6753, %v6732
    %v6755 = vpop.permute.xlu0 %6754
    %6758 = vset.pattern.permute.xlu0 0
    %6759 = vperm.xlu0 %6758, %v6733
    %v6760 = vpop.permute.xlu0 %6759
    %v6762 = vmul.f32 %v6755, %v6749
    %v6763 = vmul.f32 %v6760, %v6751
    %v6765 = vsel %vm3994, %v6729, 0
    %6767 = vmatprep.subr.mxu0 0.0
    %6768 = vmatpush1.msra.mxu0 %v6431
    %6769 = vmatprep.subr.mxu0 0.0
    %6770 = vmatpush1.msra.mxu0 0.0
    %6771 = vmatprep.subr.mxu0 0.0
    %6772 = vmatpush1.msra.mxu0 0.0
    %6773 = vmatprep.subr.mxu0 0.0
    %6774 = vmatpush1.msra.mxu0 0.0
    %6775 = vmatprep.subr.mxu0 0.0
    %6776 = vmatpush1.msra.mxu0 0.0
    %6777 = vmatprep.subr.mxu0 0.0
    %6778 = vmatpush1.msra.mxu0 0.0
    %6779 = vmatprep.subr.mxu0 0.0
    %6780 = vmatpush1.msra.mxu0 0.0
    %6781 = vmatprep.subr.mxu0 0.0
    %6782 = vmatpush1.msra.mxu0 0.0
    %6783 = vmatprep.subr.mxu0 0.0
    %6784 = vmatpush1.msra.mxu0 0.0
    %6785 = vmatprep.subr.mxu0 0.0
    %6786 = vmatpush1.msra.mxu0 0.0
    %6787 = vmatprep.subr.mxu0 0.0
    %6788 = vmatpush1.msra.mxu0 0.0
    %6789 = vmatprep.subr.mxu0 0.0
    %6790 = vmatpush1.msra.mxu0 0.0
    %6791 = vmatprep.subr.mxu0 0.0
    %6792 = vmatpush1.msra.mxu0 0.0
    %6793 = vmatprep.subr.mxu0 0.0
    %6794 = vmatpush1.msra.mxu0 0.0
    %6795 = vmatprep.subr.mxu0 0.0
    %6796 = vmatpush1.msra.mxu0 0.0
    %6797 = vmatprep.subr.mxu0 0.0
    %6798 = vmatpush1.msra.mxu0 0.0
    %6799 = vmatprep.subr.mxu0 0.0
    %6800 = vmatpush1.msra.mxu0 0.0
    %6801 = vmatprep.subr.mxu0 0.0
    %6802 = vmatpush1.msra.mxu0 0.0
    %6803 = vmatprep.subr.mxu0 0.0
    %6804 = vmatpush1.msra.mxu0 0.0
    %6805 = vmatprep.subr.mxu0 0.0
    %6806 = vmatpush1.msra.mxu0 0.0
    %6807 = vmatprep.subr.mxu0 0.0
    %6808 = vmatpush1.msra.mxu0 0.0
    %6809 = vmatprep.subr.mxu0 0.0
    %6810 = vmatpush1.msra.mxu0 0.0
    %6811 = vmatprep.subr.mxu0 0.0
    %6812 = vmatpush1.msra.mxu0 0.0
    %6813 = vmatprep.subr.mxu0 0.0
    %6814 = vmatpush1.msra.mxu0 0.0
    %6815 = vmatprep.subr.mxu0 0.0
    %6816 = vmatpush1.msra.mxu0 0.0
    %6817 = vmatprep.subr.mxu0 0.0
    %6818 = vmatpush1.msra.mxu0 0.0
    %6819 = vmatprep.subr.mxu0 0.0
    %6820 = vmatpush1.msra.mxu0 0.0
    %6821 = vmatprep.subr.mxu0 0.0
    %6822 = vmatpush1.msra.mxu0 0.0
    %6823 = vmatprep.subr.mxu0 0.0
    %6824 = vmatpush1.msra.mxu0 0.0
    %6825 = vmatprep.subr.mxu0 0.0
    %6826 = vmatpush1.msra.mxu0 0.0
    %6827 = vmatprep.subr.mxu0 0.0
    %6828 = vmatpush1.msra.mxu0 0.0
    %6829 = vmatprep.subr.mxu0 0.0
    %6830 = vmatpush1.msra.mxu0 0.0
    %6831 = vmatprep.mubr.f32.mxu0 0.0
    %6832 = vmatmul.mubr.f32.gmra.mrb[0].mxu0 %v6765
    %v6833 = vpop.f32.mrb[0].mxu0
    %v6834 = vadd.f32 0.0, %v6833
    %v6835 = vpop.f32.mrb[0].mxu0
    %6836 = vdwg.mxu0
    %v6838 = vsel %vm3994, %v6731, 0
    %6840 = vmatprep.subr.mxu0 0.0
    %6841 = vmatpush1.msra.mxu0 %v6436
    %6842 = vmatprep.subr.mxu0 0.0
    %6843 = vmatpush1.msra.mxu0 0.0
    %6844 = vmatprep.subr.mxu0 0.0
    %6845 = vmatpush1.msra.mxu0 0.0
    %6846 = vmatprep.subr.mxu0 0.0
    %6847 = vmatpush1.msra.mxu0 0.0
    %6848 = vmatprep.subr.mxu0 0.0
    %6849 = vmatpush1.msra.mxu0 0.0
    %6850 = vmatprep.subr.mxu0 0.0
    %6851 = vmatpush1.msra.mxu0 0.0
    %6852 = vmatprep.subr.mxu0 0.0
    %6853 = vmatpush1.msra.mxu0 0.0
    %6854 = vmatprep.subr.mxu0 0.0
    %6855 = vmatpush1.msra.mxu0 0.0
    %6856 = vmatprep.subr.mxu0 0.0
    %6857 = vmatpush1.msra.mxu0 0.0
    %6858 = vmatprep.subr.mxu0 0.0
    %6859 = vmatpush1.msra.mxu0 0.0
    %6860 = vmatprep.subr.mxu0 0.0
    %6861 = vmatpush1.msra.mxu0 0.0
    %6862 = vmatprep.subr.mxu0 0.0
    %6863 = vmatpush1.msra.mxu0 0.0
    %6864 = vmatprep.subr.mxu0 0.0
    %6865 = vmatpush1.msra.mxu0 0.0
    %6866 = vmatprep.subr.mxu0 0.0
    %6867 = vmatpush1.msra.mxu0 0.0
    %6868 = vmatprep.subr.mxu0 0.0
    %6869 = vmatpush1.msra.mxu0 0.0
    %6870 = vmatprep.subr.mxu0 0.0
    %6871 = vmatpush1.msra.mxu0 0.0
    %6872 = vmatprep.subr.mxu0 0.0
    %6873 = vmatpush1.msra.mxu0 0.0
    %6874 = vmatprep.subr.mxu0 0.0
    %6875 = vmatpush1.msra.mxu0 0.0
    %6876 = vmatprep.subr.mxu0 0.0
    %6877 = vmatpush1.msra.mxu0 0.0
    %6878 = vmatprep.subr.mxu0 0.0
    %6879 = vmatpush1.msra.mxu0 0.0
    %6880 = vmatprep.subr.mxu0 0.0
    %6881 = vmatpush1.msra.mxu0 0.0
    %6882 = vmatprep.subr.mxu0 0.0
    %6883 = vmatpush1.msra.mxu0 0.0
    %6884 = vmatprep.subr.mxu0 0.0
    %6885 = vmatpush1.msra.mxu0 0.0
    %6886 = vmatprep.subr.mxu0 0.0
    %6887 = vmatpush1.msra.mxu0 0.0
    %6888 = vmatprep.subr.mxu0 0.0
    %6889 = vmatpush1.msra.mxu0 0.0
    %6890 = vmatprep.subr.mxu0 0.0
    %6891 = vmatpush1.msra.mxu0 0.0
    %6892 = vmatprep.subr.mxu0 0.0
    %6893 = vmatpush1.msra.mxu0 0.0
    %6894 = vmatprep.subr.mxu0 0.0
    %6895 = vmatpush1.msra.mxu0 0.0
    %6896 = vmatprep.subr.mxu0 0.0
    %6897 = vmatpush1.msra.mxu0 0.0
    %6898 = vmatprep.subr.mxu0 0.0
    %6899 = vmatpush1.msra.mxu0 0.0
    %6900 = vmatprep.subr.mxu0 0.0
    %6901 = vmatpush1.msra.mxu0 0.0
    %6902 = vmatprep.subr.mxu0 0.0
    %6903 = vmatpush1.msra.mxu0 0.0
    %6904 = vmatprep.mubr.f32.mxu0 0.0
    %6905 = vmatmul.mubr.f32.gmra.mrb[0].mxu0 %v6838
    %v6906 = vpop.f32.mrb[0].mxu0
    %v6907 = vadd.f32 0.0, %v6906
    %v6908 = vpop.f32.mrb[0].mxu0
    %6909 = vdwg.mxu0
    %6910 = vst.msk [vmem:[#allocation2] sm:$0xff] %vm3994, %v6834
    %6911 = vst.msk [vmem:[#allocation2 + $0x8] sm:$0xff] %vm3994, %v6907
    %s6912 = scalar_lea.vmem %s59, 64
    %6913 = vst.msk [vmem:[%s6912] sm:$0xff] %vm3994, %v6729
    %s6914 = scalar_lea.vmem %s61, 64
    %6915 = vst.msk [vmem:[%s6914] sm:$0xff] %vm3994, %v6762
    %s6916 = scalar_lea.vmem %s59, 96
    %6917 = vst.msk [vmem:[%s6916] sm:$0xff] %vm3994, %v6731
    %s6918 = scalar_lea.vmem %s61, 96
    %6919 = vst.msk [vmem:[%s6918] sm:$0xff] %vm3994, %v6763
    %6920 = vrot.lane.b32.xlu0 %v6249, 120
    %v6921 = vpop.permute.xlu0 %6920
    %6922 = vrot.lane.b32.xlu0 %v6343, 120
    %v6923 = vpop.permute.xlu0 %6922
    %v6924 = vsel %vm3994, %v6921, 0
    %v6926 = vsel %vm3994, %v6923, 0
    %6928 = vmatprep.subr.mxu0 0.0
    %6929 = vmatpush1.xpose.msra.mxu0 %v6926
    %6930 = vmatprep.subr.mxu0 0.0
    %6931 = vmatpush1.xpose.msra.mxu0 0.0
    %6932 = vmatprep.subr.mxu0 0.0
    %6933 = vmatpush1.xpose.msra.mxu0 0.0
    %6934 = vmatprep.subr.mxu0 0.0
    %6935 = vmatpush1.xpose.msra.mxu0 0.0
    %6936 = vmatprep.subr.mxu0 0.0
    %6937 = vmatpush1.xpose.msra.mxu0 0.0
    %6938 = vmatprep.subr.mxu0 0.0
    %6939 = vmatpush1.xpose.msra.mxu0 0.0
    %6940 = vmatprep.subr.mxu0 0.0
    %6941 = vmatpush1.xpose.msra.mxu0 0.0
    %6942 = vmatprep.subr.mxu0 0.0
    %6943 = vmatpush1.xpose.msra.mxu0 0.0
    %6944 = vmatprep.subr.mxu0 0.0
    %6945 = vmatpush1.xpose.msra.mxu0 0.0
    %6946 = vmatprep.subr.mxu0 0.0
    %6947 = vmatpush1.xpose.msra.mxu0 0.0
    %6948 = vmatprep.subr.mxu0 0.0
    %6949 = vmatpush1.xpose.msra.mxu0 0.0
    %6950 = vmatprep.subr.mxu0 0.0
    %6951 = vmatpush1.xpose.msra.mxu0 0.0
    %6952 = vmatprep.subr.mxu0 0.0
    %6953 = vmatpush1.xpose.msra.mxu0 0.0
    %6954 = vmatprep.subr.mxu0 0.0
    %6955 = vmatpush1.xpose.msra.mxu0 0.0
    %6956 = vmatprep.subr.mxu0 0.0
    %6957 = vmatpush1.xpose.msra.mxu0 0.0
    %6958 = vmatprep.subr.mxu0 0.0
    %6959 = vmatpush1.xpose.msra.mxu0 0.0
    %6960 = vmatprep.subr.mxu0 0.0
    %6961 = vmatpush1.xpose.msra.mxu0 0.0
    %6962 = vmatprep.subr.mxu0 0.0
    %6963 = vmatpush1.xpose.msra.mxu0 0.0
    %6964 = vmatprep.subr.mxu0 0.0
    %6965 = vmatpush1.xpose.msra.mxu0 0.0
    %6966 = vmatprep.subr.mxu0 0.0
    %6967 = vmatpush1.xpose.msra.mxu0 0.0
    %6968 = vmatprep.subr.mxu0 0.0
    %6969 = vmatpush1.xpose.msra.mxu0 0.0
    %6970 = vmatprep.subr.mxu0 0.0
    %6971 = vmatpush1.xpose.msra.mxu0 0.0
    %6972 = vmatprep.subr.mxu0 0.0
    %6973 = vmatpush1.xpose.msra.mxu0 0.0
    %6974 = vmatprep.subr.mxu0 0.0
    %6975 = vmatpush1.xpose.msra.mxu0 0.0
    %6976 = vmatprep.subr.mxu0 0.0
    %6977 = vmatpush1.xpose.msra.mxu0 0.0
    %6978 = vmatprep.subr.mxu0 0.0
    %6979 = vmatpush1.xpose.msra.mxu0 0.0
    %6980 = vmatprep.subr.mxu0 0.0
    %6981 = vmatpush1.xpose.msra.mxu0 0.0
    %6982 = vmatprep.subr.mxu0 0.0
    %6983 = vmatpush1.xpose.msra.mxu0 0.0
    %6984 = vmatprep.subr.mxu0 0.0
    %6985 = vmatpush1.xpose.msra.mxu0 0.0
    %6986 = vmatprep.subr.mxu0 0.0
    %6987 = vmatpush1.xpose.msra.mxu0 0.0
    %6988 = vmatprep.subr.mxu0 0.0
    %6989 = vmatpush1.xpose.msra.mxu0 0.0
    %6990 = vmatprep.subr.mxu0 0.0
    %6991 = vmatpush1.xpose.msra.mxu0 0.0
    %6992 = vmatprep.mubr.f32.mxu0 0.0
    %6993 = vmatmul.mubr.f32.gmra.mrb[0].mxu0 %v6924
    %v6994 = vpop.f32.mrb[0].mxu0
    %v6995 = vadd.f32 0.0, %v6994
    %v6996 = vpop.f32.mrb[0].mxu0
    %6997 = vdwg.mxu0
    %6998 = vrot.lane.b32.xlu0 %v6254, 120
    %v6999 = vpop.permute.xlu0 %6998
    %7000 = vrot.lane.b32.xlu0 %v6348, 120
    %v7001 = vpop.permute.xlu0 %7000
    %v7002 = vsel %vm3994, %v6999, 0
    %v7004 = vsel %vm3994, %v7001, 0
    %7006 = vmatprep.subr.mxu0 0.0
    %7007 = vmatpush1.xpose.msra.mxu0 %v7004
    %7008 = vmatprep.subr.mxu0 0.0
    %7009 = vmatpush1.xpose.msra.mxu0 0.0
    %7010 = vmatprep.subr.mxu0 0.0
    %7011 = vmatpush1.xpose.msra.mxu0 0.0
    %7012 = vmatprep.subr.mxu0 0.0
    %7013 = vmatpush1.xpose.msra.mxu0 0.0
    %7014 = vmatprep.subr.mxu0 0.0
    %7015 = vmatpush1.xpose.msra.mxu0 0.0
    %7016 = vmatprep.subr.mxu0 0.0
    %7017 = vmatpush1.xpose.msra.mxu0 0.0
    %7018 = vmatprep.subr.mxu0 0.0
    %7019 = vmatpush1.xpose.msra.mxu0 0.0
    %7020 = vmatprep.subr.mxu0 0.0
    %7021 = vmatpush1.xpose.msra.mxu0 0.0
    %7022 = vmatprep.subr.mxu0 0.0
    %7023 = vmatpush1.xpose.msra.mxu0 0.0
    %7024 = vmatprep.subr.mxu0 0.0
    %7025 = vmatpush1.xpose.msra.mxu0 0.0
    %7026 = vmatprep.subr.mxu0 0.0
    %7027 = vmatpush1.xpose.msra.mxu0 0.0
    %7028 = vmatprep.subr.mxu0 0.0
    %7029 = vmatpush1.xpose.msra.mxu0 0.0
    %7030 = vmatprep.subr.mxu0 0.0
    %7031 = vmatpush1.xpose.msra.mxu0 0.0
    %7032 = vmatprep.subr.mxu0 0.0
    %7033 = vmatpush1.xpose.msra.mxu0 0.0
    %7034 = vmatprep.subr.mxu0 0.0
    %7035 = vmatpush1.xpose.msra.mxu0 0.0
    %7036 = vmatprep.subr.mxu0 0.0
    %7037 = vmatpush1.xpose.msra.mxu0 0.0
    %7038 = vmatprep.subr.mxu0 0.0
    %7039 = vmatpush1.xpose.msra.mxu0 0.0
    %7040 = vmatprep.subr.mxu0 0.0
    %7041 = vmatpush1.xpose.msra.mxu0 0.0
    %7042 = vmatprep.subr.mxu0 0.0
    %7043 = vmatpush1.xpose.msra.mxu0 0.0
    %7044 = vmatprep.subr.mxu0 0.0
    %7045 = vmatpush1.xpose.msra.mxu0 0.0
    %7046 = vmatprep.subr.mxu0 0.0
    %7047 = vmatpush1.xpose.msra.mxu0 0.0
    %7048 = vmatprep.subr.mxu0 0.0
    %7049 = vmatpush1.xpose.msra.mxu0 0.0
    %7050 = vmatprep.subr.mxu0 0.0
    %7051 = vmatpush1.xpose.msra.mxu0 0.0
    %7052 = vmatprep.subr.mxu0 0.0
    %7053 = vmatpush1.xpose.msra.mxu0 0.0
    %7054 = vmatprep.subr.mxu0 0.0
    %7055 = vmatpush1.xpose.msra.mxu0 0.0
    %7056 = vmatprep.subr.mxu0 0.0
    %7057 = vmatpush1.xpose.msra.mxu0 0.0
    %7058 = vmatprep.subr.mxu0 0.0
    %7059 = vmatpush1.xpose.msra.mxu0 0.0
    %7060 = vmatprep.subr.mxu0 0.0
    %7061 = vmatpush1.xpose.msra.mxu0 0.0
    %7062 = vmatprep.subr.mxu0 0.0
    %7063 = vmatpush1.xpose.msra.mxu0 0.0
    %7064 = vmatprep.subr.mxu0 0.0
    %7065 = vmatpush1.xpose.msra.mxu0 0.0
    %7066 = vmatprep.subr.mxu0 0.0
    %7067 = vmatpush1.xpose.msra.mxu0 0.0
    %7068 = vmatprep.subr.mxu0 0.0
    %7069 = vmatpush1.xpose.msra.mxu0 0.0
    %7070 = vmatprep.mubr.f32.mxu0 0.0
    %7071 = vmatmul.mubr.f32.gmra.mrb[0].mxu0 %v7002
    %v7072 = vpop.f32.mrb[0].mxu0
    %v7073 = vadd.f32 0.0, %v7072
    %v7074 = vpop.f32.mrb[0].mxu0
    %7075 = vdwg.mxu0
    %v7076 = vmul.f32 %v6995, 0.35355338
    %v7077 = vmul.f32 %v7073, 0.35355338
    %v7078 = vsel %vm3994, %v7076, -inf
    %7079 = vmax.xlane.f32.xlu0 %v7078
    %v7080 = vpop.xlane.xlu0 %7079
    %v7081 = vsel %vm3994, %v7077, -inf
    %7082 = vmax.xlane.f32.xlu0 %v7081
    %v7083 = vpop.xlane.xlu0 %7082
    %v7084 = vsub.f32 %v7076, %v7080
    %v7085 = vsub.f32 %v7077, %v7083
    %v7086 = vmul.f32 %v7084, 1.442695
    %v7087 = vpow.pop %v7086
    %v7088 = vmul.f32 %v7085, 1.442695
    %v7089 = vpow.pop %v7088
    %v7090 = vsel %vm3994, %v7087, 0.0
    %7091 = vadd.xlane.f32.xlu0 %v7090
    %v7092 = vpop.xlane.xlu0 %7091
    %v7093 = vsel %vm3994, %v7089, 0.0
    %7094 = vadd.xlane.f32.xlu0 %v7093
    %v7095 = vpop.xlane.xlu0 %7094
    %v7096 = vrcp.pop %v7092
    %v7097 = vmul.f32 %v7087, %v7096
    %v7098 = vrcp.pop %v7095
    %v7099 = vmul.f32 %v7089, %v7098
    %7100 = vset.pattern.permute.xlu0 1
    %7101 = vperm.xlu0 %7100, %v6550
    %v7102 = vpop.permute.xlu0 %7101
    %7104 = vset.pattern.permute.xlu0 1
    %7105 = vperm.xlu0 %7104, %v6552
    %v7106 = vpop.permute.xlu0 %7105
    %v7108 = vmul.f32 %v281, %v7102
    %v7109 = vmul.f32 %v281, %v7106
    %v7110 = vmul.f32 %v7108, %v7102
    %v7111 = vmul.f32 %v7109, %v7106
    %v7112 = vmul.f32 %v7110, 1.442695
    %v7113 = vpow.pop %v7112
    %v7114 = vmul.f32 %v7111, 1.442695
    %v7115 = vpow.pop %v7114
    %7116 = vset.pattern.permute.xlu0 1
    %7117 = vperm.xlu0 %7116, %v6732
    %v7118 = vpop.permute.xlu0 %7117
    %7120 = vset.pattern.permute.xlu0 1
    %7121 = vperm.xlu0 %7120, %v6733
    %v7122 = vpop.permute.xlu0 %7121
    %v7124 = vmul.f32 %v7118, %v7113
    %v7125 = vmul.f32 %v7122, %v7115
    %7127 = vrot.lane.b32.xlu0 %v6431, 120
    %v7128 = vpop.permute.xlu0 %7127
    %v7131 = vsel %vm3994, %v7097, 0
    %7133 = vmatprep.subr.mxu0 0.0
    %7134 = vmatpush1.msra.mxu0 %v7128
    %7135 = vmatprep.subr.mxu0 0.0
    %7136 = vmatpush1.msra.mxu0 0.0
    %7137 = vmatprep.subr.mxu0 0.0
    %7138 = vmatpush1.msra.mxu0 0.0
    %7139 = vmatprep.subr.mxu0 0.0
    %7140 = vmatpush1.msra.mxu0 0.0
    %7141 = vmatprep.subr.mxu0 0.0
    %7142 = vmatpush1.msra.mxu0 0.0
    %7143 = vmatprep.subr.mxu0 0.0
    %7144 = vmatpush1.msra.mxu0 0.0
    %7145 = vmatprep.subr.mxu0 0.0
    %7146 = vmatpush1.msra.mxu0 0.0
    %7147 = vmatprep.subr.mxu0 0.0
    %7148 = vmatpush1.msra.mxu0 0.0
    %7149 = vmatprep.subr.mxu0 0.0
    %7150 = vmatpush1.msra.mxu0 0.0
    %7151 = vmatprep.subr.mxu0 0.0
    %7152 = vmatpush1.msra.mxu0 0.0
    %7153 = vmatprep.subr.mxu0 0.0
    %7154 = vmatpush1.msra.mxu0 0.0
    %7155 = vmatprep.subr.mxu0 0.0
    %7156 = vmatpush1.msra.mxu0 0.0
    %7157 = vmatprep.subr.mxu0 0.0
    %7158 = vmatpush1.msra.mxu0 0.0
    %7159 = vmatprep.subr.mxu0 0.0
    %7160 = vmatpush1.msra.mxu0 0.0
    %7161 = vmatprep.subr.mxu0 0.0
    %7162 = vmatpush1.msra.mxu0 0.0
    %7163 = vmatprep.subr.mxu0 0.0
    %7164 = vmatpush1.msra.mxu0 0.0
    %7165 = vmatprep.subr.mxu0 0.0
    %7166 = vmatpush1.msra.mxu0 0.0
    %7167 = vmatprep.subr.mxu0 0.0
    %7168 = vmatpush1.msra.mxu0 0.0
    %7169 = vmatprep.subr.mxu0 0.0
    %7170 = vmatpush1.msra.mxu0 0.0
    %7171 = vmatprep.subr.mxu0 0.0
    %7172 = vmatpush1.msra.mxu0 0.0
    %7173 = vmatprep.subr.mxu0 0.0
    %7174 = vmatpush1.msra.mxu0 0.0
    %7175 = vmatprep.subr.mxu0 0.0
    %7176 = vmatpush1.msra.mxu0 0.0
    %7177 = vmatprep.subr.mxu0 0.0
    %7178 = vmatpush1.msra.mxu0 0.0
    %7179 = vmatprep.subr.mxu0 0.0
    %7180 = vmatpush1.msra.mxu0 0.0
    %7181 = vmatprep.subr.mxu0 0.0
    %7182 = vmatpush1.msra.mxu0 0.0
    %7183 = vmatprep.subr.mxu0 0.0
    %7184 = vmatpush1.msra.mxu0 0.0
    %7185 = vmatprep.subr.mxu0 0.0
    %7186 = vmatpush1.msra.mxu0 0.0
    %7187 = vmatprep.subr.mxu0 0.0
    %7188 = vmatpush1.msra.mxu0 0.0
    %7189 = vmatprep.subr.mxu0 0.0
    %7190 = vmatpush1.msra.mxu0 0.0
    %7191 = vmatprep.subr.mxu0 0.0
    %7192 = vmatpush1.msra.mxu0 0.0
    %7193 = vmatprep.subr.mxu0 0.0
    %7194 = vmatpush1.msra.mxu0 0.0
    %7195 = vmatprep.subr.mxu0 0.0
    %7196 = vmatpush1.msra.mxu0 0.0
    %7197 = vmatprep.mubr.f32.mxu0 0.0
    %7198 = vmatmul.mubr.f32.gmra.mrb[0].mxu0 %v7131
    %v7199 = vpop.f32.mrb[0].mxu0
    %v7200 = vadd.f32 0.0, %v7199
    %v7201 = vpop.f32.mrb[0].mxu0
    %7202 = vdwg.mxu0
    %7204 = vrot.lane.b32.xlu0 %v6436, 120
    %v7205 = vpop.permute.xlu0 %7204
    %v7208 = vsel %vm3994, %v7099, 0
    %7210 = vmatprep.subr.mxu0 0.0
    %7211 = vmatpush1.msra.mxu0 %v7205
    %7212 = vmatprep.subr.mxu0 0.0
    %7213 = vmatpush1.msra.mxu0 0.0
    %7214 = vmatprep.subr.mxu0 0.0
    %7215 = vmatpush1.msra.mxu0 0.0
    %7216 = vmatprep.subr.mxu0 0.0
    %7217 = vmatpush1.msra.mxu0 0.0
    %7218 = vmatprep.subr.mxu0 0.0
    %7219 = vmatpush1.msra.mxu0 0.0
    %7220 = vmatprep.subr.mxu0 0.0
    %7221 = vmatpush1.msra.mxu0 0.0
    %7222 = vmatprep.subr.mxu0 0.0
    %7223 = vmatpush1.msra.mxu0 0.0
    %7224 = vmatprep.subr.mxu0 0.0
    %7225 = vmatpush1.msra.mxu0 0.0
    %7226 = vmatprep.subr.mxu0 0.0
    %7227 = vmatpush1.msra.mxu0 0.0
    %7228 = vmatprep.subr.mxu0 0.0
    %7229 = vmatpush1.msra.mxu0 0.0
    %7230 = vmatprep.subr.mxu0 0.0
    %7231 = vmatpush1.msra.mxu0 0.0
    %7232 = vmatprep.subr.mxu0 0.0
    %7233 = vmatpush1.msra.mxu0 0.0
    %7234 = vmatprep.subr.mxu0 0.0
    %7235 = vmatpush1.msra.mxu0 0.0
    %7236 = vmatprep.subr.mxu0 0.0
    %7237 = vmatpush1.msra.mxu0 0.0
    %7238 = vmatprep.subr.mxu0 0.0
    %7239 = vmatpush1.msra.mxu0 0.0
    %7240 = vmatprep.subr.mxu0 0.0
    %7241 = vmatpush1.msra.mxu0 0.0
    %7242 = vmatprep.subr.mxu0 0.0
    %7243 = vmatpush1.msra.mxu0 0.0
    %7244 = vmatprep.subr.mxu0 0.0
    %7245 = vmatpush1.msra.mxu0 0.0
    %7246 = vmatprep.subr.mxu0 0.0
    %7247 = vmatpush1.msra.mxu0 0.0
    %7248 = vmatprep.subr.mxu0 0.0
    %7249 = vmatpush1.msra.mxu0 0.0
    %7250 = vmatprep.subr.mxu0 0.0
    %7251 = vmatpush1.msra.mxu0 0.0
    %7252 = vmatprep.subr.mxu0 0.0
    %7253 = vmatpush1.msra.mxu0 0.0
    %7254 = vmatprep.subr.mxu0 0.0
    %7255 = vmatpush1.msra.mxu0 0.0
    %7256 = vmatprep.subr.mxu0 0.0
    %7257 = vmatpush1.msra.mxu0 0.0
    %7258 = vmatprep.subr.mxu0 0.0
    %7259 = vmatpush1.msra.mxu0 0.0
    %7260 = vmatprep.subr.mxu0 0.0
    %7261 = vmatpush1.msra.mxu0 0.0
    %7262 = vmatprep.subr.mxu0 0.0
    %7263 = vmatpush1.msra.mxu0 0.0
    %7264 = vmatprep.subr.mxu0 0.0
    %7265 = vmatpush1.msra.mxu0 0.0
    %7266 = vmatprep.subr.mxu0 0.0
    %7267 = vmatpush1.msra.mxu0 0.0
    %7268 = vmatprep.subr.mxu0 0.0
    %7269 = vmatpush1.msra.mxu0 0.0
    %7270 = vmatprep.subr.mxu0 0.0
    %7271 = vmatpush1.msra.mxu0 0.0
    %7272 = vmatprep.subr.mxu0 0.0
    %7273 = vmatpush1.msra.mxu0 0.0
    %7274 = vmatprep.mubr.f32.mxu0 0.0
    %7275 = vmatmul.mubr.f32.gmra.mrb[0].mxu0 %v7208
    %v7276 = vpop.f32.mrb[0].mxu0
    %v7277 = vadd.f32 0.0, %v7276
    %v7278 = vpop.f32.mrb[0].mxu0
    %7279 = vdwg.mxu0
    %7282 = vrot.lane.b32.xlu0 %v7200, 8
    %v7283 = vpop.permute.xlu0 %7282
    %7284 = vrot.lane.b32.xlu0 %v7277, 8
    %v7285 = vpop.permute.xlu0 %7284
    %7288 = vst.msk [vmem:[#allocation2] sm:$0xff] %vm4725, %v7283
    %7289 = vst.msk [vmem:[#allocation2 + $0x8] sm:$0xff] %vm4725, %v7285
    %s7290 = scalar_lea.vmem %s59, 72
    %7291 = vst.msk [vmem:[%s7290] sm:$0xff] %vm3994, %v7097
    %s7292 = scalar_lea.vmem %s61, 72
    %7293 = vst.msk [vmem:[%s7292] sm:$0xff] %vm3994, %v7124
    %s7294 = scalar_lea.vmem %s59, 104
    %7295 = vst.msk [vmem:[%s7294] sm:$0xff] %vm3994, %v7099
    %s7296 = scalar_lea.vmem %s61, 104
    %7297 = vst.msk [vmem:[%s7296] sm:$0xff] %vm3994, %v7125
    %7298 = vrot.lane.b32.xlu0 %v6249, 112
    %v7299 = vpop.permute.xlu0 %7298
    %7300 = vrot.lane.b32.xlu0 %v6343, 112
    %v7301 = vpop.permute.xlu0 %7300
    %v7302 = vsel %vm3994, %v7299, 0
    %v7304 = vsel %vm3994, %v7301, 0
    %7306 = vmatprep.subr.mxu0 0.0
    %7307 = vmatpush1.xpose.msra.mxu0 %v7304
    %7308 = vmatprep.subr.mxu0 0.0
    %7309 = vmatpush1.xpose.msra.mxu0 0.0
    %7310 = vmatprep.subr.mxu0 0.0
    %7311 = vmatpush1.xpose.msra.mxu0 0.0
    %7312 = vmatprep.subr.mxu0 0.0
    %7313 = vmatpush1.xpose.msra.mxu0 0.0
    %7314 = vmatprep.subr.mxu0 0.0
    %7315 = vmatpush1.xpose.msra.mxu0 0.0
    %7316 = vmatprep.subr.mxu0 0.0
    %7317 = vmatpush1.xpose.msra.mxu0 0.0
    %7318 = vmatprep.subr.mxu0 0.0
    %7319 = vmatpush1.xpose.msra.mxu0 0.0
    %7320 = vmatprep.subr.mxu0 0.0
    %7321 = vmatpush1.xpose.msra.mxu0 0.0
    %7322 = vmatprep.subr.mxu0 0.0
    %7323 = vmatpush1.xpose.msra.mxu0 0.0
    %7324 = vmatprep.subr.mxu0 0.0
    %7325 = vmatpush1.xpose.msra.mxu0 0.0
    %7326 = vmatprep.subr.mxu0 0.0
    %7327 = vmatpush1.xpose.msra.mxu0 0.0
    %7328 = vmatprep.subr.mxu0 0.0
    %7329 = vmatpush1.xpose.msra.mxu0 0.0
    %7330 = vmatprep.subr.mxu0 0.0
    %7331 = vmatpush1.xpose.msra.mxu0 0.0
    %7332 = vmatprep.subr.mxu0 0.0
    %7333 = vmatpush1.xpose.msra.mxu0 0.0
    %7334 = vmatprep.subr.mxu0 0.0
    %7335 = vmatpush1.xpose.msra.mxu0 0.0
    %7336 = vmatprep.subr.mxu0 0.0
    %7337 = vmatpush1.xpose.msra.mxu0 0.0
    %7338 = vmatprep.subr.mxu0 0.0
    %7339 = vmatpush1.xpose.msra.mxu0 0.0
    %7340 = vmatprep.subr.mxu0 0.0
    %7341 = vmatpush1.xpose.msra.mxu0 0.0
    %7342 = vmatprep.subr.mxu0 0.0
    %7343 = vmatpush1.xpose.msra.mxu0 0.0
    %7344 = vmatprep.subr.mxu0 0.0
    %7345 = vmatpush1.xpose.msra.mxu0 0.0
    %7346 = vmatprep.subr.mxu0 0.0
    %7347 = vmatpush1.xpose.msra.mxu0 0.0
    %7348 = vmatprep.subr.mxu0 0.0
    %7349 = vmatpush1.xpose.msra.mxu0 0.0
    %7350 = vmatprep.subr.mxu0 0.0
    %7351 = vmatpush1.xpose.msra.mxu0 0.0
    %7352 = vmatprep.subr.mxu0 0.0
    %7353 = vmatpush1.xpose.msra.mxu0 0.0
    %7354 = vmatprep.subr.mxu0 0.0
    %7355 = vmatpush1.xpose.msra.mxu0 0.0
    %7356 = vmatprep.subr.mxu0 0.0
    %7357 = vmatpush1.xpose.msra.mxu0 0.0
    %7358 = vmatprep.subr.mxu0 0.0
    %7359 = vmatpush1.xpose.msra.mxu0 0.0
    %7360 = vmatprep.subr.mxu0 0.0
    %7361 = vmatpush1.xpose.msra.mxu0 0.0
    %7362 = vmatprep.subr.mxu0 0.0
    %7363 = vmatpush1.xpose.msra.mxu0 0.0
    %7364 = vmatprep.subr.mxu0 0.0
    %7365 = vmatpush1.xpose.msra.mxu0 0.0
    %7366 = vmatprep.subr.mxu0 0.0
    %7367 = vmatpush1.xpose.msra.mxu0 0.0
    %7368 = vmatprep.subr.mxu0 0.0
    %7369 = vmatpush1.xpose.msra.mxu0 0.0
    %7370 = vmatprep.mubr.f32.mxu0 0.0
    %7371 = vmatmul.mubr.f32.gmra.mrb[0].mxu0 %v7302
    %v7372 = vpop.f32.mrb[0].mxu0
    %v7373 = vadd.f32 0.0, %v7372
    %v7374 = vpop.f32.mrb[0].mxu0
    %7375 = vdwg.mxu0
    %7376 = vrot.lane.b32.xlu0 %v6254, 112
    %v7377 = vpop.permute.xlu0 %7376
    %7378 = vrot.lane.b32.xlu0 %v6348, 112
    %v7379 = vpop.permute.xlu0 %7378
    %v7380 = vsel %vm3994, %v7377, 0
    %v7382 = vsel %vm3994, %v7379, 0
    %7384 = vmatprep.subr.mxu0 0.0
    %7385 = vmatpush1.xpose.msra.mxu0 %v7382
    %7386 = vmatprep.subr.mxu0 0.0
    %7387 = vmatpush1.xpose.msra.mxu0 0.0
    %7388 = vmatprep.subr.mxu0 0.0
    %7389 = vmatpush1.xpose.msra.mxu0 0.0
    %7390 = vmatprep.subr.mxu0 0.0
    %7391 = vmatpush1.xpose.msra.mxu0 0.0
    %7392 = vmatprep.subr.mxu0 0.0
    %7393 = vmatpush1.xpose.msra.mxu0 0.0
    %7394 = vmatprep.subr.mxu0 0.0
    %7395 = vmatpush1.xpose.msra.mxu0 0.0
    %7396 = vmatprep.subr.mxu0 0.0
    %7397 = vmatpush1.xpose.msra.mxu0 0.0
    %7398 = vmatprep.subr.mxu0 0.0
    %7399 = vmatpush1.xpose.msra.mxu0 0.0
    %7400 = vmatprep.subr.mxu0 0.0
    %7401 = vmatpush1.xpose.msra.mxu0 0.0
    %7402 = vmatprep.subr.mxu0 0.0
    %7403 = vmatpush1.xpose.msra.mxu0 0.0
    %7404 = vmatprep.subr.mxu0 0.0
    %7405 = vmatpush1.xpose.msra.mxu0 0.0
    %7406 = vmatprep.subr.mxu0 0.0
    %7407 = vmatpush1.xpose.msra.mxu0 0.0
    %7408 = vmatprep.subr.mxu0 0.0
    %7409 = vmatpush1.xpose.msra.mxu0 0.0
    %7410 = vmatprep.subr.mxu0 0.0
    %7411 = vmatpush1.xpose.msra.mxu0 0.0
    %7412 = vmatprep.subr.mxu0 0.0
    %7413 = vmatpush1.xpose.msra.mxu0 0.0
    %7414 = vmatprep.subr.mxu0 0.0
    %7415 = vmatpush1.xpose.msra.mxu0 0.0
    %7416 = vmatprep.subr.mxu0 0.0
    %7417 = vmatpush1.xpose.msra.mxu0 0.0
    %7418 = vmatprep.subr.mxu0 0.0
    %7419 = vmatpush1.xpose.msra.mxu0 0.0
    %7420 = vmatprep.subr.mxu0 0.0
    %7421 = vmatpush1.xpose.msra.mxu0 0.0
    %7422 = vmatprep.subr.mxu0 0.0
    %7423 = vmatpush1.xpose.msra.mxu0 0.0
    %7424 = vmatprep.subr.mxu0 0.0
    %7425 = vmatpush1.xpose.msra.mxu0 0.0
    %7426 = vmatprep.subr.mxu0 0.0
    %7427 = vmatpush1.xpose.msra.mxu0 0.0
    %7428 = vmatprep.subr.mxu0 0.0
    %7429 = vmatpush1.xpose.msra.mxu0 0.0
    %7430 = vmatprep.subr.mxu0 0.0
    %7431 = vmatpush1.xpose.msra.mxu0 0.0
    %7432 = vmatprep.subr.mxu0 0.0
    %7433 = vmatpush1.xpose.msra.mxu0 0.0
    %7434 = vmatprep.subr.mxu0 0.0
    %7435 = vmatpush1.xpose.msra.mxu0 0.0
    %7436 = vmatprep.subr.mxu0 0.0
    %7437 = vmatpush1.xpose.msra.mxu0 0.0
    %7438 = vmatprep.subr.mxu0 0.0
    %7439 = vmatpush1.xpose.msra.mxu0 0.0
    %7440 = vmatprep.subr.mxu0 0.0
    %7441 = vmatpush1.xpose.msra.mxu0 0.0
    %7442 = vmatprep.subr.mxu0 0.0
    %7443 = vmatpush1.xpose.msra.mxu0 0.0
    %7444 = vmatprep.subr.mxu0 0.0
    %7445 = vmatpush1.xpose.msra.mxu0 0.0
    %7446 = vmatprep.subr.mxu0 0.0
    %7447 = vmatpush1.xpose.msra.mxu0 0.0
    %7448 = vmatprep.mubr.f32.mxu0 0.0
    %7449 = vmatmul.mubr.f32.gmra.mrb[0].mxu0 %v7380
    %v7450 = vpop.f32.mrb[0].mxu0
    %v7451 = vadd.f32 0.0, %v7450
    %v7452 = vpop.f32.mrb[0].mxu0
    %7453 = vdwg.mxu0
    %v7454 = vmul.f32 %v7373, 0.35355338
    %v7455 = vmul.f32 %v7451, 0.35355338
    %v7456 = vsel %vm3994, %v7454, -inf
    %7457 = vmax.xlane.f32.xlu0 %v7456
    %v7458 = vpop.xlane.xlu0 %7457
    %v7459 = vsel %vm3994, %v7455, -inf
    %7460 = vmax.xlane.f32.xlu0 %v7459
    %v7461 = vpop.xlane.xlu0 %7460
    %v7462 = vsub.f32 %v7454, %v7458
    %v7463 = vsub.f32 %v7455, %v7461
    %v7464 = vmul.f32 %v7462, 1.442695
    %v7465 = vpow.pop %v7464
    %v7466 = vmul.f32 %v7463, 1.442695
    %v7467 = vpow.pop %v7466
    %v7468 = vsel %vm3994, %v7465, 0.0
    %7469 = vadd.xlane.f32.xlu0 %v7468
    %v7470 = vpop.xlane.xlu0 %7469
    %v7471 = vsel %vm3994, %v7467, 0.0
    %7472 = vadd.xlane.f32.xlu0 %v7471
    %v7473 = vpop.xlane.xlu0 %7472
    %v7474 = vrcp.pop %v7470
    %v7475 = vmul.f32 %v7465, %v7474
    %v7476 = vrcp.pop %v7473
    %v7477 = vmul.f32 %v7467, %v7476
    %7478 = vset.pattern.permute.xlu0 2
    %7479 = vperm.xlu0 %7478, %v6550
    %v7480 = vpop.permute.xlu0 %7479
    %7482 = vset.pattern.permute.xlu0 2
    %7483 = vperm.xlu0 %7482, %v6552
    %v7484 = vpop.permute.xlu0 %7483
    %v7486 = vmul.f32 %v281, %v7480
    %v7487 = vmul.f32 %v281, %v7484
    %v7488 = vmul.f32 %v7486, %v7480
    %v7489 = vmul.f32 %v7487, %v7484
    %v7490 = vmul.f32 %v7488, 1.442695
    %v7491 = vpow.pop %v7490
    %v7492 = vmul.f32 %v7489, 1.442695
    %v7493 = vpow.pop %v7492
    %7494 = vset.pattern.permute.xlu0 2
    %7495 = vperm.xlu0 %7494, %v6732
    %v7496 = vpop.permute.xlu0 %7495
    %7498 = vset.pattern.permute.xlu0 2
    %7499 = vperm.xlu0 %7498, %v6733
    %v7500 = vpop.permute.xlu0 %7499
    %v7502 = vmul.f32 %v7496, %v7491
    %v7503 = vmul.f32 %v7500, %v7493
    %7504 = vrot.lane.b32.xlu0 %v6431, 112
    %v7505 = vpop.permute.xlu0 %7504
    %v7508 = vsel %vm3994, %v7475, 0
    %7510 = vmatprep.subr.mxu0 0.0
    %7511 = vmatpush1.msra.mxu0 %v7505
    %7512 = vmatprep.subr.mxu0 0.0
    %7513 = vmatpush1.msra.mxu0 0.0
    %7514 = vmatprep.subr.mxu0 0.0
    %7515 = vmatpush1.msra.mxu0 0.0
    %7516 = vmatprep.subr.mxu0 0.0
    %7517 = vmatpush1.msra.mxu0 0.0
    %7518 = vmatprep.subr.mxu0 0.0
    %7519 = vmatpush1.msra.mxu0 0.0
    %7520 = vmatprep.subr.mxu0 0.0
    %7521 = vmatpush1.msra.mxu0 0.0
    %7522 = vmatprep.subr.mxu0 0.0
    %7523 = vmatpush1.msra.mxu0 0.0
    %7524 = vmatprep.subr.mxu0 0.0
    %7525 = vmatpush1.msra.mxu0 0.0
    %7526 = vmatprep.subr.mxu0 0.0
    %7527 = vmatpush1.msra.mxu0 0.0
    %7528 = vmatprep.subr.mxu0 0.0
    %7529 = vmatpush1.msra.mxu0 0.0
    %7530 = vmatprep.subr.mxu0 0.0
    %7531 = vmatpush1.msra.mxu0 0.0
    %7532 = vmatprep.subr.mxu0 0.0
    %7533 = vmatpush1.msra.mxu0 0.0
    %7534 = vmatprep.subr.mxu0 0.0
    %7535 = vmatpush1.msra.mxu0 0.0
    %7536 = vmatprep.subr.mxu0 0.0
    %7537 = vmatpush1.msra.mxu0 0.0
    %7538 = vmatprep.subr.mxu0 0.0
    %7539 = vmatpush1.msra.mxu0 0.0
    %7540 = vmatprep.subr.mxu0 0.0
    %7541 = vmatpush1.msra.mxu0 0.0
    %7542 = vmatprep.subr.mxu0 0.0
    %7543 = vmatpush1.msra.mxu0 0.0
    %7544 = vmatprep.subr.mxu0 0.0
    %7545 = vmatpush1.msra.mxu0 0.0
    %7546 = vmatprep.subr.mxu0 0.0
    %7547 = vmatpush1.msra.mxu0 0.0
    %7548 = vmatprep.subr.mxu0 0.0
    %7549 = vmatpush1.msra.mxu0 0.0
    %7550 = vmatprep.subr.mxu0 0.0
    %7551 = vmatpush1.msra.mxu0 0.0
    %7552 = vmatprep.subr.mxu0 0.0
    %7553 = vmatpush1.msra.mxu0 0.0
    %7554 = vmatprep.subr.mxu0 0.0
    %7555 = vmatpush1.msra.mxu0 0.0
    %7556 = vmatprep.subr.mxu0 0.0
    %7557 = vmatpush1.msra.mxu0 0.0
    %7558 = vmatprep.subr.mxu0 0.0
    %7559 = vmatpush1.msra.mxu0 0.0
    %7560 = vmatprep.subr.mxu0 0.0
    %7561 = vmatpush1.msra.mxu0 0.0
    %7562 = vmatprep.subr.mxu0 0.0
    %7563 = vmatpush1.msra.mxu0 0.0
    %7564 = vmatprep.subr.mxu0 0.0
    %7565 = vmatpush1.msra.mxu0 0.0
    %7566 = vmatprep.subr.mxu0 0.0
    %7567 = vmatpush1.msra.mxu0 0.0
    %7568 = vmatprep.subr.mxu0 0.0
    %7569 = vmatpush1.msra.mxu0 0.0
    %7570 = vmatprep.subr.mxu0 0.0
    %7571 = vmatpush1.msra.mxu0 0.0
    %7572 = vmatprep.subr.mxu0 0.0
    %7573 = vmatpush1.msra.mxu0 0.0
    %7574 = vmatprep.mubr.f32.mxu0 0.0
    %7575 = vmatmul.mubr.f32.gmra.mrb[0].mxu0 %v7508
    %v7576 = vpop.f32.mrb[0].mxu0
    %v7577 = vadd.f32 0.0, %v7576
    %v7578 = vpop.f32.mrb[0].mxu0
    %7579 = vdwg.mxu0
    %7580 = vrot.lane.b32.xlu0 %v6436, 112
    %v7581 = vpop.permute.xlu0 %7580
    %v7584 = vsel %vm3994, %v7477, 0
    %7586 = vmatprep.subr.mxu0 0.0
    %7587 = vmatpush1.msra.mxu0 %v7581
    %7588 = vmatprep.subr.mxu0 0.0
    %7589 = vmatpush1.msra.mxu0 0.0
    %7590 = vmatprep.subr.mxu0 0.0
    %7591 = vmatpush1.msra.mxu0 0.0
    %7592 = vmatprep.subr.mxu0 0.0
    %7593 = vmatpush1.msra.mxu0 0.0
    %7594 = vmatprep.subr.mxu0 0.0
    %7595 = vmatpush1.msra.mxu0 0.0
    %7596 = vmatprep.subr.mxu0 0.0
    %7597 = vmatpush1.msra.mxu0 0.0
    %7598 = vmatprep.subr.mxu0 0.0
    %7599 = vmatpush1.msra.mxu0 0.0
    %7600 = vmatprep.subr.mxu0 0.0
    %7601 = vmatpush1.msra.mxu0 0.0
    %7602 = vmatprep.subr.mxu0 0.0
    %7603 = vmatpush1.msra.mxu0 0.0
    %7604 = vmatprep.subr.mxu0 0.0
    %7605 = vmatpush1.msra.mxu0 0.0
    %7606 = vmatprep.subr.mxu0 0.0
    %7607 = vmatpush1.msra.mxu0 0.0
    %7608 = vmatprep.subr.mxu0 0.0
    %7609 = vmatpush1.msra.mxu0 0.0
    %7610 = vmatprep.subr.mxu0 0.0
    %7611 = vmatpush1.msra.mxu0 0.0
    %7612 = vmatprep.subr.mxu0 0.0
    %7613 = vmatpush1.msra.mxu0 0.0
    %7614 = vmatprep.subr.mxu0 0.0
    %7615 = vmatpush1.msra.mxu0 0.0
    %7616 = vmatprep.subr.mxu0 0.0
    %7617 = vmatpush1.msra.mxu0 0.0
    %7618 = vmatprep.subr.mxu0 0.0
    %7619 = vmatpush1.msra.mxu0 0.0
    %7620 = vmatprep.subr.mxu0 0.0
    %7621 = vmatpush1.msra.mxu0 0.0
    %7622 = vmatprep.subr.mxu0 0.0
    %7623 = vmatpush1.msra.mxu0 0.0
    %7624 = vmatprep.subr.mxu0 0.0
    %7625 = vmatpush1.msra.mxu0 0.0
    %7626 = vmatprep.subr.mxu0 0.0
    %7627 = vmatpush1.msra.mxu0 0.0
    %7628 = vmatprep.subr.mxu0 0.0
    %7629 = vmatpush1.msra.mxu0 0.0
    %7630 = vmatprep.subr.mxu0 0.0
    %7631 = vmatpush1.msra.mxu0 0.0
    %7632 = vmatprep.subr.mxu0 0.0
    %7633 = vmatpush1.msra.mxu0 0.0
    %7634 = vmatprep.subr.mxu0 0.0
    %7635 = vmatpush1.msra.mxu0 0.0
    %7636 = vmatprep.subr.mxu0 0.0
    %7637 = vmatpush1.msra.mxu0 0.0
    %7638 = vmatprep.subr.mxu0 0.0
    %7639 = vmatpush1.msra.mxu0 0.0
    %7640 = vmatprep.subr.mxu0 0.0
    %7641 = vmatpush1.msra.mxu0 0.0
    %7642 = vmatprep.subr.mxu0 0.0
    %7643 = vmatpush1.msra.mxu0 0.0
    %7644 = vmatprep.subr.mxu0 0.0
    %7645 = vmatpush1.msra.mxu0 0.0
    %7646 = vmatprep.subr.mxu0 0.0
    %7647 = vmatpush1.msra.mxu0 0.0
    %7648 = vmatprep.subr.mxu0 0.0
    %7649 = vmatpush1.msra.mxu0 0.0
    %7650 = vmatprep.mubr.f32.mxu0 0.0
    %7651 = vmatmul.mubr.f32.gmra.mrb[0].mxu0 %v7584
    %v7652 = vpop.f32.mrb[0].mxu0
    %v7653 = vadd.f32 0.0, %v7652
    %v7654 = vpop.f32.mrb[0].mxu0
    %7655 = vdwg.mxu0
    %7658 = vrot.lane.b32.xlu0 %v7577, 16
    %v7659 = vpop.permute.xlu0 %7658
    %7660 = vrot.lane.b32.xlu0 %v7653, 16
    %v7661 = vpop.permute.xlu0 %7660
    %7664 = vst.msk [vmem:[#allocation2] sm:$0xff] %vm5102, %v7659
    %7665 = vst.msk [vmem:[#allocation2 + $0x8] sm:$0xff] %vm5102, %v7661
    %s7666 = scalar_lea.vmem %s59, 80
    %7667 = vst.msk [vmem:[%s7666] sm:$0xff] %vm3994, %v7475
    %s7668 = scalar_lea.vmem %s61, 80
    %7669 = vst.msk [vmem:[%s7668] sm:$0xff] %vm3994, %v7502
    %s7670 = scalar_lea.vmem %s59, 112
    %7671 = vst.msk [vmem:[%s7670] sm:$0xff] %vm3994, %v7477
    %s7672 = scalar_lea.vmem %s61, 112
    %7673 = vst.msk [vmem:[%s7672] sm:$0xff] %vm3994, %v7503
    %7674 = vrot.lane.b32.xlu0 %v6249, 104
    %v7675 = vpop.permute.xlu0 %7674
    %7676 = vrot.lane.b32.xlu0 %v6343, 104
    %v7677 = vpop.permute.xlu0 %7676
    %v7678 = vsel %vm3994, %v7675, 0
    %v7680 = vsel %vm3994, %v7677, 0
    %7682 = vmatprep.subr.mxu0 0.0
    %7683 = vmatpush1.xpose.msra.mxu0 %v7680
    %7684 = vmatprep.subr.mxu0 0.0
    %7685 = vmatpush1.xpose.msra.mxu0 0.0
    %7686 = vmatprep.subr.mxu0 0.0
    %7687 = vmatpush1.xpose.msra.mxu0 0.0
    %7688 = vmatprep.subr.mxu0 0.0
    %7689 = vmatpush1.xpose.msra.mxu0 0.0
    %7690 = vmatprep.subr.mxu0 0.0
    %7691 = vmatpush1.xpose.msra.mxu0 0.0
    %7692 = vmatprep.subr.mxu0 0.0
    %7693 = vmatpush1.xpose.msra.mxu0 0.0
    %7694 = vmatprep.subr.mxu0 0.0
    %7695 = vmatpush1.xpose.msra.mxu0 0.0
    %7696 = vmatprep.subr.mxu0 0.0
    %7697 = vmatpush1.xpose.msra.mxu0 0.0
    %7698 = vmatprep.subr.mxu0 0.0
    %7699 = vmatpush1.xpose.msra.mxu0 0.0
    %7700 = vmatprep.subr.mxu0 0.0
    %7701 = vmatpush1.xpose.msra.mxu0 0.0
    %7702 = vmatprep.subr.mxu0 0.0
    %7703 = vmatpush1.xpose.msra.mxu0 0.0
    %7704 = vmatprep.subr.mxu0 0.0
    %7705 = vmatpush1.xpose.msra.mxu0 0.0
    %7706 = vmatprep.subr.mxu0 0.0
    %7707 = vmatpush1.xpose.msra.mxu0 0.0
    %7708 = vmatprep.subr.mxu0 0.0
    %7709 = vmatpush1.xpose.msra.mxu0 0.0
    %7710 = vmatprep.subr.mxu0 0.0
    %7711 = vmatpush1.xpose.msra.mxu0 0.0
    %7712 = vmatprep.subr.mxu0 0.0
    %7713 = vmatpush1.xpose.msra.mxu0 0.0
    %7714 = vmatprep.subr.mxu0 0.0
    %7715 = vmatpush1.xpose.msra.mxu0 0.0
    %7716 = vmatprep.subr.mxu0 0.0
    %7717 = vmatpush1.xpose.msra.mxu0 0.0
    %7718 = vmatprep.subr.mxu0 0.0
    %7719 = vmatpush1.xpose.msra.mxu0 0.0
    %7720 = vmatprep.subr.mxu0 0.0
    %7721 = vmatpush1.xpose.msra.mxu0 0.0
    %7722 = vmatprep.subr.mxu0 0.0
    %7723 = vmatpush1.xpose.msra.mxu0 0.0
    %7724 = vmatprep.subr.mxu0 0.0
    %7725 = vmatpush1.xpose.msra.mxu0 0.0
    %7726 = vmatprep.subr.mxu0 0.0
    %7727 = vmatpush1.xpose.msra.mxu0 0.0
    %7728 = vmatprep.subr.mxu0 0.0
    %7729 = vmatpush1.xpose.msra.mxu0 0.0
    %7730 = vmatprep.subr.mxu0 0.0
    %7731 = vmatpush1.xpose.msra.mxu0 0.0
    %7732 = vmatprep.subr.mxu0 0.0
    %7733 = vmatpush1.xpose.msra.mxu0 0.0
    %7734 = vmatprep.subr.mxu0 0.0
    %7735 = vmatpush1.xpose.msra.mxu0 0.0
    %7736 = vmatprep.subr.mxu0 0.0
    %7737 = vmatpush1.xpose.msra.mxu0 0.0
    %7738 = vmatprep.subr.mxu0 0.0
    %7739 = vmatpush1.xpose.msra.mxu0 0.0
    %7740 = vmatprep.subr.mxu0 0.0
    %7741 = vmatpush1.xpose.msra.mxu0 0.0
    %7742 = vmatprep.subr.mxu0 0.0
    %7743 = vmatpush1.xpose.msra.mxu0 0.0
    %7744 = vmatprep.subr.mxu0 0.0
    %7745 = vmatpush1.xpose.msra.mxu0 0.0
    %7746 = vmatprep.mubr.f32.mxu0 0.0
    %7747 = vmatmul.mubr.f32.gmra.mrb[0].mxu0 %v7678
    %v7748 = vpop.f32.mrb[0].mxu0
    %v7749 = vadd.f32 0.0, %v7748
    %v7750 = vpop.f32.mrb[0].mxu0
    %7751 = vdwg.mxu0
    %7752 = vrot.lane.b32.xlu0 %v6254, 104
    %v7753 = vpop.permute.xlu0 %7752
    %7754 = vrot.lane.b32.xlu0 %v6348, 104
    %v7755 = vpop.permute.xlu0 %7754
    %v7756 = vsel %vm3994, %v7753, 0
    %v7758 = vsel %vm3994, %v7755, 0
    %7760 = vmatprep.subr.mxu0 0.0
    %7761 = vmatpush1.xpose.msra.mxu0 %v7758
    %7762 = vmatprep.subr.mxu0 0.0
    %7763 = vmatpush1.xpose.msra.mxu0 0.0
    %7764 = vmatprep.subr.mxu0 0.0
    %7765 = vmatpush1.xpose.msra.mxu0 0.0
    %7766 = vmatprep.subr.mxu0 0.0
    %7767 = vmatpush1.xpose.msra.mxu0 0.0
    %7768 = vmatprep.subr.mxu0 0.0
    %7769 = vmatpush1.xpose.msra.mxu0 0.0
    %7770 = vmatprep.subr.mxu0 0.0
    %7771 = vmatpush1.xpose.msra.mxu0 0.0
    %7772 = vmatprep.subr.mxu0 0.0
    %7773 = vmatpush1.xpose.msra.mxu0 0.0
    %7774 = vmatprep.subr.mxu0 0.0
    %7775 = vmatpush1.xpose.msra.mxu0 0.0
    %7776 = vmatprep.subr.mxu0 0.0
    %7777 = vmatpush1.xpose.msra.mxu0 0.0
    %7778 = vmatprep.subr.mxu0 0.0
    %7779 = vmatpush1.xpose.msra.mxu0 0.0
    %7780 = vmatprep.subr.mxu0 0.0
    %7781 = vmatpush1.xpose.msra.mxu0 0.0
    %7782 = vmatprep.subr.mxu0 0.0
    %7783 = vmatpush1.xpose.msra.mxu0 0.0
    %7784 = vmatprep.subr.mxu0 0.0
    %7785 = vmatpush1.xpose.msra.mxu0 0.0
    %7786 = vmatprep.subr.mxu0 0.0
    %7787 = vmatpush1.xpose.msra.mxu0 0.0
    %7788 = vmatprep.subr.mxu0 0.0
    %7789 = vmatpush1.xpose.msra.mxu0 0.0
    %7790 = vmatprep.subr.mxu0 0.0
    %7791 = vmatpush1.xpose.msra.mxu0 0.0
    %7792 = vmatprep.subr.mxu0 0.0
    %7793 = vmatpush1.xpose.msra.mxu0 0.0
    %7794 = vmatprep.subr.mxu0 0.0
    %7795 = vmatpush1.xpose.msra.mxu0 0.0
    %7796 = vmatprep.subr.mxu0 0.0
    %7797 = vmatpush1.xpose.msra.mxu0 0.0
    %7798 = vmatprep.subr.mxu0 0.0
    %7799 = vmatpush1.xpose.msra.mxu0 0.0
    %7800 = vmatprep.subr.mxu0 0.0
    %7801 = vmatpush1.xpose.msra.mxu0 0.0
    %7802 = vmatprep.subr.mxu0 0.0
    %7803 = vmatpush1.xpose.msra.mxu0 0.0
    %7804 = vmatprep.subr.mxu0 0.0
    %7805 = vmatpush1.xpose.msra.mxu0 0.0
    %7806 = vmatprep.subr.mxu0 0.0
    %7807 = vmatpush1.xpose.msra.mxu0 0.0
    %7808 = vmatprep.subr.mxu0 0.0
    %7809 = vmatpush1.xpose.msra.mxu0 0.0
    %7810 = vmatprep.subr.mxu0 0.0
    %7811 = vmatpush1.xpose.msra.mxu0 0.0
    %7812 = vmatprep.subr.mxu0 0.0
    %7813 = vmatpush1.xpose.msra.mxu0 0.0
    %7814 = vmatprep.subr.mxu0 0.0
    %7815 = vmatpush1.xpose.msra.mxu0 0.0
    %7816 = vmatprep.subr.mxu0 0.0
    %7817 = vmatpush1.xpose.msra.mxu0 0.0
    %7818 = vmatprep.subr.mxu0 0.0
    %7819 = vmatpush1.xpose.msra.mxu0 0.0
    %7820 = vmatprep.subr.mxu0 0.0
    %7821 = vmatpush1.xpose.msra.mxu0 0.0
    %7822 = vmatprep.subr.mxu0 0.0
    %7823 = vmatpush1.xpose.msra.mxu0 0.0
    %7824 = vmatprep.mubr.f32.mxu0 0.0
    %7825 = vmatmul.mubr.f32.gmra.mrb[0].mxu0 %v7756
    %v7826 = vpop.f32.mrb[0].mxu0
    %v7827 = vadd.f32 0.0, %v7826
    %v7828 = vpop.f32.mrb[0].mxu0
    %7829 = vdwg.mxu0
    %v7830 = vmul.f32 %v7749, 0.35355338
    %v7831 = vmul.f32 %v7827, 0.35355338
    %v7832 = vsel %vm3994, %v7830, -inf
    %7833 = vmax.xlane.f32.xlu0 %v7832
    %v7834 = vpop.xlane.xlu0 %7833
    %v7835 = vsel %vm3994, %v7831, -inf
    %7836 = vmax.xlane.f32.xlu0 %v7835
    %v7837 = vpop.xlane.xlu0 %7836
    %v7838 = vsub.f32 %v7830, %v7834
    %v7839 = vsub.f32 %v7831, %v7837
    %v7840 = vmul.f32 %v7838, 1.442695
    %v7841 = vpow.pop %v7840
    %v7842 = vmul.f32 %v7839, 1.442695
    %v7843 = vpow.pop %v7842
    %v7844 = vsel %vm3994, %v7841, 0.0
    %7845 = vadd.xlane.f32.xlu0 %v7844
    %v7846 = vpop.xlane.xlu0 %7845
    %v7847 = vsel %vm3994, %v7843, 0.0
    %7848 = vadd.xlane.f32.xlu0 %v7847
    %v7849 = vpop.xlane.xlu0 %7848
    %v7850 = vrcp.pop %v7846
    %v7851 = vmul.f32 %v7841, %v7850
    %v7852 = vrcp.pop %v7849
    %v7853 = vmul.f32 %v7843, %v7852
    %7854 = vset.pattern.permute.xlu0 3
    %7855 = vperm.xlu0 %7854, %v6550
    %v7856 = vpop.permute.xlu0 %7855
    %7858 = vset.pattern.permute.xlu0 3
    %7859 = vperm.xlu0 %7858, %v6552
    %v7860 = vpop.permute.xlu0 %7859
    %v7862 = vmul.f32 %v281, %v7856
    %v7863 = vmul.f32 %v281, %v7860
    %v7864 = vmul.f32 %v7862, %v7856
    %v7865 = vmul.f32 %v7863, %v7860
    %v7866 = vmul.f32 %v7864, 1.442695
    %v7867 = vpow.pop %v7866
    %v7868 = vmul.f32 %v7865, 1.442695
    %v7869 = vpow.pop %v7868
    %7870 = vset.pattern.permute.xlu0 3
    %7871 = vperm.xlu0 %7870, %v6732
    %v7872 = vpop.permute.xlu0 %7871
    %7874 = vset.pattern.permute.xlu0 3
    %7875 = vperm.xlu0 %7874, %v6733
    %v7876 = vpop.permute.xlu0 %7875
    %v7878 = vmul.f32 %v7872, %v7867
    %v7879 = vmul.f32 %v7876, %v7869
    %7880 = vrot.lane.b32.xlu0 %v6431, 104
    %v7881 = vpop.permute.xlu0 %7880
    %v7884 = vsel %vm3994, %v7851, 0
    %7886 = vmatprep.subr.mxu0 0.0
    %7887 = vmatpush1.msra.mxu0 %v7881
    %7888 = vmatprep.subr.mxu0 0.0
    %7889 = vmatpush1.msra.mxu0 0.0
    %7890 = vmatprep.subr.mxu0 0.0
    %7891 = vmatpush1.msra.mxu0 0.0
    %7892 = vmatprep.subr.mxu0 0.0
    %7893 = vmatpush1.msra.mxu0 0.0
    %7894 = vmatprep.subr.mxu0 0.0
    %7895 = vmatpush1.msra.mxu0 0.0
    %7896 = vmatprep.subr.mxu0 0.0
    %7897 = vmatpush1.msra.mxu0 0.0
    %7898 = vmatprep.subr.mxu0 0.0
    %7899 = vmatpush1.msra.mxu0 0.0
    %7900 = vmatprep.subr.mxu0 0.0
    %7901 = vmatpush1.msra.mxu0 0.0
    %7902 = vmatprep.subr.mxu0 0.0
    %7903 = vmatpush1.msra.mxu0 0.0
    %7904 = vmatprep.subr.mxu0 0.0
    %7905 = vmatpush1.msra.mxu0 0.0
    %7906 = vmatprep.subr.mxu0 0.0
    %7907 = vmatpush1.msra.mxu0 0.0
    %7908 = vmatprep.subr.mxu0 0.0
    %7909 = vmatpush1.msra.mxu0 0.0
    %7910 = vmatprep.subr.mxu0 0.0
    %7911 = vmatpush1.msra.mxu0 0.0
    %7912 = vmatprep.subr.mxu0 0.0
    %7913 = vmatpush1.msra.mxu0 0.0
    %7914 = vmatprep.subr.mxu0 0.0
    %7915 = vmatpush1.msra.mxu0 0.0
    %7916 = vmatprep.subr.mxu0 0.0
    %7917 = vmatpush1.msra.mxu0 0.0
    %7918 = vmatprep.subr.mxu0 0.0
    %7919 = vmatpush1.msra.mxu0 0.0
    %7920 = vmatprep.subr.mxu0 0.0
    %7921 = vmatpush1.msra.mxu0 0.0
    %7922 = vmatprep.subr.mxu0 0.0
    %7923 = vmatpush1.msra.mxu0 0.0
    %7924 = vmatprep.subr.mxu0 0.0
    %7925 = vmatpush1.msra.mxu0 0.0
    %7926 = vmatprep.subr.mxu0 0.0
    %7927 = vmatpush1.msra.mxu0 0.0
    %7928 = vmatprep.subr.mxu0 0.0
    %7929 = vmatpush1.msra.mxu0 0.0
    %7930 = vmatprep.subr.mxu0 0.0
    %7931 = vmatpush1.msra.mxu0 0.0
    %7932 = vmatprep.subr.mxu0 0.0
    %7933 = vmatpush1.msra.mxu0 0.0
    %7934 = vmatprep.subr.mxu0 0.0
    %7935 = vmatpush1.msra.mxu0 0.0
    %7936 = vmatprep.subr.mxu0 0.0
    %7937 = vmatpush1.msra.mxu0 0.0
    %7938 = vmatprep.subr.mxu0 0.0
    %7939 = vmatpush1.msra.mxu0 0.0
    %7940 = vmatprep.subr.mxu0 0.0
    %7941 = vmatpush1.msra.mxu0 0.0
    %7942 = vmatprep.subr.mxu0 0.0
    %7943 = vmatpush1.msra.mxu0 0.0
    %7944 = vmatprep.subr.mxu0 0.0
    %7945 = vmatpush1.msra.mxu0 0.0
    %7946 = vmatprep.subr.mxu0 0.0
    %7947 = vmatpush1.msra.mxu0 0.0
    %7948 = vmatprep.subr.mxu0 0.0
    %7949 = vmatpush1.msra.mxu0 0.0
    %7950 = vmatprep.mubr.f32.mxu0 0.0
    %7951 = vmatmul.mubr.f32.gmra.mrb[0].mxu0 %v7884
    %v7952 = vpop.f32.mrb[0].mxu0
    %v7953 = vadd.f32 0.0, %v7952
    %v7954 = vpop.f32.mrb[0].mxu0
    %7955 = vdwg.mxu0
    %7956 = vrot.lane.b32.xlu0 %v6436, 104
    %v7957 = vpop.permute.xlu0 %7956
    %v7960 = vsel %vm3994, %v7853, 0
    %7962 = vmatprep.subr.mxu0 0.0
    %7963 = vmatpush1.msra.mxu0 %v7957
    %7964 = vmatprep.subr.mxu0 0.0
    %7965 = vmatpush1.msra.mxu0 0.0
    %7966 = vmatprep.subr.mxu0 0.0
    %7967 = vmatpush1.msra.mxu0 0.0
    %7968 = vmatprep.subr.mxu0 0.0
    %7969 = vmatpush1.msra.mxu0 0.0
    %7970 = vmatprep.subr.mxu0 0.0
    %7971 = vmatpush1.msra.mxu0 0.0
    %7972 = vmatprep.subr.mxu0 0.0
    %7973 = vmatpush1.msra.mxu0 0.0
    %7974 = vmatprep.subr.mxu0 0.0
    %7975 = vmatpush1.msra.mxu0 0.0
    %7976 = vmatprep.subr.mxu0 0.0
    %7977 = vmatpush1.msra.mxu0 0.0
    %7978 = vmatprep.subr.mxu0 0.0
    %7979 = vmatpush1.msra.mxu0 0.0
    %7980 = vmatprep.subr.mxu0 0.0
    %7981 = vmatpush1.msra.mxu0 0.0
    %7982 = vmatprep.subr.mxu0 0.0
    %7983 = vmatpush1.msra.mxu0 0.0
    %7984 = vmatprep.subr.mxu0 0.0
    %7985 = vmatpush1.msra.mxu0 0.0
    %7986 = vmatprep.subr.mxu0 0.0
    %7987 = vmatpush1.msra.mxu0 0.0
    %7988 = vmatprep.subr.mxu0 0.0
    %7989 = vmatpush1.msra.mxu0 0.0
    %7990 = vmatprep.subr.mxu0 0.0
    %7991 = vmatpush1.msra.mxu0 0.0
    %7992 = vmatprep.subr.mxu0 0.0
    %7993 = vmatpush1.msra.mxu0 0.0
    %7994 = vmatprep.subr.mxu0 0.0
    %7995 = vmatpush1.msra.mxu0 0.0
    %7996 = vmatprep.subr.mxu0 0.0
    %7997 = vmatpush1.msra.mxu0 0.0
    %7998 = vmatprep.subr.mxu0 0.0
    %7999 = vmatpush1.msra.mxu0 0.0
    %8000 = vmatprep.subr.mxu0 0.0
    %8001 = vmatpush1.msra.mxu0 0.0
    %8002 = vmatprep.subr.mxu0 0.0
    %8003 = vmatpush1.msra.mxu0 0.0
    %8004 = vmatprep.subr.mxu0 0.0
    %8005 = vmatpush1.msra.mxu0 0.0
    %8006 = vmatprep.subr.mxu0 0.0
    %8007 = vmatpush1.msra.mxu0 0.0
    %8008 = vmatprep.subr.mxu0 0.0
    %8009 = vmatpush1.msra.mxu0 0.0
    %8010 = vmatprep.subr.mxu0 0.0
    %8011 = vmatpush1.msra.mxu0 0.0
    %8012 = vmatprep.subr.mxu0 0.0
    %8013 = vmatpush1.msra.mxu0 0.0
    %8014 = vmatprep.subr.mxu0 0.0
    %8015 = vmatpush1.msra.mxu0 0.0
    %8016 = vmatprep.subr.mxu0 0.0
    %8017 = vmatpush1.msra.mxu0 0.0
    %8018 = vmatprep.subr.mxu0 0.0
    %8019 = vmatpush1.msra.mxu0 0.0
    %8020 = vmatprep.subr.mxu0 0.0
    %8021 = vmatpush1.msra.mxu0 0.0
    %8022 = vmatprep.subr.mxu0 0.0
    %8023 = vmatpush1.msra.mxu0 0.0
    %8024 = vmatprep.subr.mxu0 0.0
    %8025 = vmatpush1.msra.mxu0 0.0
    %8026 = vmatprep.mubr.f32.mxu0 0.0
    %8027 = vmatmul.mubr.f32.gmra.mrb[0].mxu0 %v7960
    %v8028 = vpop.f32.mrb[0].mxu0
    %v8029 = vadd.f32 0.0, %v8028
    %v8030 = vpop.f32.mrb[0].mxu0
    %8031 = vdwg.mxu0
    %8034 = vrot.lane.b32.xlu0 %v7953, 24
    %v8035 = vpop.permute.xlu0 %8034
    %8036 = vrot.lane.b32.xlu0 %v8029, 24
    %v8037 = vpop.permute.xlu0 %8036
    %8040 = vst.msk [vmem:[#allocation2] sm:$0xff] %vm5479, %v8035
    %8041 = vst.msk [vmem:[#allocation2 + $0x8] sm:$0xff] %vm5479, %v8037
    %s8042 = scalar_lea.vmem %s59, 88
    %8043 = vst.msk [vmem:[%s8042] sm:$0xff] %vm3994, %v7851
    %s8044 = scalar_lea.vmem %s61, 88
    %8045 = vst.msk [vmem:[%s8044] sm:$0xff] %vm3994, %v7878
    %s8046 = scalar_lea.vmem %s59, 120
    %8047 = vst.msk [vmem:[%s8046] sm:$0xff] %vm3994, %v7853
    %s8048 = scalar_lea.vmem %s61, 120
    %8049 = vst.msk [vmem:[%s8048] sm:$0xff] %vm3994, %v7879
    %v8050 = vld [vmem:[#allocation2] sm:$0xff]
    %v8051 = vld [vmem:[#allocation2 + $0x8] sm:$0xff]
    %s8052 = scalar_lea.vmem [#allocation8], 32
    %v8053 = vld [vmem:[%s8052] sm:$0xff]
    %v8054 = vld [vmem:[%s8052 + $0x8] sm:$0xff]
    %v8055 = vld [vmem:[%s8052 + $0x10] sm:$0xff]
    %v8056 = vld [vmem:[%s8052 + $0x18] sm:$0xff]
    %s8057 = scalar_lea.vmem [#allocation10], 1
    %v8058 = vld [vmem:[%s8057] sm:$0x1]
    %v8060 = vlaneseq
    %v8061 = vshrl.u32 %v8060, 7
    %v8062 = vsub.s32 0, %v8061
    %v8063 = vrot.slane %v8058, %v8062
    %v8066 = vsel %vm3620, %v8050, 0
    %v8069 = vsel %vm3620, %v8051, 0
    %8071 = vmatprep.subr.mxu0 0.0
    %8072 = vmatpush1.msra.mxu0 %v8053
    %8073 = vmatprep.subr.mxu0 0.0
    %8074 = vmatpush1.msra.mxu0 %v8054
    %8075 = vmatprep.subr.mxu0 0.0
    %8076 = vmatpush1.msra.mxu0 %v8055
    %8077 = vmatprep.subr.mxu0 0.0
    %8078 = vmatpush1.msra.mxu0 %v8056
    %8079 = vmatprep.subr.mxu0 0.0
    %8080 = vmatpush1.msra.mxu0 0.0
    %8081 = vmatprep.subr.mxu0 0.0
    %8082 = vmatpush1.msra.mxu0 0.0
    %8083 = vmatprep.subr.mxu0 0.0
    %8084 = vmatpush1.msra.mxu0 0.0
    %8085 = vmatprep.subr.mxu0 0.0
    %8086 = vmatpush1.msra.mxu0 0.0
    %8087 = vmatprep.subr.mxu0 0.0
    %8088 = vmatpush1.msra.mxu0 0.0
    %8089 = vmatprep.subr.mxu0 0.0
    %8090 = vmatpush1.msra.mxu0 0.0
    %8091 = vmatprep.subr.mxu0 0.0
    %8092 = vmatpush1.msra.mxu0 0.0
    %8093 = vmatprep.subr.mxu0 0.0
    %8094 = vmatpush1.msra.mxu0 0.0
    %8095 = vmatprep.subr.mxu0 0.0
    %8096 = vmatpush1.msra.mxu0 0.0
    %8097 = vmatprep.subr.mxu0 0.0
    %8098 = vmatpush1.msra.mxu0 0.0
    %8099 = vmatprep.subr.mxu0 0.0
    %8100 = vmatpush1.msra.mxu0 0.0
    %8101 = vmatprep.subr.mxu0 0.0
    %8102 = vmatpush1.msra.mxu0 0.0
    %8103 = vmatprep.subr.mxu0 0.0
    %8104 = vmatpush1.msra.mxu0 0.0
    %8105 = vmatprep.subr.mxu0 0.0
    %8106 = vmatpush1.msra.mxu0 0.0
    %8107 = vmatprep.subr.mxu0 0.0
    %8108 = vmatpush1.msra.mxu0 0.0
    %8109 = vmatprep.subr.mxu0 0.0
    %8110 = vmatpush1.msra.mxu0 0.0
    %8111 = vmatprep.subr.mxu0 0.0
    %8112 = vmatpush1.msra.mxu0 0.0
    %8113 = vmatprep.subr.mxu0 0.0
    %8114 = vmatpush1.msra.mxu0 0.0
    %8115 = vmatprep.subr.mxu0 0.0
    %8116 = vmatpush1.msra.mxu0 0.0
    %8117 = vmatprep.subr.mxu0 0.0
    %8118 = vmatpush1.msra.mxu0 0.0
    %8119 = vmatprep.subr.mxu0 0.0
    %8120 = vmatpush1.msra.mxu0 0.0
    %8121 = vmatprep.subr.mxu0 0.0
    %8122 = vmatpush1.msra.mxu0 0.0
    %8123 = vmatprep.subr.mxu0 0.0
    %8124 = vmatpush1.msra.mxu0 0.0
    %8125 = vmatprep.subr.mxu0 0.0
    %8126 = vmatpush1.msra.mxu0 0.0
    %8127 = vmatprep.subr.mxu0 0.0
    %8128 = vmatpush1.msra.mxu0 0.0
    %8129 = vmatprep.subr.mxu0 0.0
    %8130 = vmatpush1.msra.mxu0 0.0
    %8131 = vmatprep.subr.mxu0 0.0
    %8132 = vmatpush1.msra.mxu0 0.0
    %8133 = vmatprep.subr.mxu0 0.0
    %8134 = vmatpush1.msra.mxu0 0.0
    %8135 = vmatprep.mubr.f32.mxu0 0.0
    %8136 = vmatmul.mubr.f32.gmra.mrb[0].mxu0 %v8066
    %v8137 = vpop.f32.mrb[0].mxu0
    %v8138 = vadd.f32 %v8063, %v8137
    %v8139 = vpop.f32.mrb[0].mxu0
    %8140 = vmatprep.mubr.f32.mxu0 0.0
    %8141 = vmatmul.mubr.f32.gmra.mrb[0].mxu0 %v8069
    %v8142 = vpop.f32.mrb[0].mxu0
    %v8143 = vadd.f32 %v8063, %v8142
    %v8144 = vpop.f32.mrb[0].mxu0
    %8145 = vdwg.mxu0
    %v8146 = vadd.f32 %v5913, %v8138
    %v8147 = vadd.f32 %v5914, %v8143
    %v8148 = vsel %vm3620, %v8146, 0.0
    %8149 = vadd.xlane.f32.xlu0 %v8148
    %v8150 = vpop.xlane.xlu0 %8149
    %v8151 = vsel %vm3620, %v8147, 0.0
    %8152 = vadd.xlane.f32.xlu0 %v8151
    %v8153 = vpop.xlane.xlu0 %8152
    %v8154 = vmul.f32 %v8150, %v5592
    %v8155 = vmul.f32 %v8153, %v5592
    %v8156 = vsub.f32 %v8146, %v8154
    %v8157 = vsub.f32 %v8147, %v8155
    %v8158 = vmul.f32 %v8156, %v8156
    %v8159 = vmul.f32 %v8157, %v8157
    %v8160 = vsel %vm3620, %v8158, 0.0
    %8161 = vadd.xlane.f32.xlu0 %v8160
    %v8162 = vpop.xlane.xlu0 %8161
    %v8163 = vsel %vm3620, %v8159, 0.0
    %8164 = vadd.xlane.f32.xlu0 %v8163
    %v8165 = vpop.xlane.xlu0 %8164
    %v8166 = vmul.f32 %v8162, %v5592
    %v8167 = vmul.f32 %v8165, %v5592
    %v8168 = vadd.f32 %v8166, 1e-05
    %v8169 = vadd.f32 %v8167, 1e-05
    %v8170 = vrsqrt.pop %v8168
    %v8171 = vrsqrt.pop %v8169
    %v8172 = vmul.f32 %v8156, %v8170
    %v8173 = vmul.f32 %v8157, %v8171
    %v8174 = vlaneseq
    %v8175 = vshrl.u32 %v8174, 7
    %v8176 = vsub.s32 0, %v8175
    %v8177 = vrot.slane %v6162, %v8176
    %v8178 = vmul.f32 %v8172, %v8177
    %v8179 = vmul.f32 %v8173, %v8177
    %v8180 = vlaneseq
    %v8181 = vshrl.u32 %v8180, 7
    %v8182 = vsub.s32 1, %v8181
    %v8183 = vrot.slane %v6162, %v8182
    %v8184 = vadd.f32 %v8178, %v8183
    %v8185 = vadd.f32 %v8179, %v8183
    %s8186 = scalar_lea.vmem %s41, 64
    %v8187 = vld [vmem:[%s8186] sm:$0xff]
    %v8188 = vld [vmem:[%s8186 + $0x8] sm:$0xff]
    %v8189 = vld [vmem:[%s8186 + $0x10] sm:$0xff]
    %v8190 = vld [vmem:[%s8186 + $0x18] sm:$0xff]
    %s8191 = scalar_lea.vmem [#allocation13], 2
    %v8192 = vld [vmem:[%s8191] sm:$0x1]
    %v8194 = vlaneseq
    %v8195 = vshrl.u32 %v8194, 7
    %v8196 = vsub.s32 0, %v8195
    %v8197 = vrot.slane %v8192, %v8196
    %v8200 = vsel %vm3620, %v8184, 0
    %v8203 = vsel %vm3620, %v8185, 0
    %8205 = vmatprep.subr.mxu0 0.0
    %8206 = vmatpush1.msra.mxu0 %v8187
    %8207 = vmatprep.subr.mxu0 0.0
    %8208 = vmatpush1.msra.mxu0 %v8188
    %8209 = vmatprep.subr.mxu0 0.0
    %8210 = vmatpush1.msra.mxu0 %v8189
    %8211 = vmatprep.subr.mxu0 0.0
    %8212 = vmatpush1.msra.mxu0 %v8190
    %8213 = vmatprep.subr.mxu0 0.0
    %8214 = vmatpush1.msra.mxu0 0.0
    %8215 = vmatprep.subr.mxu0 0.0
    %8216 = vmatpush1.msra.mxu0 0.0
    %8217 = vmatprep.subr.mxu0 0.0
    %8218 = vmatpush1.msra.mxu0 0.0
    %8219 = vmatprep.subr.mxu0 0.0
    %8220 = vmatpush1.msra.mxu0 0.0
    %8221 = vmatprep.subr.mxu0 0.0
    %8222 = vmatpush1.msra.mxu0 0.0
    %8223 = vmatprep.subr.mxu0 0.0
    %8224 = vmatpush1.msra.mxu0 0.0
    %8225 = vmatprep.subr.mxu0 0.0
    %8226 = vmatpush1.msra.mxu0 0.0
    %8227 = vmatprep.subr.mxu0 0.0
    %8228 = vmatpush1.msra.mxu0 0.0
    %8229 = vmatprep.subr.mxu0 0.0
    %8230 = vmatpush1.msra.mxu0 0.0
    %8231 = vmatprep.subr.mxu0 0.0
    %8232 = vmatpush1.msra.mxu0 0.0
    %8233 = vmatprep.subr.mxu0 0.0
    %8234 = vmatpush1.msra.mxu0 0.0
    %8235 = vmatprep.subr.mxu0 0.0
    %8236 = vmatpush1.msra.mxu0 0.0
    %8237 = vmatprep.subr.mxu0 0.0
    %8238 = vmatpush1.msra.mxu0 0.0
    %8239 = vmatprep.subr.mxu0 0.0
    %8240 = vmatpush1.msra.mxu0 0.0
    %8241 = vmatprep.subr.mxu0 0.0
    %8242 = vmatpush1.msra.mxu0 0.0
    %8243 = vmatprep.subr.mxu0 0.0
    %8244 = vmatpush1.msra.mxu0 0.0
    %8245 = vmatprep.subr.mxu0 0.0
    %8246 = vmatpush1.msra.mxu0 0.0
    %8247 = vmatprep.subr.mxu0 0.0
    %8248 = vmatpush1.msra.mxu0 0.0
    %8249 = vmatprep.subr.mxu0 0.0
    %8250 = vmatpush1.msra.mxu0 0.0
    %8251 = vmatprep.subr.mxu0 0.0
    %8252 = vmatpush1.msra.mxu0 0.0
    %8253 = vmatprep.subr.mxu0 0.0
    %8254 = vmatpush1.msra.mxu0 0.0
    %8255 = vmatprep.subr.mxu0 0.0
    %8256 = vmatpush1.msra.mxu0 0.0
    %8257 = vmatprep.subr.mxu0 0.0
    %8258 = vmatpush1.msra.mxu0 0.0
    %8259 = vmatprep.subr.mxu0 0.0
    %8260 = vmatpush1.msra.mxu0 0.0
    %8261 = vmatprep.subr.mxu0 0.0
    %8262 = vmatpush1.msra.mxu0 0.0
    %8263 = vmatprep.subr.mxu0 0.0
    %8264 = vmatpush1.msra.mxu0 0.0
    %8265 = vmatprep.subr.mxu0 0.0
    %8266 = vmatpush1.msra.mxu0 0.0
    %8267 = vmatprep.subr.mxu0 0.0
    %8268 = vmatpush1.msra.mxu0 0.0
    %8269 = vmatprep.mubr.f32.mxu0 0.0
    %8270 = vmatmul.mubr.f32.gmra.mrb[0].mxu0 %v8200
    %v8271 = vpop.f32.mrb[0].mxu0
    %v8272 = vadd.f32 %v8197, %v8271
    %v8273 = vpop.f32.mrb[0].mxu0
    %8274 = vmatprep.mubr.f32.mxu0 0.0
    %8275 = vmatmul.mubr.f32.gmra.mrb[0].mxu0 %v8203
    %v8276 = vpop.f32.mrb[0].mxu0
    %v8277 = vadd.f32 %v8197, %v8276
    %v8278 = vpop.f32.mrb[0].mxu0
    %8279 = vdwg.mxu0
    %v8280 = vmul.f32 %v8272, 0.5
    %v8281 = vmul.f32 %v8277, 0.5
    %v8282 = vmul.f32 %v8272, 0.044715
    %v8283 = vmul.f32 %v8277, 0.044715
    %v8284 = vmul.f32 %v8282, %v8272
    %v8285 = vmul.f32 %v8283, %v8277
    %v8286 = vmul.f32 %v8284, %v8272
    %v8287 = vmul.f32 %v8285, %v8277
    %v8288 = vadd.f32 %v8272, %v8286
    %v8289 = vadd.f32 %v8277, %v8287
    %v8290 = vmul.f32 %v8288, 0.7978846
    %v8291 = vmul.f32 %v8289, 0.7978846
    %v8292 = vtanh.pop %v8290
    %v8293 = vtanh.pop %v8291
    %v8294 = vadd.f32 %v8292, 1.0
    %v8295 = vadd.f32 %v8293, 1.0
    %v8296 = vmul.f32 %v8280, %v8294
    %v8297 = vmul.f32 %v8281, %v8295
    %s8298 = scalar_lea.vmem %s45, 64
    %v8299 = vld [vmem:[%s8298] sm:$0xff]
    %v8300 = vld [vmem:[%s8298 + $0x8] sm:$0xff]
    %v8301 = vld [vmem:[%s8298 + $0x10] sm:$0xff]
    %v8302 = vld [vmem:[%s8298 + $0x18] sm:$0xff]
    %s8303 = scalar_lea.vmem [#allocation14], 2
    %v8304 = vld [vmem:[%s8303] sm:$0x1]
    %v8306 = vlaneseq
    %v8307 = vshrl.u32 %v8306, 7
    %v8308 = vsub.s32 0, %v8307
    %v8309 = vrot.slane %v8304, %v8308
    %v8312 = vsel %vm3620, %v8296, 0
    %v8315 = vsel %vm3620, %v8297, 0
    %8317 = vmatprep.subr.mxu0 0.0
    %8318 = vmatpush1.msra.mxu0 %v8299
    %8319 = vmatprep.subr.mxu0 0.0
    %8320 = vmatpush1.msra.mxu0 %v8300
    %8321 = vmatprep.subr.mxu0 0.0
    %8322 = vmatpush1.msra.mxu0 %v8301
    %8323 = vmatprep.subr.mxu0 0.0
    %8324 = vmatpush1.msra.mxu0 %v8302
    %8325 = vmatprep.subr.mxu0 0.0
    %8326 = vmatpush1.msra.mxu0 0.0
    %8327 = vmatprep.subr.mxu0 0.0
    %8328 = vmatpush1.msra.mxu0 0.0
    %8329 = vmatprep.subr.mxu0 0.0
    %8330 = vmatpush1.msra.mxu0 0.0
    %8331 = vmatprep.subr.mxu0 0.0
    %8332 = vmatpush1.msra.mxu0 0.0
    %8333 = vmatprep.subr.mxu0 0.0
    %8334 = vmatpush1.msra.mxu0 0.0
    %8335 = vmatprep.subr.mxu0 0.0
    %8336 = vmatpush1.msra.mxu0 0.0
    %8337 = vmatprep.subr.mxu0 0.0
    %8338 = vmatpush1.msra.mxu0 0.0
    %8339 = vmatprep.subr.mxu0 0.0
    %8340 = vmatpush1.msra.mxu0 0.0
    %8341 = vmatprep.subr.mxu0 0.0
    %8342 = vmatpush1.msra.mxu0 0.0
    %8343 = vmatprep.subr.mxu0 0.0
    %8344 = vmatpush1.msra.mxu0 0.0
    %8345 = vmatprep.subr.mxu0 0.0
    %8346 = vmatpush1.msra.mxu0 0.0
    %8347 = vmatprep.subr.mxu0 0.0
    %8348 = vmatpush1.msra.mxu0 0.0
    %8349 = vmatprep.subr.mxu0 0.0
    %8350 = vmatpush1.msra.mxu0 0.0
    %8351 = vmatprep.subr.mxu0 0.0
    %8352 = vmatpush1.msra.mxu0 0.0
    %8353 = vmatprep.subr.mxu0 0.0
    %8354 = vmatpush1.msra.mxu0 0.0
    %8355 = vmatprep.subr.mxu0 0.0
    %8356 = vmatpush1.msra.mxu0 0.0
    %8357 = vmatprep.subr.mxu0 0.0
    %8358 = vmatpush1.msra.mxu0 0.0
    %8359 = vmatprep.subr.mxu0 0.0
    %8360 = vmatpush1.msra.mxu0 0.0
    %8361 = vmatprep.subr.mxu0 0.0
    %8362 = vmatpush1.msra.mxu0 0.0
    %8363 = vmatprep.subr.mxu0 0.0
    %8364 = vmatpush1.msra.mxu0 0.0
    %8365 = vmatprep.subr.mxu0 0.0
    %8366 = vmatpush1.msra.mxu0 0.0
    %8367 = vmatprep.subr.mxu0 0.0
    %8368 = vmatpush1.msra.mxu0 0.0
    %8369 = vmatprep.subr.mxu0 0.0
    %8370 = vmatpush1.msra.mxu0 0.0
    %8371 = vmatprep.subr.mxu0 0.0
    %8372 = vmatpush1.msra.mxu0 0.0
    %8373 = vmatprep.subr.mxu0 0.0
    %8374 = vmatpush1.msra.mxu0 0.0
    %8375 = vmatprep.subr.mxu0 0.0
    %8376 = vmatpush1.msra.mxu0 0.0
    %8377 = vmatprep.subr.mxu0 0.0
    %8378 = vmatpush1.msra.mxu0 0.0
    %8379 = vmatprep.subr.mxu0 0.0
    %8380 = vmatpush1.msra.mxu0 0.0
    %8381 = vmatprep.mubr.f32.mxu0 0.0
    %8382 = vmatmul.mubr.f32.gmra.mrb[0].mxu0 %v8312
    %v8383 = vpop.f32.mrb[0].mxu0
    %v8384 = vadd.f32 %v8309, %v8383
    %v8385 = vpop.f32.mrb[0].mxu0
    %8386 = vmatprep.mubr.f32.mxu0 0.0
    %8387 = vmatmul.mubr.f32.gmra.mrb[0].mxu0 %v8315
    %v8388 = vpop.f32.mrb[0].mxu0
    %v8389 = vadd.f32 %v8309, %v8388
    %v8390 = vpop.f32.mrb[0].mxu0
    %8391 = vdwg.mxu0
    %v8392 = vadd.f32 %v8184, %v8384
    %v8393 = vadd.f32 %v8185, %v8389
    %v8394 = vsel %vm3620, %v8392, 0.0
    %8395 = vadd.xlane.f32.xlu0 %v8394
    %v8396 = vpop.xlane.xlu0 %8395
    %v8397 = vsel %vm3620, %v8393, 0.0
    %8398 = vadd.xlane.f32.xlu0 %v8397
    %v8399 = vpop.xlane.xlu0 %8398
    %v8400 = vmul.f32 %v8396, %v5592
    %v8401 = vmul.f32 %v8399, %v5592
    %v8402 = vsub.f32 %v8392, %v8400
    %v8403 = vsub.f32 %v8393, %v8401
    %v8404 = vmul.f32 %v8402, %v8402
    %v8405 = vmul.f32 %v8403, %v8403
    %v8406 = vsel %vm3620, %v8404, 0.0
    %8407 = vadd.xlane.f32.xlu0 %v8406
    %v8408 = vpop.xlane.xlu0 %8407
    %v8409 = vsel %vm3620, %v8405, 0.0
    %8410 = vadd.xlane.f32.xlu0 %v8409
    %v8411 = vpop.xlane.xlu0 %8410
    %v8412 = vmul.f32 %v8408, %v5592
    %v8413 = vmul.f32 %v8411, %v5592
    %v8414 = vadd.f32 %v8412, 1e-05
    %v8415 = vadd.f32 %v8413, 1e-05
    %v8416 = vrsqrt.pop %v8414
    %v8417 = vrsqrt.pop %v8415
    %v8418 = vmul.f32 %v8402, %v8416
    %v8419 = vmul.f32 %v8403, %v8417
    %v8420 = vlaneseq
    %v8421 = vshrl.u32 %v8420, 7
    %v8422 = vsub.s32 4, %v8421
    %v8423 = vrot.slane %v6162, %v8422
    %v8424 = vmul.f32 %v8418, %v8423
    %v8425 = vmul.f32 %v8419, %v8423
    %v8426 = vlaneseq
    %v8427 = vshrl.u32 %v8426, 7
    %v8428 = vsub.s32 5, %v8427
    %v8429 = vrot.slane %v6162, %v8428
    %v8430 = vadd.f32 %v8424, %v8429
    %v8431 = vadd.f32 %v8425, %v8429
    %v8432 = vld [vmem:[#allocation16] sm:$0x1]
    %v8433 = vld [vmem:[#allocation17] sm:$0x1]
    %v8434 = vsel %vm3620, %v8430, 0.0
    %8435 = vadd.xlane.f32.xlu0 %v8434
    %v8436 = vpop.xlane.xlu0 %8435
    %v8437 = vsel %vm3620, %v8431, 0.0
    %8438 = vadd.xlane.f32.xlu0 %v8437
    %v8439 = vpop.xlane.xlu0 %8438
    %v8440 = vmul.f32 %v8436, %v5592
    %v8441 = vmul.f32 %v8439, %v5592
    %v8442 = vsub.f32 %v8430, %v8440
    %v8443 = vsub.f32 %v8431, %v8441
    %v8444 = vmul.f32 %v8442, %v8442
    %v8445 = vmul.f32 %v8443, %v8443
    %v8446 = vsel %vm3620, %v8444, 0.0
    %8447 = vadd.xlane.f32.xlu0 %v8446
    %v8448 = vpop.xlane.xlu0 %8447
    %v8449 = vsel %vm3620, %v8445, 0.0
    %8450 = vadd.xlane.f32.xlu0 %v8449
    %v8451 = vpop.xlane.xlu0 %8450
    %v8452 = vmul.f32 %v8448, %v5592
    %v8453 = vmul.f32 %v8451, %v5592
    %v8454 = vadd.f32 %v8452, 1e-05
    %v8455 = vadd.f32 %v8453, 1e-05
    %v8456 = vrsqrt.pop %v8454
    %v8457 = vrsqrt.pop %v8455
    %v8458 = vmul.f32 %v8442, %v8456
    %v8459 = vmul.f32 %v8443, %v8457
    %v8461 = vlaneseq
    %v8462 = vshrl.u32 %v8461, 7
    %v8463 = vsub.s32 0, %v8462
    %v8464 = vrot.slane %v8432, %v8463
    %v8466 = vmul.f32 %v8458, %v8464
    %v8467 = vmul.f32 %v8459, %v8464
    %v8469 = vlaneseq
    %v8470 = vshrl.u32 %v8469, 7
    %v8471 = vsub.s32 0, %v8470
    %v8472 = vrot.slane %v8433, %v8471
    %v8474 = vadd.f32 %v8466, %v8472
    %v8475 = vadd.f32 %v8467, %v8472
    %v8476 = vld [vmem:[%s53] sm:$0xff]
    %v8477 = vld [vmem:[%s53 + $0x8] sm:$0xff]
    %v8478 = vld [vmem:[%s53 + $0x10] sm:$0xff]
    %v8479 = vld [vmem:[%s53 + $0x18] sm:$0xff]
    %v8480 = vld [vmem:[#allocation19] sm:$0x1]
    %v8482 = vlaneseq
    %v8483 = vshrl.u32 %v8482, 7
    %v8484 = vsub.s32 0, %v8483
    %v8485 = vrot.slane %v8480, %v8484
    %v8488 = vsel %vm3620, %v8474, 0
    %v8491 = vsel %vm3620, %v8475, 0
    %8493 = vmatprep.subr.mxu0 0.0
    %8494 = vmatpush1.msra.mxu0 %v8476
    %8495 = vmatprep.subr.mxu0 0.0
    %8496 = vmatpush1.msra.mxu0 %v8477
    %8497 = vmatprep.subr.mxu0 0.0
    %8498 = vmatpush1.msra.mxu0 %v8478
    %8499 = vmatprep.subr.mxu0 0.0
    %8500 = vmatpush1.msra.mxu0 %v8479
    %8501 = vmatprep.subr.mxu0 0.0
    %8502 = vmatpush1.msra.mxu0 0.0
    %8503 = vmatprep.subr.mxu0 0.0
    %8504 = vmatpush1.msra.mxu0 0.0
    %8505 = vmatprep.subr.mxu0 0.0
    %8506 = vmatpush1.msra.mxu0 0.0
    %8507 = vmatprep.subr.mxu0 0.0
    %8508 = vmatpush1.msra.mxu0 0.0
    %8509 = vmatprep.subr.mxu0 0.0
    %8510 = vmatpush1.msra.mxu0 0.0
    %8511 = vmatprep.subr.mxu0 0.0
    %8512 = vmatpush1.msra.mxu0 0.0
    %8513 = vmatprep.subr.mxu0 0.0
    %8514 = vmatpush1.msra.mxu0 0.0
    %8515 = vmatprep.subr.mxu0 0.0
    %8516 = vmatpush1.msra.mxu0 0.0
    %8517 = vmatprep.subr.mxu0 0.0
    %8518 = vmatpush1.msra.mxu0 0.0
    %8519 = vmatprep.subr.mxu0 0.0
    %8520 = vmatpush1.msra.mxu0 0.0
    %8521 = vmatprep.subr.mxu0 0.0
    %8522 = vmatpush1.msra.mxu0 0.0
    %8523 = vmatprep.subr.mxu0 0.0
    %8524 = vmatpush1.msra.mxu0 0.0
    %8525 = vmatprep.subr.mxu0 0.0
    %8526 = vmatpush1.msra.mxu0 0.0
    %8527 = vmatprep.subr.mxu0 0.0
    %8528 = vmatpush1.msra.mxu0 0.0
    %8529 = vmatprep.subr.mxu0 0.0
    %8530 = vmatpush1.msra.mxu0 0.0
    %8531 = vmatprep.subr.mxu0 0.0
    %8532 = vmatpush1.msra.mxu0 0.0
    %8533 = vmatprep.subr.mxu0 0.0
    %8534 = vmatpush1.msra.mxu0 0.0
    %8535 = vmatprep.subr.mxu0 0.0
    %8536 = vmatpush1.msra.mxu0 0.0
    %8537 = vmatprep.subr.mxu0 0.0
    %8538 = vmatpush1.msra.mxu0 0.0
    %8539 = vmatprep.subr.mxu0 0.0
    %8540 = vmatpush1.msra.mxu0 0.0
    %8541 = vmatprep.subr.mxu0 0.0
    %8542 = vmatpush1.msra.mxu0 0.0
    %8543 = vmatprep.subr.mxu0 0.0
    %8544 = vmatpush1.msra.mxu0 0.0
    %8545 = vmatprep.subr.mxu0 0.0
    %8546 = vmatpush1.msra.mxu0 0.0
    %8547 = vmatprep.subr.mxu0 0.0
    %8548 = vmatpush1.msra.mxu0 0.0
    %8549 = vmatprep.subr.mxu0 0.0
    %8550 = vmatpush1.msra.mxu0 0.0
    %8551 = vmatprep.subr.mxu0 0.0
    %8552 = vmatpush1.msra.mxu0 0.0
    %8553 = vmatprep.subr.mxu0 0.0
    %8554 = vmatpush1.msra.mxu0 0.0
    %8555 = vmatprep.subr.mxu0 0.0
    %8556 = vmatpush1.msra.mxu0 0.0
    %8557 = vmatprep.mubr.f32.mxu0 0.0
    %8558 = vmatmul.mubr.f32.gmra.mrb[0].mxu0 %v8488
    %v8559 = vpop.f32.mrb[0].mxu0
    %v8560 = vadd.f32 %v8485, %v8559
    %v8561 = vpop.f32.mrb[0].mxu0
    %8562 = vmatprep.mubr.f32.mxu0 0.0
    %8563 = vmatmul.mubr.f32.gmra.mrb[0].mxu0 %v8491
    %v8564 = vpop.f32.mrb[0].mxu0
    %v8565 = vadd.f32 %v8485, %v8564
    %v8566 = vpop.f32.mrb[0].mxu0
    %8567 = vdwg.mxu0
    %8568 = vst.msk [vmem:[%s57] sm:$0xff] %vm451, %v8560
    %8569 = vst.msk [vmem:[%s57 + $0x8] sm:$0xff] %vm451, %v8565
    // Predicated region
    $region158: #{anomaly_transformer_fwd.1} parent=1 // pred_check
      _
    $region159: #{anomaly_transformer_fwd.1} parent=1 // pred_check_branch
      %8571 = sbr.rel (0) target = $region161
    $region160: #{anomaly_transformer_fwd.1} parent=1 // pred_region
      _
    $region161: #{anomaly_transformer_fwd.1} parent=1 // pred_fallthru
      _
    // Predicated region
    $region162: #{anomaly_transformer_fwd.1} parent=1 // pred_check
      _
    $region163: #{anomaly_transformer_fwd.1} parent=1 // pred_check_branch
      %8573 = sbr.rel (0) target = $region165
    $region164: #{anomaly_transformer_fwd.1} parent=1 // pred_region
      _
    $region165: #{anomaly_transformer_fwd.1} parent=1 // pred_fallthru
      _
    // Predicated region
    $region166: #{anomaly_transformer_fwd.1} parent=1 // pred_check
      _
    $region167: #{anomaly_transformer_fwd.1} parent=1 // pred_check_branch
      %8575 = sbr.rel (0) target = $region169
    $region168: #{anomaly_transformer_fwd.1} parent=1 // pred_region
      _
    $region169: #{anomaly_transformer_fwd.1} parent=1 // pred_fallthru
      _
    // Predicated region
    $region170: #{anomaly_transformer_fwd.1} parent=1 // pred_check
      _
    $region171: #{anomaly_transformer_fwd.1} parent=1 // pred_check_branch
      %8577 = sbr.rel (0) target = $region173
    $region172: #{anomaly_transformer_fwd.1} parent=1 // pred_region
      _
    $region173: #{anomaly_transformer_fwd.1} parent=1 // pred_fallthru
      _
    // Predicated region
    $region174: #{anomaly_transformer_fwd.1} parent=1 // pred_check
      _
    $region175: #{anomaly_transformer_fwd.1} parent=1 // pred_check_branch
      %8579 = sbr.rel (0) target = $region177
    $region176: #{anomaly_transformer_fwd.1} parent=1 // pred_region
      _
    $region177: #{anomaly_transformer_fwd.1} parent=1 // pred_fallthru
      _
    // Predicated region
    $region178: #{anomaly_transformer_fwd.1} parent=1 // pred_check
      _
    $region179: #{anomaly_transformer_fwd.1} parent=1 // pred_check_branch
      %8581 = sbr.rel (0) target = $region181
    $region180: #{anomaly_transformer_fwd.1} parent=1 // pred_region
      _
    $region181: #{anomaly_transformer_fwd.1} parent=1 // pred_fallthru
      _
    // Predicated region
    $region182: #{anomaly_transformer_fwd.1} parent=1 // pred_check
      _
    $region183: #{anomaly_transformer_fwd.1} parent=1 // pred_check_branch
      %8583 = sbr.rel (0) target = $region185
    $region184: #{anomaly_transformer_fwd.1} parent=1 // pred_region
      _
    $region185: #{anomaly_transformer_fwd.1} parent=1 // pred_fallthru
      _
    // Predicated region
    $region186: #{anomaly_transformer_fwd.1} parent=1 // pred_check
      _
    $region187: #{anomaly_transformer_fwd.1} parent=1 // pred_check_branch
      %8585 = sbr.rel (0) target = $region189
    $region188: #{anomaly_transformer_fwd.1} parent=1 // pred_region
      _
    $region189: #{anomaly_transformer_fwd.1} parent=1 // pred_fallthru
      _
    %8586 = vsyncpa [#allocation4], 1
    %8587 = vsyncpa [#allocation6], 1
    %8588 = vsyncpa [#allocation9], 1
    %8589 = vsyncpa [#allocation12], 1
    %8590 = vsyncpa [#allocation15], 1
    %8591 = vsyncpa [#allocation18], 1

</llo_original>
